<compile_context>
chip_gen: v7x
topology: tpu7x:2x2x1
jax: 0.10.0
libtpu: 0.0.40
codegen_flags: <defaults>
</compile_context>

<pallas_src>
import math
from functools import partial

import jax
import jax.numpy as jnp
from jax.experimental import pallas as pl
from jax.experimental.pallas import tpu as pltpu

# ----------------------- small, forward-consistent sizes -----------------------
BATCH = 2
IMG = 16            # now_2D_input_size = (16, 16)
PATCH = 4           # patch_size
CHANS = 3           # 2D images are RGB (decoder_pred_2D = patch**2 * 3)
NUM_PATCHES = (IMG // PATCH) * (IMG // PATCH)   # 16
PATCH_DIM = PATCH * PATCH * CHANS               # 48

EMBED = 128         # stands in for 768
NHEAD = 4           # stands in for 12
FFN = 256           # stands in for 3072
ENC_DEPTH = 2       # stands in for 12
LS_INIT = 1e-3      # layer_scale init

DEC_EMBED = 128     # stands in for 512
DEC_NHEAD = 4       # stands in for 16
MLP_RATIO = 4
DEC_DEPTH = 2       # stands in for 8

MASK_RATIO = 0.75


def _pad8(n):
    return ((n + 7) // 8) * 8


# =============================== Pallas kernels ================================

def _fused_layer_kernel(x_ref,
                        ln1_g, ln1_b, in_w, in_b, out_w, out_b, ls1,
                        ln2_g, ln2_b, fc1_w, fc1_b, fc2_w, fc2_b, ls2,
                        o_ref, *, nheads, l_real, eps):
    """One pre-norm transformer layer on a (Lp, E) VMEM-resident tile (one batch elem).

    LN1 -> QKV -> per-head softmax attention (padded keys masked) -> out-proj ->
    layer-scale residual -> LN2 -> fc1+GELU -> fc2 -> layer-scale residual.
    """
    Lp = x_ref.shape[1]
    E = x_ref.shape[2]
    Dh = E // nheads
    scale = 1.0 / math.sqrt(Dh)

    x = x_ref[0]                                   # (Lp, E)

    def ln(v, g_ref, b_ref):
        mu = jnp.mean(v, axis=-1, keepdims=True)
        var = jnp.mean((v - mu) ** 2, axis=-1, keepdims=True)
        return (v - mu) * jax.lax.rsqrt(var + eps) * g_ref[...] + b_ref[...]

    # ---- attention ----
    h = ln(x, ln1_g, ln1_b)
    qkv = jnp.dot(h, in_w[...], preferred_element_type=jnp.float32) + in_b[...]
    q = qkv[:, :E]
    k = qkv[:, E:2 * E]
    v = qkv[:, 2 * E:]

    out_w_v = out_w[...]                           # (E, E)

    # mask out padded key columns (rows beyond l_real are zero-padded sequence slots)
    key_idx = jax.lax.broadcasted_iota(jnp.int32, (Lp, Lp), 1)
    kbias = jnp.where(key_idx < l_real, 0.0, -1e30).astype(jnp.float32)

    attn_acc = None
    for hd in range(nheads):
        lo, hi = hd * Dh, (hd + 1) * Dh
        qh = q[:, lo:hi] * scale
        kh = k[:, lo:hi]
        vh = v[:, lo:hi]
        # q @ k^T without an explicit transpose (contract the Dh dims).
        s = jax.lax.dot_general(qh, kh, (((1,), (1,)), ((), ())),
                                preferred_element_type=jnp.float32) + kbias
        s = s - jnp.max(s, axis=-1, keepdims=True)
        p = jnp.exp(s)
        p = p * pl.reciprocal(jnp.sum(p, axis=-1, keepdims=True), approx=True)
        oh = jnp.dot(p, vh, preferred_element_type=jnp.float32)      # (Lp, Dh)
        # fold the head-merge + out-projection into a per-head row-slice matmul:
        # concat(oh) @ out_w == sum_h oh @ out_w[h*Dh:(h+1)*Dh, :]
        contrib = jnp.dot(oh, out_w_v[lo:hi, :], preferred_element_type=jnp.float32)
        attn_acc = contrib if attn_acc is None else attn_acc + contrib
    attn = attn_acc + out_b[...]
    x = x + ls1[...] * attn

    # ---- MLP ----
    h2 = ln(x, ln2_g, ln2_b)
    h2 = jnp.dot(h2, fc1_w[...], preferred_element_type=jnp.float32) + fc1_b[...]
    h2 = jax.nn.gelu(h2, approximate=True)
    h2 = jnp.dot(h2, fc2_w[...], preferred_element_type=jnp.float32) + fc2_b[...]
    x = x + ls2[...] * h2

    o_ref[0] = x


def fused_transformer_layer(x, p, nheads, l_real, eps):
    """x: (B, Lp, E) f32; one whole pre-norm transformer layer per batch element."""
    B, Lp, E = x.shape
    FF = p['fc1_w'].shape[1]
    row = lambda a: a.reshape(1, -1)
    rep = lambda r, c: pl.BlockSpec((r, c), lambda i: (0, 0))   # weight, same block each step
    xspec = pl.BlockSpec((1, Lp, E), lambda i: (i, 0, 0))
    return pl.pallas_call(
        partial(_fused_layer_kernel, nheads=nheads, l_real=l_real, eps=eps),
        out_shape=jax.ShapeDtypeStruct((B, Lp, E), jnp.float32),
        grid=(B,),
        in_specs=[
            xspec,
            rep(1, E), rep(1, E),              # ln1
            rep(E, 3 * E), rep(1, 3 * E),      # qkv in-proj
            rep(E, E), rep(1, E),              # out-proj
            rep(1, E),                         # ls1
            rep(1, E), rep(1, E),              # ln2
            rep(E, FF), rep(1, FF),            # fc1
            rep(FF, E), rep(1, E),             # fc2
            rep(1, E),                         # ls2
        ],
        out_specs=xspec,
        compiler_params=pltpu.CompilerParams(dimension_semantics=("parallel",)),
    )(x,
      row(p['ln1_g']), row(p['ln1_b']),
      p['in_w'], row(p['in_b']),
      p['out_w'], row(p['out_b']),
      row(p['ls1']),
      row(p['ln2_g']), row(p['ln2_b']),
      p['fc1_w'], row(p['fc1_b']),
      p['fc2_w'], row(p['fc2_b']),
      row(p['ls2']))


def _blinear_kernel(x_ref, w_ref, b_ref, o_ref):
    o_ref[0] = jnp.dot(x_ref[0], w_ref[...],
                       preferred_element_type=jnp.float32) + b_ref[...]


def _blinear_pos_kernel(x_ref, w_ref, b_ref, pos_ref, o_ref):
    o_ref[0] = (jnp.dot(x_ref[0], w_ref[...], preferred_element_type=jnp.float32)
                + b_ref[...] + pos_ref[...])


def batched_linear(x, w, b, pos=None):
    """x: (B, L, K) @ w: (K, N) + b, optionally fused + pos (1, L, N).  Grid over batch."""
    B, L, K = x.shape
    N = w.shape[1]
    in_specs = [
        pl.BlockSpec((1, L, K), lambda i: (i, 0, 0)),
        pl.BlockSpec((K, N), lambda i: (0, 0)),
        pl.BlockSpec((1, N), lambda i: (0, 0)),
    ]
    args = [x, w, b.reshape(1, N)]
    kern = _blinear_kernel
    if pos is not None:
        in_specs.append(pl.BlockSpec((L, N), lambda i: (0, 0)))
        args.append(pos.reshape(L, N))
        kern = _blinear_pos_kernel
    return pl.pallas_call(
        kern,
        out_shape=jax.ShapeDtypeStruct((B, L, N), jnp.float32),
        grid=(B,),
        in_specs=in_specs,
        out_specs=pl.BlockSpec((1, L, N), lambda i: (i, 0, 0)),
        compiler_params=pltpu.CompilerParams(dimension_semantics=("parallel",)),
    )(*args)


def _norm_linear_kernel(x_ref, g_ref, b_ref, w_ref, wb_ref, o_ref, *, eps):
    x = x_ref[...]
    mu = jnp.mean(x, axis=-1, keepdims=True)
    var = jnp.mean((x - mu) ** 2, axis=-1, keepdims=True)
    h = (x - mu) * jax.lax.rsqrt(var + eps) * g_ref[...] + b_ref[...]
    o_ref[...] = jnp.dot(h, w_ref[...], preferred_element_type=jnp.float32) + wb_ref[...]


def norm_linear(x, g, b, w, wb, eps=1e-6):
    """Fused LayerNorm + Linear on a (M, D) slab (decoder_norm + decoder_pred)."""
    M, D = x.shape
    N = w.shape[1]
    return pl.pallas_call(
        partial(_norm_linear_kernel, eps=eps),
        out_shape=jax.ShapeDtypeStruct((M, N), jnp.float32),
        grid=(1,),
        in_specs=[
            pl.BlockSpec((M, D), lambda i: (0, 0)),
            pl.BlockSpec((1, D), lambda i: (0, 0)),
            pl.BlockSpec((1, D), lambda i: (0, 0)),
            pl.BlockSpec((D, N), lambda i: (0, 0)),
            pl.BlockSpec((1, N), lambda i: (0, 0)),
        ],
        out_specs=pl.BlockSpec((M, N), lambda i: (0, 0)),
    )(x, g.reshape(1, D), b.reshape(1, D), w, wb.reshape(1, N))


def _masked_mse_kernel(pred_ref, tgt_ref, mask_ref, loss_ref, mean_ref, var_ref,
                       *, norm_pix, eps):
    t = tgt_ref[...]                  # (M, P)
    p = pred_ref[...]
    m = mask_ref[...]                 # (M, 1)
    P = t.shape[-1]
    mean = jnp.mean(t, axis=-1, keepdims=True)
    var = jnp.sum((t - mean) ** 2, axis=-1, keepdims=True) / (P - 1)  # unbiased (torch .var)
    mean_ref[...] = mean
    var_ref[...] = var
    if norm_pix:
        t = (t - mean) * jax.lax.rsqrt(var + eps)
    per_tok = jnp.mean((p - t) ** 2, axis=-1, keepdims=True)           # (M, 1)
    num = jnp.sum(per_tok * m, axis=(0, 1), keepdims=True)             # (1, 1)
    den = jnp.sum(m, axis=(0, 1), keepdims=True)                       # (1, 1)
    loss_ref[...] = num / den


def masked_mse_loss(pred, target, mask, norm_pix=True, eps=1e-6):
    N, L, P = pred.shape
    M = N * L
    loss, mean, var = pl.pallas_call(
        partial(_masked_mse_kernel, norm_pix=norm_pix, eps=eps),
        out_shape=(
            jax.ShapeDtypeStruct((1, 1), jnp.float32),
            jax.ShapeDtypeStruct((M, 1), jnp.float32),
            jax.ShapeDtypeStruct((M, 1), jnp.float32),
        ),
        grid=(1,),
        in_specs=[pl.BlockSpec((M, P), lambda i: (0, 0)),
                  pl.BlockSpec((M, P), lambda i: (0, 0)),
                  pl.BlockSpec((M, 1), lambda i: (0, 0))],
        out_specs=(
            pl.BlockSpec((1, 1), lambda i: (0, 0)),
            pl.BlockSpec((M, 1), lambda i: (0, 0)),
            pl.BlockSpec((M, 1), lambda i: (0, 0)),
        ),
    )(pred.reshape(M, P), target.reshape(M, P), mask.reshape(M, 1))
    return loss[0, 0], mean.reshape(N, L, 1), var.reshape(N, L, 1)


# ============================ model glue (plain JAX) ===========================

def patchify_2d(imgs, p):
    """(N, C, H, W) -> (N, h*w, p*p*C), exactly Unified_Model.patchify('2D image')."""
    N, C, H, W = imgs.shape
    h, w = H // p, W // p
    x = imgs.reshape(N, C, h, p, w, p)
    x = jnp.einsum('nchpwq->nhwpqc', x)
    return x.reshape(N, h * w, p * p * C)


def random_masking(x, mask_ratio, key):
    N, L, D = x.shape
    len_keep = int(L * (1 - mask_ratio))
    noise = jax.random.uniform(key, (N, L))
    ids_shuffle = jnp.argsort(noise, axis=1)
    ids_restore = jnp.argsort(ids_shuffle, axis=1)
    ids_keep = ids_shuffle[:, :len_keep]
    x_masked = jnp.take_along_axis(x, ids_keep[:, :, None], axis=1)
    mask = jnp.ones((N, L), jnp.float32).at[:, :len_keep].set(0.0)
    mask = jnp.take_along_axis(mask, ids_restore, axis=1)
    return x_masked, mask, ids_restore, noise


def run_layers(x, layer_params, nheads, eps):
    """Pad seq len to a sublane multiple, run fused per-layer kernels, un-pad."""
    B, L, E = x.shape
    Lp = _pad8(L)
    if Lp != L:
        x = jnp.pad(x, ((0, 0), (0, Lp - L), (0, 0)))
    for p in layer_params:
        x = fused_transformer_layer(x, p, nheads, l_real=L, eps=eps)
    return x[:, :L, :]


def forward_decoder(x, ids_restore, params):
    B, Lx, E = x.shape
    Dd = params['dec_embed_w'].shape[1]
    x = batched_linear(x, params['dec_embed_w'], params['dec_embed_b'])       # (B, Lx, Dd)
    L_full = ids_restore.shape[1]
    mask_tokens = jnp.broadcast_to(params['mask_token'], (B, L_full + 1 - Lx, Dd))
    x_ = jnp.concatenate([x[:, 1:, :], mask_tokens], axis=1)
    x_ = jnp.take_along_axis(x_, ids_restore[:, :, None], axis=1)
    x = jnp.concatenate([x[:, :1, :], x_], axis=1)                            # (B, L_full+1, Dd)
    x = x + params['dec_pos_2d']
    x = run_layers(x, params['decoder'], DEC_NHEAD, eps=1e-6)
    B_, L_, _ = x.shape
    # fused decoder_norm + decoder_pred
    h = norm_linear(x.reshape(B_ * L_, Dd), params['dec_norm_g'], params['dec_norm_b'],
                    params['dec_pred_w'], params['dec_pred_b'], eps=1e-6)
    h = h.reshape(B_, L_, -1)
    return h[:, 1:, :]


def unified_model_forward(params, imgs, rng, mask_ratio=MASK_RATIO):
    """'2D image' branch of Unified_Model.forward (mask_ratio != 0, feature=False)."""
    B = imgs.shape[0]
    # _tokenize -> VideoBaseEmbedding: patchify + linear projection + learned pos embed
    # (projection and pos-add fused into one kernel).
    patches = patchify_2d(imgs, PATCH)                                        # (B, L, p*p*3)
    tokens = batched_linear(patches, params['embed_w'], params['embed_b'],
                            pos=params['embed_pos'])                          # (B, L, E)
    # random masking
    x, mask, ids_restore, noise = random_masking(tokens, mask_ratio, rng)
    # prepend cls token, run fused encoder
    cls = jnp.broadcast_to(params['cls_token'], (B, 1, EMBED))
    x = jnp.concatenate([cls, x], axis=1)
    x = run_layers(x, params['encoder'], NHEAD, eps=1e-5)
    feature_embed = x
    # decoder + reconstruction loss (norm_pix_loss=True)
    pred = forward_decoder(x, ids_restore, params)
    loss, mean, var = masked_mse_loss(pred, patches, mask, norm_pix=True)
    return (loss, feature_embed), pred, mask, (mean, var)


# ================================ parameters ===================================

def init_params(key):
    E, FF = EMBED, FFN
    Dd, FFd = DEC_EMBED, DEC_EMBED * MLP_RATIO
    keys = iter(jax.random.split(key, 256))

    def nrm(shape, std=0.02):
        return (std * jax.random.normal(next(keys), shape)).astype(jnp.float32)

    params = {
        'embed_w': nrm((PATCH_DIM, E)), 'embed_b': jnp.zeros((E,), jnp.float32),
        'embed_pos': nrm((1, NUM_PATCHES, E)),
        'cls_token': nrm((1, 1, E)),
        'dec_embed_w': nrm((E, Dd)), 'dec_embed_b': jnp.zeros((Dd,), jnp.float32),
        'mask_token': nrm((1, 1, Dd)),
        'dec_pos_2d': jnp.zeros((1, NUM_PATCHES + 1, Dd), jnp.float32),  # torch.zeros param
        'dec_norm_g': jnp.ones((Dd,), jnp.float32), 'dec_norm_b': jnp.zeros((Dd,), jnp.float32),
        'dec_pred_w': nrm((Dd, PATCH_DIM)), 'dec_pred_b': jnp.zeros((PATCH_DIM,), jnp.float32),
    }

    enc = []
    for _ in range(ENC_DEPTH):
        enc.append(dict(
            ln1_g=jnp.ones((E,), jnp.float32), ln1_b=jnp.zeros((E,), jnp.float32),
            in_w=nrm((E, 3 * E)), in_b=jnp.zeros((3 * E,), jnp.float32),
            out_w=nrm((E, E)), out_b=jnp.zeros((E,), jnp.float32),
            ls1=LS_INIT * jnp.ones((E,), jnp.float32),
            ln2_g=jnp.ones((E,), jnp.float32), ln2_b=jnp.zeros((E,), jnp.float32),
            fc1_w=nrm((E, FF)), fc1_b=jnp.zeros((FF,), jnp.float32),
            fc2_w=nrm((FF, E)), fc2_b=jnp.zeros((E,), jnp.float32),
            ls2=LS_INIT * jnp.ones((E,), jnp.float32),
        ))
    params['encoder'] = enc

    dec = []
    for _ in range(DEC_DEPTH):
        dec.append(dict(
            ln1_g=jnp.ones((Dd,), jnp.float32), ln1_b=jnp.zeros((Dd,), jnp.float32),
            in_w=nrm((Dd, 3 * Dd)), in_b=jnp.zeros((3 * Dd,), jnp.float32),
            out_w=nrm((Dd, Dd)), out_b=jnp.zeros((Dd,), jnp.float32),
            ls1=jnp.ones((Dd,), jnp.float32),        # timm Block has no layer-scale -> identity
            ln2_g=jnp.ones((Dd,), jnp.float32), ln2_b=jnp.zeros((Dd,), jnp.float32),
            fc1_w=nrm((Dd, FFd)), fc1_b=jnp.zeros((FFd,), jnp.float32),
            fc2_w=nrm((FFd, Dd)), fc2_b=jnp.zeros((Dd,), jnp.float32),
            ls2=jnp.ones((Dd,), jnp.float32),
        ))
    params['decoder'] = dec
    return params


# =================================== main ======================================

if __name__ == "__main__":
    root = jax.random.PRNGKey(0)
    pkey, dkey, mkey = jax.random.split(root, 3)

    params = init_params(pkey)
    imgs = jax.random.normal(dkey, (BATCH, CHANS, IMG, IMG), jnp.float32)  # NCHW

    fwd = jax.jit(partial(unified_model_forward, mask_ratio=MASK_RATIO))
    (loss, feature), pred, mask, (mean, var) = fwd(params, imgs, mkey)
    jax.block_until_ready((loss, feature, pred, mask, mean, var))

    assert pred.shape == (BATCH, NUM_PATCHES, PATCH_DIM)
    assert feature.shape[0] == BATCH and feature.shape[2] == EMBED
    assert mask.shape == (BATCH, NUM_PATCHES)
    assert bool(jnp.isfinite(loss))
    print("KERNEL_OK")
</pallas_src>

<mosaic_0001>
module attributes {stable_mosaic.version = 11 : i64} {
  func.func @_blinear_pos_kernel(%arg0: i32, %arg1: memref<1x16x48xf32, #tpu.memory_space<vmem>>, %arg2: memref<48x128xf32, #tpu.memory_space<vmem>>, %arg3: memref<1x128xf32, #tpu.memory_space<vmem>>, %arg4: memref<16x128xf32, #tpu.memory_space<vmem>>, %arg5: memref<1x16x128xf32, #tpu.memory_space<vmem>>) attributes {dimension_semantics = [#tpu.dimension_semantics<parallel>], iteration_bounds = array<i64: 2>, scalar_prefetch = 0 : i64, scratch_operands = 0 : i64, tpu.core_type = #tpu.core_type<tc>, window_params = [{transform_indices = @transform_0, window_bounds = array<i64: 1, 16, 48>}, {pipeline_mode = #tpu.pipeline_mode<synchronous>, transform_indices = @transform_1, window_bounds = array<i64: 48, 128>}, {pipeline_mode = #tpu.pipeline_mode<synchronous>, transform_indices = @transform_2, window_bounds = array<i64: 1, 128>}, {pipeline_mode = #tpu.pipeline_mode<synchronous>, transform_indices = @transform_3, window_bounds = array<i64: 16, 128>}, {transform_indices = @transform_4, window_bounds = array<i64: 1, 16, 128>}]} {
    %c0 = arith.constant 0 : index
    %c0_0 = arith.constant 0 : index
    %c0_1 = arith.constant 0 : index
    %0 = vector.load %arg1[%c0, %c0_0, %c0_1] : memref<1x16x48xf32, #tpu.memory_space<vmem>>, vector<1x16x48xf32>
    %1 = vector.shape_cast %0 : vector<1x16x48xf32> to vector<16x48xf32>
    %c0_2 = arith.constant 0 : index
    %c0_3 = arith.constant 0 : index
    %2 = vector.load %arg2[%c0_2, %c0_3] : memref<48x128xf32, #tpu.memory_space<vmem>>, vector<48x128xf32>
    %cst = arith.constant dense<0.000000e+00> : vector<16x128xf32>
    %3 = tpu.matmul %1, %2, %cst {dimension_numbers = #tpu.dot_dimension_numbers<[1], [0], [0], [1], [0, 0, 1, 1], [], []>} : vector<16x48xf32>, vector<48x128xf32>, vector<16x128xf32> -> vector<16x128xf32>
    %c0_4 = arith.constant 0 : index
    %c0_5 = arith.constant 0 : index
    %4 = vector.load %arg3[%c0_4, %c0_5] : memref<1x128xf32, #tpu.memory_space<vmem>>, vector<1x128xf32>
    %5 = vector.broadcast %4 : vector<1x128xf32> to vector<16x128xf32>
    %6 = arith.addf %3, %5 : vector<16x128xf32>
    %c0_6 = arith.constant 0 : index
    %c0_7 = arith.constant 0 : index
    %7 = vector.load %arg4[%c0_6, %c0_7] : memref<16x128xf32, #tpu.memory_space<vmem>>, vector<16x128xf32>
    %8 = arith.addf %6, %7 : vector<16x128xf32>
    %c0_8 = arith.constant 0 : index
    %c0_9 = arith.constant 0 : index
    %c0_10 = arith.constant 0 : index
    %9 = vector.load %arg5[%c0_8, %c0_9, %c0_10] : memref<1x16x128xf32, #tpu.memory_space<vmem>>, vector<1x16x128xf32>
    %10 = vector.shape_cast %9 : vector<1x16x128xf32> to vector<16x128xf32>
    %11 = vector.shape_cast %8 : vector<16x128xf32> to vector<1x16x128xf32>
    tpu.vector_store %arg5[%c0_8, %c0_9, %c0_10], %11 {strides = array<i32>} : memref<1x16x128xf32, #tpu.memory_space<vmem>>, vector<1x16x128xf32>,
    return
  }
  func.func @transform_0(%arg0: i32) -> (i32, i32, i32) {
    %c0_i32 = arith.constant 0 : i32
    %c0_i32_0 = arith.constant 0 : i32
    %c0_i32_1 = arith.constant 0 : i32
    return %arg0, %c0_i32, %c0_i32_0 : i32, i32, i32
  }
  func.func @transform_1(%arg0: i32) -> (i32, i32) {
    %c0_i32 = arith.constant 0 : i32
    %c0_i32_0 = arith.constant 0 : i32
    %c0_i32_1 = arith.constant 0 : i32
    return %c0_i32, %c0_i32_0 : i32, i32
  }
  func.func @transform_2(%arg0: i32) -> (i32, i32) {
    %c0_i32 = arith.constant 0 : i32
    %c0_i32_0 = arith.constant 0 : i32
    %c0_i32_1 = arith.constant 0 : i32
    return %c0_i32, %c0_i32_0 : i32, i32
  }
  func.func @transform_3(%arg0: i32) -> (i32, i32) {
    %c0_i32 = arith.constant 0 : i32
    %c0_i32_0 = arith.constant 0 : i32
    %c0_i32_1 = arith.constant 0 : i32
    return %c0_i32, %c0_i32_0 : i32, i32
  }
  func.func @transform_4(%arg0: i32) -> (i32, i32, i32) {
    %c0_i32 = arith.constant 0 : i32
    %c0_i32_0 = arith.constant 0 : i32
    %c0_i32_1 = arith.constant 0 : i32
    return %arg0, %c0_i32, %c0_i32_0 : i32, i32, i32
  }
}

module attributes {stable_mosaic.version = 11 : i64} {
  func.func @_blinear_kernel(%arg0: i32, %arg1: memref<1x5x128xf32, #tpu.memory_space<vmem>>, %arg2: memref<128x128xf32, #tpu.memory_space<vmem>>, %arg3: memref<1x128xf32, #tpu.memory_space<vmem>>, %arg4: memref<1x5x128xf32, #tpu.memory_space<vmem>>) attributes {dimension_semantics = [#tpu.dimension_semantics<parallel>], iteration_bounds = array<i64: 2>, scalar_prefetch = 0 : i64, scratch_operands = 0 : i64, tpu.core_type = #tpu.core_type<tc>, window_params = [{transform_indices = @transform_0, window_bounds = array<i64: 1, 5, 128>}, {pipeline_mode = #tpu.pipeline_mode<synchronous>, transform_indices = @transform_1, window_bounds = array<i64: 128, 128>}, {pipeline_mode = #tpu.pipeline_mode<synchronous>, transform_indices = @transform_2, window_bounds = array<i64: 1, 128>}, {transform_indices = @transform_3, window_bounds = array<i64: 1, 5, 128>}]} {
    %c0 = arith.constant 0 : index
    %c0_0 = arith.constant 0 : index
    %c0_1 = arith.constant 0 : index
    %0 = vector.load %arg1[%c0, %c0_0, %c0_1] : memref<1x5x128xf32, #tpu.memory_space<vmem>>, vector<1x5x128xf32>
    %1 = vector.shape_cast %0 : vector<1x5x128xf32> to vector<5x128xf32>
    %c0_2 = arith.constant 0 : index
    %c0_3 = arith.constant 0 : index
    %2 = vector.load %arg2[%c0_2, %c0_3] : memref<128x128xf32, #tpu.memory_space<vmem>>, vector<128x128xf32>
    %cst = arith.constant dense<0.000000e+00> : vector<5x128xf32>
    %3 = tpu.matmul %1, %2, %cst {dimension_numbers = #tpu.dot_dimension_numbers<[1], [0], [0], [1], [0, 0, 1, 1], [], []>} : vector<5x128xf32>, vector<128x128xf32>, vector<5x128xf32> -> vector<5x128xf32>
    %c0_4 = arith.constant 0 : index
    %c0_5 = arith.constant 0 : index
    %4 = vector.load %arg3[%c0_4, %c0_5] : memref<1x128xf32, #tpu.memory_space<vmem>>, vector<1x128xf32>
    %5 = vector.broadcast %4 : vector<1x128xf32> to vector<5x128xf32>
    %6 = arith.addf %3, %5 : vector<5x128xf32>
    %c0_6 = arith.constant 0 : index
    %c0_7 = arith.constant 0 : index
    %c0_8 = arith.constant 0 : index
    %7 = vector.load %arg4[%c0_6, %c0_7, %c0_8] : memref<1x5x128xf32, #tpu.memory_space<vmem>>, vector<1x5x128xf32>
    %8 = vector.shape_cast %7 : vector<1x5x128xf32> to vector<5x128xf32>
    %9 = vector.shape_cast %6 : vector<5x128xf32> to vector<1x5x128xf32>
    tpu.vector_store %arg4[%c0_6, %c0_7, %c0_8], %9 {strides = array<i32>} : memref<1x5x128xf32, #tpu.memory_space<vmem>>, vector<1x5x128xf32>,
    return
  }
  func.func @transform_0(%arg0: i32) -> (i32, i32, i32) {
    %c0_i32 = arith.constant 0 : i32
    %c0_i32_0 = arith.constant 0 : i32
    %c0_i32_1 = arith.constant 0 : i32
    return %arg0, %c0_i32, %c0_i32_0 : i32, i32, i32
  }
  func.func @transform_1(%arg0: i32) -> (i32, i32) {
    %c0_i32 = arith.constant 0 : i32
    %c0_i32_0 = arith.constant 0 : i32
    %c0_i32_1 = arith.constant 0 : i32
    return %c0_i32, %c0_i32_0 : i32, i32
  }
  func.func @transform_2(%arg0: i32) -> (i32, i32) {
    %c0_i32 = arith.constant 0 : i32
    %c0_i32_0 = arith.constant 0 : i32
    %c0_i32_1 = arith.constant 0 : i32
    return %c0_i32, %c0_i32_0 : i32, i32
  }
  func.func @transform_3(%arg0: i32) -> (i32, i32, i32) {
    %c0_i32 = arith.constant 0 : i32
    %c0_i32_0 = arith.constant 0 : i32
    %c0_i32_1 = arith.constant 0 : i32
    return %arg0, %c0_i32, %c0_i32_0 : i32, i32, i32
  }
}

module attributes {stable_mosaic.version = 11 : i64} {
  func.func @_fused_layer_kernel(%arg0: i32, %arg1: memref<1x8x128xf32, #tpu.memory_space<vmem>>, %arg2: memref<1x128xf32, #tpu.memory_space<vmem>>, %arg3: memref<1x128xf32, #tpu.memory_space<vmem>>, %arg4: memref<128x384xf32, #tpu.memory_space<vmem>>, %arg5: memref<1x384xf32, #tpu.memory_space<vmem>>, %arg6: memref<128x128xf32, #tpu.memory_space<vmem>>, %arg7: memref<1x128xf32, #tpu.memory_space<vmem>>, %arg8: memref<1x128xf32, #tpu.memory_space<vmem>>, %arg9: memref<1x128xf32, #tpu.memory_space<vmem>>, %arg10: memref<1x128xf32, #tpu.memory_space<vmem>>, %arg11: memref<128x256xf32, #tpu.memory_space<vmem>>, %arg12: memref<1x256xf32, #tpu.memory_space<vmem>>, %arg13: memref<256x128xf32, #tpu.memory_space<vmem>>, %arg14: memref<1x128xf32, #tpu.memory_space<vmem>>, %arg15: memref<1x128xf32, #tpu.memory_space<vmem>>, %arg16: memref<1x8x128xf32, #tpu.memory_space<vmem>>) attributes {dimension_semantics = [#tpu.dimension_semantics<parallel>], iteration_bounds = array<i64: 2>, scalar_prefetch = 0 : i64, scratch_operands = 0 : i64, tpu.core_type = #tpu.core_type<tc>, window_params = [{transform_indices = @transform_0, window_bounds = array<i64: 1, 8, 128>}, {pipeline_mode = #tpu.pipeline_mode<synchronous>, transform_indices = @transform_1, window_bounds = array<i64: 1, 128>}, {pipeline_mode = #tpu.pipeline_mode<synchronous>, transform_indices = @transform_2, window_bounds = array<i64: 1, 128>}, {pipeline_mode = #tpu.pipeline_mode<synchronous>, transform_indices = @transform_3, window_bounds = array<i64: 128, 384>}, {pipeline_mode = #tpu.pipeline_mode<synchronous>, transform_indices = @transform_4, window_bounds = array<i64: 1, 384>}, {pipeline_mode = #tpu.pipeline_mode<synchronous>, transform_indices = @transform_5, window_bounds = array<i64: 128, 128>}, {pipeline_mode = #tpu.pipeline_mode<synchronous>, transform_indices = @transform_6, window_bounds = array<i64: 1, 128>}, {pipeline_mode = #tpu.pipeline_mode<synchronous>, transform_indices = @transform_7, window_bounds = array<i64: 1, 128>}, {pipeline_mode = #tpu.pipeline_mode<synchronous>, transform_indices = @transform_8, window_bounds = array<i64: 1, 128>}, {pipeline_mode = #tpu.pipeline_mode<synchronous>, transform_indices = @transform_9, window_bounds = array<i64: 1, 128>}, {pipeline_mode = #tpu.pipeline_mode<synchronous>, transform_indices = @transform_10, window_bounds = array<i64: 128, 256>}, {pipeline_mode = #tpu.pipeline_mode<synchronous>, transform_indices = @transform_11, window_bounds = array<i64: 1, 256>}, {pipeline_mode = #tpu.pipeline_mode<synchronous>, transform_indices = @transform_12, window_bounds = array<i64: 256, 128>}, {pipeline_mode = #tpu.pipeline_mode<synchronous>, transform_indices = @transform_13, window_bounds = array<i64: 1, 128>}, {pipeline_mode = #tpu.pipeline_mode<synchronous>, transform_indices = @transform_14, window_bounds = array<i64: 1, 128>}, {transform_indices = @transform_15, window_bounds = array<i64: 1, 8, 128>}]} {
    %c0 = arith.constant 0 : index
    %c0_0 = arith.constant 0 : index
    %c0_1 = arith.constant 0 : index
    %0 = vector.load %arg1[%c0, %c0_0, %c0_1] : memref<1x8x128xf32, #tpu.memory_space<vmem>>, vector<1x8x128xf32>
    %1 = vector.shape_cast %0 : vector<1x8x128xf32> to vector<8x128xf32>
    %cst = arith.constant dense<0.000000e+00> : vector<8xf32>
    %2 = vector.multi_reduction <add>, %1, %cst [1] : vector<8x128xf32> to vector<8xf32>
    %3 = vector.shape_cast %2 : vector<8xf32> to vector<8x1xf32>
    %cst_2 = arith.constant 1.280000e+02 : f32
    %4 = vector.broadcast %cst_2 : f32 to vector<8x1xf32>
    %5 = arith.divf %3, %4 : vector<8x1xf32>
    %6 = vector.broadcast %5 : vector<8x1xf32> to vector<8x128xf32>
    %7 = arith.subf %1, %6 : vector<8x128xf32>
    %8 = arith.mulf %7, %7 : vector<8x128xf32>
    %cst_3 = arith.constant dense<0.000000e+00> : vector<8xf32>
    %9 = vector.multi_reduction <add>, %8, %cst_3 [1] : vector<8x128xf32> to vector<8xf32>
    %10 = vector.shape_cast %9 : vector<8xf32> to vector<8x1xf32>
    %cst_4 = arith.constant 1.280000e+02 : f32
    %11 = vector.broadcast %cst_4 : f32 to vector<8x1xf32>
    %12 = arith.divf %10, %11 : vector<8x1xf32>
    %13 = vector.broadcast %5 : vector<8x1xf32> to vector<8x128xf32>
    %14 = arith.subf %1, %13 : vector<8x128xf32>
    %cst_5 = arith.constant 9.99999974E-6 : f32
    %15 = vector.broadcast %cst_5 : f32 to vector<8x1xf32>
    %16 = arith.addf %12, %15 : vector<8x1xf32>
    %17 = math.rsqrt %16 : vector<8x1xf32>
    %18 = vector.broadcast %17 : vector<8x1xf32> to vector<8x128xf32>
    %19 = arith.mulf %14, %18 : vector<8x128xf32>
    %c0_6 = arith.constant 0 : index
    %c0_7 = arith.constant 0 : index
    %20 = vector.load %arg2[%c0_6, %c0_7] : memref<1x128xf32, #tpu.memory_space<vmem>>, vector<1x128xf32>
    %21 = vector.broadcast %20 : vector<1x128xf32> to vector<8x128xf32>
    %22 = arith.mulf %19, %21 : vector<8x128xf32>
    %c0_8 = arith.constant 0 : index
    %c0_9 = arith.constant 0 : index
    %23 = vector.load %arg3[%c0_8, %c0_9] : memref<1x128xf32, #tpu.memory_space<vmem>>, vector<1x128xf32>
    %24 = vector.broadcast %23 : vector<1x128xf32> to vector<8x128xf32>
    %25 = arith.addf %22, %24 : vector<8x128xf32>
    %c0_10 = arith.constant 0 : index
    %c0_11 = arith.constant 0 : index
    %26 = vector.load %arg4[%c0_10, %c0_11] : memref<128x384xf32, #tpu.memory_space<vmem>>, vector<128x384xf32>
    %cst_12 = arith.constant dense<0.000000e+00> : vector<8x384xf32>
    %27 = tpu.matmul %25, %26, %cst_12 {dimension_numbers = #tpu.dot_dimension_numbers<[1], [0], [0], [1], [0, 0, 1, 1], [], []>} : vector<8x128xf32>, vector<128x384xf32>, vector<8x384xf32> -> vector<8x384xf32>
    %c0_13 = arith.constant 0 : index
    %c0_14 = arith.constant 0 : index
    %28 = vector.load %arg5[%c0_13, %c0_14] : memref<1x384xf32, #tpu.memory_space<vmem>>, vector<1x384xf32>
    %29 = vector.broadcast %28 : vector<1x384xf32> to vector<8x384xf32>
    %30 = arith.addf %27, %29 : vector<8x384xf32>
    %31 = vector.extract_strided_slice %30 {offsets = [0, 0], sizes = [8, 128], strides = [1, 1]} : vector<8x384xf32> to vector<8x128xf32>
    %32 = vector.extract_strided_slice %30 {offsets = [0, 128], sizes = [8, 128], strides = [1, 1]} : vector<8x384xf32> to vector<8x128xf32>
    %33 = vector.extract_strided_slice %30 {offsets = [0, 256], sizes = [8, 128], strides = [1, 1]} : vector<8x384xf32> to vector<8x128xf32>
    %c0_15 = arith.constant 0 : index
    %c0_16 = arith.constant 0 : index
    %34 = vector.load %arg6[%c0_15, %c0_16] : memref<128x128xf32, #tpu.memory_space<vmem>>, vector<128x128xf32>
    %35 = tpu.iota {dimensions = array<i32: 1>} : vector<8x8xi32>
    %c5_i32 = arith.constant 5 : i32
    %36 = vector.broadcast %c5_i32 : i32 to vector<8x8xi32>
    %37 = arith.cmpi slt, %35, %36 : vector<8x8xi32>
    %cst_17 = arith.constant 0.000000e+00 : f32
    %cst_18 = arith.constant -1.000000e+30 : f32
    %38 = vector.broadcast %cst_17 : f32 to vector<8x8xf32>
    %39 = vector.broadcast %cst_18 : f32 to vector<8x8xf32>
    %40 = arith.select %37, %38, %39 : vector<8x8xi1>, vector<8x8xf32>
    %41 = vector.extract_strided_slice %31 {offsets = [0, 0], sizes = [8, 32], strides = [1, 1]} : vector<8x128xf32> to vector<8x32xf32>
    %cst_19 = arith.constant 0.176776692 : f32
    %42 = vector.broadcast %cst_19 : f32 to vector<8x32xf32>
    %43 = arith.mulf %41, %42 : vector<8x32xf32>
    %44 = vector.extract_strided_slice %32 {offsets = [0, 0], sizes = [8, 32], strides = [1, 1]} : vector<8x128xf32> to vector<8x32xf32>
    %45 = vector.extract_strided_slice %33 {offsets = [0, 0], sizes = [8, 32], strides = [1, 1]} : vector<8x128xf32> to vector<8x32xf32>
    %cst_20 = arith.constant dense<0.000000e+00> : vector<8x8xf32>
    %46 = tpu.matmul %43, %44, %cst_20 {dimension_numbers = #tpu.dot_dimension_numbers<[1], [1], [0], [0], [0, 0, 1, 0], [], []>} : vector<8x32xf32>, vector<8x32xf32>, vector<8x8xf32> -> vector<8x8xf32>
    %47 = arith.addf %46, %40 : vector<8x8xf32>
    %cst_21 = arith.constant dense<0xFF800000> : vector<8xf32>
    %48 = vector.multi_reduction <maximumf>, %47, %cst_21 [1] : vector<8x8xf32> to vector<8xf32>
    %49 = vector.shape_cast %48 : vector<8xf32> to vector<8x1xf32>
    %50 = vector.broadcast %49 : vector<8x1xf32> to vector<8x8xf32>
    %51 = arith.subf %47, %50 : vector<8x8xf32>
    %52 = math.exp %51 : vector<8x8xf32>
    %cst_22 = arith.constant dense<0.000000e+00> : vector<8xf32>
    %53 = vector.multi_reduction <add>, %52, %cst_22 [1] : vector<8x8xf32> to vector<8xf32>
    %54 = vector.shape_cast %53 : vector<8xf32> to vector<8x1xf32>
    %55 = tpu.reciprocal %54 {approx = true} : vector<8x1xf32> -> vector<8x1xf32>
    %56 = vector.broadcast %55 : vector<8x1xf32> to vector<8x8xf32>
    %57 = arith.mulf %52, %56 : vector<8x8xf32>
    %cst_23 = arith.constant dense<0.000000e+00> : vector<8x32xf32>
    %58 = tpu.matmul %57, %45, %cst_23 {dimension_numbers = #tpu.dot_dimension_numbers<[1], [0], [0], [1], [0, 0, 1, 1], [], []>} : vector<8x8xf32>, vector<8x32xf32>, vector<8x32xf32> -> vector<8x32xf32>
    %59 = vector.extract_strided_slice %34 {offsets = [0, 0], sizes = [32, 128], strides = [1, 1]} : vector<128x128xf32> to vector<32x128xf32>
    %cst_24 = arith.constant dense<0.000000e+00> : vector<8x128xf32>
    %60 = tpu.matmul %58, %59, %cst_24 {dimension_numbers = #tpu.dot_dimension_numbers<[1], [0], [0], [1], [0, 0, 1, 1], [], []>} : vector<8x32xf32>, vector<32x128xf32>, vector<8x128xf32> -> vector<8x128xf32>
    %61 = vector.extract_strided_slice %31 {offsets = [0, 32], sizes = [8, 32], strides = [1, 1]} : vector<8x128xf32> to vector<8x32xf32>
    %cst_25 = arith.constant 0.176776692 : f32
    %62 = vector.broadcast %cst_25 : f32 to vector<8x32xf32>
    %63 = arith.mulf %61, %62 : vector<8x32xf32>
    %64 = vector.extract_strided_slice %32 {offsets = [0, 32], sizes = [8, 32], strides = [1, 1]} : vector<8x128xf32> to vector<8x32xf32>
    %65 = vector.extract_strided_slice %33 {offsets = [0, 32], sizes = [8, 32], strides = [1, 1]} : vector<8x128xf32> to vector<8x32xf32>
    %cst_26 = arith.constant dense<0.000000e+00> : vector<8x8xf32>
    %66 = tpu.matmul %63, %64, %cst_26 {dimension_numbers = #tpu.dot_dimension_numbers<[1], [1], [0], [0], [0, 0, 1, 0], [], []>} : vector<8x32xf32>, vector<8x32xf32>, vector<8x8xf32> -> vector<8x8xf32>
    %67 = arith.addf %66, %40 : vector<8x8xf32>
    %cst_27 = arith.constant dense<0xFF800000> : vector<8xf32>
    %68 = vector.multi_reduction <maximumf>, %67, %cst_27 [1] : vector<8x8xf32> to vector<8xf32>
    %69 = vector.shape_cast %68 : vector<8xf32> to vector<8x1xf32>
    %70 = vector.broadcast %69 : vector<8x1xf32> to vector<8x8xf32>
    %71 = arith.subf %67, %70 : vector<8x8xf32>
    %72 = math.exp %71 : vector<8x8xf32>
    %cst_28 = arith.constant dense<0.000000e+00> : vector<8xf32>
    %73 = vector.multi_reduction <add>, %72, %cst_28 [1] : vector<8x8xf32> to vector<8xf32>
    %74 = vector.shape_cast %73 : vector<8xf32> to vector<8x1xf32>
    %75 = tpu.reciprocal %74 {approx = true} : vector<8x1xf32> -> vector<8x1xf32>
    %76 = vector.broadcast %75 : vector<8x1xf32> to vector<8x8xf32>
    %77 = arith.mulf %72, %76 : vector<8x8xf32>
    %cst_29 = arith.constant dense<0.000000e+00> : vector<8x32xf32>
    %78 = tpu.matmul %77, %65, %cst_29 {dimension_numbers = #tpu.dot_dimension_numbers<[1], [0], [0], [1], [0, 0, 1, 1], [], []>} : vector<8x8xf32>, vector<8x32xf32>, vector<8x32xf32> -> vector<8x32xf32>
    %79 = vector.extract_strided_slice %34 {offsets = [32, 0], sizes = [32, 128], strides = [1, 1]} : vector<128x128xf32> to vector<32x128xf32>
    %cst_30 = arith.constant dense<0.000000e+00> : vector<8x128xf32>
    %80 = tpu.matmul %78, %79, %cst_30 {dimension_numbers = #tpu.dot_dimension_numbers<[1], [0], [0], [1], [0, 0, 1, 1], [], []>} : vector<8x32xf32>, vector<32x128xf32>, vector<8x128xf32> -> vector<8x128xf32>
    %81 = arith.addf %60, %80 : vector<8x128xf32>
    %82 = vector.extract_strided_slice %31 {offsets = [0, 64], sizes = [8, 32], strides = [1, 1]} : vector<8x128xf32> to vector<8x32xf32>
    %cst_31 = arith.constant 0.176776692 : f32
    %83 = vector.broadcast %cst_31 : f32 to vector<8x32xf32>
    %84 = arith.mulf %82, %83 : vector<8x32xf32>
    %85 = vector.extract_strided_slice %32 {offsets = [0, 64], sizes = [8, 32], strides = [1, 1]} : vector<8x128xf32> to vector<8x32xf32>
    %86 = vector.extract_strided_slice %33 {offsets = [0, 64], sizes = [8, 32], strides = [1, 1]} : vector<8x128xf32> to vector<8x32xf32>
    %cst_32 = arith.constant dense<0.000000e+00> : vector<8x8xf32>
    %87 = tpu.matmul %84, %85, %cst_32 {dimension_numbers = #tpu.dot_dimension_numbers<[1], [1], [0], [0], [0, 0, 1, 0], [], []>} : vector<8x32xf32>, vector<8x32xf32>, vector<8x8xf32> -> vector<8x8xf32>
    %88 = arith.addf %87, %40 : vector<8x8xf32>
    %cst_33 = arith.constant dense<0xFF800000> : vector<8xf32>
    %89 = vector.multi_reduction <maximumf>, %88, %cst_33 [1] : vector<8x8xf32> to vector<8xf32>
    %90 = vector.shape_cast %89 : vector<8xf32> to vector<8x1xf32>
    %91 = vector.broadcast %90 : vector<8x1xf32> to vector<8x8xf32>
    %92 = arith.subf %88, %91 : vector<8x8xf32>
    %93 = math.exp %92 : vector<8x8xf32>
    %cst_34 = arith.constant dense<0.000000e+00> : vector<8xf32>
    %94 = vector.multi_reduction <add>, %93, %cst_34 [1] : vector<8x8xf32> to vector<8xf32>
    %95 = vector.shape_cast %94 : vector<8xf32> to vector<8x1xf32>
    %96 = tpu.reciprocal %95 {approx = true} : vector<8x1xf32> -> vector<8x1xf32>
    %97 = vector.broadcast %96 : vector<8x1xf32> to vector<8x8xf32>
    %98 = arith.mulf %93, %97 : vector<8x8xf32>
    %cst_35 = arith.constant dense<0.000000e+00> : vector<8x32xf32>
    %99 = tpu.matmul %98, %86, %cst_35 {dimension_numbers = #tpu.dot_dimension_numbers<[1], [0], [0], [1], [0, 0, 1, 1], [], []>} : vector<8x8xf32>, vector<8x32xf32>, vector<8x32xf32> -> vector<8x32xf32>
    %100 = vector.extract_strided_slice %34 {offsets = [64, 0], sizes = [32, 128], strides = [1, 1]} : vector<128x128xf32> to vector<32x128xf32>
    %cst_36 = arith.constant dense<0.000000e+00> : vector<8x128xf32>
    %101 = tpu.matmul %99, %100, %cst_36 {dimension_numbers = #tpu.dot_dimension_numbers<[1], [0], [0], [1], [0, 0, 1, 1], [], []>} : vector<8x32xf32>, vector<32x128xf32>, vector<8x128xf32> -> vector<8x128xf32>
    %102 = arith.addf %81, %101 : vector<8x128xf32>
    %103 = vector.extract_strided_slice %31 {offsets = [0, 96], sizes = [8, 32], strides = [1, 1]} : vector<8x128xf32> to vector<8x32xf32>
    %cst_37 = arith.constant 0.176776692 : f32
    %104 = vector.broadcast %cst_37 : f32 to vector<8x32xf32>
    %105 = arith.mulf %103, %104 : vector<8x32xf32>
    %106 = vector.extract_strided_slice %32 {offsets = [0, 96], sizes = [8, 32], strides = [1, 1]} : vector<8x128xf32> to vector<8x32xf32>
    %107 = vector.extract_strided_slice %33 {offsets = [0, 96], sizes = [8, 32], strides = [1, 1]} : vector<8x128xf32> to vector<8x32xf32>
    %cst_38 = arith.constant dense<0.000000e+00> : vector<8x8xf32>
    %108 = tpu.matmul %105, %106, %cst_38 {dimension_numbers = #tpu.dot_dimension_numbers<[1], [1], [0], [0], [0, 0, 1, 0], [], []>} : vector<8x32xf32>, vector<8x32xf32>, vector<8x8xf32> -> vector<8x8xf32>
    %109 = arith.addf %108, %40 : vector<8x8xf32>
    %cst_39 = arith.constant dense<0xFF800000> : vector<8xf32>
    %110 = vector.multi_reduction <maximumf>, %109, %cst_39 [1] : vector<8x8xf32> to vector<8xf32>
    %111 = vector.shape_cast %110 : vector<8xf32> to vector<8x1xf32>
    %112 = vector.broadcast %111 : vector<8x1xf32> to vector<8x8xf32>
    %113 = arith.subf %109, %112 : vector<8x8xf32>
    %114 = math.exp %113 : vector<8x8xf32>
    %cst_40 = arith.constant dense<0.000000e+00> : vector<8xf32>
    %115 = vector.multi_reduction <add>, %114, %cst_40 [1] : vector<8x8xf32> to vector<8xf32>
    %116 = vector.shape_cast %115 : vector<8xf32> to vector<8x1xf32>
    %117 = tpu.reciprocal %116 {approx = true} : vector<8x1xf32> -> vector<8x1xf32>
    %118 = vector.broadcast %117 : vector<8x1xf32> to vector<8x8xf32>
    %119 = arith.mulf %114, %118 : vector<8x8xf32>
    %cst_41 = arith.constant dense<0.000000e+00> : vector<8x32xf32>
    %120 = tpu.matmul %119, %107, %cst_41 {dimension_numbers = #tpu.dot_dimension_numbers<[1], [0], [0], [1], [0, 0, 1, 1], [], []>} : vector<8x8xf32>, vector<8x32xf32>, vector<8x32xf32> -> vector<8x32xf32>
    %121 = vector.extract_strided_slice %34 {offsets = [96, 0], sizes = [32, 128], strides = [1, 1]} : vector<128x128xf32> to vector<32x128xf32>
    %cst_42 = arith.constant dense<0.000000e+00> : vector<8x128xf32>
    %122 = tpu.matmul %120, %121, %cst_42 {dimension_numbers = #tpu.dot_dimension_numbers<[1], [0], [0], [1], [0, 0, 1, 1], [], []>} : vector<8x32xf32>, vector<32x128xf32>, vector<8x128xf32> -> vector<8x128xf32>
    %123 = arith.addf %102, %122 : vector<8x128xf32>
    %c0_43 = arith.constant 0 : index
    %c0_44 = arith.constant 0 : index
    %124 = vector.load %arg7[%c0_43, %c0_44] : memref<1x128xf32, #tpu.memory_space<vmem>>, vector<1x128xf32>
    %125 = vector.broadcast %124 : vector<1x128xf32> to vector<8x128xf32>
    %126 = arith.addf %123, %125 : vector<8x128xf32>
    %c0_45 = arith.constant 0 : index
    %c0_46 = arith.constant 0 : index
    %127 = vector.load %arg8[%c0_45, %c0_46] : memref<1x128xf32, #tpu.memory_space<vmem>>, vector<1x128xf32>
    %128 = vector.broadcast %127 : vector<1x128xf32> to vector<8x128xf32>
    %129 = arith.mulf %128, %126 : vector<8x128xf32>
    %130 = arith.addf %1, %129 : vector<8x128xf32>
    %cst_47 = arith.constant dense<0.000000e+00> : vector<8xf32>
    %131 = vector.multi_reduction <add>, %130, %cst_47 [1] : vector<8x128xf32> to vector<8xf32>
    %132 = vector.shape_cast %131 : vector<8xf32> to vector<8x1xf32>
    %cst_48 = arith.constant 1.280000e+02 : f32
    %133 = vector.broadcast %cst_48 : f32 to vector<8x1xf32>
    %134 = arith.divf %132, %133 : vector<8x1xf32>
    %135 = vector.broadcast %134 : vector<8x1xf32> to vector<8x128xf32>
    %136 = arith.subf %130, %135 : vector<8x128xf32>
    %137 = arith.mulf %136, %136 : vector<8x128xf32>
    %cst_49 = arith.constant dense<0.000000e+00> : vector<8xf32>
    %138 = vector.multi_reduction <add>, %137, %cst_49 [1] : vector<8x128xf32> to vector<8xf32>
    %139 = vector.shape_cast %138 : vector<8xf32> to vector<8x1xf32>
    %cst_50 = arith.constant 1.280000e+02 : f32
    %140 = vector.broadcast %cst_50 : f32 to vector<8x1xf32>
    %141 = arith.divf %139, %140 : vector<8x1xf32>
    %142 = vector.broadcast %134 : vector<8x1xf32> to vector<8x128xf32>
    %143 = arith.subf %130, %142 : vector<8x128xf32>
    %cst_51 = arith.constant 9.99999974E-6 : f32
    %144 = vector.broadcast %cst_51 : f32 to vector<8x1xf32>
    %145 = arith.addf %141, %144 : vector<8x1xf32>
    %146 = math.rsqrt %145 : vector<8x1xf32>
    %147 = vector.broadcast %146 : vector<8x1xf32> to vector<8x128xf32>
    %148 = arith.mulf %143, %147 : vector<8x128xf32>
    %c0_52 = arith.constant 0 : index
    %c0_53 = arith.constant 0 : index
    %149 = vector.load %arg9[%c0_52, %c0_53] : memref<1x128xf32, #tpu.memory_space<vmem>>, vector<1x128xf32>
    %150 = vector.broadcast %149 : vector<1x128xf32> to vector<8x128xf32>
    %151 = arith.mulf %148, %150 : vector<8x128xf32>
    %c0_54 = arith.constant 0 : index
    %c0_55 = arith.constant 0 : index
    %152 = vector.load %arg10[%c0_54, %c0_55] : memref<1x128xf32, #tpu.memory_space<vmem>>, vector<1x128xf32>
    %153 = vector.broadcast %152 : vector<1x128xf32> to vector<8x128xf32>
    %154 = arith.addf %151, %153 : vector<8x128xf32>
    %c0_56 = arith.constant 0 : index
    %c0_57 = arith.constant 0 : index
    %155 = vector.load %arg11[%c0_56, %c0_57] : memref<128x256xf32, #tpu.memory_space<vmem>>, vector<128x256xf32>
    %cst_58 = arith.constant dense<0.000000e+00> : vector<8x256xf32>
    %156 = tpu.matmul %154, %155, %cst_58 {dimension_numbers = #tpu.dot_dimension_numbers<[1], [0], [0], [1], [0, 0, 1, 1], [], []>} : vector<8x128xf32>, vector<128x256xf32>, vector<8x256xf32> -> vector<8x256xf32>
    %c0_59 = arith.constant 0 : index
    %c0_60 = arith.constant 0 : index
    %157 = vector.load %arg12[%c0_59, %c0_60] : memref<1x256xf32, #tpu.memory_space<vmem>>, vector<1x256xf32>
    %158 = vector.broadcast %157 : vector<1x256xf32> to vector<8x256xf32>
    %159 = arith.addf %156, %158 : vector<8x256xf32>
    %160 = arith.mulf %159, %159 : vector<8x256xf32>
    %161 = arith.mulf %159, %160 : vector<8x256xf32>
    %cst_61 = arith.constant 4.471500e-02 : f32
    %162 = vector.broadcast %cst_61 : f32 to vector<8x256xf32>
    %163 = arith.mulf %162, %161 : vector<8x256xf32>
    %164 = arith.addf %159, %163 : vector<8x256xf32>
    %cst_62 = arith.constant 0.797884583 : f32
    %165 = vector.broadcast %cst_62 : f32 to vector<8x256xf32>
    %166 = arith.mulf %165, %164 : vector<8x256xf32>
    %167 = math.tanh %166 : vector<8x256xf32>
    %cst_63 = arith.constant 1.000000e+00 : f32
    %168 = vector.broadcast %cst_63 : f32 to vector<8x256xf32>
    %169 = arith.addf %168, %167 : vector<8x256xf32>
    %cst_64 = arith.constant 5.000000e-01 : f32
    %170 = vector.broadcast %cst_64 : f32 to vector<8x256xf32>
    %171 = arith.mulf %170, %169 : vector<8x256xf32>
    %172 = arith.mulf %159, %171 : vector<8x256xf32>
    %c0_65 = arith.constant 0 : index
    %c0_66 = arith.constant 0 : index
    %173 = vector.load %arg13[%c0_65, %c0_66] : memref<256x128xf32, #tpu.memory_space<vmem>>, vector<256x128xf32>
    %cst_67 = arith.constant dense<0.000000e+00> : vector<8x128xf32>
    %174 = tpu.matmul %172, %173, %cst_67 {dimension_numbers = #tpu.dot_dimension_numbers<[1], [0], [0], [1], [0, 0, 1, 1], [], []>} : vector<8x256xf32>, vector<256x128xf32>, vector<8x128xf32> -> vector<8x128xf32>
    %c0_68 = arith.constant 0 : index
    %c0_69 = arith.constant 0 : index
    %175 = vector.load %arg14[%c0_68, %c0_69] : memref<1x128xf32, #tpu.memory_space<vmem>>, vector<1x128xf32>
    %176 = vector.broadcast %175 : vector<1x128xf32> to vector<8x128xf32>
    %177 = arith.addf %174, %176 : vector<8x128xf32>
    %c0_70 = arith.constant 0 : index
    %c0_71 = arith.constant 0 : index
    %178 = vector.load %arg15[%c0_70, %c0_71] : memref<1x128xf32, #tpu.memory_space<vmem>>, vector<1x128xf32>
    %179 = vector.broadcast %178 : vector<1x128xf32> to vector<8x128xf32>
    %180 = arith.mulf %179, %177 : vector<8x128xf32>
    %181 = arith.addf %130, %180 : vector<8x128xf32>
    %c0_72 = arith.constant 0 : index
    %c0_73 = arith.constant 0 : index
    %c0_74 = arith.constant 0 : index
    %182 = vector.load %arg16[%c0_72, %c0_73, %c0_74] : memref<1x8x128xf32, #tpu.memory_space<vmem>>, vector<1x8x128xf32>
    %183 = vector.shape_cast %182 : vector<1x8x128xf32> to vector<8x128xf32>
    %184 = vector.shape_cast %181 : vector<8x128xf32> to vector<1x8x128xf32>
    tpu.vector_store %arg16[%c0_72, %c0_73, %c0_74], %184 {strides = array<i32>} : memref<1x8x128xf32, #tpu.memory_space<vmem>>, vector<1x8x128xf32>,
    return
  }
  func.func @transform_0(%arg0: i32) -> (i32, i32, i32) {
    %c0_i32 = arith.constant 0 : i32
    %c0_i32_0 = arith.constant 0 : i32
    %c0_i32_1 = arith.constant 0 : i32
    return %arg0, %c0_i32, %c0_i32_0 : i32, i32, i32
  }
  func.func @transform_1(%arg0: i32) -> (i32, i32) {
    %c0_i32 = arith.constant 0 : i32
    %c0_i32_0 = arith.constant 0 : i32
    %c0_i32_1 = arith.constant 0 : i32
    return %c0_i32, %c0_i32_0 : i32, i32
  }
  func.func @transform_2(%arg0: i32) -> (i32, i32) {
    %c0_i32 = arith.constant 0 : i32
    %c0_i32_0 = arith.constant 0 : i32
    %c0_i32_1 = arith.constant 0 : i32
    return %c0_i32, %c0_i32_0 : i32, i32
  }
  func.func @transform_3(%arg0: i32) -> (i32, i32) {
    %c0_i32 = arith.constant 0 : i32
    %c0_i32_0 = arith.constant 0 : i32
    %c0_i32_1 = arith.constant 0 : i32
    return %c0_i32, %c0_i32_0 : i32, i32
  }
  func.func @transform_4(%arg0: i32) -> (i32, i32) {
    %c0_i32 = arith.constant 0 : i32
    %c0_i32_0 = arith.constant 0 : i32
    %c0_i32_1 = arith.constant 0 : i32
    return %c0_i32, %c0_i32_0 : i32, i32
  }
  func.func @transform_5(%arg0: i32) -> (i32, i32) {
    %c0_i32 = arith.constant 0 : i32
    %c0_i32_0 = arith.constant 0 : i32
    %c0_i32_1 = arith.constant 0 : i32
    return %c0_i32, %c0_i32_0 : i32, i32
  }
  func.func @transform_6(%arg0: i32) -> (i32, i32) {
    %c0_i32 = arith.constant 0 : i32
    %c0_i32_0 = arith.constant 0 : i32
    %c0_i32_1 = arith.constant 0 : i32
    return %c0_i32, %c0_i32_0 : i32, i32
  }
  func.func @transform_7(%arg0: i32) -> (i32, i32) {
    %c0_i32 = arith.constant 0 : i32
    %c0_i32_0 = arith.constant 0 : i32
    %c0_i32_1 = arith.constant 0 : i32
    return %c0_i32, %c0_i32_0 : i32, i32
  }
  func.func @transform_8(%arg0: i32) -> (i32, i32) {
    %c0_i32 = arith.constant 0 : i32
    %c0_i32_0 = arith.constant 0 : i32
    %c0_i32_1 = arith.constant 0 : i32
    return %c0_i32, %c0_i32_0 : i32, i32
  }
  func.func @transform_9(%arg0: i32) -> (i32, i32) {
    %c0_i32 = arith.constant 0 : i32
    %c0_i32_0 = arith.constant 0 : i32
    %c0_i32_1 = arith.constant 0 : i32
    return %c0_i32, %c0_i32_0 : i32, i32
  }
  func.func @transform_10(%arg0: i32) -> (i32, i32) {
    %c0_i32 = arith.constant 0 : i32
    %c0_i32_0 = arith.constant 0 : i32
    %c0_i32_1 = arith.constant 0 : i32
    return %c0_i32, %c0_i32_0 : i32, i32
  }
  func.func @transform_11(%arg0: i32) -> (i32, i32) {
    %c0_i32 = arith.constant 0 : i32
    %c0_i32_0 = arith.constant 0 : i32
    %c0_i32_1 = arith.constant 0 : i32
    return %c0_i32, %c0_i32_0 : i32, i32
  }
  func.func @transform_12(%arg0: i32) -> (i32, i32) {
    %c0_i32 = arith.constant 0 : i32
    %c0_i32_0 = arith.constant 0 : i32
    %c0_i32_1 = arith.constant 0 : i32
    return %c0_i32, %c0_i32_0 : i32, i32
  }
  func.func @transform_13(%arg0: i32) -> (i32, i32) {
    %c0_i32 = arith.constant 0 : i32
    %c0_i32_0 = arith.constant 0 : i32
    %c0_i32_1 = arith.constant 0 : i32
    return %c0_i32, %c0_i32_0 : i32, i32
  }
  func.func @transform_14(%arg0: i32) -> (i32, i32) {
    %c0_i32 = arith.constant 0 : i32
    %c0_i32_0 = arith.constant 0 : i32
    %c0_i32_1 = arith.constant 0 : i32
    return %c0_i32, %c0_i32_0 : i32, i32
  }
  func.func @transform_15(%arg0: i32) -> (i32, i32, i32) {
    %c0_i32 = arith.constant 0 : i32
    %c0_i32_0 = arith.constant 0 : i32
    %c0_i32_1 = arith.constant 0 : i32
    return %arg0, %c0_i32, %c0_i32_0 : i32, i32, i32
  }
}

module attributes {stable_mosaic.version = 11 : i64} {
  func.func @_fused_layer_kernel(%arg0: i32, %arg1: memref<1x24x128xf32, #tpu.memory_space<vmem>>, %arg2: memref<1x128xf32, #tpu.memory_space<vmem>>, %arg3: memref<1x128xf32, #tpu.memory_space<vmem>>, %arg4: memref<128x384xf32, #tpu.memory_space<vmem>>, %arg5: memref<1x384xf32, #tpu.memory_space<vmem>>, %arg6: memref<128x128xf32, #tpu.memory_space<vmem>>, %arg7: memref<1x128xf32, #tpu.memory_space<vmem>>, %arg8: memref<1x128xf32, #tpu.memory_space<vmem>>, %arg9: memref<1x128xf32, #tpu.memory_space<vmem>>, %arg10: memref<1x128xf32, #tpu.memory_space<vmem>>, %arg11: memref<128x512xf32, #tpu.memory_space<vmem>>, %arg12: memref<1x512xf32, #tpu.memory_space<vmem>>, %arg13: memref<512x128xf32, #tpu.memory_space<vmem>>, %arg14: memref<1x128xf32, #tpu.memory_space<vmem>>, %arg15: memref<1x128xf32, #tpu.memory_space<vmem>>, %arg16: memref<1x24x128xf32, #tpu.memory_space<vmem>>) attributes {dimension_semantics = [#tpu.dimension_semantics<parallel>], iteration_bounds = array<i64: 2>, scalar_prefetch = 0 : i64, scratch_operands = 0 : i64, tpu.core_type = #tpu.core_type<tc>, window_params = [{transform_indices = @transform_0, window_bounds = array<i64: 1, 24, 128>}, {pipeline_mode = #tpu.pipeline_mode<synchronous>, transform_indices = @transform_1, window_bounds = array<i64: 1, 128>}, {pipeline_mode = #tpu.pipeline_mode<synchronous>, transform_indices = @transform_2, window_bounds = array<i64: 1, 128>}, {pipeline_mode = #tpu.pipeline_mode<synchronous>, transform_indices = @transform_3, window_bounds = array<i64: 128, 384>}, {pipeline_mode = #tpu.pipeline_mode<synchronous>, transform_indices = @transform_4, window_bounds = array<i64: 1, 384>}, {pipeline_mode = #tpu.pipeline_mode<synchronous>, transform_indices = @transform_5, window_bounds = array<i64: 128, 128>}, {pipeline_mode = #tpu.pipeline_mode<synchronous>, transform_indices = @transform_6, window_bounds = array<i64: 1, 128>}, {pipeline_mode = #tpu.pipeline_mode<synchronous>, transform_indices = @transform_7, window_bounds = array<i64: 1, 128>}, {pipeline_mode = #tpu.pipeline_mode<synchronous>, transform_indices = @transform_8, window_bounds = array<i64: 1, 128>}, {pipeline_mode = #tpu.pipeline_mode<synchronous>, transform_indices = @transform_9, window_bounds = array<i64: 1, 128>}, {pipeline_mode = #tpu.pipeline_mode<synchronous>, transform_indices = @transform_10, window_bounds = array<i64: 128, 512>}, {pipeline_mode = #tpu.pipeline_mode<synchronous>, transform_indices = @transform_11, window_bounds = array<i64: 1, 512>}, {pipeline_mode = #tpu.pipeline_mode<synchronous>, transform_indices = @transform_12, window_bounds = array<i64: 512, 128>}, {pipeline_mode = #tpu.pipeline_mode<synchronous>, transform_indices = @transform_13, window_bounds = array<i64: 1, 128>}, {pipeline_mode = #tpu.pipeline_mode<synchronous>, transform_indices = @transform_14, window_bounds = array<i64: 1, 128>}, {transform_indices = @transform_15, window_bounds = array<i64: 1, 24, 128>}]} {
    %c0 = arith.constant 0 : index
    %c0_0 = arith.constant 0 : index
    %c0_1 = arith.constant 0 : index
    %0 = vector.load %arg1[%c0, %c0_0, %c0_1] : memref<1x24x128xf32, #tpu.memory_space<vmem>>, vector<1x24x128xf32>
    %1 = vector.shape_cast %0 : vector<1x24x128xf32> to vector<24x128xf32>
    %cst = arith.constant dense<0.000000e+00> : vector<24xf32>
    %2 = vector.multi_reduction <add>, %1, %cst [1] : vector<24x128xf32> to vector<24xf32>
    %3 = vector.shape_cast %2 : vector<24xf32> to vector<24x1xf32>
    %cst_2 = arith.constant 1.280000e+02 : f32
    %4 = vector.broadcast %cst_2 : f32 to vector<24x1xf32>
    %5 = arith.divf %3, %4 : vector<24x1xf32>
    %6 = vector.broadcast %5 : vector<24x1xf32> to vector<24x128xf32>
    %7 = arith.subf %1, %6 : vector<24x128xf32>
    %8 = arith.mulf %7, %7 : vector<24x128xf32>
    %cst_3 = arith.constant dense<0.000000e+00> : vector<24xf32>
    %9 = vector.multi_reduction <add>, %8, %cst_3 [1] : vector<24x128xf32> to vector<24xf32>
    %10 = vector.shape_cast %9 : vector<24xf32> to vector<24x1xf32>
    %cst_4 = arith.constant 1.280000e+02 : f32
    %11 = vector.broadcast %cst_4 : f32 to vector<24x1xf32>
    %12 = arith.divf %10, %11 : vector<24x1xf32>
    %13 = vector.broadcast %5 : vector<24x1xf32> to vector<24x128xf32>
    %14 = arith.subf %1, %13 : vector<24x128xf32>
    %cst_5 = arith.constant 9.99999997E-7 : f32
    %15 = vector.broadcast %cst_5 : f32 to vector<24x1xf32>
    %16 = arith.addf %12, %15 : vector<24x1xf32>
    %17 = math.rsqrt %16 : vector<24x1xf32>
    %18 = vector.broadcast %17 : vector<24x1xf32> to vector<24x128xf32>
    %19 = arith.mulf %14, %18 : vector<24x128xf32>
    %c0_6 = arith.constant 0 : index
    %c0_7 = arith.constant 0 : index
    %20 = vector.load %arg2[%c0_6, %c0_7] : memref<1x128xf32, #tpu.memory_space<vmem>>, vector<1x128xf32>
    %21 = vector.broadcast %20 : vector<1x128xf32> to vector<24x128xf32>
    %22 = arith.mulf %19, %21 : vector<24x128xf32>
    %c0_8 = arith.constant 0 : index
    %c0_9 = arith.constant 0 : index
    %23 = vector.load %arg3[%c0_8, %c0_9] : memref<1x128xf32, #tpu.memory_space<vmem>>, vector<1x128xf32>
    %24 = vector.broadcast %23 : vector<1x128xf32> to vector<24x128xf32>
    %25 = arith.addf %22, %24 : vector<24x128xf32>
    %c0_10 = arith.constant 0 : index
    %c0_11 = arith.constant 0 : index
    %26 = vector.load %arg4[%c0_10, %c0_11] : memref<128x384xf32, #tpu.memory_space<vmem>>, vector<128x384xf32>
    %cst_12 = arith.constant dense<0.000000e+00> : vector<24x384xf32>
    %27 = tpu.matmul %25, %26, %cst_12 {dimension_numbers = #tpu.dot_dimension_numbers<[1], [0], [0], [1], [0, 0, 1, 1], [], []>} : vector<24x128xf32>, vector<128x384xf32>, vector<24x384xf32> -> vector<24x384xf32>
    %c0_13 = arith.constant 0 : index
    %c0_14 = arith.constant 0 : index
    %28 = vector.load %arg5[%c0_13, %c0_14] : memref<1x384xf32, #tpu.memory_space<vmem>>, vector<1x384xf32>
    %29 = vector.broadcast %28 : vector<1x384xf32> to vector<24x384xf32>
    %30 = arith.addf %27, %29 : vector<24x384xf32>
    %31 = vector.extract_strided_slice %30 {offsets = [0, 0], sizes = [24, 128], strides = [1, 1]} : vector<24x384xf32> to vector<24x128xf32>
    %32 = vector.extract_strided_slice %30 {offsets = [0, 128], sizes = [24, 128], strides = [1, 1]} : vector<24x384xf32> to vector<24x128xf32>
    %33 = vector.extract_strided_slice %30 {offsets = [0, 256], sizes = [24, 128], strides = [1, 1]} : vector<24x384xf32> to vector<24x128xf32>
    %c0_15 = arith.constant 0 : index
    %c0_16 = arith.constant 0 : index
    %34 = vector.load %arg6[%c0_15, %c0_16] : memref<128x128xf32, #tpu.memory_space<vmem>>, vector<128x128xf32>
    %35 = tpu.iota {dimensions = array<i32: 1>} : vector<24x24xi32>
    %c17_i32 = arith.constant 17 : i32
    %36 = vector.broadcast %c17_i32 : i32 to vector<24x24xi32>
    %37 = arith.cmpi slt, %35, %36 : vector<24x24xi32>
    %cst_17 = arith.constant 0.000000e+00 : f32
    %cst_18 = arith.constant -1.000000e+30 : f32
    %38 = vector.broadcast %cst_17 : f32 to vector<24x24xf32>
    %39 = vector.broadcast %cst_18 : f32 to vector<24x24xf32>
    %40 = arith.select %37, %38, %39 : vector<24x24xi1>, vector<24x24xf32>
    %41 = vector.extract_strided_slice %31 {offsets = [0, 0], sizes = [24, 32], strides = [1, 1]} : vector<24x128xf32> to vector<24x32xf32>
    %cst_19 = arith.constant 0.176776692 : f32
    %42 = vector.broadcast %cst_19 : f32 to vector<24x32xf32>
    %43 = arith.mulf %41, %42 : vector<24x32xf32>
    %44 = vector.extract_strided_slice %32 {offsets = [0, 0], sizes = [24, 32], strides = [1, 1]} : vector<24x128xf32> to vector<24x32xf32>
    %45 = vector.extract_strided_slice %33 {offsets = [0, 0], sizes = [24, 32], strides = [1, 1]} : vector<24x128xf32> to vector<24x32xf32>
    %cst_20 = arith.constant dense<0.000000e+00> : vector<24x24xf32>
    %46 = tpu.matmul %43, %44, %cst_20 {dimension_numbers = #tpu.dot_dimension_numbers<[1], [1], [0], [0], [0, 0, 1, 0], [], []>} : vector<24x32xf32>, vector<24x32xf32>, vector<24x24xf32> -> vector<24x24xf32>
    %47 = arith.addf %46, %40 : vector<24x24xf32>
    %cst_21 = arith.constant dense<0xFF800000> : vector<24xf32>
    %48 = vector.multi_reduction <maximumf>, %47, %cst_21 [1] : vector<24x24xf32> to vector<24xf32>
    %49 = vector.shape_cast %48 : vector<24xf32> to vector<24x1xf32>
    %50 = vector.broadcast %49 : vector<24x1xf32> to vector<24x24xf32>
    %51 = arith.subf %47, %50 : vector<24x24xf32>
    %52 = math.exp %51 : vector<24x24xf32>
    %cst_22 = arith.constant dense<0.000000e+00> : vector<24xf32>
    %53 = vector.multi_reduction <add>, %52, %cst_22 [1] : vector<24x24xf32> to vector<24xf32>
    %54 = vector.shape_cast %53 : vector<24xf32> to vector<24x1xf32>
    %55 = tpu.reciprocal %54 {approx = true} : vector<24x1xf32> -> vector<24x1xf32>
    %56 = vector.broadcast %55 : vector<24x1xf32> to vector<24x24xf32>
    %57 = arith.mulf %52, %56 : vector<24x24xf32>
    %cst_23 = arith.constant dense<0.000000e+00> : vector<24x32xf32>
    %58 = tpu.matmul %57, %45, %cst_23 {dimension_numbers = #tpu.dot_dimension_numbers<[1], [0], [0], [1], [0, 0, 1, 1], [], []>} : vector<24x24xf32>, vector<24x32xf32>, vector<24x32xf32> -> vector<24x32xf32>
    %59 = vector.extract_strided_slice %34 {offsets = [0, 0], sizes = [32, 128], strides = [1, 1]} : vector<128x128xf32> to vector<32x128xf32>
    %cst_24 = arith.constant dense<0.000000e+00> : vector<24x128xf32>
    %60 = tpu.matmul %58, %59, %cst_24 {dimension_numbers = #tpu.dot_dimension_numbers<[1], [0], [0], [1], [0, 0, 1, 1], [], []>} : vector<24x32xf32>, vector<32x128xf32>, vector<24x128xf32> -> vector<24x128xf32>
    %61 = vector.extract_strided_slice %31 {offsets = [0, 32], sizes = [24, 32], strides = [1, 1]} : vector<24x128xf32> to vector<24x32xf32>
    %cst_25 = arith.constant 0.176776692 : f32
    %62 = vector.broadcast %cst_25 : f32 to vector<24x32xf32>
    %63 = arith.mulf %61, %62 : vector<24x32xf32>
    %64 = vector.extract_strided_slice %32 {offsets = [0, 32], sizes = [24, 32], strides = [1, 1]} : vector<24x128xf32> to vector<24x32xf32>
    %65 = vector.extract_strided_slice %33 {offsets = [0, 32], sizes = [24, 32], strides = [1, 1]} : vector<24x128xf32> to vector<24x32xf32>
    %cst_26 = arith.constant dense<0.000000e+00> : vector<24x24xf32>
    %66 = tpu.matmul %63, %64, %cst_26 {dimension_numbers = #tpu.dot_dimension_numbers<[1], [1], [0], [0], [0, 0, 1, 0], [], []>} : vector<24x32xf32>, vector<24x32xf32>, vector<24x24xf32> -> vector<24x24xf32>
    %67 = arith.addf %66, %40 : vector<24x24xf32>
    %cst_27 = arith.constant dense<0xFF800000> : vector<24xf32>
    %68 = vector.multi_reduction <maximumf>, %67, %cst_27 [1] : vector<24x24xf32> to vector<24xf32>
    %69 = vector.shape_cast %68 : vector<24xf32> to vector<24x1xf32>
    %70 = vector.broadcast %69 : vector<24x1xf32> to vector<24x24xf32>
    %71 = arith.subf %67, %70 : vector<24x24xf32>
    %72 = math.exp %71 : vector<24x24xf32>
    %cst_28 = arith.constant dense<0.000000e+00> : vector<24xf32>
    %73 = vector.multi_reduction <add>, %72, %cst_28 [1] : vector<24x24xf32> to vector<24xf32>
    %74 = vector.shape_cast %73 : vector<24xf32> to vector<24x1xf32>
    %75 = tpu.reciprocal %74 {approx = true} : vector<24x1xf32> -> vector<24x1xf32>
    %76 = vector.broadcast %75 : vector<24x1xf32> to vector<24x24xf32>
    %77 = arith.mulf %72, %76 : vector<24x24xf32>
    %cst_29 = arith.constant dense<0.000000e+00> : vector<24x32xf32>
    %78 = tpu.matmul %77, %65, %cst_29 {dimension_numbers = #tpu.dot_dimension_numbers<[1], [0], [0], [1], [0, 0, 1, 1], [], []>} : vector<24x24xf32>, vector<24x32xf32>, vector<24x32xf32> -> vector<24x32xf32>
    %79 = vector.extract_strided_slice %34 {offsets = [32, 0], sizes = [32, 128], strides = [1, 1]} : vector<128x128xf32> to vector<32x128xf32>
    %cst_30 = arith.constant dense<0.000000e+00> : vector<24x128xf32>
    %80 = tpu.matmul %78, %79, %cst_30 {dimension_numbers = #tpu.dot_dimension_numbers<[1], [0], [0], [1], [0, 0, 1, 1], [], []>} : vector<24x32xf32>, vector<32x128xf32>, vector<24x128xf32> -> vector<24x128xf32>
    %81 = arith.addf %60, %80 : vector<24x128xf32>
    %82 = vector.extract_strided_slice %31 {offsets = [0, 64], sizes = [24, 32], strides = [1, 1]} : vector<24x128xf32> to vector<24x32xf32>
    %cst_31 = arith.constant 0.176776692 : f32
    %83 = vector.broadcast %cst_31 : f32 to vector<24x32xf32>
    %84 = arith.mulf %82, %83 : vector<24x32xf32>
    %85 = vector.extract_strided_slice %32 {offsets = [0, 64], sizes = [24, 32], strides = [1, 1]} : vector<24x128xf32> to vector<24x32xf32>
    %86 = vector.extract_strided_slice %33 {offsets = [0, 64], sizes = [24, 32], strides = [1, 1]} : vector<24x128xf32> to vector<24x32xf32>
    %cst_32 = arith.constant dense<0.000000e+00> : vector<24x24xf32>
    %87 = tpu.matmul %84, %85, %cst_32 {dimension_numbers = #tpu.dot_dimension_numbers<[1], [1], [0], [0], [0, 0, 1, 0], [], []>} : vector<24x32xf32>, vector<24x32xf32>, vector<24x24xf32> -> vector<24x24xf32>
    %88 = arith.addf %87, %40 : vector<24x24xf32>
    %cst_33 = arith.constant dense<0xFF800000> : vector<24xf32>
    %89 = vector.multi_reduction <maximumf>, %88, %cst_33 [1] : vector<24x24xf32> to vector<24xf32>
    %90 = vector.shape_cast %89 : vector<24xf32> to vector<24x1xf32>
    %91 = vector.broadcast %90 : vector<24x1xf32> to vector<24x24xf32>
    %92 = arith.subf %88, %91 : vector<24x24xf32>
    %93 = math.exp %92 : vector<24x24xf32>
    %cst_34 = arith.constant dense<0.000000e+00> : vector<24xf32>
    %94 = vector.multi_reduction <add>, %93, %cst_34 [1] : vector<24x24xf32> to vector<24xf32>
    %95 = vector.shape_cast %94 : vector<24xf32> to vector<24x1xf32>
    %96 = tpu.reciprocal %95 {approx = true} : vector<24x1xf32> -> vector<24x1xf32>
    %97 = vector.broadcast %96 : vector<24x1xf32> to vector<24x24xf32>
    %98 = arith.mulf %93, %97 : vector<24x24xf32>
    %cst_35 = arith.constant dense<0.000000e+00> : vector<24x32xf32>
    %99 = tpu.matmul %98, %86, %cst_35 {dimension_numbers = #tpu.dot_dimension_numbers<[1], [0], [0], [1], [0, 0, 1, 1], [], []>} : vector<24x24xf32>, vector<24x32xf32>, vector<24x32xf32> -> vector<24x32xf32>
    %100 = vector.extract_strided_slice %34 {offsets = [64, 0], sizes = [32, 128], strides = [1, 1]} : vector<128x128xf32> to vector<32x128xf32>
    %cst_36 = arith.constant dense<0.000000e+00> : vector<24x128xf32>
    %101 = tpu.matmul %99, %100, %cst_36 {dimension_numbers = #tpu.dot_dimension_numbers<[1], [0], [0], [1], [0, 0, 1, 1], [], []>} : vector<24x32xf32>, vector<32x128xf32>, vector<24x128xf32> -> vector<24x128xf32>
    %102 = arith.addf %81, %101 : vector<24x128xf32>
    %103 = vector.extract_strided_slice %31 {offsets = [0, 96], sizes = [24, 32], strides = [1, 1]} : vector<24x128xf32> to vector<24x32xf32>
    %cst_37 = arith.constant 0.176776692 : f32
    %104 = vector.broadcast %cst_37 : f32 to vector<24x32xf32>
    %105 = arith.mulf %103, %104 : vector<24x32xf32>
    %106 = vector.extract_strided_slice %32 {offsets = [0, 96], sizes = [24, 32], strides = [1, 1]} : vector<24x128xf32> to vector<24x32xf32>
    %107 = vector.extract_strided_slice %33 {offsets = [0, 96], sizes = [24, 32], strides = [1, 1]} : vector<24x128xf32> to vector<24x32xf32>
    %cst_38 = arith.constant dense<0.000000e+00> : vector<24x24xf32>
    %108 = tpu.matmul %105, %106, %cst_38 {dimension_numbers = #tpu.dot_dimension_numbers<[1], [1], [0], [0], [0, 0, 1, 0], [], []>} : vector<24x32xf32>, vector<24x32xf32>, vector<24x24xf32> -> vector<24x24xf32>
    %109 = arith.addf %108, %40 : vector<24x24xf32>
    %cst_39 = arith.constant dense<0xFF800000> : vector<24xf32>
    %110 = vector.multi_reduction <maximumf>, %109, %cst_39 [1] : vector<24x24xf32> to vector<24xf32>
    %111 = vector.shape_cast %110 : vector<24xf32> to vector<24x1xf32>
    %112 = vector.broadcast %111 : vector<24x1xf32> to vector<24x24xf32>
    %113 = arith.subf %109, %112 : vector<24x24xf32>
    %114 = math.exp %113 : vector<24x24xf32>
    %cst_40 = arith.constant dense<0.000000e+00> : vector<24xf32>
    %115 = vector.multi_reduction <add>, %114, %cst_40 [1] : vector<24x24xf32> to vector<24xf32>
    %116 = vector.shape_cast %115 : vector<24xf32> to vector<24x1xf32>
    %117 = tpu.reciprocal %116 {approx = true} : vector<24x1xf32> -> vector<24x1xf32>
    %118 = vector.broadcast %117 : vector<24x1xf32> to vector<24x24xf32>
    %119 = arith.mulf %114, %118 : vector<24x24xf32>
    %cst_41 = arith.constant dense<0.000000e+00> : vector<24x32xf32>
    %120 = tpu.matmul %119, %107, %cst_41 {dimension_numbers = #tpu.dot_dimension_numbers<[1], [0], [0], [1], [0, 0, 1, 1], [], []>} : vector<24x24xf32>, vector<24x32xf32>, vector<24x32xf32> -> vector<24x32xf32>
    %121 = vector.extract_strided_slice %34 {offsets = [96, 0], sizes = [32, 128], strides = [1, 1]} : vector<128x128xf32> to vector<32x128xf32>
    %cst_42 = arith.constant dense<0.000000e+00> : vector<24x128xf32>
    %122 = tpu.matmul %120, %121, %cst_42 {dimension_numbers = #tpu.dot_dimension_numbers<[1], [0], [0], [1], [0, 0, 1, 1], [], []>} : vector<24x32xf32>, vector<32x128xf32>, vector<24x128xf32> -> vector<24x128xf32>
    %123 = arith.addf %102, %122 : vector<24x128xf32>
    %c0_43 = arith.constant 0 : index
    %c0_44 = arith.constant 0 : index
    %124 = vector.load %arg7[%c0_43, %c0_44] : memref<1x128xf32, #tpu.memory_space<vmem>>, vector<1x128xf32>
    %125 = vector.broadcast %124 : vector<1x128xf32> to vector<24x128xf32>
    %126 = arith.addf %123, %125 : vector<24x128xf32>
    %c0_45 = arith.constant 0 : index
    %c0_46 = arith.constant 0 : index
    %127 = vector.load %arg8[%c0_45, %c0_46] : memref<1x128xf32, #tpu.memory_space<vmem>>, vector<1x128xf32>
    %128 = vector.broadcast %127 : vector<1x128xf32> to vector<24x128xf32>
    %129 = arith.mulf %128, %126 : vector<24x128xf32>
    %130 = arith.addf %1, %129 : vector<24x128xf32>
    %cst_47 = arith.constant dense<0.000000e+00> : vector<24xf32>
    %131 = vector.multi_reduction <add>, %130, %cst_47 [1] : vector<24x128xf32> to vector<24xf32>
    %132 = vector.shape_cast %131 : vector<24xf32> to vector<24x1xf32>
    %cst_48 = arith.constant 1.280000e+02 : f32
    %133 = vector.broadcast %cst_48 : f32 to vector<24x1xf32>
    %134 = arith.divf %132, %133 : vector<24x1xf32>
    %135 = vector.broadcast %134 : vector<24x1xf32> to vector<24x128xf32>
    %136 = arith.subf %130, %135 : vector<24x128xf32>
    %137 = arith.mulf %136, %136 : vector<24x128xf32>
    %cst_49 = arith.constant dense<0.000000e+00> : vector<24xf32>
    %138 = vector.multi_reduction <add>, %137, %cst_49 [1] : vector<24x128xf32> to vector<24xf32>
    %139 = vector.shape_cast %138 : vector<24xf32> to vector<24x1xf32>
    %cst_50 = arith.constant 1.280000e+02 : f32
    %140 = vector.broadcast %cst_50 : f32 to vector<24x1xf32>
    %141 = arith.divf %139, %140 : vector<24x1xf32>
    %142 = vector.broadcast %134 : vector<24x1xf32> to vector<24x128xf32>
    %143 = arith.subf %130, %142 : vector<24x128xf32>
    %cst_51 = arith.constant 9.99999997E-7 : f32
    %144 = vector.broadcast %cst_51 : f32 to vector<24x1xf32>
    %145 = arith.addf %141, %144 : vector<24x1xf32>
    %146 = math.rsqrt %145 : vector<24x1xf32>
    %147 = vector.broadcast %146 : vector<24x1xf32> to vector<24x128xf32>
    %148 = arith.mulf %143, %147 : vector<24x128xf32>
    %c0_52 = arith.constant 0 : index
    %c0_53 = arith.constant 0 : index
    %149 = vector.load %arg9[%c0_52, %c0_53] : memref<1x128xf32, #tpu.memory_space<vmem>>, vector<1x128xf32>
    %150 = vector.broadcast %149 : vector<1x128xf32> to vector<24x128xf32>
    %151 = arith.mulf %148, %150 : vector<24x128xf32>
    %c0_54 = arith.constant 0 : index
    %c0_55 = arith.constant 0 : index
    %152 = vector.load %arg10[%c0_54, %c0_55] : memref<1x128xf32, #tpu.memory_space<vmem>>, vector<1x128xf32>
    %153 = vector.broadcast %152 : vector<1x128xf32> to vector<24x128xf32>
    %154 = arith.addf %151, %153 : vector<24x128xf32>
    %c0_56 = arith.constant 0 : index
    %c0_57 = arith.constant 0 : index
    %155 = vector.load %arg11[%c0_56, %c0_57] : memref<128x512xf32, #tpu.memory_space<vmem>>, vector<128x512xf32>
    %cst_58 = arith.constant dense<0.000000e+00> : vector<24x512xf32>
    %156 = tpu.matmul %154, %155, %cst_58 {dimension_numbers = #tpu.dot_dimension_numbers<[1], [0], [0], [1], [0, 0, 1, 1], [], []>} : vector<24x128xf32>, vector<128x512xf32>, vector<24x512xf32> -> vector<24x512xf32>
    %c0_59 = arith.constant 0 : index
    %c0_60 = arith.constant 0 : index
    %157 = vector.load %arg12[%c0_59, %c0_60] : memref<1x512xf32, #tpu.memory_space<vmem>>, vector<1x512xf32>
    %158 = vector.broadcast %157 : vector<1x512xf32> to vector<24x512xf32>
    %159 = arith.addf %156, %158 : vector<24x512xf32>
    %160 = arith.mulf %159, %159 : vector<24x512xf32>
    %161 = arith.mulf %159, %160 : vector<24x512xf32>
    %cst_61 = arith.constant 4.471500e-02 : f32
    %162 = vector.broadcast %cst_61 : f32 to vector<24x512xf32>
    %163 = arith.mulf %162, %161 : vector<24x512xf32>
    %164 = arith.addf %159, %163 : vector<24x512xf32>
    %cst_62 = arith.constant 0.797884583 : f32
    %165 = vector.broadcast %cst_62 : f32 to vector<24x512xf32>
    %166 = arith.mulf %165, %164 : vector<24x512xf32>
    %167 = math.tanh %166 : vector<24x512xf32>
    %cst_63 = arith.constant 1.000000e+00 : f32
    %168 = vector.broadcast %cst_63 : f32 to vector<24x512xf32>
    %169 = arith.addf %168, %167 : vector<24x512xf32>
    %cst_64 = arith.constant 5.000000e-01 : f32
    %170 = vector.broadcast %cst_64 : f32 to vector<24x512xf32>
    %171 = arith.mulf %170, %169 : vector<24x512xf32>
    %172 = arith.mulf %159, %171 : vector<24x512xf32>
    %c0_65 = arith.constant 0 : index
    %c0_66 = arith.constant 0 : index
    %173 = vector.load %arg13[%c0_65, %c0_66] : memref<512x128xf32, #tpu.memory_space<vmem>>, vector<512x128xf32>
    %cst_67 = arith.constant dense<0.000000e+00> : vector<24x128xf32>
    %174 = tpu.matmul %172, %173, %cst_67 {dimension_numbers = #tpu.dot_dimension_numbers<[1], [0], [0], [1], [0, 0, 1, 1], [], []>} : vector<24x512xf32>, vector<512x128xf32>, vector<24x128xf32> -> vector<24x128xf32>
    %c0_68 = arith.constant 0 : index
    %c0_69 = arith.constant 0 : index
    %175 = vector.load %arg14[%c0_68, %c0_69] : memref<1x128xf32, #tpu.memory_space<vmem>>, vector<1x128xf32>
    %176 = vector.broadcast %175 : vector<1x128xf32> to vector<24x128xf32>
    %177 = arith.addf %174, %176 : vector<24x128xf32>
    %c0_70 = arith.constant 0 : index
    %c0_71 = arith.constant 0 : index
    %178 = vector.load %arg15[%c0_70, %c0_71] : memref<1x128xf32, #tpu.memory_space<vmem>>, vector<1x128xf32>
    %179 = vector.broadcast %178 : vector<1x128xf32> to vector<24x128xf32>
    %180 = arith.mulf %179, %177 : vector<24x128xf32>
    %181 = arith.addf %130, %180 : vector<24x128xf32>
    %c0_72 = arith.constant 0 : index
    %c0_73 = arith.constant 0 : index
    %c0_74 = arith.constant 0 : index
    %182 = vector.load %arg16[%c0_72, %c0_73, %c0_74] : memref<1x24x128xf32, #tpu.memory_space<vmem>>, vector<1x24x128xf32>
    %183 = vector.shape_cast %182 : vector<1x24x128xf32> to vector<24x128xf32>
    %184 = vector.shape_cast %181 : vector<24x128xf32> to vector<1x24x128xf32>
    tpu.vector_store %arg16[%c0_72, %c0_73, %c0_74], %184 {strides = array<i32>} : memref<1x24x128xf32, #tpu.memory_space<vmem>>, vector<1x24x128xf32>,
    return
  }
  func.func @transform_0(%arg0: i32) -> (i32, i32, i32) {
    %c0_i32 = arith.constant 0 : i32
    %c0_i32_0 = arith.constant 0 : i32
    %c0_i32_1 = arith.constant 0 : i32
    return %arg0, %c0_i32, %c0_i32_0 : i32, i32, i32
  }
  func.func @transform_1(%arg0: i32) -> (i32, i32) {
    %c0_i32 = arith.constant 0 : i32
    %c0_i32_0 = arith.constant 0 : i32
    %c0_i32_1 = arith.constant 0 : i32
    return %c0_i32, %c0_i32_0 : i32, i32
  }
  func.func @transform_2(%arg0: i32) -> (i32, i32) {
    %c0_i32 = arith.constant 0 : i32
    %c0_i32_0 = arith.constant 0 : i32
    %c0_i32_1 = arith.constant 0 : i32
    return %c0_i32, %c0_i32_0 : i32, i32
  }
  func.func @transform_3(%arg0: i32) -> (i32, i32) {
    %c0_i32 = arith.constant 0 : i32
    %c0_i32_0 = arith.constant 0 : i32
    %c0_i32_1 = arith.constant 0 : i32
    return %c0_i32, %c0_i32_0 : i32, i32
  }
  func.func @transform_4(%arg0: i32) -> (i32, i32) {
    %c0_i32 = arith.constant 0 : i32
    %c0_i32_0 = arith.constant 0 : i32
    %c0_i32_1 = arith.constant 0 : i32
    return %c0_i32, %c0_i32_0 : i32, i32
  }
  func.func @transform_5(%arg0: i32) -> (i32, i32) {
    %c0_i32 = arith.constant 0 : i32
    %c0_i32_0 = arith.constant 0 : i32
    %c0_i32_1 = arith.constant 0 : i32
    return %c0_i32, %c0_i32_0 : i32, i32
  }
  func.func @transform_6(%arg0: i32) -> (i32, i32) {
    %c0_i32 = arith.constant 0 : i32
    %c0_i32_0 = arith.constant 0 : i32
    %c0_i32_1 = arith.constant 0 : i32
    return %c0_i32, %c0_i32_0 : i32, i32
  }
  func.func @transform_7(%arg0: i32) -> (i32, i32) {
    %c0_i32 = arith.constant 0 : i32
    %c0_i32_0 = arith.constant 0 : i32
    %c0_i32_1 = arith.constant 0 : i32
    return %c0_i32, %c0_i32_0 : i32, i32
  }
  func.func @transform_8(%arg0: i32) -> (i32, i32) {
    %c0_i32 = arith.constant 0 : i32
    %c0_i32_0 = arith.constant 0 : i32
    %c0_i32_1 = arith.constant 0 : i32
    return %c0_i32, %c0_i32_0 : i32, i32
  }
  func.func @transform_9(%arg0: i32) -> (i32, i32) {
    %c0_i32 = arith.constant 0 : i32
    %c0_i32_0 = arith.constant 0 : i32
    %c0_i32_1 = arith.constant 0 : i32
    return %c0_i32, %c0_i32_0 : i32, i32
  }
  func.func @transform_10(%arg0: i32) -> (i32, i32) {
    %c0_i32 = arith.constant 0 : i32
    %c0_i32_0 = arith.constant 0 : i32
    %c0_i32_1 = arith.constant 0 : i32
    return %c0_i32, %c0_i32_0 : i32, i32
  }
  func.func @transform_11(%arg0: i32) -> (i32, i32) {
    %c0_i32 = arith.constant 0 : i32
    %c0_i32_0 = arith.constant 0 : i32
    %c0_i32_1 = arith.constant 0 : i32
    return %c0_i32, %c0_i32_0 : i32, i32
  }
  func.func @transform_12(%arg0: i32) -> (i32, i32) {
    %c0_i32 = arith.constant 0 : i32
    %c0_i32_0 = arith.constant 0 : i32
    %c0_i32_1 = arith.constant 0 : i32
    return %c0_i32, %c0_i32_0 : i32, i32
  }
  func.func @transform_13(%arg0: i32) -> (i32, i32) {
    %c0_i32 = arith.constant 0 : i32
    %c0_i32_0 = arith.constant 0 : i32
    %c0_i32_1 = arith.constant 0 : i32
    return %c0_i32, %c0_i32_0 : i32, i32
  }
  func.func @transform_14(%arg0: i32) -> (i32, i32) {
    %c0_i32 = arith.constant 0 : i32
    %c0_i32_0 = arith.constant 0 : i32
    %c0_i32_1 = arith.constant 0 : i32
    return %c0_i32, %c0_i32_0 : i32, i32
  }
  func.func @transform_15(%arg0: i32) -> (i32, i32, i32) {
    %c0_i32 = arith.constant 0 : i32
    %c0_i32_0 = arith.constant 0 : i32
    %c0_i32_1 = arith.constant 0 : i32
    return %arg0, %c0_i32, %c0_i32_0 : i32, i32, i32
  }
}

module attributes {stable_mosaic.version = 11 : i64} {
  func.func @_norm_linear_kernel(%arg0: i32, %arg1: memref<34x128xf32, #tpu.memory_space<vmem>>, %arg2: memref<1x128xf32, #tpu.memory_space<vmem>>, %arg3: memref<1x128xf32, #tpu.memory_space<vmem>>, %arg4: memref<128x48xf32, #tpu.memory_space<vmem>>, %arg5: memref<1x48xf32, #tpu.memory_space<vmem>>, %arg6: memref<34x48xf32, #tpu.memory_space<vmem>>) attributes {dimension_semantics = [#tpu.dimension_semantics<arbitrary>], iteration_bounds = array<i64: 1>, scalar_prefetch = 0 : i64, scratch_operands = 0 : i64, tpu.core_type = #tpu.core_type<tc>, window_params = [{pipeline_mode = #tpu.pipeline_mode<synchronous>, transform_indices = @transform_0, window_bounds = array<i64: 34, 128>}, {pipeline_mode = #tpu.pipeline_mode<synchronous>, transform_indices = @transform_1, window_bounds = array<i64: 1, 128>}, {pipeline_mode = #tpu.pipeline_mode<synchronous>, transform_indices = @transform_2, window_bounds = array<i64: 1, 128>}, {pipeline_mode = #tpu.pipeline_mode<synchronous>, transform_indices = @transform_3, window_bounds = array<i64: 128, 48>}, {pipeline_mode = #tpu.pipeline_mode<synchronous>, transform_indices = @transform_4, window_bounds = array<i64: 1, 48>}, {pipeline_mode = #tpu.pipeline_mode<synchronous>, transform_indices = @transform_5, window_bounds = array<i64: 34, 48>}]} {
    %c0 = arith.constant 0 : index
    %c0_0 = arith.constant 0 : index
    %0 = vector.load %arg1[%c0, %c0_0] : memref<34x128xf32, #tpu.memory_space<vmem>>, vector<34x128xf32>
    %cst = arith.constant dense<0.000000e+00> : vector<34xf32>
    %1 = vector.multi_reduction <add>, %0, %cst [1] : vector<34x128xf32> to vector<34xf32>
    %2 = vector.shape_cast %1 : vector<34xf32> to vector<34x1xf32>
    %cst_1 = arith.constant 1.280000e+02 : f32
    %3 = vector.broadcast %cst_1 : f32 to vector<34x1xf32>
    %4 = arith.divf %2, %3 : vector<34x1xf32>
    %5 = vector.broadcast %4 : vector<34x1xf32> to vector<34x128xf32>
    %6 = arith.subf %0, %5 : vector<34x128xf32>
    %7 = arith.mulf %6, %6 : vector<34x128xf32>
    %cst_2 = arith.constant dense<0.000000e+00> : vector<34xf32>
    %8 = vector.multi_reduction <add>, %7, %cst_2 [1] : vector<34x128xf32> to vector<34xf32>
    %9 = vector.shape_cast %8 : vector<34xf32> to vector<34x1xf32>
    %cst_3 = arith.constant 1.280000e+02 : f32
    %10 = vector.broadcast %cst_3 : f32 to vector<34x1xf32>
    %11 = arith.divf %9, %10 : vector<34x1xf32>
    %12 = vector.broadcast %4 : vector<34x1xf32> to vector<34x128xf32>
    %13 = arith.subf %0, %12 : vector<34x128xf32>
    %cst_4 = arith.constant 9.99999997E-7 : f32
    %14 = vector.broadcast %cst_4 : f32 to vector<34x1xf32>
    %15 = arith.addf %11, %14 : vector<34x1xf32>
    %16 = math.rsqrt %15 : vector<34x1xf32>
    %17 = vector.broadcast %16 : vector<34x1xf32> to vector<34x128xf32>
    %18 = arith.mulf %13, %17 : vector<34x128xf32>
    %c0_5 = arith.constant 0 : index
    %c0_6 = arith.constant 0 : index
    %19 = vector.load %arg2[%c0_5, %c0_6] : memref<1x128xf32, #tpu.memory_space<vmem>>, vector<1x128xf32>
    %20 = vector.broadcast %19 : vector<1x128xf32> to vector<34x128xf32>
    %21 = arith.mulf %18, %20 : vector<34x128xf32>
    %c0_7 = arith.constant 0 : index
    %c0_8 = arith.constant 0 : index
    %22 = vector.load %arg3[%c0_7, %c0_8] : memref<1x128xf32, #tpu.memory_space<vmem>>, vector<1x128xf32>
    %23 = vector.broadcast %22 : vector<1x128xf32> to vector<34x128xf32>
    %24 = arith.addf %21, %23 : vector<34x128xf32>
    %c0_9 = arith.constant 0 : index
    %c0_10 = arith.constant 0 : index
    %25 = vector.load %arg4[%c0_9, %c0_10] : memref<128x48xf32, #tpu.memory_space<vmem>>, vector<128x48xf32>
    %cst_11 = arith.constant dense<0.000000e+00> : vector<34x48xf32>
    %26 = tpu.matmul %24, %25, %cst_11 {dimension_numbers = #tpu.dot_dimension_numbers<[1], [0], [0], [1], [0, 0, 1, 1], [], []>} : vector<34x128xf32>, vector<128x48xf32>, vector<34x48xf32> -> vector<34x48xf32>
    %c0_12 = arith.constant 0 : index
    %c0_13 = arith.constant 0 : index
    %27 = vector.load %arg5[%c0_12, %c0_13] : memref<1x48xf32, #tpu.memory_space<vmem>>, vector<1x48xf32>
    %28 = vector.broadcast %27 : vector<1x48xf32> to vector<34x48xf32>
    %29 = arith.addf %26, %28 : vector<34x48xf32>
    %c0_14 = arith.constant 0 : index
    %c0_15 = arith.constant 0 : index
    %30 = vector.load %arg6[%c0_14, %c0_15] : memref<34x48xf32, #tpu.memory_space<vmem>>, vector<34x48xf32>
    tpu.vector_store %arg6[%c0_14, %c0_15], %29 {strides = array<i32>} : memref<34x48xf32, #tpu.memory_space<vmem>>, vector<34x48xf32>,
    return
  }
  func.func @transform_0(%arg0: i32) -> (i32, i32) {
    %c0_i32 = arith.constant 0 : i32
    %c0_i32_0 = arith.constant 0 : i32
    %c0_i32_1 = arith.constant 0 : i32
    return %c0_i32, %c0_i32_0 : i32, i32
  }
  func.func @transform_1(%arg0: i32) -> (i32, i32) {
    %c0_i32 = arith.constant 0 : i32
    %c0_i32_0 = arith.constant 0 : i32
    %c0_i32_1 = arith.constant 0 : i32
    return %c0_i32, %c0_i32_0 : i32, i32
  }
  func.func @transform_2(%arg0: i32) -> (i32, i32) {
    %c0_i32 = arith.constant 0 : i32
    %c0_i32_0 = arith.constant 0 : i32
    %c0_i32_1 = arith.constant 0 : i32
    return %c0_i32, %c0_i32_0 : i32, i32
  }
  func.func @transform_3(%arg0: i32) -> (i32, i32) {
    %c0_i32 = arith.constant 0 : i32
    %c0_i32_0 = arith.constant 0 : i32
    %c0_i32_1 = arith.constant 0 : i32
    return %c0_i32, %c0_i32_0 : i32, i32
  }
  func.func @transform_4(%arg0: i32) -> (i32, i32) {
    %c0_i32 = arith.constant 0 : i32
    %c0_i32_0 = arith.constant 0 : i32
    %c0_i32_1 = arith.constant 0 : i32
    return %c0_i32, %c0_i32_0 : i32, i32
  }
  func.func @transform_5(%arg0: i32) -> (i32, i32) {
    %c0_i32 = arith.constant 0 : i32
    %c0_i32_0 = arith.constant 0 : i32
    %c0_i32_1 = arith.constant 0 : i32
    return %c0_i32, %c0_i32_0 : i32, i32
  }
}

module attributes {stable_mosaic.version = 11 : i64} {
  func.func @_masked_mse_kernel(%arg0: i32, %arg1: memref<32x48xf32, #tpu.memory_space<vmem>>, %arg2: memref<32x48xf32, #tpu.memory_space<vmem>>, %arg3: memref<32x1xf32, #tpu.memory_space<vmem>>, %arg4: memref<1x1xf32, #tpu.memory_space<vmem>>, %arg5: memref<32x1xf32, #tpu.memory_space<vmem>>, %arg6: memref<32x1xf32, #tpu.memory_space<vmem>>) attributes {dimension_semantics = [#tpu.dimension_semantics<arbitrary>], iteration_bounds = array<i64: 1>, scalar_prefetch = 0 : i64, scratch_operands = 0 : i64, tpu.core_type = #tpu.core_type<tc>, window_params = [{pipeline_mode = #tpu.pipeline_mode<synchronous>, transform_indices = @transform_0, window_bounds = array<i64: 32, 48>}, {pipeline_mode = #tpu.pipeline_mode<synchronous>, transform_indices = @transform_1, window_bounds = array<i64: 32, 48>}, {pipeline_mode = #tpu.pipeline_mode<synchronous>, transform_indices = @transform_2, window_bounds = array<i64: 32, 1>}, {pipeline_mode = #tpu.pipeline_mode<synchronous>, transform_indices = @transform_3, window_bounds = array<i64: 1, 1>}, {pipeline_mode = #tpu.pipeline_mode<synchronous>, transform_indices = @transform_4, window_bounds = array<i64: 32, 1>}, {pipeline_mode = #tpu.pipeline_mode<synchronous>, transform_indices = @transform_5, window_bounds = array<i64: 32, 1>}]} {
    %c0 = arith.constant 0 : index
    %c0_0 = arith.constant 0 : index
    %0 = vector.load %arg2[%c0, %c0_0] : memref<32x48xf32, #tpu.memory_space<vmem>>, vector<32x48xf32>
    %c0_1 = arith.constant 0 : index
    %c0_2 = arith.constant 0 : index
    %1 = vector.load %arg1[%c0_1, %c0_2] : memref<32x48xf32, #tpu.memory_space<vmem>>, vector<32x48xf32>
    %c0_3 = arith.constant 0 : index
    %c0_4 = arith.constant 0 : index
    %2 = vector.load %arg3[%c0_3, %c0_4] : memref<32x1xf32, #tpu.memory_space<vmem>>, vector<32x1xf32>
    %cst = arith.constant dense<0.000000e+00> : vector<32xf32>
    %3 = vector.multi_reduction <add>, %0, %cst [1] : vector<32x48xf32> to vector<32xf32>
    %4 = vector.shape_cast %3 : vector<32xf32> to vector<32x1xf32>
    %cst_5 = arith.constant 4.800000e+01 : f32
    %5 = vector.broadcast %cst_5 : f32 to vector<32x1xf32>
    %6 = arith.divf %4, %5 : vector<32x1xf32>
    %7 = vector.broadcast %6 : vector<32x1xf32> to vector<32x48xf32>
    %8 = arith.subf %0, %7 : vector<32x48xf32>
    %9 = arith.mulf %8, %8 : vector<32x48xf32>
    %cst_6 = arith.constant dense<0.000000e+00> : vector<32xf32>
    %10 = vector.multi_reduction <add>, %9, %cst_6 [1] : vector<32x48xf32> to vector<32xf32>
    %11 = vector.shape_cast %10 : vector<32xf32> to vector<32x1xf32>
    %cst_7 = arith.constant 4.700000e+01 : f32
    %12 = vector.broadcast %cst_7 : f32 to vector<32x1xf32>
    %13 = arith.divf %11, %12 : vector<32x1xf32>
    %c0_8 = arith.constant 0 : index
    %c0_9 = arith.constant 0 : index
    %14 = vector.load %arg5[%c0_8, %c0_9] : memref<32x1xf32, #tpu.memory_space<vmem>>, vector<32x1xf32>
    tpu.vector_store %arg5[%c0_8, %c0_9], %6 {strides = array<i32>} : memref<32x1xf32, #tpu.memory_space<vmem>>, vector<32x1xf32>,
    %c0_10 = arith.constant 0 : index
    %c0_11 = arith.constant 0 : index
    %15 = vector.load %arg6[%c0_10, %c0_11] : memref<32x1xf32, #tpu.memory_space<vmem>>, vector<32x1xf32>
    tpu.vector_store %arg6[%c0_10, %c0_11], %13 {strides = array<i32>} : memref<32x1xf32, #tpu.memory_space<vmem>>, vector<32x1xf32>,
    %16 = vector.broadcast %6 : vector<32x1xf32> to vector<32x48xf32>
    %17 = arith.subf %0, %16 : vector<32x48xf32>
    %cst_12 = arith.constant 9.99999997E-7 : f32
    %18 = vector.broadcast %cst_12 : f32 to vector<32x1xf32>
    %19 = arith.addf %13, %18 : vector<32x1xf32>
    %20 = math.rsqrt %19 : vector<32x1xf32>
    %21 = vector.broadcast %20 : vector<32x1xf32> to vector<32x48xf32>
    %22 = arith.mulf %17, %21 : vector<32x48xf32>
    %23 = arith.subf %1, %22 : vector<32x48xf32>
    %24 = arith.mulf %23, %23 : vector<32x48xf32>
    %cst_13 = arith.constant dense<0.000000e+00> : vector<32xf32>
    %25 = vector.multi_reduction <add>, %24, %cst_13 [1] : vector<32x48xf32> to vector<32xf32>
    %26 = vector.shape_cast %25 : vector<32xf32> to vector<32x1xf32>
    %cst_14 = arith.constant 4.800000e+01 : f32
    %27 = vector.broadcast %cst_14 : f32 to vector<32x1xf32>
    %28 = arith.divf %26, %27 : vector<32x1xf32>
    %29 = arith.mulf %28, %2 : vector<32x1xf32>
    %30 = vector.shape_cast %29 : vector<32x1xf32> to vector<1x32x1xf32>
    %cst_15 = arith.constant dense<0.000000e+00> : vector<1xf32>
    %31 = vector.multi_reduction <add>, %30, %cst_15 [1, 2] : vector<1x32x1xf32> to vector<1xf32>
    %32 = vector.shape_cast %31 : vector<1xf32> to vector<1x1x1xf32>
    %33 = vector.extract %32[0, 0, 0] : f32 from vector<1x1x1xf32>
    %34 = vector.broadcast %33 : f32 to vector<1x1xf32>
    %35 = vector.shape_cast %2 : vector<32x1xf32> to vector<1x32x1xf32>
    %cst_16 = arith.constant dense<0.000000e+00> : vector<1xf32>
    %36 = vector.multi_reduction <add>, %35, %cst_16 [1, 2] : vector<1x32x1xf32> to vector<1xf32>
    %37 = vector.shape_cast %36 : vector<1xf32> to vector<1x1x1xf32>
    %38 = vector.extract %37[0, 0, 0] : f32 from vector<1x1x1xf32>
    %39 = vector.broadcast %38 : f32 to vector<1x1xf32>
    %40 = arith.divf %34, %39 : vector<1x1xf32>
    %c0_17 = arith.constant 0 : index
    %c0_18 = arith.constant 0 : index
    %41 = vector.load %arg4[%c0_17, %c0_18] : memref<1x1xf32, #tpu.memory_space<vmem>>, vector<1x1xf32>
    tpu.vector_store %arg4[%c0_17, %c0_18], %40 {strides = array<i32>} : memref<1x1xf32, #tpu.memory_space<vmem>>, vector<1x1xf32>,
    return
  }
  func.func @transform_0(%arg0: i32) -> (i32, i32) {
    %c0_i32 = arith.constant 0 : i32
    %c0_i32_0 = arith.constant 0 : i32
    %c0_i32_1 = arith.constant 0 : i32
    return %c0_i32, %c0_i32_0 : i32, i32
  }
  func.func @transform_1(%arg0: i32) -> (i32, i32) {
    %c0_i32 = arith.constant 0 : i32
    %c0_i32_0 = arith.constant 0 : i32
    %c0_i32_1 = arith.constant 0 : i32
    return %c0_i32, %c0_i32_0 : i32, i32
  }
  func.func @transform_2(%arg0: i32) -> (i32, i32) {
    %c0_i32 = arith.constant 0 : i32
    %c0_i32_0 = arith.constant 0 : i32
    %c0_i32_1 = arith.constant 0 : i32
    return %c0_i32, %c0_i32_0 : i32, i32
  }
  func.func @transform_3(%arg0: i32) -> (i32, i32) {
    %c0_i32 = arith.constant 0 : i32
    %c0_i32_0 = arith.constant 0 : i32
    %c0_i32_1 = arith.constant 0 : i32
    return %c0_i32, %c0_i32_0 : i32, i32
  }
  func.func @transform_4(%arg0: i32) -> (i32, i32) {
    %c0_i32 = arith.constant 0 : i32
    %c0_i32_0 = arith.constant 0 : i32
    %c0_i32_1 = arith.constant 0 : i32
    return %c0_i32, %c0_i32_0 : i32, i32
  }
  func.func @transform_5(%arg0: i32) -> (i32, i32) {
    %c0_i32 = arith.constant 0 : i32
    %c0_i32_0 = arith.constant 0 : i32
    %c0_i32_1 = arith.constant 0 : i32
    return %c0_i32, %c0_i32_0 : i32, i32
  }
}

</mosaic_0001>

<llo_original>
// kernel: unified_model_forward.8
$region0: #{unified_model_forward.8}
  #allocation0 [shape = 'u32[]', space=smem, size = 0x4, offset = 0x4, fixed_abs, tag = 'smem constant byte address 0x4 - core index']
  #allocation1 [shape = 'u32[144,128]{1,0:T(1,128)}', space=vmem, size = 0x12000, scoped, tag = 'internal scratch']
  %s0 = inlined_call_operand.vmem [shape: f32[2,16,48], index: 0, kind: input, shape index: {}]
  %s1 = inlined_call_operand.vmem [shape: f32[48,128], index: 1, kind: input, shape index: {}]
  %s2 = inlined_call_operand.vmem [shape: f32[1,128], index: 2, kind: input, shape index: {}]
  %s3 = inlined_call_operand.vmem [shape: f32[16,128], index: 3, kind: input, shape index: {}]
  %s4 = inlined_call_operand.vmem [shape: f32[2,16,128], index: 4, kind: output, shape index: {}]
  %s5 = sld [smem:[#allocation0]]
  $region49: #{unified_model_forward.8} parent=0
    _
  %s7 = ssub.s32 1, %s5
  %s8 = scalar_select 0, %s7, %s5
  loop: start=0, step=1, limit=4
  $region2: #{unified_model_forward.8} parent=0 // loop_pre_header
    _
  $region3: #{unified_model_forward.8} parent=0 // loop_header
    %s10 = sphi 0, %s14
    %p11 = scmp.ge.s32.totalorder %s10, 4
    %s20 = sphi 0, %s22
    %s23 = sphi 0, %s20
    %s24 = sphi 0, %s23
    %s40 = sphi 0, %s24
    %s44 = sphi 0, %s44
    %s46 = sphi 0, %s44
    %s47 = sphi 0, %s46
    %s61 = sphi 0, %s47
    %s65 = sphi 0, %s65
    %s67 = sphi 0, %s65
    %s68 = sphi 0, %s67
    %s82 = sphi 0, %s68
    %s86 = sphi 0, %s86
    %s88 = sphi 0, %s86
    %s89 = sphi 0, %s88
    %s103 = sphi 0, %s89
    %s109 = sphi 0, %s111
    %s112 = sphi 0, %s109
    %s113 = sphi 0, %s112
    %s129 = sphi 0, %s113
  $region4: #{unified_model_forward.8} parent=0 // loop_header_branch
    %13 = sbr.rel (%p11) target = $region8
  $region5: #{unified_model_forward.8} parent=0 // loop_body
    %s15 = ssub.s32 %s10, 1
    %s16 = ssub.s32 %s10, 2
    %s17 = sadd.s32 %s10, 1
    %s18 = ssub.s32 %s10, %s17
    %p19 = scmp.eq.s32.totalorder %s18, 0
    %s21 = sadd.s32 %s20, 1
    %s22 = scalar_select %p19, %s20, %s21
    %p25 = pneg %p19
    %p26 = scmp.eq.s32.totalorder %s10, 1
    %p27 = por %p25, %p26
    %p28 = scmp.ne.s32.totalorder %s20, %s23
    %p29 = scmp.eq.s32.totalorder %s10, 0
    %p30 = por %p28, %p29
    %p31 = scmp.ne.s32.totalorder %s20, %s23
    %p32 = scmp.eq.s32.totalorder %s15, 1
    %p33 = por %p31, %p32
    %p34 = scmp.ne.s32.totalorder %s23, %s24
    %p35 = scmp.eq.s32.totalorder %s15, 0
    %p36 = por %p34, %p35
    %p37 = scmp.ne.s32.totalorder %s23, %s24
    %p38 = scmp.eq.s32.totalorder %s16, 1
    %p39 = por %p37, %p38
    %p41 = scmp.ne.s32.totalorder %s24, %s40
    %p42 = scmp.eq.s32.totalorder %s16, 0
    %p43 = por %p41, %p42
    %s45 = sadd.s32 %s44, 1
    %p48 = scmp.eq.s32.totalorder %s10, 1
    %p49 = scmp.ne.s32.totalorder %s44, %s46
    %p50 = scmp.eq.s32.totalorder %s10, 0
    %p51 = por %p49, %p50
    %p52 = scmp.ne.s32.totalorder %s44, %s46
    %p53 = scmp.eq.s32.totalorder %s15, 1
    %p54 = por %p52, %p53
    %p55 = scmp.ne.s32.totalorder %s46, %s47
    %p56 = scmp.eq.s32.totalorder %s15, 0
    %p57 = por %p55, %p56
    %p58 = scmp.ne.s32.totalorder %s46, %s47
    %p59 = scmp.eq.s32.totalorder %s16, 1
    %p60 = por %p58, %p59
    %p62 = scmp.ne.s32.totalorder %s47, %s61
    %p63 = scmp.eq.s32.totalorder %s16, 0
    %p64 = por %p62, %p63
    %s66 = sadd.s32 %s65, 1
    %p69 = scmp.eq.s32.totalorder %s10, 1
    %p70 = scmp.ne.s32.totalorder %s65, %s67
    %p71 = scmp.eq.s32.totalorder %s10, 0
    %p72 = por %p70, %p71
    %p73 = scmp.ne.s32.totalorder %s65, %s67
    %p74 = scmp.eq.s32.totalorder %s15, 1
    %p75 = por %p73, %p74
    %p76 = scmp.ne.s32.totalorder %s67, %s68
    %p77 = scmp.eq.s32.totalorder %s15, 0
    %p78 = por %p76, %p77
    %p79 = scmp.ne.s32.totalorder %s67, %s68
    %p80 = scmp.eq.s32.totalorder %s16, 1
    %p81 = por %p79, %p80
    %p83 = scmp.ne.s32.totalorder %s68, %s82
    %p84 = scmp.eq.s32.totalorder %s16, 0
    %p85 = por %p83, %p84
    %s87 = sadd.s32 %s86, 1
    %p90 = scmp.eq.s32.totalorder %s10, 1
    %p91 = scmp.ne.s32.totalorder %s86, %s88
    %p92 = scmp.eq.s32.totalorder %s10, 0
    %p93 = por %p91, %p92
    %p94 = scmp.ne.s32.totalorder %s86, %s88
    %p95 = scmp.eq.s32.totalorder %s15, 1
    %p96 = por %p94, %p95
    %p97 = scmp.ne.s32.totalorder %s88, %s89
    %p98 = scmp.eq.s32.totalorder %s15, 0
    %p99 = por %p97, %p98
    %p100 = scmp.ne.s32.totalorder %s88, %s89
    %p101 = scmp.eq.s32.totalorder %s16, 1
    %p102 = por %p100, %p101
    %p104 = scmp.ne.s32.totalorder %s89, %s103
    %p105 = scmp.eq.s32.totalorder %s16, 0
    %p106 = por %p104, %p105
    %s107 = ssub.s32 %s10, %s17
    %p108 = scmp.eq.s32.totalorder %s107, 0
    %s110 = sadd.s32 %s109, 1
    %s111 = scalar_select %p108, %s109, %s110
    %p114 = pneg %p108
    %p115 = scmp.eq.s32.totalorder %s10, 1
    %p116 = por %p114, %p115
    %p117 = scmp.ne.s32.totalorder %s109, %s112
    %p118 = scmp.eq.s32.totalorder %s10, 0
    %p119 = por %p117, %p118
    %p120 = scmp.ne.s32.totalorder %s109, %s112
    %p121 = scmp.eq.s32.totalorder %s15, 1
    %p122 = por %p120, %p121
    %p123 = scmp.ne.s32.totalorder %s112, %s113
    %p124 = scmp.eq.s32.totalorder %s15, 0
    %p125 = por %p123, %p124
    %p126 = scmp.ne.s32.totalorder %s112, %s113
    %p127 = scmp.eq.s32.totalorder %s16, 1
    %p128 = por %p126, %p127
    %p130 = scmp.ne.s32.totalorder %s113, %s129
    %p131 = scmp.eq.s32.totalorder %s16, 0
    %p132 = por %p130, %p131
    %p133 = scmp.le.s32.totalorder 1, %s10
    %p134 = scmp.lt.s32.totalorder %s10, 3
    %p135 = pnand %p133, %p134
    %p136 = pneg %p135
    // Predicated region
    $region9: #{unified_model_forward.8} parent=5 // pred_check
      _
    $region10: #{unified_model_forward.8} parent=5 // pred_check_branch
      %138 = sbr.rel (%p135) target = $region12
    $region11: #{unified_model_forward.8} parent=5 // pred_region
      %s139 = ssub.s32 %s10, 1
      // Predicated region
      $region13: #{unified_model_forward.8} parent=11 // pred_check
        %p140 = pneg %p57
      $region14: #{unified_model_forward.8} parent=11 // pred_check_branch
        %142 = sbr.rel (%p140) target = $region16
      $region15: #{unified_model_forward.8} parent=11 // pred_region
        _
      $region16: #{unified_model_forward.8} parent=11 // pred_fallthru
        _
      // Predicated region
      $region17: #{unified_model_forward.8} parent=11 // pred_check
        %p143 = pneg %p78
      $region18: #{unified_model_forward.8} parent=11 // pred_check_branch
        %145 = sbr.rel (%p143) target = $region20
      $region19: #{unified_model_forward.8} parent=11 // pred_region
        _
      $region20: #{unified_model_forward.8} parent=11 // pred_fallthru
        _
      // Predicated region
      $region21: #{unified_model_forward.8} parent=11 // pred_check
        %p146 = pneg %p99
      $region22: #{unified_model_forward.8} parent=11 // pred_check_branch
        %148 = sbr.rel (%p146) target = $region24
      $region23: #{unified_model_forward.8} parent=11 // pred_region
        _
      $region24: #{unified_model_forward.8} parent=11 // pred_fallthru
        _
    $region12: #{unified_model_forward.8} parent=5 // pred_fallthru
      _
    %p149 = scmp.lt.s32.totalorder %s10, 2
    // Predicated region
    $region25: #{unified_model_forward.8} parent=5 // pred_check
      %p150 = pneg %p149
    $region26: #{unified_model_forward.8} parent=5 // pred_check_branch
      %152 = sbr.rel (%p150) target = $region28
    $region27: #{unified_model_forward.8} parent=5 // pred_region
      // Predicated region
      $region29: #{unified_model_forward.8} parent=27 // pred_check
        %p153 = pneg %p30
      $region30: #{unified_model_forward.8} parent=27 // pred_check_branch
        %155 = sbr.rel (%p153) target = $region32
      $region31: #{unified_model_forward.8} parent=27 // pred_region
        %p156 = scmp.lt.s32.totalorder %s10, 1
        %s157 = scalar_select %p156, %s10, 1
        %s158 = smul.addr %s157, 2
        %s159 = smul.addr %s158, 8
        %s160 = scalar_lea.vmem %s0, %s159
      $region32: #{unified_model_forward.8} parent=27 // pred_fallthru
        _
    $region28: #{unified_model_forward.8} parent=5 // pred_fallthru
      _
    %p161 = scmp.le.s32.totalorder 1, %s10
    %p162 = scmp.lt.s32.totalorder %s10, 3
    %p163 = pnand %p161, %p162
    %p164 = pneg %p163
    // Predicated region
    $region33: #{unified_model_forward.8} parent=5 // pred_check
      _
    $region34: #{unified_model_forward.8} parent=5 // pred_check_branch
      %166 = sbr.rel (%p163) target = $region36
    $region35: #{unified_model_forward.8} parent=5 // pred_region
      %s167 = ssub.s32 %s10, 1
      %p168 = scmp.lt.s32.totalorder %s15, 1
      %s169 = scalar_select %p168, %s15, 1
      %s170 = smul.addr %s169, 2
      %s171 = smul.addr %s170, 8
      %s172 = scalar_lea.vmem %s0, %s171
      %p173 = pneg %p36
      %p174 = pneg %p33
      %p175 = pneg %p57
      %p176 = pneg %p54
      %p177 = pneg %p78
      %p178 = pneg %p75
      %p179 = pneg %p99
      %p180 = pneg %p96
      %p181 = pneg %p125
      %p182 = pneg %p122
      %p183 = scmp.lt.s32.totalorder %s15, 1
      %s184 = scalar_select %p183, %s15, 1
      %s185 = smul.addr %s184, 2
      %s186 = smul.addr %s185, 8
      %s187 = scalar_lea.vmem %s4, %s186
      %p188 = scmp.lt.s32.totalorder %s15, 1
      %s189 = scalar_select %p188, %s15, 1
      %s190 = smul.addr %s189, 2
      %s191 = smul.addr %s190, 8
      %s192 = scalar_lea.vmem %s0, %s191
      %p193 = scmp.lt.s32.totalorder %s15, 1
      %s194 = scalar_select %p193, %s15, 1
      %s195 = smul.addr %s194, 2
      %s196 = smul.addr %s195, 8
      %s197 = scalar_lea.vmem %s4, %s196
      %v198 = vld [vmem:[%s192] sm:$0xff]
      %v199 = vld [vmem:[%s192 + $0x8] sm:$0xff]
      %v200 = vld [vmem:[%s1] sm:$0xff]
      %v201 = vld [vmem:[%s1 + $0x8] sm:$0xff]
      %v202 = vld [vmem:[%s1 + $0x10] sm:$0xff]
      %v203 = vld [vmem:[%s1 + $0x18] sm:$0xff]
      %v204 = vld [vmem:[%s1 + $0x20] sm:$0xff]
      %v205 = vld [vmem:[%s1 + $0x28] sm:$0xff]
      %v206 = vld [vmem:[%s2] sm:$0x1]
      %v208 = vlaneseq
      %v209 = vshrl.u32 %v208, 7
      %v210 = vsub.s32 0, %v209
      %v211 = vrot.slane %v206, %v210
      %vm213 = vcmask 392192
      %v215 = vsel %vm213, %v198, 0
      %v218 = vsel %vm213, %v199, 0
      %220 = vmatprep.subr.mxu0 0.0
      %221 = vmatpush1.msra.mxu0 %v200
      %222 = vmatprep.subr.mxu0 0.0
      %223 = vmatpush1.msra.mxu0 %v201
      %224 = vmatprep.subr.mxu0 0.0
      %225 = vmatpush1.msra.mxu0 %v202
      %226 = vmatprep.subr.mxu0 0.0
      %227 = vmatpush1.msra.mxu0 %v203
      %228 = vmatprep.subr.mxu0 0.0
      %229 = vmatpush1.msra.mxu0 %v204
      %230 = vmatprep.subr.mxu0 0.0
      %231 = vmatpush1.msra.mxu0 %v205
      %232 = vmatprep.subr.mxu0 0.0
      %233 = vmatpush1.msra.mxu0 0.0
      %234 = vmatprep.subr.mxu0 0.0
      %235 = vmatpush1.msra.mxu0 0.0
      %236 = vmatprep.subr.mxu0 0.0
      %237 = vmatpush1.msra.mxu0 0.0
      %238 = vmatprep.subr.mxu0 0.0
      %239 = vmatpush1.msra.mxu0 0.0
      %240 = vmatprep.subr.mxu0 0.0
      %241 = vmatpush1.msra.mxu0 0.0
      %242 = vmatprep.subr.mxu0 0.0
      %243 = vmatpush1.msra.mxu0 0.0
      %244 = vmatprep.subr.mxu0 0.0
      %245 = vmatpush1.msra.mxu0 0.0
      %246 = vmatprep.subr.mxu0 0.0
      %247 = vmatpush1.msra.mxu0 0.0
      %248 = vmatprep.subr.mxu0 0.0
      %249 = vmatpush1.msra.mxu0 0.0
      %250 = vmatprep.subr.mxu0 0.0
      %251 = vmatpush1.msra.mxu0 0.0
      %252 = vmatprep.subr.mxu0 0.0
      %253 = vmatpush1.msra.mxu0 0.0
      %254 = vmatprep.subr.mxu0 0.0
      %255 = vmatpush1.msra.mxu0 0.0
      %256 = vmatprep.subr.mxu0 0.0
      %257 = vmatpush1.msra.mxu0 0.0
      %258 = vmatprep.subr.mxu0 0.0
      %259 = vmatpush1.msra.mxu0 0.0
      %260 = vmatprep.subr.mxu0 0.0
      %261 = vmatpush1.msra.mxu0 0.0
      %262 = vmatprep.subr.mxu0 0.0
      %263 = vmatpush1.msra.mxu0 0.0
      %264 = vmatprep.subr.mxu0 0.0
      %265 = vmatpush1.msra.mxu0 0.0
      %266 = vmatprep.subr.mxu0 0.0
      %267 = vmatpush1.msra.mxu0 0.0
      %268 = vmatprep.subr.mxu0 0.0
      %269 = vmatpush1.msra.mxu0 0.0
      %270 = vmatprep.subr.mxu0 0.0
      %271 = vmatpush1.msra.mxu0 0.0
      %272 = vmatprep.subr.mxu0 0.0
      %273 = vmatpush1.msra.mxu0 0.0
      %274 = vmatprep.subr.mxu0 0.0
      %275 = vmatpush1.msra.mxu0 0.0
      %276 = vmatprep.subr.mxu0 0.0
      %277 = vmatpush1.msra.mxu0 0.0
      %278 = vmatprep.subr.mxu0 0.0
      %279 = vmatpush1.msra.mxu0 0.0
      %280 = vmatprep.subr.mxu0 0.0
      %281 = vmatpush1.msra.mxu0 0.0
      %282 = vmatprep.subr.mxu0 0.0
      %283 = vmatpush1.msra.mxu0 0.0
      %284 = vmatprep.mubr.f32.mxu0 0.0
      %285 = vmatmul.mubr.f32.gmra.mrb[0].mxu0 %v215
      %v286 = vpop.f32.mrb[0].mxu0
      %v287 = vadd.f32 %v211, %v286
      %v288 = vpop.f32.mrb[0].mxu0
      %289 = vmatprep.mubr.f32.mxu0 0.0
      %290 = vmatmul.mubr.f32.gmra.mrb[0].mxu0 %v218
      %v291 = vpop.f32.mrb[0].mxu0
      %v292 = vadd.f32 %v211, %v291
      %v293 = vpop.f32.mrb[0].mxu0
      %294 = vdwg.mxu0
      %v295 = vld [vmem:[%s3] sm:$0xff]
      %v296 = vld [vmem:[%s3 + $0x8] sm:$0xff]
      %v297 = vadd.f32 %v287, %v295
      %v298 = vadd.f32 %v292, %v296
      %299 = vst [vmem:[%s197] sm:$0xff] %v297
      %300 = vst [vmem:[%s197 + $0x8] sm:$0xff] %v298
      %p301 = scmp.lt.s32.totalorder %s15, 1
      %s302 = scalar_select %p301, %s15, 1
      %s303 = smul.addr %s302, 2
      %s304 = smul.addr %s303, 8
      %s305 = scalar_lea.vmem %s4, %s304
      // Predicated region
      $region37: #{unified_model_forward.8} parent=35 // pred_check
        %p306 = pneg %p122
      $region38: #{unified_model_forward.8} parent=35 // pred_check_branch
        %308 = sbr.rel (%p306) target = $region40
      $region39: #{unified_model_forward.8} parent=35 // pred_region
        _
      $region40: #{unified_model_forward.8} parent=35 // pred_fallthru
        _
    $region36: #{unified_model_forward.8} parent=5 // pred_fallthru
      _
    %p309 = scmp.le.s32.totalorder 2, %s10
    // Predicated region
    $region41: #{unified_model_forward.8} parent=5 // pred_check
      %p310 = pneg %p309
    $region42: #{unified_model_forward.8} parent=5 // pred_check_branch
      %312 = sbr.rel (%p310) target = $region44
    $region43: #{unified_model_forward.8} parent=5 // pred_region
      %s313 = ssub.s32 %s10, 2
      // Predicated region
      $region45: #{unified_model_forward.8} parent=43 // pred_check
        %p314 = pneg %p128
      $region46: #{unified_model_forward.8} parent=43 // pred_check_branch
        %316 = sbr.rel (%p314) target = $region48
      $region47: #{unified_model_forward.8} parent=43 // pred_region
        %p317 = scmp.lt.s32.totalorder %s16, 1
        %s318 = scalar_select %p317, %s16, 1
        %s319 = smul.addr %s318, 2
        %s320 = smul.addr %s319, 8
        %s321 = scalar_lea.vmem %s4, %s320
      $region48: #{unified_model_forward.8} parent=43 // pred_fallthru
        _
    $region44: #{unified_model_forward.8} parent=5 // pred_fallthru
      _
  $region6: #{unified_model_forward.8} parent=0 // loop_footer
    %s14 = sadd.s32 1, %s10
  $region7: #{unified_model_forward.8} parent=0 // loop_footer_branch
    %9 = sbr.rel target = $region3
  $region8: #{unified_model_forward.8} parent=0 // loop_exit
    _

// kernel: unified_model_forward.11
$region0: #{unified_model_forward.11}
  #allocation0 [shape = 'u32[]', space=smem, size = 0x4, offset = 0x4, fixed_abs, tag = 'smem constant byte address 0x4 - core index']
  #allocation1 [shape = 'u32[144,128]{1,0:T(1,128)}', space=vmem, size = 0x12000, scoped, tag = 'internal scratch']
  %s0 = inlined_call_operand.vmem [shape: f32[2,5,128], index: 0, kind: input, shape index: {}]
  %s1 = inlined_call_operand.vmem [shape: f32[128,128], index: 1, kind: input, shape index: {}]
  %s2 = inlined_call_operand.vmem [shape: f32[1,128], index: 2, kind: input, shape index: {}]
  %s3 = inlined_call_operand.vmem [shape: f32[2,5,128], index: 3, kind: output, shape index: {}]
  %s4 = sld [smem:[#allocation0]]
  $region45: #{unified_model_forward.11} parent=0
    _
  %s6 = ssub.s32 1, %s4
  %s7 = scalar_select 0, %s6, %s4
  loop: start=0, step=1, limit=4
  $region2: #{unified_model_forward.11} parent=0 // loop_pre_header
    _
  $region3: #{unified_model_forward.11} parent=0 // loop_header
    %s9 = sphi 0, %s13
    %p10 = scmp.ge.s32.totalorder %s9, 4
    %s19 = sphi 0, %s21
    %s22 = sphi 0, %s19
    %s23 = sphi 0, %s22
    %s39 = sphi 0, %s23
    %s43 = sphi 0, %s43
    %s45 = sphi 0, %s43
    %s46 = sphi 0, %s45
    %s60 = sphi 0, %s46
    %s64 = sphi 0, %s64
    %s66 = sphi 0, %s64
    %s67 = sphi 0, %s66
    %s81 = sphi 0, %s67
    %s87 = sphi 0, %s89
    %s90 = sphi 0, %s87
    %s91 = sphi 0, %s90
    %s107 = sphi 0, %s91
  $region4: #{unified_model_forward.11} parent=0 // loop_header_branch
    %12 = sbr.rel (%p10) target = $region8
  $region5: #{unified_model_forward.11} parent=0 // loop_body
    %s14 = ssub.s32 %s9, 1
    %s15 = ssub.s32 %s9, 2
    %s16 = sadd.s32 %s9, 1
    %s17 = ssub.s32 %s9, %s16
    %p18 = scmp.eq.s32.totalorder %s17, 0
    %s20 = sadd.s32 %s19, 1
    %s21 = scalar_select %p18, %s19, %s20
    %p24 = pneg %p18
    %p25 = scmp.eq.s32.totalorder %s9, 1
    %p26 = por %p24, %p25
    %p27 = scmp.ne.s32.totalorder %s19, %s22
    %p28 = scmp.eq.s32.totalorder %s9, 0
    %p29 = por %p27, %p28
    %p30 = scmp.ne.s32.totalorder %s19, %s22
    %p31 = scmp.eq.s32.totalorder %s14, 1
    %p32 = por %p30, %p31
    %p33 = scmp.ne.s32.totalorder %s22, %s23
    %p34 = scmp.eq.s32.totalorder %s14, 0
    %p35 = por %p33, %p34
    %p36 = scmp.ne.s32.totalorder %s22, %s23
    %p37 = scmp.eq.s32.totalorder %s15, 1
    %p38 = por %p36, %p37
    %p40 = scmp.ne.s32.totalorder %s23, %s39
    %p41 = scmp.eq.s32.totalorder %s15, 0
    %p42 = por %p40, %p41
    %s44 = sadd.s32 %s43, 1
    %p47 = scmp.eq.s32.totalorder %s9, 1
    %p48 = scmp.ne.s32.totalorder %s43, %s45
    %p49 = scmp.eq.s32.totalorder %s9, 0
    %p50 = por %p48, %p49
    %p51 = scmp.ne.s32.totalorder %s43, %s45
    %p52 = scmp.eq.s32.totalorder %s14, 1
    %p53 = por %p51, %p52
    %p54 = scmp.ne.s32.totalorder %s45, %s46
    %p55 = scmp.eq.s32.totalorder %s14, 0
    %p56 = por %p54, %p55
    %p57 = scmp.ne.s32.totalorder %s45, %s46
    %p58 = scmp.eq.s32.totalorder %s15, 1
    %p59 = por %p57, %p58
    %p61 = scmp.ne.s32.totalorder %s46, %s60
    %p62 = scmp.eq.s32.totalorder %s15, 0
    %p63 = por %p61, %p62
    %s65 = sadd.s32 %s64, 1
    %p68 = scmp.eq.s32.totalorder %s9, 1
    %p69 = scmp.ne.s32.totalorder %s64, %s66
    %p70 = scmp.eq.s32.totalorder %s9, 0
    %p71 = por %p69, %p70
    %p72 = scmp.ne.s32.totalorder %s64, %s66
    %p73 = scmp.eq.s32.totalorder %s14, 1
    %p74 = por %p72, %p73
    %p75 = scmp.ne.s32.totalorder %s66, %s67
    %p76 = scmp.eq.s32.totalorder %s14, 0
    %p77 = por %p75, %p76
    %p78 = scmp.ne.s32.totalorder %s66, %s67
    %p79 = scmp.eq.s32.totalorder %s15, 1
    %p80 = por %p78, %p79
    %p82 = scmp.ne.s32.totalorder %s67, %s81
    %p83 = scmp.eq.s32.totalorder %s15, 0
    %p84 = por %p82, %p83
    %s85 = ssub.s32 %s9, %s16
    %p86 = scmp.eq.s32.totalorder %s85, 0
    %s88 = sadd.s32 %s87, 1
    %s89 = scalar_select %p86, %s87, %s88
    %p92 = pneg %p86
    %p93 = scmp.eq.s32.totalorder %s9, 1
    %p94 = por %p92, %p93
    %p95 = scmp.ne.s32.totalorder %s87, %s90
    %p96 = scmp.eq.s32.totalorder %s9, 0
    %p97 = por %p95, %p96
    %p98 = scmp.ne.s32.totalorder %s87, %s90
    %p99 = scmp.eq.s32.totalorder %s14, 1
    %p100 = por %p98, %p99
    %p101 = scmp.ne.s32.totalorder %s90, %s91
    %p102 = scmp.eq.s32.totalorder %s14, 0
    %p103 = por %p101, %p102
    %p104 = scmp.ne.s32.totalorder %s90, %s91
    %p105 = scmp.eq.s32.totalorder %s15, 1
    %p106 = por %p104, %p105
    %p108 = scmp.ne.s32.totalorder %s91, %s107
    %p109 = scmp.eq.s32.totalorder %s15, 0
    %p110 = por %p108, %p109
    %p111 = scmp.le.s32.totalorder 1, %s9
    %p112 = scmp.lt.s32.totalorder %s9, 3
    %p113 = pnand %p111, %p112
    %p114 = pneg %p113
    // Predicated region
    $region9: #{unified_model_forward.11} parent=5 // pred_check
      _
    $region10: #{unified_model_forward.11} parent=5 // pred_check_branch
      %116 = sbr.rel (%p113) target = $region12
    $region11: #{unified_model_forward.11} parent=5 // pred_region
      %s117 = ssub.s32 %s9, 1
      // Predicated region
      $region13: #{unified_model_forward.11} parent=11 // pred_check
        %p118 = pneg %p56
      $region14: #{unified_model_forward.11} parent=11 // pred_check_branch
        %120 = sbr.rel (%p118) target = $region16
      $region15: #{unified_model_forward.11} parent=11 // pred_region
        _
      $region16: #{unified_model_forward.11} parent=11 // pred_fallthru
        _
      // Predicated region
      $region17: #{unified_model_forward.11} parent=11 // pred_check
        %p121 = pneg %p77
      $region18: #{unified_model_forward.11} parent=11 // pred_check_branch
        %123 = sbr.rel (%p121) target = $region20
      $region19: #{unified_model_forward.11} parent=11 // pred_region
        _
      $region20: #{unified_model_forward.11} parent=11 // pred_fallthru
        _
    $region12: #{unified_model_forward.11} parent=5 // pred_fallthru
      _
    %p124 = scmp.lt.s32.totalorder %s9, 2
    // Predicated region
    $region21: #{unified_model_forward.11} parent=5 // pred_check
      %p125 = pneg %p124
    $region22: #{unified_model_forward.11} parent=5 // pred_check_branch
      %127 = sbr.rel (%p125) target = $region24
    $region23: #{unified_model_forward.11} parent=5 // pred_region
      // Predicated region
      $region25: #{unified_model_forward.11} parent=23 // pred_check
        %p128 = pneg %p29
      $region26: #{unified_model_forward.11} parent=23 // pred_check_branch
        %130 = sbr.rel (%p128) target = $region28
      $region27: #{unified_model_forward.11} parent=23 // pred_region
        %p131 = scmp.lt.s32.totalorder %s9, 1
        %s132 = scalar_select %p131, %s9, 1
        %s133 = smul.addr %s132, 8
        %s134 = scalar_lea.vmem %s0, %s133
      $region28: #{unified_model_forward.11} parent=23 // pred_fallthru
        _
    $region24: #{unified_model_forward.11} parent=5 // pred_fallthru
      _
    %p135 = scmp.le.s32.totalorder 1, %s9
    %p136 = scmp.lt.s32.totalorder %s9, 3
    %p137 = pnand %p135, %p136
    %p138 = pneg %p137
    // Predicated region
    $region29: #{unified_model_forward.11} parent=5 // pred_check
      _
    $region30: #{unified_model_forward.11} parent=5 // pred_check_branch
      %140 = sbr.rel (%p137) target = $region32
    $region31: #{unified_model_forward.11} parent=5 // pred_region
      %s141 = ssub.s32 %s9, 1
      %p142 = scmp.lt.s32.totalorder %s14, 1
      %s143 = scalar_select %p142, %s14, 1
      %s144 = smul.addr %s143, 8
      %s145 = scalar_lea.vmem %s0, %s144
      %p146 = pneg %p35
      %p147 = pneg %p32
      %p148 = pneg %p56
      %p149 = pneg %p53
      %p150 = pneg %p77
      %p151 = pneg %p74
      %p152 = pneg %p103
      %p153 = pneg %p100
      %p154 = scmp.lt.s32.totalorder %s14, 1
      %s155 = scalar_select %p154, %s14, 1
      %s156 = smul.addr %s155, 8
      %s157 = scalar_lea.vmem %s3, %s156
      %p158 = scmp.lt.s32.totalorder %s14, 1
      %s159 = scalar_select %p158, %s14, 1
      %s160 = smul.addr %s159, 8
      %s161 = scalar_lea.vmem %s0, %s160
      %p162 = scmp.lt.s32.totalorder %s14, 1
      %s163 = scalar_select %p162, %s14, 1
      %s164 = smul.addr %s163, 8
      %s165 = scalar_lea.vmem %s3, %s164
      %v166 = vld [vmem:[%s161] sm:$0x1f]
      %v167 = vld [vmem:[%s1] sm:$0xff]
      %v168 = vld [vmem:[%s1 + $0x8] sm:$0xff]
      %v169 = vld [vmem:[%s1 + $0x10] sm:$0xff]
      %v170 = vld [vmem:[%s1 + $0x18] sm:$0xff]
      %v171 = vld [vmem:[%s1 + $0x20] sm:$0xff]
      %v172 = vld [vmem:[%s1 + $0x28] sm:$0xff]
      %v173 = vld [vmem:[%s1 + $0x30] sm:$0xff]
      %v174 = vld [vmem:[%s1 + $0x38] sm:$0xff]
      %v175 = vld [vmem:[%s1 + $0x40] sm:$0xff]
      %v176 = vld [vmem:[%s1 + $0x48] sm:$0xff]
      %v177 = vld [vmem:[%s1 + $0x50] sm:$0xff]
      %v178 = vld [vmem:[%s1 + $0x58] sm:$0xff]
      %v179 = vld [vmem:[%s1 + $0x60] sm:$0xff]
      %v180 = vld [vmem:[%s1 + $0x68] sm:$0xff]
      %v181 = vld [vmem:[%s1 + $0x70] sm:$0xff]
      %v182 = vld [vmem:[%s1 + $0x78] sm:$0xff]
      %v183 = vld [vmem:[%s2] sm:$0x1]
      %v185 = vlaneseq
      %v186 = vshrl.u32 %v185, 7
      %v187 = vsub.s32 0, %v186
      %v188 = vrot.slane %v183, %v187
      %190 = vmatprep.subr.mxu0 0.0
      %191 = vmatpush1.msra.mxu0 %v167
      %192 = vmatprep.subr.mxu0 0.0
      %193 = vmatpush1.msra.mxu0 %v168
      %194 = vmatprep.subr.mxu0 0.0
      %195 = vmatpush1.msra.mxu0 %v169
      %196 = vmatprep.subr.mxu0 0.0
      %197 = vmatpush1.msra.mxu0 %v170
      %198 = vmatprep.subr.mxu0 0.0
      %199 = vmatpush1.msra.mxu0 %v171
      %200 = vmatprep.subr.mxu0 0.0
      %201 = vmatpush1.msra.mxu0 %v172
      %202 = vmatprep.subr.mxu0 0.0
      %203 = vmatpush1.msra.mxu0 %v173
      %204 = vmatprep.subr.mxu0 0.0
      %205 = vmatpush1.msra.mxu0 %v174
      %206 = vmatprep.subr.mxu0 0.0
      %207 = vmatpush1.msra.mxu0 %v175
      %208 = vmatprep.subr.mxu0 0.0
      %209 = vmatpush1.msra.mxu0 %v176
      %210 = vmatprep.subr.mxu0 0.0
      %211 = vmatpush1.msra.mxu0 %v177
      %212 = vmatprep.subr.mxu0 0.0
      %213 = vmatpush1.msra.mxu0 %v178
      %214 = vmatprep.subr.mxu0 0.0
      %215 = vmatpush1.msra.mxu0 %v179
      %216 = vmatprep.subr.mxu0 0.0
      %217 = vmatpush1.msra.mxu0 %v180
      %218 = vmatprep.subr.mxu0 0.0
      %219 = vmatpush1.msra.mxu0 %v181
      %220 = vmatprep.subr.mxu0 0.0
      %221 = vmatpush1.msra.mxu0 %v182
      %222 = vmatprep.subr.mxu0 0.0
      %223 = vmatpush1.msra.mxu0 0.0
      %224 = vmatprep.subr.mxu0 0.0
      %225 = vmatpush1.msra.mxu0 0.0
      %226 = vmatprep.subr.mxu0 0.0
      %227 = vmatpush1.msra.mxu0 0.0
      %228 = vmatprep.subr.mxu0 0.0
      %229 = vmatpush1.msra.mxu0 0.0
      %230 = vmatprep.subr.mxu0 0.0
      %231 = vmatpush1.msra.mxu0 0.0
      %232 = vmatprep.subr.mxu0 0.0
      %233 = vmatpush1.msra.mxu0 0.0
      %234 = vmatprep.subr.mxu0 0.0
      %235 = vmatpush1.msra.mxu0 0.0
      %236 = vmatprep.subr.mxu0 0.0
      %237 = vmatpush1.msra.mxu0 0.0
      %238 = vmatprep.subr.mxu0 0.0
      %239 = vmatpush1.msra.mxu0 0.0
      %240 = vmatprep.subr.mxu0 0.0
      %241 = vmatpush1.msra.mxu0 0.0
      %242 = vmatprep.subr.mxu0 0.0
      %243 = vmatpush1.msra.mxu0 0.0
      %244 = vmatprep.subr.mxu0 0.0
      %245 = vmatpush1.msra.mxu0 0.0
      %246 = vmatprep.subr.mxu0 0.0
      %247 = vmatpush1.msra.mxu0 0.0
      %248 = vmatprep.subr.mxu0 0.0
      %249 = vmatpush1.msra.mxu0 0.0
      %250 = vmatprep.subr.mxu0 0.0
      %251 = vmatpush1.msra.mxu0 0.0
      %252 = vmatprep.subr.mxu0 0.0
      %253 = vmatpush1.msra.mxu0 0.0
      %254 = vmatprep.mubr.f32.mxu0 0.0
      %255 = vmatmul.mubr.f32.gmra.mrb[0].mxu0 %v166
      %v256 = vpop.f32.mrb[0].mxu0
      %v257 = vadd.f32 %v188, %v256
      %v258 = vpop.f32.mrb[0].mxu0
      %259 = vdwg.mxu0
      %260 = vst [vmem:[%s165] sm:$0x1f] %v257
      %p261 = scmp.lt.s32.totalorder %s14, 1
      %s262 = scalar_select %p261, %s14, 1
      %s263 = smul.addr %s262, 8
      %s264 = scalar_lea.vmem %s3, %s263
      // Predicated region
      $region33: #{unified_model_forward.11} parent=31 // pred_check
        %p265 = pneg %p100
      $region34: #{unified_model_forward.11} parent=31 // pred_check_branch
        %267 = sbr.rel (%p265) target = $region36
      $region35: #{unified_model_forward.11} parent=31 // pred_region
        _
      $region36: #{unified_model_forward.11} parent=31 // pred_fallthru
        _
    $region32: #{unified_model_forward.11} parent=5 // pred_fallthru
      _
    %p268 = scmp.le.s32.totalorder 2, %s9
    // Predicated region
    $region37: #{unified_model_forward.11} parent=5 // pred_check
      %p269 = pneg %p268
    $region38: #{unified_model_forward.11} parent=5 // pred_check_branch
      %271 = sbr.rel (%p269) target = $region40
    $region39: #{unified_model_forward.11} parent=5 // pred_region
      %s272 = ssub.s32 %s9, 2
      // Predicated region
      $region41: #{unified_model_forward.11} parent=39 // pred_check
        %p273 = pneg %p106
      $region42: #{unified_model_forward.11} parent=39 // pred_check_branch
        %275 = sbr.rel (%p273) target = $region44
      $region43: #{unified_model_forward.11} parent=39 // pred_region
        %p276 = scmp.lt.s32.totalorder %s15, 1
        %s277 = scalar_select %p276, %s15, 1
        %s278 = smul.addr %s277, 8
        %s279 = scalar_lea.vmem %s3, %s278
      $region44: #{unified_model_forward.11} parent=39 // pred_fallthru
        _
    $region40: #{unified_model_forward.11} parent=5 // pred_fallthru
      _
  $region6: #{unified_model_forward.11} parent=0 // loop_footer
    %s13 = sadd.s32 1, %s9
  $region7: #{unified_model_forward.11} parent=0 // loop_footer_branch
    %8 = sbr.rel target = $region3
  $region8: #{unified_model_forward.11} parent=0 // loop_exit
    _

// kernel: unified_model_forward.9
$region0: #{unified_model_forward.9}
  #allocation0 [shape = 'u32[]', space=smem, size = 0x4, offset = 0x4, fixed_abs, tag = 'smem constant byte address 0x4 - core index']
  #allocation1 [shape = 'u32[144,128]{1,0:T(1,128)}', space=vmem, size = 0x12000, scoped, tag = 'internal scratch']
  %s0 = inlined_call_operand.vmem [shape: f32[2,8,128], index: 0, kind: input, shape index: {}]
  %s1 = inlined_call_operand.vmem [shape: f32[1,128], index: 1, kind: input, shape index: {}]
  %s2 = inlined_call_operand.vmem [shape: f32[1,128], index: 2, kind: input, shape index: {}]
  %s3 = inlined_call_operand.vmem [shape: f32[128,384], index: 3, kind: input, shape index: {}]
  %s4 = inlined_call_operand.vmem [shape: f32[1,384], index: 4, kind: input, shape index: {}]
  %s5 = inlined_call_operand.vmem [shape: f32[128,128], index: 5, kind: input, shape index: {}]
  %s6 = inlined_call_operand.vmem [shape: f32[1,128], index: 6, kind: input, shape index: {}]
  %s7 = inlined_call_operand.vmem [shape: f32[1,128], index: 7, kind: input, shape index: {}]
  %s8 = inlined_call_operand.vmem [shape: f32[1,128], index: 8, kind: input, shape index: {}]
  %s9 = inlined_call_operand.vmem [shape: f32[1,128], index: 9, kind: input, shape index: {}]
  %s10 = inlined_call_operand.vmem [shape: f32[128,256], index: 10, kind: input, shape index: {}]
  %s11 = inlined_call_operand.vmem [shape: f32[1,256], index: 11, kind: input, shape index: {}]
  %s12 = inlined_call_operand.vmem [shape: f32[256,128], index: 12, kind: input, shape index: {}]
  %s13 = inlined_call_operand.vmem [shape: f32[1,128], index: 13, kind: input, shape index: {}]
  %s14 = inlined_call_operand.vmem [shape: f32[1,128], index: 14, kind: input, shape index: {}]
  %s15 = inlined_call_operand.vmem [shape: f32[2,8,128], index: 15, kind: output, shape index: {}]
  %s16 = sld [smem:[#allocation0]]
  $region93: #{unified_model_forward.9} parent=0
    _
  %s18 = ssub.s32 1, %s16
  %s19 = scalar_select 0, %s18, %s16
  loop: start=0, step=1, limit=4
  $region2: #{unified_model_forward.9} parent=0 // loop_pre_header
    _
  $region3: #{unified_model_forward.9} parent=0 // loop_header
    %s21 = sphi 0, %s25
    %p22 = scmp.ge.s32.totalorder %s21, 4
    %s31 = sphi 0, %s33
    %s34 = sphi 0, %s31
    %s35 = sphi 0, %s34
    %s51 = sphi 0, %s35
    %s55 = sphi 0, %s55
    %s57 = sphi 0, %s55
    %s58 = sphi 0, %s57
    %s72 = sphi 0, %s58
    %s76 = sphi 0, %s76
    %s78 = sphi 0, %s76
    %s79 = sphi 0, %s78
    %s93 = sphi 0, %s79
    %s97 = sphi 0, %s97
    %s99 = sphi 0, %s97
    %s100 = sphi 0, %s99
    %s114 = sphi 0, %s100
    %s118 = sphi 0, %s118
    %s120 = sphi 0, %s118
    %s121 = sphi 0, %s120
    %s135 = sphi 0, %s121
    %s139 = sphi 0, %s139
    %s141 = sphi 0, %s139
    %s142 = sphi 0, %s141
    %s156 = sphi 0, %s142
    %s160 = sphi 0, %s160
    %s162 = sphi 0, %s160
    %s163 = sphi 0, %s162
    %s177 = sphi 0, %s163
    %s181 = sphi 0, %s181
    %s183 = sphi 0, %s181
    %s184 = sphi 0, %s183
    %s198 = sphi 0, %s184
    %s202 = sphi 0, %s202
    %s204 = sphi 0, %s202
    %s205 = sphi 0, %s204
    %s219 = sphi 0, %s205
    %s223 = sphi 0, %s223
    %s225 = sphi 0, %s223
    %s226 = sphi 0, %s225
    %s240 = sphi 0, %s226
    %s244 = sphi 0, %s244
    %s246 = sphi 0, %s244
    %s247 = sphi 0, %s246
    %s261 = sphi 0, %s247
    %s265 = sphi 0, %s265
    %s267 = sphi 0, %s265
    %s268 = sphi 0, %s267
    %s282 = sphi 0, %s268
    %s286 = sphi 0, %s286
    %s288 = sphi 0, %s286
    %s289 = sphi 0, %s288
    %s303 = sphi 0, %s289
    %s307 = sphi 0, %s307
    %s309 = sphi 0, %s307
    %s310 = sphi 0, %s309
    %s324 = sphi 0, %s310
    %s328 = sphi 0, %s328
    %s330 = sphi 0, %s328
    %s331 = sphi 0, %s330
    %s345 = sphi 0, %s331
    %s351 = sphi 0, %s353
    %s354 = sphi 0, %s351
    %s355 = sphi 0, %s354
    %s371 = sphi 0, %s355
  $region4: #{unified_model_forward.9} parent=0 // loop_header_branch
    %24 = sbr.rel (%p22) target = $region8
  $region5: #{unified_model_forward.9} parent=0 // loop_body
    %s26 = ssub.s32 %s21, 1
    %s27 = ssub.s32 %s21, 2
    %s28 = sadd.s32 %s21, 1
    %s29 = ssub.s32 %s21, %s28
    %p30 = scmp.eq.s32.totalorder %s29, 0
    %s32 = sadd.s32 %s31, 1
    %s33 = scalar_select %p30, %s31, %s32
    %p36 = pneg %p30
    %p37 = scmp.eq.s32.totalorder %s21, 1
    %p38 = por %p36, %p37
    %p39 = scmp.ne.s32.totalorder %s31, %s34
    %p40 = scmp.eq.s32.totalorder %s21, 0
    %p41 = por %p39, %p40
    %p42 = scmp.ne.s32.totalorder %s31, %s34
    %p43 = scmp.eq.s32.totalorder %s26, 1
    %p44 = por %p42, %p43
    %p45 = scmp.ne.s32.totalorder %s34, %s35
    %p46 = scmp.eq.s32.totalorder %s26, 0
    %p47 = por %p45, %p46
    %p48 = scmp.ne.s32.totalorder %s34, %s35
    %p49 = scmp.eq.s32.totalorder %s27, 1
    %p50 = por %p48, %p49
    %p52 = scmp.ne.s32.totalorder %s35, %s51
    %p53 = scmp.eq.s32.totalorder %s27, 0
    %p54 = por %p52, %p53
    %s56 = sadd.s32 %s55, 1
    %p59 = scmp.eq.s32.totalorder %s21, 1
    %p60 = scmp.ne.s32.totalorder %s55, %s57
    %p61 = scmp.eq.s32.totalorder %s21, 0
    %p62 = por %p60, %p61
    %p63 = scmp.ne.s32.totalorder %s55, %s57
    %p64 = scmp.eq.s32.totalorder %s26, 1
    %p65 = por %p63, %p64
    %p66 = scmp.ne.s32.totalorder %s57, %s58
    %p67 = scmp.eq.s32.totalorder %s26, 0
    %p68 = por %p66, %p67
    %p69 = scmp.ne.s32.totalorder %s57, %s58
    %p70 = scmp.eq.s32.totalorder %s27, 1
    %p71 = por %p69, %p70
    %p73 = scmp.ne.s32.totalorder %s58, %s72
    %p74 = scmp.eq.s32.totalorder %s27, 0
    %p75 = por %p73, %p74
    %s77 = sadd.s32 %s76, 1
    %p80 = scmp.eq.s32.totalorder %s21, 1
    %p81 = scmp.ne.s32.totalorder %s76, %s78
    %p82 = scmp.eq.s32.totalorder %s21, 0
    %p83 = por %p81, %p82
    %p84 = scmp.ne.s32.totalorder %s76, %s78
    %p85 = scmp.eq.s32.totalorder %s26, 1
    %p86 = por %p84, %p85
    %p87 = scmp.ne.s32.totalorder %s78, %s79
    %p88 = scmp.eq.s32.totalorder %s26, 0
    %p89 = por %p87, %p88
    %p90 = scmp.ne.s32.totalorder %s78, %s79
    %p91 = scmp.eq.s32.totalorder %s27, 1
    %p92 = por %p90, %p91
    %p94 = scmp.ne.s32.totalorder %s79, %s93
    %p95 = scmp.eq.s32.totalorder %s27, 0
    %p96 = por %p94, %p95
    %s98 = sadd.s32 %s97, 1
    %p101 = scmp.eq.s32.totalorder %s21, 1
    %p102 = scmp.ne.s32.totalorder %s97, %s99
    %p103 = scmp.eq.s32.totalorder %s21, 0
    %p104 = por %p102, %p103
    %p105 = scmp.ne.s32.totalorder %s97, %s99
    %p106 = scmp.eq.s32.totalorder %s26, 1
    %p107 = por %p105, %p106
    %p108 = scmp.ne.s32.totalorder %s99, %s100
    %p109 = scmp.eq.s32.totalorder %s26, 0
    %p110 = por %p108, %p109
    %p111 = scmp.ne.s32.totalorder %s99, %s100
    %p112 = scmp.eq.s32.totalorder %s27, 1
    %p113 = por %p111, %p112
    %p115 = scmp.ne.s32.totalorder %s100, %s114
    %p116 = scmp.eq.s32.totalorder %s27, 0
    %p117 = por %p115, %p116
    %s119 = sadd.s32 %s118, 1
    %p122 = scmp.eq.s32.totalorder %s21, 1
    %p123 = scmp.ne.s32.totalorder %s118, %s120
    %p124 = scmp.eq.s32.totalorder %s21, 0
    %p125 = por %p123, %p124
    %p126 = scmp.ne.s32.totalorder %s118, %s120
    %p127 = scmp.eq.s32.totalorder %s26, 1
    %p128 = por %p126, %p127
    %p129 = scmp.ne.s32.totalorder %s120, %s121
    %p130 = scmp.eq.s32.totalorder %s26, 0
    %p131 = por %p129, %p130
    %p132 = scmp.ne.s32.totalorder %s120, %s121
    %p133 = scmp.eq.s32.totalorder %s27, 1
    %p134 = por %p132, %p133
    %p136 = scmp.ne.s32.totalorder %s121, %s135
    %p137 = scmp.eq.s32.totalorder %s27, 0
    %p138 = por %p136, %p137
    %s140 = sadd.s32 %s139, 1
    %p143 = scmp.eq.s32.totalorder %s21, 1
    %p144 = scmp.ne.s32.totalorder %s139, %s141
    %p145 = scmp.eq.s32.totalorder %s21, 0
    %p146 = por %p144, %p145
    %p147 = scmp.ne.s32.totalorder %s139, %s141
    %p148 = scmp.eq.s32.totalorder %s26, 1
    %p149 = por %p147, %p148
    %p150 = scmp.ne.s32.totalorder %s141, %s142
    %p151 = scmp.eq.s32.totalorder %s26, 0
    %p152 = por %p150, %p151
    %p153 = scmp.ne.s32.totalorder %s141, %s142
    %p154 = scmp.eq.s32.totalorder %s27, 1
    %p155 = por %p153, %p154
    %p157 = scmp.ne.s32.totalorder %s142, %s156
    %p158 = scmp.eq.s32.totalorder %s27, 0
    %p159 = por %p157, %p158
    %s161 = sadd.s32 %s160, 1
    %p164 = scmp.eq.s32.totalorder %s21, 1
    %p165 = scmp.ne.s32.totalorder %s160, %s162
    %p166 = scmp.eq.s32.totalorder %s21, 0
    %p167 = por %p165, %p166
    %p168 = scmp.ne.s32.totalorder %s160, %s162
    %p169 = scmp.eq.s32.totalorder %s26, 1
    %p170 = por %p168, %p169
    %p171 = scmp.ne.s32.totalorder %s162, %s163
    %p172 = scmp.eq.s32.totalorder %s26, 0
    %p173 = por %p171, %p172
    %p174 = scmp.ne.s32.totalorder %s162, %s163
    %p175 = scmp.eq.s32.totalorder %s27, 1
    %p176 = por %p174, %p175
    %p178 = scmp.ne.s32.totalorder %s163, %s177
    %p179 = scmp.eq.s32.totalorder %s27, 0
    %p180 = por %p178, %p179
    %s182 = sadd.s32 %s181, 1
    %p185 = scmp.eq.s32.totalorder %s21, 1
    %p186 = scmp.ne.s32.totalorder %s181, %s183
    %p187 = scmp.eq.s32.totalorder %s21, 0
    %p188 = por %p186, %p187
    %p189 = scmp.ne.s32.totalorder %s181, %s183
    %p190 = scmp.eq.s32.totalorder %s26, 1
    %p191 = por %p189, %p190
    %p192 = scmp.ne.s32.totalorder %s183, %s184
    %p193 = scmp.eq.s32.totalorder %s26, 0
    %p194 = por %p192, %p193
    %p195 = scmp.ne.s32.totalorder %s183, %s184
    %p196 = scmp.eq.s32.totalorder %s27, 1
    %p197 = por %p195, %p196
    %p199 = scmp.ne.s32.totalorder %s184, %s198
    %p200 = scmp.eq.s32.totalorder %s27, 0
    %p201 = por %p199, %p200
    %s203 = sadd.s32 %s202, 1
    %p206 = scmp.eq.s32.totalorder %s21, 1
    %p207 = scmp.ne.s32.totalorder %s202, %s204
    %p208 = scmp.eq.s32.totalorder %s21, 0
    %p209 = por %p207, %p208
    %p210 = scmp.ne.s32.totalorder %s202, %s204
    %p211 = scmp.eq.s32.totalorder %s26, 1
    %p212 = por %p210, %p211
    %p213 = scmp.ne.s32.totalorder %s204, %s205
    %p214 = scmp.eq.s32.totalorder %s26, 0
    %p215 = por %p213, %p214
    %p216 = scmp.ne.s32.totalorder %s204, %s205
    %p217 = scmp.eq.s32.totalorder %s27, 1
    %p218 = por %p216, %p217
    %p220 = scmp.ne.s32.totalorder %s205, %s219
    %p221 = scmp.eq.s32.totalorder %s27, 0
    %p222 = por %p220, %p221
    %s224 = sadd.s32 %s223, 1
    %p227 = scmp.eq.s32.totalorder %s21, 1
    %p228 = scmp.ne.s32.totalorder %s223, %s225
    %p229 = scmp.eq.s32.totalorder %s21, 0
    %p230 = por %p228, %p229
    %p231 = scmp.ne.s32.totalorder %s223, %s225
    %p232 = scmp.eq.s32.totalorder %s26, 1
    %p233 = por %p231, %p232
    %p234 = scmp.ne.s32.totalorder %s225, %s226
    %p235 = scmp.eq.s32.totalorder %s26, 0
    %p236 = por %p234, %p235
    %p237 = scmp.ne.s32.totalorder %s225, %s226
    %p238 = scmp.eq.s32.totalorder %s27, 1
    %p239 = por %p237, %p238
    %p241 = scmp.ne.s32.totalorder %s226, %s240
    %p242 = scmp.eq.s32.totalorder %s27, 0
    %p243 = por %p241, %p242
    %s245 = sadd.s32 %s244, 1
    %p248 = scmp.eq.s32.totalorder %s21, 1
    %p249 = scmp.ne.s32.totalorder %s244, %s246
    %p250 = scmp.eq.s32.totalorder %s21, 0
    %p251 = por %p249, %p250
    %p252 = scmp.ne.s32.totalorder %s244, %s246
    %p253 = scmp.eq.s32.totalorder %s26, 1
    %p254 = por %p252, %p253
    %p255 = scmp.ne.s32.totalorder %s246, %s247
    %p256 = scmp.eq.s32.totalorder %s26, 0
    %p257 = por %p255, %p256
    %p258 = scmp.ne.s32.totalorder %s246, %s247
    %p259 = scmp.eq.s32.totalorder %s27, 1
    %p260 = por %p258, %p259
    %p262 = scmp.ne.s32.totalorder %s247, %s261
    %p263 = scmp.eq.s32.totalorder %s27, 0
    %p264 = por %p262, %p263
    %s266 = sadd.s32 %s265, 1
    %p269 = scmp.eq.s32.totalorder %s21, 1
    %p270 = scmp.ne.s32.totalorder %s265, %s267
    %p271 = scmp.eq.s32.totalorder %s21, 0
    %p272 = por %p270, %p271
    %p273 = scmp.ne.s32.totalorder %s265, %s267
    %p274 = scmp.eq.s32.totalorder %s26, 1
    %p275 = por %p273, %p274
    %p276 = scmp.ne.s32.totalorder %s267, %s268
    %p277 = scmp.eq.s32.totalorder %s26, 0
    %p278 = por %p276, %p277
    %p279 = scmp.ne.s32.totalorder %s267, %s268
    %p280 = scmp.eq.s32.totalorder %s27, 1
    %p281 = por %p279, %p280
    %p283 = scmp.ne.s32.totalorder %s268, %s282
    %p284 = scmp.eq.s32.totalorder %s27, 0
    %p285 = por %p283, %p284
    %s287 = sadd.s32 %s286, 1
    %p290 = scmp.eq.s32.totalorder %s21, 1
    %p291 = scmp.ne.s32.totalorder %s286, %s288
    %p292 = scmp.eq.s32.totalorder %s21, 0
    %p293 = por %p291, %p292
    %p294 = scmp.ne.s32.totalorder %s286, %s288
    %p295 = scmp.eq.s32.totalorder %s26, 1
    %p296 = por %p294, %p295
    %p297 = scmp.ne.s32.totalorder %s288, %s289
    %p298 = scmp.eq.s32.totalorder %s26, 0
    %p299 = por %p297, %p298
    %p300 = scmp.ne.s32.totalorder %s288, %s289
    %p301 = scmp.eq.s32.totalorder %s27, 1
    %p302 = por %p300, %p301
    %p304 = scmp.ne.s32.totalorder %s289, %s303
    %p305 = scmp.eq.s32.totalorder %s27, 0
    %p306 = por %p304, %p305
    %s308 = sadd.s32 %s307, 1
    %p311 = scmp.eq.s32.totalorder %s21, 1
    %p312 = scmp.ne.s32.totalorder %s307, %s309
    %p313 = scmp.eq.s32.totalorder %s21, 0
    %p314 = por %p312, %p313
    %p315 = scmp.ne.s32.totalorder %s307, %s309
    %p316 = scmp.eq.s32.totalorder %s26, 1
    %p317 = por %p315, %p316
    %p318 = scmp.ne.s32.totalorder %s309, %s310
    %p319 = scmp.eq.s32.totalorder %s26, 0
    %p320 = por %p318, %p319
    %p321 = scmp.ne.s32.totalorder %s309, %s310
    %p322 = scmp.eq.s32.totalorder %s27, 1
    %p323 = por %p321, %p322
    %p325 = scmp.ne.s32.totalorder %s310, %s324
    %p326 = scmp.eq.s32.totalorder %s27, 0
    %p327 = por %p325, %p326
    %s329 = sadd.s32 %s328, 1
    %p332 = scmp.eq.s32.totalorder %s21, 1
    %p333 = scmp.ne.s32.totalorder %s328, %s330
    %p334 = scmp.eq.s32.totalorder %s21, 0
    %p335 = por %p333, %p334
    %p336 = scmp.ne.s32.totalorder %s328, %s330
    %p337 = scmp.eq.s32.totalorder %s26, 1
    %p338 = por %p336, %p337
    %p339 = scmp.ne.s32.totalorder %s330, %s331
    %p340 = scmp.eq.s32.totalorder %s26, 0
    %p341 = por %p339, %p340
    %p342 = scmp.ne.s32.totalorder %s330, %s331
    %p343 = scmp.eq.s32.totalorder %s27, 1
    %p344 = por %p342, %p343
    %p346 = scmp.ne.s32.totalorder %s331, %s345
    %p347 = scmp.eq.s32.totalorder %s27, 0
    %p348 = por %p346, %p347
    %s349 = ssub.s32 %s21, %s28
    %p350 = scmp.eq.s32.totalorder %s349, 0
    %s352 = sadd.s32 %s351, 1
    %s353 = scalar_select %p350, %s351, %s352
    %p356 = pneg %p350
    %p357 = scmp.eq.s32.totalorder %s21, 1
    %p358 = por %p356, %p357
    %p359 = scmp.ne.s32.totalorder %s351, %s354
    %p360 = scmp.eq.s32.totalorder %s21, 0
    %p361 = por %p359, %p360
    %p362 = scmp.ne.s32.totalorder %s351, %s354
    %p363 = scmp.eq.s32.totalorder %s26, 1
    %p364 = por %p362, %p363
    %p365 = scmp.ne.s32.totalorder %s354, %s355
    %p366 = scmp.eq.s32.totalorder %s26, 0
    %p367 = por %p365, %p366
    %p368 = scmp.ne.s32.totalorder %s354, %s355
    %p369 = scmp.eq.s32.totalorder %s27, 1
    %p370 = por %p368, %p369
    %p372 = scmp.ne.s32.totalorder %s355, %s371
    %p373 = scmp.eq.s32.totalorder %s27, 0
    %p374 = por %p372, %p373
    %p375 = scmp.le.s32.totalorder 1, %s21
    %p376 = scmp.lt.s32.totalorder %s21, 3
    %p377 = pnand %p375, %p376
    %p378 = pneg %p377
    // Predicated region
    $region9: #{unified_model_forward.9} parent=5 // pred_check
      _
    $region10: #{unified_model_forward.9} parent=5 // pred_check_branch
      %380 = sbr.rel (%p377) target = $region12
    $region11: #{unified_model_forward.9} parent=5 // pred_region
      %s381 = ssub.s32 %s21, 1
      // Predicated region
      $region13: #{unified_model_forward.9} parent=11 // pred_check
        %p382 = pneg %p68
      $region14: #{unified_model_forward.9} parent=11 // pred_check_branch
        %384 = sbr.rel (%p382) target = $region16
      $region15: #{unified_model_forward.9} parent=11 // pred_region
        _
      $region16: #{unified_model_forward.9} parent=11 // pred_fallthru
        _
      // Predicated region
      $region17: #{unified_model_forward.9} parent=11 // pred_check
        %p385 = pneg %p89
      $region18: #{unified_model_forward.9} parent=11 // pred_check_branch
        %387 = sbr.rel (%p385) target = $region20
      $region19: #{unified_model_forward.9} parent=11 // pred_region
        _
      $region20: #{unified_model_forward.9} parent=11 // pred_fallthru
        _
      // Predicated region
      $region21: #{unified_model_forward.9} parent=11 // pred_check
        %p388 = pneg %p110
      $region22: #{unified_model_forward.9} parent=11 // pred_check_branch
        %390 = sbr.rel (%p388) target = $region24
      $region23: #{unified_model_forward.9} parent=11 // pred_region
        _
      $region24: #{unified_model_forward.9} parent=11 // pred_fallthru
        _
      // Predicated region
      $region25: #{unified_model_forward.9} parent=11 // pred_check
        %p391 = pneg %p131
      $region26: #{unified_model_forward.9} parent=11 // pred_check_branch
        %393 = sbr.rel (%p391) target = $region28
      $region27: #{unified_model_forward.9} parent=11 // pred_region
        _
      $region28: #{unified_model_forward.9} parent=11 // pred_fallthru
        _
      // Predicated region
      $region29: #{unified_model_forward.9} parent=11 // pred_check
        %p394 = pneg %p152
      $region30: #{unified_model_forward.9} parent=11 // pred_check_branch
        %396 = sbr.rel (%p394) target = $region32
      $region31: #{unified_model_forward.9} parent=11 // pred_region
        _
      $region32: #{unified_model_forward.9} parent=11 // pred_fallthru
        _
      // Predicated region
      $region33: #{unified_model_forward.9} parent=11 // pred_check
        %p397 = pneg %p173
      $region34: #{unified_model_forward.9} parent=11 // pred_check_branch
        %399 = sbr.rel (%p397) target = $region36
      $region35: #{unified_model_forward.9} parent=11 // pred_region
        _
      $region36: #{unified_model_forward.9} parent=11 // pred_fallthru
        _
      // Predicated region
      $region37: #{unified_model_forward.9} parent=11 // pred_check
        %p400 = pneg %p194
      $region38: #{unified_model_forward.9} parent=11 // pred_check_branch
        %402 = sbr.rel (%p400) target = $region40
      $region39: #{unified_model_forward.9} parent=11 // pred_region
        _
      $region40: #{unified_model_forward.9} parent=11 // pred_fallthru
        _
      // Predicated region
      $region41: #{unified_model_forward.9} parent=11 // pred_check
        %p403 = pneg %p215
      $region42: #{unified_model_forward.9} parent=11 // pred_check_branch
        %405 = sbr.rel (%p403) target = $region44
      $region43: #{unified_model_forward.9} parent=11 // pred_region
        _
      $region44: #{unified_model_forward.9} parent=11 // pred_fallthru
        _
      // Predicated region
      $region45: #{unified_model_forward.9} parent=11 // pred_check
        %p406 = pneg %p236
      $region46: #{unified_model_forward.9} parent=11 // pred_check_branch
        %408 = sbr.rel (%p406) target = $region48
      $region47: #{unified_model_forward.9} parent=11 // pred_region
        _
      $region48: #{unified_model_forward.9} parent=11 // pred_fallthru
        _
      // Predicated region
      $region49: #{unified_model_forward.9} parent=11 // pred_check
        %p409 = pneg %p257
      $region50: #{unified_model_forward.9} parent=11 // pred_check_branch
        %411 = sbr.rel (%p409) target = $region52
      $region51: #{unified_model_forward.9} parent=11 // pred_region
        _
      $region52: #{unified_model_forward.9} parent=11 // pred_fallthru
        _
      // Predicated region
      $region53: #{unified_model_forward.9} parent=11 // pred_check
        %p412 = pneg %p278
      $region54: #{unified_model_forward.9} parent=11 // pred_check_branch
        %414 = sbr.rel (%p412) target = $region56
      $region55: #{unified_model_forward.9} parent=11 // pred_region
        _
      $region56: #{unified_model_forward.9} parent=11 // pred_fallthru
        _
      // Predicated region
      $region57: #{unified_model_forward.9} parent=11 // pred_check
        %p415 = pneg %p299
      $region58: #{unified_model_forward.9} parent=11 // pred_check_branch
        %417 = sbr.rel (%p415) target = $region60
      $region59: #{unified_model_forward.9} parent=11 // pred_region
        _
      $region60: #{unified_model_forward.9} parent=11 // pred_fallthru
        _
      // Predicated region
      $region61: #{unified_model_forward.9} parent=11 // pred_check
        %p418 = pneg %p320
      $region62: #{unified_model_forward.9} parent=11 // pred_check_branch
        %420 = sbr.rel (%p418) target = $region64
      $region63: #{unified_model_forward.9} parent=11 // pred_region
        _
      $region64: #{unified_model_forward.9} parent=11 // pred_fallthru
        _
      // Predicated region
      $region65: #{unified_model_forward.9} parent=11 // pred_check
        %p421 = pneg %p341
      $region66: #{unified_model_forward.9} parent=11 // pred_check_branch
        %423 = sbr.rel (%p421) target = $region68
      $region67: #{unified_model_forward.9} parent=11 // pred_region
        _
      $region68: #{unified_model_forward.9} parent=11 // pred_fallthru
        _
    $region12: #{unified_model_forward.9} parent=5 // pred_fallthru
      _
    %p424 = scmp.lt.s32.totalorder %s21, 2
    // Predicated region
    $region69: #{unified_model_forward.9} parent=5 // pred_check
      %p425 = pneg %p424
    $region70: #{unified_model_forward.9} parent=5 // pred_check_branch
      %427 = sbr.rel (%p425) target = $region72
    $region71: #{unified_model_forward.9} parent=5 // pred_region
      // Predicated region
      $region73: #{unified_model_forward.9} parent=71 // pred_check
        %p428 = pneg %p41
      $region74: #{unified_model_forward.9} parent=71 // pred_check_branch
        %430 = sbr.rel (%p428) target = $region76
      $region75: #{unified_model_forward.9} parent=71 // pred_region
        %p431 = scmp.lt.s32.totalorder %s21, 1
        %s432 = scalar_select %p431, %s21, 1
        %s433 = smul.addr %s432, 8
        %s434 = scalar_lea.vmem %s0, %s433
      $region76: #{unified_model_forward.9} parent=71 // pred_fallthru
        _
    $region72: #{unified_model_forward.9} parent=5 // pred_fallthru
      _
    %p435 = scmp.le.s32.totalorder 1, %s21
    %p436 = scmp.lt.s32.totalorder %s21, 3
    %p437 = pnand %p435, %p436
    %p438 = pneg %p437
    // Predicated region
    $region77: #{unified_model_forward.9} parent=5 // pred_check
      _
    $region78: #{unified_model_forward.9} parent=5 // pred_check_branch
      %440 = sbr.rel (%p437) target = $region80
    $region79: #{unified_model_forward.9} parent=5 // pred_region
      %s441 = ssub.s32 %s21, 1
      %p442 = scmp.lt.s32.totalorder %s26, 1
      %s443 = scalar_select %p442, %s26, 1
      %s444 = smul.addr %s443, 8
      %s445 = scalar_lea.vmem %s0, %s444
      %p446 = pneg %p47
      %p447 = pneg %p44
      %p448 = pneg %p68
      %p449 = pneg %p65
      %p450 = pneg %p89
      %p451 = pneg %p86
      %p452 = pneg %p110
      %p453 = pneg %p107
      %p454 = pneg %p131
      %p455 = pneg %p128
      %p456 = pneg %p152
      %p457 = pneg %p149
      %p458 = pneg %p173
      %p459 = pneg %p170
      %p460 = pneg %p194
      %p461 = pneg %p191
      %p462 = pneg %p215
      %p463 = pneg %p212
      %p464 = pneg %p236
      %p465 = pneg %p233
      %p466 = pneg %p257
      %p467 = pneg %p254
      %p468 = pneg %p278
      %p469 = pneg %p275
      %p470 = pneg %p299
      %p471 = pneg %p296
      %p472 = pneg %p320
      %p473 = pneg %p317
      %p474 = pneg %p341
      %p475 = pneg %p338
      %p476 = pneg %p367
      %p477 = pneg %p364
      %p478 = scmp.lt.s32.totalorder %s26, 1
      %s479 = scalar_select %p478, %s26, 1
      %s480 = smul.addr %s479, 8
      %s481 = scalar_lea.vmem %s15, %s480
      %p482 = scmp.lt.s32.totalorder %s26, 1
      %s483 = scalar_select %p482, %s26, 1
      %s484 = smul.addr %s483, 8
      %s485 = scalar_lea.vmem %s0, %s484
      %p486 = scmp.lt.s32.totalorder %s26, 1
      %s487 = scalar_select %p486, %s26, 1
      %s488 = smul.addr %s487, 8
      %s489 = scalar_lea.vmem %s15, %s488
      %v490 = vld [vmem:[%s485] sm:$0xff]
      %491 = vadd.xlane.f32.xlu0 %v490
      %v492 = vpop.xlane.xlu0 %491
      %v493 = vrcp.pop 128.0
      %v494 = vmul.f32 %v492, %v493
      %v495 = vsub.f32 %v490, %v494
      %v496 = vmul.f32 %v495, %v495
      %497 = vadd.xlane.f32.xlu0 %v496
      %v498 = vpop.xlane.xlu0 %497
      %v499 = vmul.f32 %v498, %v493
      %v500 = vadd.f32 %v499, 1e-05
      %v501 = vrsqrt.pop %v500
      %v502 = vmul.f32 %v495, %v501
      %v503 = vld [vmem:[%s1] sm:$0x1]
      %v505 = vlaneseq
      %v506 = vshrl.u32 %v505, 7
      %v507 = vsub.s32 0, %v506
      %v508 = vrot.slane %v503, %v507
      %v510 = vmul.f32 %v502, %v508
      %v511 = vld [vmem:[%s2] sm:$0x1]
      %v513 = vlaneseq
      %v514 = vshrl.u32 %v513, 7
      %v515 = vsub.s32 0, %v514
      %v516 = vrot.slane %v511, %v515
      %v518 = vadd.f32 %v510, %v516
      %v519 = vld [vmem:[%s3] sm:$0xff]
      %v520 = vld [vmem:[%s3 + $0x8] sm:$0xff]
      %v521 = vld [vmem:[%s3 + $0x10] sm:$0xff]
      %v522 = vld [vmem:[%s3 + $0x18] sm:$0xff]
      %v523 = vld [vmem:[%s3 + $0x20] sm:$0xff]
      %v524 = vld [vmem:[%s3 + $0x28] sm:$0xff]
      %v525 = vld [vmem:[%s3 + $0x30] sm:$0xff]
      %v526 = vld [vmem:[%s3 + $0x38] sm:$0xff]
      %v527 = vld [vmem:[%s3 + $0x40] sm:$0xff]
      %v528 = vld [vmem:[%s3 + $0x48] sm:$0xff]
      %v529 = vld [vmem:[%s3 + $0x50] sm:$0xff]
      %v530 = vld [vmem:[%s3 + $0x58] sm:$0xff]
      %v531 = vld [vmem:[%s3 + $0x60] sm:$0xff]
      %v532 = vld [vmem:[%s3 + $0x68] sm:$0xff]
      %v533 = vld [vmem:[%s3 + $0x70] sm:$0xff]
      %v534 = vld [vmem:[%s3 + $0x78] sm:$0xff]
      %v535 = vld [vmem:[%s3 + $0x80] sm:$0xff]
      %v536 = vld [vmem:[%s3 + $0x88] sm:$0xff]
      %v537 = vld [vmem:[%s3 + $0x90] sm:$0xff]
      %v538 = vld [vmem:[%s3 + $0x98] sm:$0xff]
      %v539 = vld [vmem:[%s3 + $0xa0] sm:$0xff]
      %v540 = vld [vmem:[%s3 + $0xa8] sm:$0xff]
      %v541 = vld [vmem:[%s3 + $0xb0] sm:$0xff]
      %v542 = vld [vmem:[%s3 + $0xb8] sm:$0xff]
      %v543 = vld [vmem:[%s3 + $0xc0] sm:$0xff]
      %v544 = vld [vmem:[%s3 + $0xc8] sm:$0xff]
      %v545 = vld [vmem:[%s3 + $0xd0] sm:$0xff]
      %v546 = vld [vmem:[%s3 + $0xd8] sm:$0xff]
      %v547 = vld [vmem:[%s3 + $0xe0] sm:$0xff]
      %v548 = vld [vmem:[%s3 + $0xe8] sm:$0xff]
      %v549 = vld [vmem:[%s3 + $0xf0] sm:$0xff]
      %v550 = vld [vmem:[%s3 + $0xf8] sm:$0xff]
      %v551 = vld [vmem:[%s3 + $0x100] sm:$0xff]
      %v552 = vld [vmem:[%s3 + $0x108] sm:$0xff]
      %v553 = vld [vmem:[%s3 + $0x110] sm:$0xff]
      %v554 = vld [vmem:[%s3 + $0x118] sm:$0xff]
      %v555 = vld [vmem:[%s3 + $0x120] sm:$0xff]
      %v556 = vld [vmem:[%s3 + $0x128] sm:$0xff]
      %v557 = vld [vmem:[%s3 + $0x130] sm:$0xff]
      %v558 = vld [vmem:[%s3 + $0x138] sm:$0xff]
      %v559 = vld [vmem:[%s3 + $0x140] sm:$0xff]
      %v560 = vld [vmem:[%s3 + $0x148] sm:$0xff]
      %v561 = vld [vmem:[%s3 + $0x150] sm:$0xff]
      %v562 = vld [vmem:[%s3 + $0x158] sm:$0xff]
      %v563 = vld [vmem:[%s3 + $0x160] sm:$0xff]
      %v564 = vld [vmem:[%s3 + $0x168] sm:$0xff]
      %v565 = vld [vmem:[%s3 + $0x170] sm:$0xff]
      %v566 = vld [vmem:[%s3 + $0x178] sm:$0xff]
      %v567 = vld [vmem:[%s4] sm:$0x7]
      %v569 = vlaneseq
      %v570 = vshrl.u32 %v569, 7
      %v571 = vsub.s32 0, %v570
      %v572 = vrot.slane %v567, %v571
      %v573 = vlaneseq
      %v574 = vshrl.u32 %v573, 7
      %v575 = vsub.s32 1, %v574
      %v576 = vrot.slane %v567, %v575
      %v577 = vlaneseq
      %v578 = vshrl.u32 %v577, 7
      %v579 = vsub.s32 2, %v578
      %v580 = vrot.slane %v567, %v579
      %584 = vmatprep.subr.mxu0 %v520
      %585 = vmatpush1.msra.mxu0 %v519
      %586 = vmatprep.subr.mxu0 %v523
      %587 = vmatpush1.msra.mxu0 %v522
      %588 = vmatprep.subr.mxu0 %v526
      %589 = vmatpush1.msra.mxu0 %v525
      %590 = vmatprep.subr.mxu0 %v529
      %591 = vmatpush1.msra.mxu0 %v528
      %592 = vmatprep.subr.mxu0 %v532
      %593 = vmatpush1.msra.mxu0 %v531
      %594 = vmatprep.subr.mxu0 %v535
      %595 = vmatpush1.msra.mxu0 %v534
      %596 = vmatprep.subr.mxu0 %v538
      %597 = vmatpush1.msra.mxu0 %v537
      %598 = vmatprep.subr.mxu0 %v541
      %599 = vmatpush1.msra.mxu0 %v540
      %600 = vmatprep.subr.mxu0 %v544
      %601 = vmatpush1.msra.mxu0 %v543
      %602 = vmatprep.subr.mxu0 %v547
      %603 = vmatpush1.msra.mxu0 %v546
      %604 = vmatprep.subr.mxu0 %v550
      %605 = vmatpush1.msra.mxu0 %v549
      %606 = vmatprep.subr.mxu0 %v553
      %607 = vmatpush1.msra.mxu0 %v552
      %608 = vmatprep.subr.mxu0 %v556
      %609 = vmatpush1.msra.mxu0 %v555
      %610 = vmatprep.subr.mxu0 %v559
      %611 = vmatpush1.msra.mxu0 %v558
      %612 = vmatprep.subr.mxu0 %v562
      %613 = vmatpush1.msra.mxu0 %v561
      %614 = vmatprep.subr.mxu0 %v565
      %615 = vmatpush1.msra.mxu0 %v564
      %616 = vmatprep.subr.mxu0 0.0
      %617 = vmatpush1.msra.mxu0 0.0
      %618 = vmatprep.subr.mxu0 0.0
      %619 = vmatpush1.msra.mxu0 0.0
      %620 = vmatprep.subr.mxu0 0.0
      %621 = vmatpush1.msra.mxu0 0.0
      %622 = vmatprep.subr.mxu0 0.0
      %623 = vmatpush1.msra.mxu0 0.0
      %624 = vmatprep.subr.mxu0 0.0
      %625 = vmatpush1.msra.mxu0 0.0
      %626 = vmatprep.subr.mxu0 0.0
      %627 = vmatpush1.msra.mxu0 0.0
      %628 = vmatprep.subr.mxu0 0.0
      %629 = vmatpush1.msra.mxu0 0.0
      %630 = vmatprep.subr.mxu0 0.0
      %631 = vmatpush1.msra.mxu0 0.0
      %632 = vmatprep.subr.mxu0 0.0
      %633 = vmatpush1.msra.mxu0 0.0
      %634 = vmatprep.subr.mxu0 0.0
      %635 = vmatpush1.msra.mxu0 0.0
      %636 = vmatprep.subr.mxu0 0.0
      %637 = vmatpush1.msra.mxu0 0.0
      %638 = vmatprep.subr.mxu0 0.0
      %639 = vmatpush1.msra.mxu0 0.0
      %640 = vmatprep.subr.mxu0 0.0
      %641 = vmatpush1.msra.mxu0 0.0
      %642 = vmatprep.subr.mxu0 0.0
      %643 = vmatpush1.msra.mxu0 0.0
      %644 = vmatprep.subr.mxu0 0.0
      %645 = vmatpush1.msra.mxu0 0.0
      %646 = vmatprep.subr.mxu0 0.0
      %647 = vmatpush1.msra.mxu0 0.0
      %648 = vmatprep.mubr.f32.mxu0 0.0
      %649 = vmatmul.mubr.f32.gmra.mrb[0].mxu0 %v518
      %v650 = vpop.f32.mrb[0].mxu0
      %v651 = vadd.f32 %v572, %v650
      %v652 = vpop.f32.mrb[0].mxu0
      %v653 = vadd.f32 %v576, %v652
      %654 = vdwg.mxu0
      %655 = vmatprep.subr.mxu0 0.0
      %656 = vmatpush1.msra.mxu0 %v521
      %657 = vmatprep.subr.mxu0 0.0
      %658 = vmatpush1.msra.mxu0 %v524
      %659 = vmatprep.subr.mxu0 0.0
      %660 = vmatpush1.msra.mxu0 %v527
      %661 = vmatprep.subr.mxu0 0.0
      %662 = vmatpush1.msra.mxu0 %v530
      %663 = vmatprep.subr.mxu0 0.0
      %664 = vmatpush1.msra.mxu0 %v533
      %665 = vmatprep.subr.mxu0 0.0
      %666 = vmatpush1.msra.mxu0 %v536
      %667 = vmatprep.subr.mxu0 0.0
      %668 = vmatpush1.msra.mxu0 %v539
      %669 = vmatprep.subr.mxu0 0.0
      %670 = vmatpush1.msra.mxu0 %v542
      %671 = vmatprep.subr.mxu0 0.0
      %672 = vmatpush1.msra.mxu0 %v545
      %673 = vmatprep.subr.mxu0 0.0
      %674 = vmatpush1.msra.mxu0 %v548
      %675 = vmatprep.subr.mxu0 0.0
      %676 = vmatpush1.msra.mxu0 %v551
      %677 = vmatprep.subr.mxu0 0.0
      %678 = vmatpush1.msra.mxu0 %v554
      %679 = vmatprep.subr.mxu0 0.0
      %680 = vmatpush1.msra.mxu0 %v557
      %681 = vmatprep.subr.mxu0 0.0
      %682 = vmatpush1.msra.mxu0 %v560
      %683 = vmatprep.subr.mxu0 0.0
      %684 = vmatpush1.msra.mxu0 %v563
      %685 = vmatprep.subr.mxu0 0.0
      %686 = vmatpush1.msra.mxu0 %v566
      %687 = vmatprep.subr.mxu0 0.0
      %688 = vmatpush1.msra.mxu0 0.0
      %689 = vmatprep.subr.mxu0 0.0
      %690 = vmatpush1.msra.mxu0 0.0
      %691 = vmatprep.subr.mxu0 0.0
      %692 = vmatpush1.msra.mxu0 0.0
      %693 = vmatprep.subr.mxu0 0.0
      %694 = vmatpush1.msra.mxu0 0.0
      %695 = vmatprep.subr.mxu0 0.0
      %696 = vmatpush1.msra.mxu0 0.0
      %697 = vmatprep.subr.mxu0 0.0
      %698 = vmatpush1.msra.mxu0 0.0
      %699 = vmatprep.subr.mxu0 0.0
      %700 = vmatpush1.msra.mxu0 0.0
      %701 = vmatprep.subr.mxu0 0.0
      %702 = vmatpush1.msra.mxu0 0.0
      %703 = vmatprep.subr.mxu0 0.0
      %704 = vmatpush1.msra.mxu0 0.0
      %705 = vmatprep.subr.mxu0 0.0
      %706 = vmatpush1.msra.mxu0 0.0
      %707 = vmatprep.subr.mxu0 0.0
      %708 = vmatpush1.msra.mxu0 0.0
      %709 = vmatprep.subr.mxu0 0.0
      %710 = vmatpush1.msra.mxu0 0.0
      %711 = vmatprep.subr.mxu0 0.0
      %712 = vmatpush1.msra.mxu0 0.0
      %713 = vmatprep.subr.mxu0 0.0
      %714 = vmatpush1.msra.mxu0 0.0
      %715 = vmatprep.subr.mxu0 0.0
      %716 = vmatpush1.msra.mxu0 0.0
      %717 = vmatprep.subr.mxu0 0.0
      %718 = vmatpush1.msra.mxu0 0.0
      %719 = vmatprep.mubr.f32.mxu0 0.0
      %720 = vmatmul.mubr.f32.gmra.mrb[0].mxu0 %v518
      %v721 = vpop.f32.mrb[0].mxu0
      %v722 = vadd.f32 %v580, %v721
      %v723 = vpop.f32.mrb[0].mxu0
      %724 = vdwg.mxu0
      %v725 = vld [vmem:[%s5] sm:$0xff]
      %v726 = vld [vmem:[%s5 + $0x8] sm:$0xff]
      %v727 = vld [vmem:[%s5 + $0x10] sm:$0xff]
      %v728 = vld [vmem:[%s5 + $0x18] sm:$0xff]
      %v729 = vld [vmem:[%s5 + $0x20] sm:$0xff]
      %v730 = vld [vmem:[%s5 + $0x28] sm:$0xff]
      %v731 = vld [vmem:[%s5 + $0x30] sm:$0xff]
      %v732 = vld [vmem:[%s5 + $0x38] sm:$0xff]
      %v733 = vld [vmem:[%s5 + $0x40] sm:$0xff]
      %v734 = vld [vmem:[%s5 + $0x48] sm:$0xff]
      %v735 = vld [vmem:[%s5 + $0x50] sm:$0xff]
      %v736 = vld [vmem:[%s5 + $0x58] sm:$0xff]
      %v737 = vld [vmem:[%s5 + $0x60] sm:$0xff]
      %v738 = vld [vmem:[%s5 + $0x68] sm:$0xff]
      %v739 = vld [vmem:[%s5 + $0x70] sm:$0xff]
      %v740 = vld [vmem:[%s5 + $0x78] sm:$0xff]
      %v741 = vlaneseq
      %v742 = vand.u32 %v741, 127
      %vm743 = vcmp.lt.s32.totalorder %v742, 5
      %v744 = vsel %vm743, 0.0, -1e+30
      %v745 = vmul.f32 %v651, 0.17677669
      %vm746 = vcmask 261120
      %v748 = vsel %vm746, %v745, 0
      %v751 = vsel %vm746, %v653, 0
      %753 = vmatprep.subr.mxu0 0.0
      %754 = vmatpush1.xpose.msra.mxu0 %v751
      %755 = vmatprep.subr.mxu0 0.0
      %756 = vmatpush1.xpose.msra.mxu0 0.0
      %757 = vmatprep.subr.mxu0 0.0
      %758 = vmatpush1.xpose.msra.mxu0 0.0
      %759 = vmatprep.subr.mxu0 0.0
      %760 = vmatpush1.xpose.msra.mxu0 0.0
      %761 = vmatprep.subr.mxu0 0.0
      %762 = vmatpush1.xpose.msra.mxu0 0.0
      %763 = vmatprep.subr.mxu0 0.0
      %764 = vmatpush1.xpose.msra.mxu0 0.0
      %765 = vmatprep.subr.mxu0 0.0
      %766 = vmatpush1.xpose.msra.mxu0 0.0
      %767 = vmatprep.subr.mxu0 0.0
      %768 = vmatpush1.xpose.msra.mxu0 0.0
      %769 = vmatprep.subr.mxu0 0.0
      %770 = vmatpush1.xpose.msra.mxu0 0.0
      %771 = vmatprep.subr.mxu0 0.0
      %772 = vmatpush1.xpose.msra.mxu0 0.0
      %773 = vmatprep.subr.mxu0 0.0
      %774 = vmatpush1.xpose.msra.mxu0 0.0
      %775 = vmatprep.subr.mxu0 0.0
      %776 = vmatpush1.xpose.msra.mxu0 0.0
      %777 = vmatprep.subr.mxu0 0.0
      %778 = vmatpush1.xpose.msra.mxu0 0.0
      %779 = vmatprep.subr.mxu0 0.0
      %780 = vmatpush1.xpose.msra.mxu0 0.0
      %781 = vmatprep.subr.mxu0 0.0
      %782 = vmatpush1.xpose.msra.mxu0 0.0
      %783 = vmatprep.subr.mxu0 0.0
      %784 = vmatpush1.xpose.msra.mxu0 0.0
      %785 = vmatprep.subr.mxu0 0.0
      %786 = vmatpush1.xpose.msra.mxu0 0.0
      %787 = vmatprep.subr.mxu0 0.0
      %788 = vmatpush1.xpose.msra.mxu0 0.0
      %789 = vmatprep.subr.mxu0 0.0
      %790 = vmatpush1.xpose.msra.mxu0 0.0
      %791 = vmatprep.subr.mxu0 0.0
      %792 = vmatpush1.xpose.msra.mxu0 0.0
      %793 = vmatprep.subr.mxu0 0.0
      %794 = vmatpush1.xpose.msra.mxu0 0.0
      %795 = vmatprep.subr.mxu0 0.0
      %796 = vmatpush1.xpose.msra.mxu0 0.0
      %797 = vmatprep.subr.mxu0 0.0
      %798 = vmatpush1.xpose.msra.mxu0 0.0
      %799 = vmatprep.subr.mxu0 0.0
      %800 = vmatpush1.xpose.msra.mxu0 0.0
      %801 = vmatprep.subr.mxu0 0.0
      %802 = vmatpush1.xpose.msra.mxu0 0.0
      %803 = vmatprep.subr.mxu0 0.0
      %804 = vmatpush1.xpose.msra.mxu0 0.0
      %805 = vmatprep.subr.mxu0 0.0
      %806 = vmatpush1.xpose.msra.mxu0 0.0
      %807 = vmatprep.subr.mxu0 0.0
      %808 = vmatpush1.xpose.msra.mxu0 0.0
      %809 = vmatprep.subr.mxu0 0.0
      %810 = vmatpush1.xpose.msra.mxu0 0.0
      %811 = vmatprep.subr.mxu0 0.0
      %812 = vmatpush1.xpose.msra.mxu0 0.0
      %813 = vmatprep.subr.mxu0 0.0
      %814 = vmatpush1.xpose.msra.mxu0 0.0
      %815 = vmatprep.subr.mxu0 0.0
      %816 = vmatpush1.xpose.msra.mxu0 0.0
      %817 = vmatprep.mubr.f32.mxu0 0.0
      %818 = vmatmul.mubr.f32.gmra.mrb[0].mxu0 %v748
      %v819 = vpop.f32.mrb[0].mxu0
      %v820 = vadd.f32 %v744, %v819
      %v821 = vpop.f32.mrb[0].mxu0
      %822 = vdwg.mxu0
      %vm823 = vcmask 64512
      %v824 = vsel %vm823, %v820, -inf
      %825 = vmax.xlane.f32.xlu0 %v824
      %v826 = vpop.xlane.xlu0 %825
      %v827 = vsub.f32 %v820, %v826
      %v828 = vmul.f32 %v827, 1.442695
      %v829 = vpow.pop %v828
      %v830 = vsel %vm823, %v829, 0.0
      %831 = vadd.xlane.f32.xlu0 %v830
      %v832 = vpop.xlane.xlu0 %831
      %v833 = vrcp.pop %v832
      %v834 = vmul.f32 %v829, %v833
      %v836 = vsel %vm823, %v834, 0
      %838 = vmatprep.subr.mxu0 0.0
      %839 = vmatpush1.msra.mxu0 %v722
      %840 = vmatprep.subr.mxu0 0.0
      %841 = vmatpush1.msra.mxu0 0.0
      %842 = vmatprep.subr.mxu0 0.0
      %843 = vmatpush1.msra.mxu0 0.0
      %844 = vmatprep.subr.mxu0 0.0
      %845 = vmatpush1.msra.mxu0 0.0
      %846 = vmatprep.subr.mxu0 0.0
      %847 = vmatpush1.msra.mxu0 0.0
      %848 = vmatprep.subr.mxu0 0.0
      %849 = vmatpush1.msra.mxu0 0.0
      %850 = vmatprep.subr.mxu0 0.0
      %851 = vmatpush1.msra.mxu0 0.0
      %852 = vmatprep.subr.mxu0 0.0
      %853 = vmatpush1.msra.mxu0 0.0
      %854 = vmatprep.subr.mxu0 0.0
      %855 = vmatpush1.msra.mxu0 0.0
      %856 = vmatprep.subr.mxu0 0.0
      %857 = vmatpush1.msra.mxu0 0.0
      %858 = vmatprep.subr.mxu0 0.0
      %859 = vmatpush1.msra.mxu0 0.0
      %860 = vmatprep.subr.mxu0 0.0
      %861 = vmatpush1.msra.mxu0 0.0
      %862 = vmatprep.subr.mxu0 0.0
      %863 = vmatpush1.msra.mxu0 0.0
      %864 = vmatprep.subr.mxu0 0.0
      %865 = vmatpush1.msra.mxu0 0.0
      %866 = vmatprep.subr.mxu0 0.0
      %867 = vmatpush1.msra.mxu0 0.0
      %868 = vmatprep.subr.mxu0 0.0
      %869 = vmatpush1.msra.mxu0 0.0
      %870 = vmatprep.subr.mxu0 0.0
      %871 = vmatpush1.msra.mxu0 0.0
      %872 = vmatprep.subr.mxu0 0.0
      %873 = vmatpush1.msra.mxu0 0.0
      %874 = vmatprep.subr.mxu0 0.0
      %875 = vmatpush1.msra.mxu0 0.0
      %876 = vmatprep.subr.mxu0 0.0
      %877 = vmatpush1.msra.mxu0 0.0
      %878 = vmatprep.subr.mxu0 0.0
      %879 = vmatpush1.msra.mxu0 0.0
      %880 = vmatprep.subr.mxu0 0.0
      %881 = vmatpush1.msra.mxu0 0.0
      %882 = vmatprep.subr.mxu0 0.0
      %883 = vmatpush1.msra.mxu0 0.0
      %884 = vmatprep.subr.mxu0 0.0
      %885 = vmatpush1.msra.mxu0 0.0
      %886 = vmatprep.subr.mxu0 0.0
      %887 = vmatpush1.msra.mxu0 0.0
      %888 = vmatprep.subr.mxu0 0.0
      %889 = vmatpush1.msra.mxu0 0.0
      %890 = vmatprep.subr.mxu0 0.0
      %891 = vmatpush1.msra.mxu0 0.0
      %892 = vmatprep.subr.mxu0 0.0
      %893 = vmatpush1.msra.mxu0 0.0
      %894 = vmatprep.subr.mxu0 0.0
      %895 = vmatpush1.msra.mxu0 0.0
      %896 = vmatprep.subr.mxu0 0.0
      %897 = vmatpush1.msra.mxu0 0.0
      %898 = vmatprep.subr.mxu0 0.0
      %899 = vmatpush1.msra.mxu0 0.0
      %900 = vmatprep.subr.mxu0 0.0
      %901 = vmatpush1.msra.mxu0 0.0
      %902 = vmatprep.mubr.f32.mxu0 0.0
      %903 = vmatmul.mubr.f32.gmra.mrb[0].mxu0 %v836
      %v904 = vpop.f32.mrb[0].mxu0
      %v905 = vadd.f32 0.0, %v904
      %v906 = vpop.f32.mrb[0].mxu0
      %907 = vdwg.mxu0
      %908 = vrot.lane.b32.xlu0 %v745, 96
      %v909 = vpop.permute.xlu0 %908
      %910 = vrot.lane.b32.xlu0 %v653, 96
      %v911 = vpop.permute.xlu0 %910
      %v912 = vsel %vm746, %v909, 0
      %v914 = vsel %vm746, %v911, 0
      %916 = vmatprep.subr.mxu0 0.0
      %917 = vmatpush1.xpose.msra.mxu0 %v914
      %918 = vmatprep.subr.mxu0 0.0
      %919 = vmatpush1.xpose.msra.mxu0 0.0
      %920 = vmatprep.subr.mxu0 0.0
      %921 = vmatpush1.xpose.msra.mxu0 0.0
      %922 = vmatprep.subr.mxu0 0.0
      %923 = vmatpush1.xpose.msra.mxu0 0.0
      %924 = vmatprep.subr.mxu0 0.0
      %925 = vmatpush1.xpose.msra.mxu0 0.0
      %926 = vmatprep.subr.mxu0 0.0
      %927 = vmatpush1.xpose.msra.mxu0 0.0
      %928 = vmatprep.subr.mxu0 0.0
      %929 = vmatpush1.xpose.msra.mxu0 0.0
      %930 = vmatprep.subr.mxu0 0.0
      %931 = vmatpush1.xpose.msra.mxu0 0.0
      %932 = vmatprep.subr.mxu0 0.0
      %933 = vmatpush1.xpose.msra.mxu0 0.0
      %934 = vmatprep.subr.mxu0 0.0
      %935 = vmatpush1.xpose.msra.mxu0 0.0
      %936 = vmatprep.subr.mxu0 0.0
      %937 = vmatpush1.xpose.msra.mxu0 0.0
      %938 = vmatprep.subr.mxu0 0.0
      %939 = vmatpush1.xpose.msra.mxu0 0.0
      %940 = vmatprep.subr.mxu0 0.0
      %941 = vmatpush1.xpose.msra.mxu0 0.0
      %942 = vmatprep.subr.mxu0 0.0
      %943 = vmatpush1.xpose.msra.mxu0 0.0
      %944 = vmatprep.subr.mxu0 0.0
      %945 = vmatpush1.xpose.msra.mxu0 0.0
      %946 = vmatprep.subr.mxu0 0.0
      %947 = vmatpush1.xpose.msra.mxu0 0.0
      %948 = vmatprep.subr.mxu0 0.0
      %949 = vmatpush1.xpose.msra.mxu0 0.0
      %950 = vmatprep.subr.mxu0 0.0
      %951 = vmatpush1.xpose.msra.mxu0 0.0
      %952 = vmatprep.subr.mxu0 0.0
      %953 = vmatpush1.xpose.msra.mxu0 0.0
      %954 = vmatprep.subr.mxu0 0.0
      %955 = vmatpush1.xpose.msra.mxu0 0.0
      %956 = vmatprep.subr.mxu0 0.0
      %957 = vmatpush1.xpose.msra.mxu0 0.0
      %958 = vmatprep.subr.mxu0 0.0
      %959 = vmatpush1.xpose.msra.mxu0 0.0
      %960 = vmatprep.subr.mxu0 0.0
      %961 = vmatpush1.xpose.msra.mxu0 0.0
      %962 = vmatprep.subr.mxu0 0.0
      %963 = vmatpush1.xpose.msra.mxu0 0.0
      %964 = vmatprep.subr.mxu0 0.0
      %965 = vmatpush1.xpose.msra.mxu0 0.0
      %966 = vmatprep.subr.mxu0 0.0
      %967 = vmatpush1.xpose.msra.mxu0 0.0
      %968 = vmatprep.subr.mxu0 0.0
      %969 = vmatpush1.xpose.msra.mxu0 0.0
      %970 = vmatprep.subr.mxu0 0.0
      %971 = vmatpush1.xpose.msra.mxu0 0.0
      %972 = vmatprep.subr.mxu0 0.0
      %973 = vmatpush1.xpose.msra.mxu0 0.0
      %974 = vmatprep.subr.mxu0 0.0
      %975 = vmatpush1.xpose.msra.mxu0 0.0
      %976 = vmatprep.subr.mxu0 0.0
      %977 = vmatpush1.xpose.msra.mxu0 0.0
      %978 = vmatprep.subr.mxu0 0.0
      %979 = vmatpush1.xpose.msra.mxu0 0.0
      %980 = vmatprep.mubr.f32.mxu0 0.0
      %981 = vmatmul.mubr.f32.gmra.mrb[0].mxu0 %v912
      %v982 = vpop.f32.mrb[0].mxu0
      %v983 = vadd.f32 %v744, %v982
      %v984 = vpop.f32.mrb[0].mxu0
      %985 = vdwg.mxu0
      %v986 = vsel %vm823, %v983, -inf
      %987 = vmax.xlane.f32.xlu0 %v986
      %v988 = vpop.xlane.xlu0 %987
      %v989 = vsub.f32 %v983, %v988
      %v990 = vmul.f32 %v989, 1.442695
      %v991 = vpow.pop %v990
      %v992 = vsel %vm823, %v991, 0.0
      %993 = vadd.xlane.f32.xlu0 %v992
      %v994 = vpop.xlane.xlu0 %993
      %v995 = vrcp.pop %v994
      %v996 = vmul.f32 %v991, %v995
      %998 = vrot.lane.b32.xlu0 %v722, 96
      %v999 = vpop.permute.xlu0 %998
      %v1002 = vsel %vm823, %v996, 0
      %1004 = vmatprep.subr.mxu0 0.0
      %1005 = vmatpush1.msra.mxu0 %v999
      %1006 = vmatprep.subr.mxu0 0.0
      %1007 = vmatpush1.msra.mxu0 0.0
      %1008 = vmatprep.subr.mxu0 0.0
      %1009 = vmatpush1.msra.mxu0 0.0
      %1010 = vmatprep.subr.mxu0 0.0
      %1011 = vmatpush1.msra.mxu0 0.0
      %1012 = vmatprep.subr.mxu0 0.0
      %1013 = vmatpush1.msra.mxu0 0.0
      %1014 = vmatprep.subr.mxu0 0.0
      %1015 = vmatpush1.msra.mxu0 0.0
      %1016 = vmatprep.subr.mxu0 0.0
      %1017 = vmatpush1.msra.mxu0 0.0
      %1018 = vmatprep.subr.mxu0 0.0
      %1019 = vmatpush1.msra.mxu0 0.0
      %1020 = vmatprep.subr.mxu0 0.0
      %1021 = vmatpush1.msra.mxu0 0.0
      %1022 = vmatprep.subr.mxu0 0.0
      %1023 = vmatpush1.msra.mxu0 0.0
      %1024 = vmatprep.subr.mxu0 0.0
      %1025 = vmatpush1.msra.mxu0 0.0
      %1026 = vmatprep.subr.mxu0 0.0
      %1027 = vmatpush1.msra.mxu0 0.0
      %1028 = vmatprep.subr.mxu0 0.0
      %1029 = vmatpush1.msra.mxu0 0.0
      %1030 = vmatprep.subr.mxu0 0.0
      %1031 = vmatpush1.msra.mxu0 0.0
      %1032 = vmatprep.subr.mxu0 0.0
      %1033 = vmatpush1.msra.mxu0 0.0
      %1034 = vmatprep.subr.mxu0 0.0
      %1035 = vmatpush1.msra.mxu0 0.0
      %1036 = vmatprep.subr.mxu0 0.0
      %1037 = vmatpush1.msra.mxu0 0.0
      %1038 = vmatprep.subr.mxu0 0.0
      %1039 = vmatpush1.msra.mxu0 0.0
      %1040 = vmatprep.subr.mxu0 0.0
      %1041 = vmatpush1.msra.mxu0 0.0
      %1042 = vmatprep.subr.mxu0 0.0
      %1043 = vmatpush1.msra.mxu0 0.0
      %1044 = vmatprep.subr.mxu0 0.0
      %1045 = vmatpush1.msra.mxu0 0.0
      %1046 = vmatprep.subr.mxu0 0.0
      %1047 = vmatpush1.msra.mxu0 0.0
      %1048 = vmatprep.subr.mxu0 0.0
      %1049 = vmatpush1.msra.mxu0 0.0
      %1050 = vmatprep.subr.mxu0 0.0
      %1051 = vmatpush1.msra.mxu0 0.0
      %1052 = vmatprep.subr.mxu0 0.0
      %1053 = vmatpush1.msra.mxu0 0.0
      %1054 = vmatprep.subr.mxu0 0.0
      %1055 = vmatpush1.msra.mxu0 0.0
      %1056 = vmatprep.subr.mxu0 0.0
      %1057 = vmatpush1.msra.mxu0 0.0
      %1058 = vmatprep.subr.mxu0 0.0
      %1059 = vmatpush1.msra.mxu0 0.0
      %1060 = vmatprep.subr.mxu0 0.0
      %1061 = vmatpush1.msra.mxu0 0.0
      %1062 = vmatprep.subr.mxu0 0.0
      %1063 = vmatpush1.msra.mxu0 0.0
      %1064 = vmatprep.subr.mxu0 0.0
      %1065 = vmatpush1.msra.mxu0 0.0
      %1066 = vmatprep.subr.mxu0 0.0
      %1067 = vmatpush1.msra.mxu0 0.0
      %1068 = vmatprep.mubr.f32.mxu0 0.0
      %1069 = vmatmul.mubr.f32.gmra.mrb[0].mxu0 %v1002
      %v1070 = vpop.f32.mrb[0].mxu0
      %v1071 = vadd.f32 0.0, %v1070
      %v1072 = vpop.f32.mrb[0].mxu0
      %1073 = vdwg.mxu0
      %v1075 = vsel %vm746, %v1071, 0
      %1077 = vmatprep.subr.mxu0 0.0
      %1078 = vmatpush1.msra.mxu0 %v729
      %1079 = vmatprep.subr.mxu0 0.0
      %1080 = vmatpush1.msra.mxu0 %v730
      %1081 = vmatprep.subr.mxu0 0.0
      %1082 = vmatpush1.msra.mxu0 %v731
      %1083 = vmatprep.subr.mxu0 0.0
      %1084 = vmatpush1.msra.mxu0 %v732
      %1085 = vmatprep.subr.mxu0 0.0
      %1086 = vmatpush1.msra.mxu0 0.0
      %1087 = vmatprep.subr.mxu0 0.0
      %1088 = vmatpush1.msra.mxu0 0.0
      %1089 = vmatprep.subr.mxu0 0.0
      %1090 = vmatpush1.msra.mxu0 0.0
      %1091 = vmatprep.subr.mxu0 0.0
      %1092 = vmatpush1.msra.mxu0 0.0
      %1093 = vmatprep.subr.mxu0 0.0
      %1094 = vmatpush1.msra.mxu0 0.0
      %1095 = vmatprep.subr.mxu0 0.0
      %1096 = vmatpush1.msra.mxu0 0.0
      %1097 = vmatprep.subr.mxu0 0.0
      %1098 = vmatpush1.msra.mxu0 0.0
      %1099 = vmatprep.subr.mxu0 0.0
      %1100 = vmatpush1.msra.mxu0 0.0
      %1101 = vmatprep.subr.mxu0 0.0
      %1102 = vmatpush1.msra.mxu0 0.0
      %1103 = vmatprep.subr.mxu0 0.0
      %1104 = vmatpush1.msra.mxu0 0.0
      %1105 = vmatprep.subr.mxu0 0.0
      %1106 = vmatpush1.msra.mxu0 0.0
      %1107 = vmatprep.subr.mxu0 0.0
      %1108 = vmatpush1.msra.mxu0 0.0
      %1109 = vmatprep.subr.mxu0 0.0
      %1110 = vmatpush1.msra.mxu0 0.0
      %1111 = vmatprep.subr.mxu0 0.0
      %1112 = vmatpush1.msra.mxu0 0.0
      %1113 = vmatprep.subr.mxu0 0.0
      %1114 = vmatpush1.msra.mxu0 0.0
      %1115 = vmatprep.subr.mxu0 0.0
      %1116 = vmatpush1.msra.mxu0 0.0
      %1117 = vmatprep.subr.mxu0 0.0
      %1118 = vmatpush1.msra.mxu0 0.0
      %1119 = vmatprep.subr.mxu0 0.0
      %1120 = vmatpush1.msra.mxu0 0.0
      %1121 = vmatprep.subr.mxu0 0.0
      %1122 = vmatpush1.msra.mxu0 0.0
      %1123 = vmatprep.subr.mxu0 0.0
      %1124 = vmatpush1.msra.mxu0 0.0
      %1125 = vmatprep.subr.mxu0 0.0
      %1126 = vmatpush1.msra.mxu0 0.0
      %1127 = vmatprep.subr.mxu0 0.0
      %1128 = vmatpush1.msra.mxu0 0.0
      %1129 = vmatprep.subr.mxu0 0.0
      %1130 = vmatpush1.msra.mxu0 0.0
      %1131 = vmatprep.subr.mxu0 0.0
      %1132 = vmatpush1.msra.mxu0 0.0
      %1133 = vmatprep.subr.mxu0 0.0
      %1134 = vmatpush1.msra.mxu0 0.0
      %1135 = vmatprep.subr.mxu0 0.0
      %1136 = vmatpush1.msra.mxu0 0.0
      %1137 = vmatprep.subr.mxu0 0.0
      %1138 = vmatpush1.msra.mxu0 0.0
      %1139 = vmatprep.subr.mxu0 0.0
      %1140 = vmatpush1.msra.mxu0 0.0
      %1141 = vmatprep.mubr.f32.mxu0 0.0
      %1142 = vmatmul.mubr.f32.gmra.mrb[0].mxu0 %v1075
      %v1143 = vpop.f32.mrb[0].mxu0
      %v1144 = vadd.f32 0.0, %v1143
      %v1145 = vpop.f32.mrb[0].mxu0
      %1146 = vdwg.mxu0
      %v1148 = vsel %vm746, %v905, 0
      %1150 = vmatprep.subr.mxu0 0.0
      %1151 = vmatpush1.msra.mxu0 %v725
      %1152 = vmatprep.subr.mxu0 0.0
      %1153 = vmatpush1.msra.mxu0 %v726
      %1154 = vmatprep.subr.mxu0 0.0
      %1155 = vmatpush1.msra.mxu0 %v727
      %1156 = vmatprep.subr.mxu0 0.0
      %1157 = vmatpush1.msra.mxu0 %v728
      %1158 = vmatprep.subr.mxu0 0.0
      %1159 = vmatpush1.msra.mxu0 0.0
      %1160 = vmatprep.subr.mxu0 0.0
      %1161 = vmatpush1.msra.mxu0 0.0
      %1162 = vmatprep.subr.mxu0 0.0
      %1163 = vmatpush1.msra.mxu0 0.0
      %1164 = vmatprep.subr.mxu0 0.0
      %1165 = vmatpush1.msra.mxu0 0.0
      %1166 = vmatprep.subr.mxu0 0.0
      %1167 = vmatpush1.msra.mxu0 0.0
      %1168 = vmatprep.subr.mxu0 0.0
      %1169 = vmatpush1.msra.mxu0 0.0
      %1170 = vmatprep.subr.mxu0 0.0
      %1171 = vmatpush1.msra.mxu0 0.0
      %1172 = vmatprep.subr.mxu0 0.0
      %1173 = vmatpush1.msra.mxu0 0.0
      %1174 = vmatprep.subr.mxu0 0.0
      %1175 = vmatpush1.msra.mxu0 0.0
      %1176 = vmatprep.subr.mxu0 0.0
      %1177 = vmatpush1.msra.mxu0 0.0
      %1178 = vmatprep.subr.mxu0 0.0
      %1179 = vmatpush1.msra.mxu0 0.0
      %1180 = vmatprep.subr.mxu0 0.0
      %1181 = vmatpush1.msra.mxu0 0.0
      %1182 = vmatprep.subr.mxu0 0.0
      %1183 = vmatpush1.msra.mxu0 0.0
      %1184 = vmatprep.subr.mxu0 0.0
      %1185 = vmatpush1.msra.mxu0 0.0
      %1186 = vmatprep.subr.mxu0 0.0
      %1187 = vmatpush1.msra.mxu0 0.0
      %1188 = vmatprep.subr.mxu0 0.0
      %1189 = vmatpush1.msra.mxu0 0.0
      %1190 = vmatprep.subr.mxu0 0.0
      %1191 = vmatpush1.msra.mxu0 0.0
      %1192 = vmatprep.subr.mxu0 0.0
      %1193 = vmatpush1.msra.mxu0 0.0
      %1194 = vmatprep.subr.mxu0 0.0
      %1195 = vmatpush1.msra.mxu0 0.0
      %1196 = vmatprep.subr.mxu0 0.0
      %1197 = vmatpush1.msra.mxu0 0.0
      %1198 = vmatprep.subr.mxu0 0.0
      %1199 = vmatpush1.msra.mxu0 0.0
      %1200 = vmatprep.subr.mxu0 0.0
      %1201 = vmatpush1.msra.mxu0 0.0
      %1202 = vmatprep.subr.mxu0 0.0
      %1203 = vmatpush1.msra.mxu0 0.0
      %1204 = vmatprep.subr.mxu0 0.0
      %1205 = vmatpush1.msra.mxu0 0.0
      %1206 = vmatprep.subr.mxu0 0.0
      %1207 = vmatpush1.msra.mxu0 0.0
      %1208 = vmatprep.subr.mxu0 0.0
      %1209 = vmatpush1.msra.mxu0 0.0
      %1210 = vmatprep.subr.mxu0 0.0
      %1211 = vmatpush1.msra.mxu0 0.0
      %1212 = vmatprep.subr.mxu0 0.0
      %1213 = vmatpush1.msra.mxu0 0.0
      %1214 = vmatprep.mubr.f32.mxu0 0.0
      %1215 = vmatmul.mubr.f32.gmra.mrb[0].mxu0 %v1148
      %v1216 = vpop.f32.mrb[0].mxu0
      %v1217 = vadd.f32 %v1144, %v1216
      %v1218 = vpop.f32.mrb[0].mxu0
      %1219 = vdwg.mxu0
      %1220 = vrot.lane.b32.xlu0 %v745, 64
      %v1221 = vpop.permute.xlu0 %1220
      %1222 = vrot.lane.b32.xlu0 %v653, 64
      %v1223 = vpop.permute.xlu0 %1222
      %v1224 = vsel %vm746, %v1221, 0
      %v1226 = vsel %vm746, %v1223, 0
      %1228 = vmatprep.subr.mxu0 0.0
      %1229 = vmatpush1.xpose.msra.mxu0 %v1226
      %1230 = vmatprep.subr.mxu0 0.0
      %1231 = vmatpush1.xpose.msra.mxu0 0.0
      %1232 = vmatprep.subr.mxu0 0.0
      %1233 = vmatpush1.xpose.msra.mxu0 0.0
      %1234 = vmatprep.subr.mxu0 0.0
      %1235 = vmatpush1.xpose.msra.mxu0 0.0
      %1236 = vmatprep.subr.mxu0 0.0
      %1237 = vmatpush1.xpose.msra.mxu0 0.0
      %1238 = vmatprep.subr.mxu0 0.0
      %1239 = vmatpush1.xpose.msra.mxu0 0.0
      %1240 = vmatprep.subr.mxu0 0.0
      %1241 = vmatpush1.xpose.msra.mxu0 0.0
      %1242 = vmatprep.subr.mxu0 0.0
      %1243 = vmatpush1.xpose.msra.mxu0 0.0
      %1244 = vmatprep.subr.mxu0 0.0
      %1245 = vmatpush1.xpose.msra.mxu0 0.0
      %1246 = vmatprep.subr.mxu0 0.0
      %1247 = vmatpush1.xpose.msra.mxu0 0.0
      %1248 = vmatprep.subr.mxu0 0.0
      %1249 = vmatpush1.xpose.msra.mxu0 0.0
      %1250 = vmatprep.subr.mxu0 0.0
      %1251 = vmatpush1.xpose.msra.mxu0 0.0
      %1252 = vmatprep.subr.mxu0 0.0
      %1253 = vmatpush1.xpose.msra.mxu0 0.0
      %1254 = vmatprep.subr.mxu0 0.0
      %1255 = vmatpush1.xpose.msra.mxu0 0.0
      %1256 = vmatprep.subr.mxu0 0.0
      %1257 = vmatpush1.xpose.msra.mxu0 0.0
      %1258 = vmatprep.subr.mxu0 0.0
      %1259 = vmatpush1.xpose.msra.mxu0 0.0
      %1260 = vmatprep.subr.mxu0 0.0
      %1261 = vmatpush1.xpose.msra.mxu0 0.0
      %1262 = vmatprep.subr.mxu0 0.0
      %1263 = vmatpush1.xpose.msra.mxu0 0.0
      %1264 = vmatprep.subr.mxu0 0.0
      %1265 = vmatpush1.xpose.msra.mxu0 0.0
      %1266 = vmatprep.subr.mxu0 0.0
      %1267 = vmatpush1.xpose.msra.mxu0 0.0
      %1268 = vmatprep.subr.mxu0 0.0
      %1269 = vmatpush1.xpose.msra.mxu0 0.0
      %1270 = vmatprep.subr.mxu0 0.0
      %1271 = vmatpush1.xpose.msra.mxu0 0.0
      %1272 = vmatprep.subr.mxu0 0.0
      %1273 = vmatpush1.xpose.msra.mxu0 0.0
      %1274 = vmatprep.subr.mxu0 0.0
      %1275 = vmatpush1.xpose.msra.mxu0 0.0
      %1276 = vmatprep.subr.mxu0 0.0
      %1277 = vmatpush1.xpose.msra.mxu0 0.0
      %1278 = vmatprep.subr.mxu0 0.0
      %1279 = vmatpush1.xpose.msra.mxu0 0.0
      %1280 = vmatprep.subr.mxu0 0.0
      %1281 = vmatpush1.xpose.msra.mxu0 0.0
      %1282 = vmatprep.subr.mxu0 0.0
      %1283 = vmatpush1.xpose.msra.mxu0 0.0
      %1284 = vmatprep.subr.mxu0 0.0
      %1285 = vmatpush1.xpose.msra.mxu0 0.0
      %1286 = vmatprep.subr.mxu0 0.0
      %1287 = vmatpush1.xpose.msra.mxu0 0.0
      %1288 = vmatprep.subr.mxu0 0.0
      %1289 = vmatpush1.xpose.msra.mxu0 0.0
      %1290 = vmatprep.subr.mxu0 0.0
      %1291 = vmatpush1.xpose.msra.mxu0 0.0
      %1292 = vmatprep.mubr.f32.mxu0 0.0
      %1293 = vmatmul.mubr.f32.gmra.mrb[0].mxu0 %v1224
      %v1294 = vpop.f32.mrb[0].mxu0
      %v1295 = vadd.f32 %v744, %v1294
      %v1296 = vpop.f32.mrb[0].mxu0
      %1297 = vdwg.mxu0
      %v1298 = vsel %vm823, %v1295, -inf
      %1299 = vmax.xlane.f32.xlu0 %v1298
      %v1300 = vpop.xlane.xlu0 %1299
      %v1301 = vsub.f32 %v1295, %v1300
      %v1302 = vmul.f32 %v1301, 1.442695
      %v1303 = vpow.pop %v1302
      %v1304 = vsel %vm823, %v1303, 0.0
      %1305 = vadd.xlane.f32.xlu0 %v1304
      %v1306 = vpop.xlane.xlu0 %1305
      %v1307 = vrcp.pop %v1306
      %v1308 = vmul.f32 %v1303, %v1307
      %1309 = vrot.lane.b32.xlu0 %v722, 64
      %v1310 = vpop.permute.xlu0 %1309
      %v1313 = vsel %vm823, %v1308, 0
      %1315 = vmatprep.subr.mxu0 0.0
      %1316 = vmatpush1.msra.mxu0 %v1310
      %1317 = vmatprep.subr.mxu0 0.0
      %1318 = vmatpush1.msra.mxu0 0.0
      %1319 = vmatprep.subr.mxu0 0.0
      %1320 = vmatpush1.msra.mxu0 0.0
      %1321 = vmatprep.subr.mxu0 0.0
      %1322 = vmatpush1.msra.mxu0 0.0
      %1323 = vmatprep.subr.mxu0 0.0
      %1324 = vmatpush1.msra.mxu0 0.0
      %1325 = vmatprep.subr.mxu0 0.0
      %1326 = vmatpush1.msra.mxu0 0.0
      %1327 = vmatprep.subr.mxu0 0.0
      %1328 = vmatpush1.msra.mxu0 0.0
      %1329 = vmatprep.subr.mxu0 0.0
      %1330 = vmatpush1.msra.mxu0 0.0
      %1331 = vmatprep.subr.mxu0 0.0
      %1332 = vmatpush1.msra.mxu0 0.0
      %1333 = vmatprep.subr.mxu0 0.0
      %1334 = vmatpush1.msra.mxu0 0.0
      %1335 = vmatprep.subr.mxu0 0.0
      %1336 = vmatpush1.msra.mxu0 0.0
      %1337 = vmatprep.subr.mxu0 0.0
      %1338 = vmatpush1.msra.mxu0 0.0
      %1339 = vmatprep.subr.mxu0 0.0
      %1340 = vmatpush1.msra.mxu0 0.0
      %1341 = vmatprep.subr.mxu0 0.0
      %1342 = vmatpush1.msra.mxu0 0.0
      %1343 = vmatprep.subr.mxu0 0.0
      %1344 = vmatpush1.msra.mxu0 0.0
      %1345 = vmatprep.subr.mxu0 0.0
      %1346 = vmatpush1.msra.mxu0 0.0
      %1347 = vmatprep.subr.mxu0 0.0
      %1348 = vmatpush1.msra.mxu0 0.0
      %1349 = vmatprep.subr.mxu0 0.0
      %1350 = vmatpush1.msra.mxu0 0.0
      %1351 = vmatprep.subr.mxu0 0.0
      %1352 = vmatpush1.msra.mxu0 0.0
      %1353 = vmatprep.subr.mxu0 0.0
      %1354 = vmatpush1.msra.mxu0 0.0
      %1355 = vmatprep.subr.mxu0 0.0
      %1356 = vmatpush1.msra.mxu0 0.0
      %1357 = vmatprep.subr.mxu0 0.0
      %1358 = vmatpush1.msra.mxu0 0.0
      %1359 = vmatprep.subr.mxu0 0.0
      %1360 = vmatpush1.msra.mxu0 0.0
      %1361 = vmatprep.subr.mxu0 0.0
      %1362 = vmatpush1.msra.mxu0 0.0
      %1363 = vmatprep.subr.mxu0 0.0
      %1364 = vmatpush1.msra.mxu0 0.0
      %1365 = vmatprep.subr.mxu0 0.0
      %1366 = vmatpush1.msra.mxu0 0.0
      %1367 = vmatprep.subr.mxu0 0.0
      %1368 = vmatpush1.msra.mxu0 0.0
      %1369 = vmatprep.subr.mxu0 0.0
      %1370 = vmatpush1.msra.mxu0 0.0
      %1371 = vmatprep.subr.mxu0 0.0
      %1372 = vmatpush1.msra.mxu0 0.0
      %1373 = vmatprep.subr.mxu0 0.0
      %1374 = vmatpush1.msra.mxu0 0.0
      %1375 = vmatprep.subr.mxu0 0.0
      %1376 = vmatpush1.msra.mxu0 0.0
      %1377 = vmatprep.subr.mxu0 0.0
      %1378 = vmatpush1.msra.mxu0 0.0
      %1379 = vmatprep.mubr.f32.mxu0 0.0
      %1380 = vmatmul.mubr.f32.gmra.mrb[0].mxu0 %v1313
      %v1381 = vpop.f32.mrb[0].mxu0
      %v1382 = vadd.f32 0.0, %v1381
      %v1383 = vpop.f32.mrb[0].mxu0
      %1384 = vdwg.mxu0
      %v1386 = vsel %vm746, %v1382, 0
      %1388 = vmatprep.subr.mxu0 0.0
      %1389 = vmatpush1.msra.mxu0 %v733
      %1390 = vmatprep.subr.mxu0 0.0
      %1391 = vmatpush1.msra.mxu0 %v734
      %1392 = vmatprep.subr.mxu0 0.0
      %1393 = vmatpush1.msra.mxu0 %v735
      %1394 = vmatprep.subr.mxu0 0.0
      %1395 = vmatpush1.msra.mxu0 %v736
      %1396 = vmatprep.subr.mxu0 0.0
      %1397 = vmatpush1.msra.mxu0 0.0
      %1398 = vmatprep.subr.mxu0 0.0
      %1399 = vmatpush1.msra.mxu0 0.0
      %1400 = vmatprep.subr.mxu0 0.0
      %1401 = vmatpush1.msra.mxu0 0.0
      %1402 = vmatprep.subr.mxu0 0.0
      %1403 = vmatpush1.msra.mxu0 0.0
      %1404 = vmatprep.subr.mxu0 0.0
      %1405 = vmatpush1.msra.mxu0 0.0
      %1406 = vmatprep.subr.mxu0 0.0
      %1407 = vmatpush1.msra.mxu0 0.0
      %1408 = vmatprep.subr.mxu0 0.0
      %1409 = vmatpush1.msra.mxu0 0.0
      %1410 = vmatprep.subr.mxu0 0.0
      %1411 = vmatpush1.msra.mxu0 0.0
      %1412 = vmatprep.subr.mxu0 0.0
      %1413 = vmatpush1.msra.mxu0 0.0
      %1414 = vmatprep.subr.mxu0 0.0
      %1415 = vmatpush1.msra.mxu0 0.0
      %1416 = vmatprep.subr.mxu0 0.0
      %1417 = vmatpush1.msra.mxu0 0.0
      %1418 = vmatprep.subr.mxu0 0.0
      %1419 = vmatpush1.msra.mxu0 0.0
      %1420 = vmatprep.subr.mxu0 0.0
      %1421 = vmatpush1.msra.mxu0 0.0
      %1422 = vmatprep.subr.mxu0 0.0
      %1423 = vmatpush1.msra.mxu0 0.0
      %1424 = vmatprep.subr.mxu0 0.0
      %1425 = vmatpush1.msra.mxu0 0.0
      %1426 = vmatprep.subr.mxu0 0.0
      %1427 = vmatpush1.msra.mxu0 0.0
      %1428 = vmatprep.subr.mxu0 0.0
      %1429 = vmatpush1.msra.mxu0 0.0
      %1430 = vmatprep.subr.mxu0 0.0
      %1431 = vmatpush1.msra.mxu0 0.0
      %1432 = vmatprep.subr.mxu0 0.0
      %1433 = vmatpush1.msra.mxu0 0.0
      %1434 = vmatprep.subr.mxu0 0.0
      %1435 = vmatpush1.msra.mxu0 0.0
      %1436 = vmatprep.subr.mxu0 0.0
      %1437 = vmatpush1.msra.mxu0 0.0
      %1438 = vmatprep.subr.mxu0 0.0
      %1439 = vmatpush1.msra.mxu0 0.0
      %1440 = vmatprep.subr.mxu0 0.0
      %1441 = vmatpush1.msra.mxu0 0.0
      %1442 = vmatprep.subr.mxu0 0.0
      %1443 = vmatpush1.msra.mxu0 0.0
      %1444 = vmatprep.subr.mxu0 0.0
      %1445 = vmatpush1.msra.mxu0 0.0
      %1446 = vmatprep.subr.mxu0 0.0
      %1447 = vmatpush1.msra.mxu0 0.0
      %1448 = vmatprep.subr.mxu0 0.0
      %1449 = vmatpush1.msra.mxu0 0.0
      %1450 = vmatprep.subr.mxu0 0.0
      %1451 = vmatpush1.msra.mxu0 0.0
      %1452 = vmatprep.mubr.f32.mxu0 0.0
      %1453 = vmatmul.mubr.f32.gmra.mrb[0].mxu0 %v1386
      %v1454 = vpop.f32.mrb[0].mxu0
      %v1455 = vadd.f32 0.0, %v1454
      %v1456 = vpop.f32.mrb[0].mxu0
      %1457 = vdwg.mxu0
      %v1458 = vadd.f32 %v1217, %v1455
      %1459 = vrot.lane.b32.xlu0 %v745, 32
      %v1460 = vpop.permute.xlu0 %1459
      %1461 = vrot.lane.b32.xlu0 %v653, 32
      %v1462 = vpop.permute.xlu0 %1461
      %v1463 = vsel %vm746, %v1460, 0
      %v1465 = vsel %vm746, %v1462, 0
      %1467 = vmatprep.subr.mxu0 0.0
      %1468 = vmatpush1.xpose.msra.mxu0 %v1465
      %1469 = vmatprep.subr.mxu0 0.0
      %1470 = vmatpush1.xpose.msra.mxu0 0.0
      %1471 = vmatprep.subr.mxu0 0.0
      %1472 = vmatpush1.xpose.msra.mxu0 0.0
      %1473 = vmatprep.subr.mxu0 0.0
      %1474 = vmatpush1.xpose.msra.mxu0 0.0
      %1475 = vmatprep.subr.mxu0 0.0
      %1476 = vmatpush1.xpose.msra.mxu0 0.0
      %1477 = vmatprep.subr.mxu0 0.0
      %1478 = vmatpush1.xpose.msra.mxu0 0.0
      %1479 = vmatprep.subr.mxu0 0.0
      %1480 = vmatpush1.xpose.msra.mxu0 0.0
      %1481 = vmatprep.subr.mxu0 0.0
      %1482 = vmatpush1.xpose.msra.mxu0 0.0
      %1483 = vmatprep.subr.mxu0 0.0
      %1484 = vmatpush1.xpose.msra.mxu0 0.0
      %1485 = vmatprep.subr.mxu0 0.0
      %1486 = vmatpush1.xpose.msra.mxu0 0.0
      %1487 = vmatprep.subr.mxu0 0.0
      %1488 = vmatpush1.xpose.msra.mxu0 0.0
      %1489 = vmatprep.subr.mxu0 0.0
      %1490 = vmatpush1.xpose.msra.mxu0 0.0
      %1491 = vmatprep.subr.mxu0 0.0
      %1492 = vmatpush1.xpose.msra.mxu0 0.0
      %1493 = vmatprep.subr.mxu0 0.0
      %1494 = vmatpush1.xpose.msra.mxu0 0.0
      %1495 = vmatprep.subr.mxu0 0.0
      %1496 = vmatpush1.xpose.msra.mxu0 0.0
      %1497 = vmatprep.subr.mxu0 0.0
      %1498 = vmatpush1.xpose.msra.mxu0 0.0
      %1499 = vmatprep.subr.mxu0 0.0
      %1500 = vmatpush1.xpose.msra.mxu0 0.0
      %1501 = vmatprep.subr.mxu0 0.0
      %1502 = vmatpush1.xpose.msra.mxu0 0.0
      %1503 = vmatprep.subr.mxu0 0.0
      %1504 = vmatpush1.xpose.msra.mxu0 0.0
      %1505 = vmatprep.subr.mxu0 0.0
      %1506 = vmatpush1.xpose.msra.mxu0 0.0
      %1507 = vmatprep.subr.mxu0 0.0
      %1508 = vmatpush1.xpose.msra.mxu0 0.0
      %1509 = vmatprep.subr.mxu0 0.0
      %1510 = vmatpush1.xpose.msra.mxu0 0.0
      %1511 = vmatprep.subr.mxu0 0.0
      %1512 = vmatpush1.xpose.msra.mxu0 0.0
      %1513 = vmatprep.subr.mxu0 0.0
      %1514 = vmatpush1.xpose.msra.mxu0 0.0
      %1515 = vmatprep.subr.mxu0 0.0
      %1516 = vmatpush1.xpose.msra.mxu0 0.0
      %1517 = vmatprep.subr.mxu0 0.0
      %1518 = vmatpush1.xpose.msra.mxu0 0.0
      %1519 = vmatprep.subr.mxu0 0.0
      %1520 = vmatpush1.xpose.msra.mxu0 0.0
      %1521 = vmatprep.subr.mxu0 0.0
      %1522 = vmatpush1.xpose.msra.mxu0 0.0
      %1523 = vmatprep.subr.mxu0 0.0
      %1524 = vmatpush1.xpose.msra.mxu0 0.0
      %1525 = vmatprep.subr.mxu0 0.0
      %1526 = vmatpush1.xpose.msra.mxu0 0.0
      %1527 = vmatprep.subr.mxu0 0.0
      %1528 = vmatpush1.xpose.msra.mxu0 0.0
      %1529 = vmatprep.subr.mxu0 0.0
      %1530 = vmatpush1.xpose.msra.mxu0 0.0
      %1531 = vmatprep.mubr.f32.mxu0 0.0
      %1532 = vmatmul.mubr.f32.gmra.mrb[0].mxu0 %v1463
      %v1533 = vpop.f32.mrb[0].mxu0
      %v1534 = vadd.f32 %v744, %v1533
      %v1535 = vpop.f32.mrb[0].mxu0
      %1536 = vdwg.mxu0
      %v1537 = vsel %vm823, %v1534, -inf
      %1538 = vmax.xlane.f32.xlu0 %v1537
      %v1539 = vpop.xlane.xlu0 %1538
      %v1540 = vsub.f32 %v1534, %v1539
      %v1541 = vmul.f32 %v1540, 1.442695
      %v1542 = vpow.pop %v1541
      %v1543 = vsel %vm823, %v1542, 0.0
      %1544 = vadd.xlane.f32.xlu0 %v1543
      %v1545 = vpop.xlane.xlu0 %1544
      %v1546 = vrcp.pop %v1545
      %v1547 = vmul.f32 %v1542, %v1546
      %1548 = vrot.lane.b32.xlu0 %v722, 32
      %v1549 = vpop.permute.xlu0 %1548
      %v1552 = vsel %vm823, %v1547, 0
      %1554 = vmatprep.subr.mxu0 0.0
      %1555 = vmatpush1.msra.mxu0 %v1549
      %1556 = vmatprep.subr.mxu0 0.0
      %1557 = vmatpush1.msra.mxu0 0.0
      %1558 = vmatprep.subr.mxu0 0.0
      %1559 = vmatpush1.msra.mxu0 0.0
      %1560 = vmatprep.subr.mxu0 0.0
      %1561 = vmatpush1.msra.mxu0 0.0
      %1562 = vmatprep.subr.mxu0 0.0
      %1563 = vmatpush1.msra.mxu0 0.0
      %1564 = vmatprep.subr.mxu0 0.0
      %1565 = vmatpush1.msra.mxu0 0.0
      %1566 = vmatprep.subr.mxu0 0.0
      %1567 = vmatpush1.msra.mxu0 0.0
      %1568 = vmatprep.subr.mxu0 0.0
      %1569 = vmatpush1.msra.mxu0 0.0
      %1570 = vmatprep.subr.mxu0 0.0
      %1571 = vmatpush1.msra.mxu0 0.0
      %1572 = vmatprep.subr.mxu0 0.0
      %1573 = vmatpush1.msra.mxu0 0.0
      %1574 = vmatprep.subr.mxu0 0.0
      %1575 = vmatpush1.msra.mxu0 0.0
      %1576 = vmatprep.subr.mxu0 0.0
      %1577 = vmatpush1.msra.mxu0 0.0
      %1578 = vmatprep.subr.mxu0 0.0
      %1579 = vmatpush1.msra.mxu0 0.0
      %1580 = vmatprep.subr.mxu0 0.0
      %1581 = vmatpush1.msra.mxu0 0.0
      %1582 = vmatprep.subr.mxu0 0.0
      %1583 = vmatpush1.msra.mxu0 0.0
      %1584 = vmatprep.subr.mxu0 0.0
      %1585 = vmatpush1.msra.mxu0 0.0
      %1586 = vmatprep.subr.mxu0 0.0
      %1587 = vmatpush1.msra.mxu0 0.0
      %1588 = vmatprep.subr.mxu0 0.0
      %1589 = vmatpush1.msra.mxu0 0.0
      %1590 = vmatprep.subr.mxu0 0.0
      %1591 = vmatpush1.msra.mxu0 0.0
      %1592 = vmatprep.subr.mxu0 0.0
      %1593 = vmatpush1.msra.mxu0 0.0
      %1594 = vmatprep.subr.mxu0 0.0
      %1595 = vmatpush1.msra.mxu0 0.0
      %1596 = vmatprep.subr.mxu0 0.0
      %1597 = vmatpush1.msra.mxu0 0.0
      %1598 = vmatprep.subr.mxu0 0.0
      %1599 = vmatpush1.msra.mxu0 0.0
      %1600 = vmatprep.subr.mxu0 0.0
      %1601 = vmatpush1.msra.mxu0 0.0
      %1602 = vmatprep.subr.mxu0 0.0
      %1603 = vmatpush1.msra.mxu0 0.0
      %1604 = vmatprep.subr.mxu0 0.0
      %1605 = vmatpush1.msra.mxu0 0.0
      %1606 = vmatprep.subr.mxu0 0.0
      %1607 = vmatpush1.msra.mxu0 0.0
      %1608 = vmatprep.subr.mxu0 0.0
      %1609 = vmatpush1.msra.mxu0 0.0
      %1610 = vmatprep.subr.mxu0 0.0
      %1611 = vmatpush1.msra.mxu0 0.0
      %1612 = vmatprep.subr.mxu0 0.0
      %1613 = vmatpush1.msra.mxu0 0.0
      %1614 = vmatprep.subr.mxu0 0.0
      %1615 = vmatpush1.msra.mxu0 0.0
      %1616 = vmatprep.subr.mxu0 0.0
      %1617 = vmatpush1.msra.mxu0 0.0
      %1618 = vmatprep.mubr.f32.mxu0 0.0
      %1619 = vmatmul.mubr.f32.gmra.mrb[0].mxu0 %v1552
      %v1620 = vpop.f32.mrb[0].mxu0
      %v1621 = vadd.f32 0.0, %v1620
      %v1622 = vpop.f32.mrb[0].mxu0
      %1623 = vdwg.mxu0
      %v1625 = vsel %vm746, %v1621, 0
      %1627 = vmatprep.subr.mxu0 0.0
      %1628 = vmatpush1.msra.mxu0 %v737
      %1629 = vmatprep.subr.mxu0 0.0
      %1630 = vmatpush1.msra.mxu0 %v738
      %1631 = vmatprep.subr.mxu0 0.0
      %1632 = vmatpush1.msra.mxu0 %v739
      %1633 = vmatprep.subr.mxu0 0.0
      %1634 = vmatpush1.msra.mxu0 %v740
      %1635 = vmatprep.subr.mxu0 0.0
      %1636 = vmatpush1.msra.mxu0 0.0
      %1637 = vmatprep.subr.mxu0 0.0
      %1638 = vmatpush1.msra.mxu0 0.0
      %1639 = vmatprep.subr.mxu0 0.0
      %1640 = vmatpush1.msra.mxu0 0.0
      %1641 = vmatprep.subr.mxu0 0.0
      %1642 = vmatpush1.msra.mxu0 0.0
      %1643 = vmatprep.subr.mxu0 0.0
      %1644 = vmatpush1.msra.mxu0 0.0
      %1645 = vmatprep.subr.mxu0 0.0
      %1646 = vmatpush1.msra.mxu0 0.0
      %1647 = vmatprep.subr.mxu0 0.0
      %1648 = vmatpush1.msra.mxu0 0.0
      %1649 = vmatprep.subr.mxu0 0.0
      %1650 = vmatpush1.msra.mxu0 0.0
      %1651 = vmatprep.subr.mxu0 0.0
      %1652 = vmatpush1.msra.mxu0 0.0
      %1653 = vmatprep.subr.mxu0 0.0
      %1654 = vmatpush1.msra.mxu0 0.0
      %1655 = vmatprep.subr.mxu0 0.0
      %1656 = vmatpush1.msra.mxu0 0.0
      %1657 = vmatprep.subr.mxu0 0.0
      %1658 = vmatpush1.msra.mxu0 0.0
      %1659 = vmatprep.subr.mxu0 0.0
      %1660 = vmatpush1.msra.mxu0 0.0
      %1661 = vmatprep.subr.mxu0 0.0
      %1662 = vmatpush1.msra.mxu0 0.0
      %1663 = vmatprep.subr.mxu0 0.0
      %1664 = vmatpush1.msra.mxu0 0.0
      %1665 = vmatprep.subr.mxu0 0.0
      %1666 = vmatpush1.msra.mxu0 0.0
      %1667 = vmatprep.subr.mxu0 0.0
      %1668 = vmatpush1.msra.mxu0 0.0
      %1669 = vmatprep.subr.mxu0 0.0
      %1670 = vmatpush1.msra.mxu0 0.0
      %1671 = vmatprep.subr.mxu0 0.0
      %1672 = vmatpush1.msra.mxu0 0.0
      %1673 = vmatprep.subr.mxu0 0.0
      %1674 = vmatpush1.msra.mxu0 0.0
      %1675 = vmatprep.subr.mxu0 0.0
      %1676 = vmatpush1.msra.mxu0 0.0
      %1677 = vmatprep.subr.mxu0 0.0
      %1678 = vmatpush1.msra.mxu0 0.0
      %1679 = vmatprep.subr.mxu0 0.0
      %1680 = vmatpush1.msra.mxu0 0.0
      %1681 = vmatprep.subr.mxu0 0.0
      %1682 = vmatpush1.msra.mxu0 0.0
      %1683 = vmatprep.subr.mxu0 0.0
      %1684 = vmatpush1.msra.mxu0 0.0
      %1685 = vmatprep.subr.mxu0 0.0
      %1686 = vmatpush1.msra.mxu0 0.0
      %1687 = vmatprep.subr.mxu0 0.0
      %1688 = vmatpush1.msra.mxu0 0.0
      %1689 = vmatprep.subr.mxu0 0.0
      %1690 = vmatpush1.msra.mxu0 0.0
      %1691 = vmatprep.mubr.f32.mxu0 0.0
      %1692 = vmatmul.mubr.f32.gmra.mrb[0].mxu0 %v1625
      %v1693 = vpop.f32.mrb[0].mxu0
      %v1694 = vadd.f32 0.0, %v1693
      %v1695 = vpop.f32.mrb[0].mxu0
      %1696 = vdwg.mxu0
      %v1697 = vadd.f32 %v1458, %v1694
      %v1698 = vld [vmem:[%s6] sm:$0x1]
      %v1700 = vlaneseq
      %v1701 = vshrl.u32 %v1700, 7
      %v1702 = vsub.s32 0, %v1701
      %v1703 = vrot.slane %v1698, %v1702
      %v1705 = vadd.f32 %v1697, %v1703
      %v1706 = vld [vmem:[%s7] sm:$0x1]
      %v1708 = vlaneseq
      %v1709 = vshrl.u32 %v1708, 7
      %v1710 = vsub.s32 0, %v1709
      %v1711 = vrot.slane %v1706, %v1710
      %v1713 = vmul.f32 %v1711, %v1705
      %v1714 = vadd.f32 %v490, %v1713
      %1715 = vadd.xlane.f32.xlu0 %v1714
      %v1716 = vpop.xlane.xlu0 %1715
      %v1717 = vmul.f32 %v1716, %v493
      %v1718 = vsub.f32 %v1714, %v1717
      %v1719 = vmul.f32 %v1718, %v1718
      %1720 = vadd.xlane.f32.xlu0 %v1719
      %v1721 = vpop.xlane.xlu0 %1720
      %v1722 = vmul.f32 %v1721, %v493
      %v1723 = vadd.f32 %v1722, 1e-05
      %v1724 = vrsqrt.pop %v1723
      %v1725 = vmul.f32 %v1718, %v1724
      %v1726 = vld [vmem:[%s8] sm:$0x1]
      %v1728 = vlaneseq
      %v1729 = vshrl.u32 %v1728, 7
      %v1730 = vsub.s32 0, %v1729
      %v1731 = vrot.slane %v1726, %v1730
      %v1733 = vmul.f32 %v1725, %v1731
      %v1734 = vld [vmem:[%s9] sm:$0x1]
      %v1736 = vlaneseq
      %v1737 = vshrl.u32 %v1736, 7
      %v1738 = vsub.s32 0, %v1737
      %v1739 = vrot.slane %v1734, %v1738
      %v1741 = vadd.f32 %v1733, %v1739
      %v1742 = vld [vmem:[%s10] sm:$0xff]
      %v1743 = vld [vmem:[%s10 + $0x8] sm:$0xff]
      %v1744 = vld [vmem:[%s10 + $0x10] sm:$0xff]
      %v1745 = vld [vmem:[%s10 + $0x18] sm:$0xff]
      %v1746 = vld [vmem:[%s10 + $0x20] sm:$0xff]
      %v1747 = vld [vmem:[%s10 + $0x28] sm:$0xff]
      %v1748 = vld [vmem:[%s10 + $0x30] sm:$0xff]
      %v1749 = vld [vmem:[%s10 + $0x38] sm:$0xff]
      %v1750 = vld [vmem:[%s10 + $0x40] sm:$0xff]
      %v1751 = vld [vmem:[%s10 + $0x48] sm:$0xff]
      %v1752 = vld [vmem:[%s10 + $0x50] sm:$0xff]
      %v1753 = vld [vmem:[%s10 + $0x58] sm:$0xff]
      %v1754 = vld [vmem:[%s10 + $0x60] sm:$0xff]
      %v1755 = vld [vmem:[%s10 + $0x68] sm:$0xff]
      %v1756 = vld [vmem:[%s10 + $0x70] sm:$0xff]
      %v1757 = vld [vmem:[%s10 + $0x78] sm:$0xff]
      %v1758 = vld [vmem:[%s10 + $0x80] sm:$0xff]
      %v1759 = vld [vmem:[%s10 + $0x88] sm:$0xff]
      %v1760 = vld [vmem:[%s10 + $0x90] sm:$0xff]
      %v1761 = vld [vmem:[%s10 + $0x98] sm:$0xff]
      %v1762 = vld [vmem:[%s10 + $0xa0] sm:$0xff]
      %v1763 = vld [vmem:[%s10 + $0xa8] sm:$0xff]
      %v1764 = vld [vmem:[%s10 + $0xb0] sm:$0xff]
      %v1765 = vld [vmem:[%s10 + $0xb8] sm:$0xff]
      %v1766 = vld [vmem:[%s10 + $0xc0] sm:$0xff]
      %v1767 = vld [vmem:[%s10 + $0xc8] sm:$0xff]
      %v1768 = vld [vmem:[%s10 + $0xd0] sm:$0xff]
      %v1769 = vld [vmem:[%s10 + $0xd8] sm:$0xff]
      %v1770 = vld [vmem:[%s10 + $0xe0] sm:$0xff]
      %v1771 = vld [vmem:[%s10 + $0xe8] sm:$0xff]
      %v1772 = vld [vmem:[%s10 + $0xf0] sm:$0xff]
      %v1773 = vld [vmem:[%s10 + $0xf8] sm:$0xff]
      %v1774 = vld [vmem:[%s11] sm:$0x3]
      %v1776 = vlaneseq
      %v1777 = vshrl.u32 %v1776, 7
      %v1778 = vsub.s32 0, %v1777
      %v1779 = vrot.slane %v1774, %v1778
      %v1780 = vlaneseq
      %v1781 = vshrl.u32 %v1780, 7
      %v1782 = vsub.s32 1, %v1781
      %v1783 = vrot.slane %v1774, %v1782
      %1786 = vmatprep.subr.mxu0 %v1743
      %1787 = vmatpush1.msra.mxu0 %v1742
      %1788 = vmatprep.subr.mxu0 %v1745
      %1789 = vmatpush1.msra.mxu0 %v1744
      %1790 = vmatprep.subr.mxu0 %v1747
      %1791 = vmatpush1.msra.mxu0 %v1746
      %1792 = vmatprep.subr.mxu0 %v1749
      %1793 = vmatpush1.msra.mxu0 %v1748
      %1794 = vmatprep.subr.mxu0 %v1751
      %1795 = vmatpush1.msra.mxu0 %v1750
      %1796 = vmatprep.subr.mxu0 %v1753
      %1797 = vmatpush1.msra.mxu0 %v1752
      %1798 = vmatprep.subr.mxu0 %v1755
      %1799 = vmatpush1.msra.mxu0 %v1754
      %1800 = vmatprep.subr.mxu0 %v1757
      %1801 = vmatpush1.msra.mxu0 %v1756
      %1802 = vmatprep.subr.mxu0 %v1759
      %1803 = vmatpush1.msra.mxu0 %v1758
      %1804 = vmatprep.subr.mxu0 %v1761
      %1805 = vmatpush1.msra.mxu0 %v1760
      %1806 = vmatprep.subr.mxu0 %v1763
      %1807 = vmatpush1.msra.mxu0 %v1762
      %1808 = vmatprep.subr.mxu0 %v1765
      %1809 = vmatpush1.msra.mxu0 %v1764
      %1810 = vmatprep.subr.mxu0 %v1767
      %1811 = vmatpush1.msra.mxu0 %v1766
      %1812 = vmatprep.subr.mxu0 %v1769
      %1813 = vmatpush1.msra.mxu0 %v1768
      %1814 = vmatprep.subr.mxu0 %v1771
      %1815 = vmatpush1.msra.mxu0 %v1770
      %1816 = vmatprep.subr.mxu0 %v1773
      %1817 = vmatpush1.msra.mxu0 %v1772
      %1818 = vmatprep.subr.mxu0 0.0
      %1819 = vmatpush1.msra.mxu0 0.0
      %1820 = vmatprep.subr.mxu0 0.0
      %1821 = vmatpush1.msra.mxu0 0.0
      %1822 = vmatprep.subr.mxu0 0.0
      %1823 = vmatpush1.msra.mxu0 0.0
      %1824 = vmatprep.subr.mxu0 0.0
      %1825 = vmatpush1.msra.mxu0 0.0
      %1826 = vmatprep.subr.mxu0 0.0
      %1827 = vmatpush1.msra.mxu0 0.0
      %1828 = vmatprep.subr.mxu0 0.0
      %1829 = vmatpush1.msra.mxu0 0.0
      %1830 = vmatprep.subr.mxu0 0.0
      %1831 = vmatpush1.msra.mxu0 0.0
      %1832 = vmatprep.subr.mxu0 0.0
      %1833 = vmatpush1.msra.mxu0 0.0
      %1834 = vmatprep.subr.mxu0 0.0
      %1835 = vmatpush1.msra.mxu0 0.0
      %1836 = vmatprep.subr.mxu0 0.0
      %1837 = vmatpush1.msra.mxu0 0.0
      %1838 = vmatprep.subr.mxu0 0.0
      %1839 = vmatpush1.msra.mxu0 0.0
      %1840 = vmatprep.subr.mxu0 0.0
      %1841 = vmatpush1.msra.mxu0 0.0
      %1842 = vmatprep.subr.mxu0 0.0
      %1843 = vmatpush1.msra.mxu0 0.0
      %1844 = vmatprep.subr.mxu0 0.0
      %1845 = vmatpush1.msra.mxu0 0.0
      %1846 = vmatprep.subr.mxu0 0.0
      %1847 = vmatpush1.msra.mxu0 0.0
      %1848 = vmatprep.subr.mxu0 0.0
      %1849 = vmatpush1.msra.mxu0 0.0
      %1850 = vmatprep.mubr.f32.mxu0 0.0
      %1851 = vmatmul.mubr.f32.gmra.mrb[0].mxu0 %v1741
      %v1852 = vpop.f32.mrb[0].mxu0
      %v1853 = vadd.f32 %v1779, %v1852
      %v1854 = vpop.f32.mrb[0].mxu0
      %v1855 = vadd.f32 %v1783, %v1854
      %1856 = vdwg.mxu0
      %v1857 = vmul.f32 %v1853, %v1853
      %v1858 = vmul.f32 %v1855, %v1855
      %v1859 = vmul.f32 %v1853, %v1857
      %v1860 = vmul.f32 %v1855, %v1858
      %v1861 = vmul.f32 %v1859, 0.044715
      %v1862 = vmul.f32 %v1860, 0.044715
      %v1863 = vadd.f32 %v1853, %v1861
      %v1864 = vadd.f32 %v1855, %v1862
      %v1865 = vmul.f32 %v1863, 0.7978846
      %v1866 = vmul.f32 %v1864, 0.7978846
      %v1867 = vtanh.pop %v1865
      %v1868 = vtanh.pop %v1866
      %v1869 = vadd.f32 %v1867, 1.0
      %v1870 = vadd.f32 %v1868, 1.0
      %v1871 = vmul.f32 %v1869, 0.5
      %v1872 = vmul.f32 %v1870, 0.5
      %v1873 = vmul.f32 %v1853, %v1871
      %v1874 = vmul.f32 %v1855, %v1872
      %v1875 = vld [vmem:[%s12] sm:$0xff]
      %v1876 = vld [vmem:[%s12 + $0x8] sm:$0xff]
      %v1877 = vld [vmem:[%s12 + $0x10] sm:$0xff]
      %v1878 = vld [vmem:[%s12 + $0x18] sm:$0xff]
      %v1879 = vld [vmem:[%s12 + $0x20] sm:$0xff]
      %v1880 = vld [vmem:[%s12 + $0x28] sm:$0xff]
      %v1881 = vld [vmem:[%s12 + $0x30] sm:$0xff]
      %v1882 = vld [vmem:[%s12 + $0x38] sm:$0xff]
      %v1883 = vld [vmem:[%s12 + $0x40] sm:$0xff]
      %v1884 = vld [vmem:[%s12 + $0x48] sm:$0xff]
      %v1885 = vld [vmem:[%s12 + $0x50] sm:$0xff]
      %v1886 = vld [vmem:[%s12 + $0x58] sm:$0xff]
      %v1887 = vld [vmem:[%s12 + $0x60] sm:$0xff]
      %v1888 = vld [vmem:[%s12 + $0x68] sm:$0xff]
      %v1889 = vld [vmem:[%s12 + $0x70] sm:$0xff]
      %v1890 = vld [vmem:[%s12 + $0x78] sm:$0xff]
      %v1891 = vld [vmem:[%s12 + $0x80] sm:$0xff]
      %v1892 = vld [vmem:[%s12 + $0x88] sm:$0xff]
      %v1893 = vld [vmem:[%s12 + $0x90] sm:$0xff]
      %v1894 = vld [vmem:[%s12 + $0x98] sm:$0xff]
      %v1895 = vld [vmem:[%s12 + $0xa0] sm:$0xff]
      %v1896 = vld [vmem:[%s12 + $0xa8] sm:$0xff]
      %v1897 = vld [vmem:[%s12 + $0xb0] sm:$0xff]
      %v1898 = vld [vmem:[%s12 + $0xb8] sm:$0xff]
      %v1899 = vld [vmem:[%s12 + $0xc0] sm:$0xff]
      %v1900 = vld [vmem:[%s12 + $0xc8] sm:$0xff]
      %v1901 = vld [vmem:[%s12 + $0xd0] sm:$0xff]
      %v1902 = vld [vmem:[%s12 + $0xd8] sm:$0xff]
      %v1903 = vld [vmem:[%s12 + $0xe0] sm:$0xff]
      %v1904 = vld [vmem:[%s12 + $0xe8] sm:$0xff]
      %v1905 = vld [vmem:[%s12 + $0xf0] sm:$0xff]
      %v1906 = vld [vmem:[%s12 + $0xf8] sm:$0xff]
      %v1907 = vld [vmem:[%s13] sm:$0x1]
      %v1909 = vlaneseq
      %v1910 = vshrl.u32 %v1909, 7
      %v1911 = vsub.s32 0, %v1910
      %v1912 = vrot.slane %v1907, %v1911
      %1914 = vmatprep.subr.mxu0 0.0
      %1915 = vmatpush1.msra.mxu0 %v1875
      %1916 = vmatprep.subr.mxu0 0.0
      %1917 = vmatpush1.msra.mxu0 %v1876
      %1918 = vmatprep.subr.mxu0 0.0
      %1919 = vmatpush1.msra.mxu0 %v1877
      %1920 = vmatprep.subr.mxu0 0.0
      %1921 = vmatpush1.msra.mxu0 %v1878
      %1922 = vmatprep.subr.mxu0 0.0
      %1923 = vmatpush1.msra.mxu0 %v1879
      %1924 = vmatprep.subr.mxu0 0.0
      %1925 = vmatpush1.msra.mxu0 %v1880
      %1926 = vmatprep.subr.mxu0 0.0
      %1927 = vmatpush1.msra.mxu0 %v1881
      %1928 = vmatprep.subr.mxu0 0.0
      %1929 = vmatpush1.msra.mxu0 %v1882
      %1930 = vmatprep.subr.mxu0 0.0
      %1931 = vmatpush1.msra.mxu0 %v1883
      %1932 = vmatprep.subr.mxu0 0.0
      %1933 = vmatpush1.msra.mxu0 %v1884
      %1934 = vmatprep.subr.mxu0 0.0
      %1935 = vmatpush1.msra.mxu0 %v1885
      %1936 = vmatprep.subr.mxu0 0.0
      %1937 = vmatpush1.msra.mxu0 %v1886
      %1938 = vmatprep.subr.mxu0 0.0
      %1939 = vmatpush1.msra.mxu0 %v1887
      %1940 = vmatprep.subr.mxu0 0.0
      %1941 = vmatpush1.msra.mxu0 %v1888
      %1942 = vmatprep.subr.mxu0 0.0
      %1943 = vmatpush1.msra.mxu0 %v1889
      %1944 = vmatprep.subr.mxu0 0.0
      %1945 = vmatpush1.msra.mxu0 %v1890
      %1946 = vmatprep.subr.mxu0 0.0
      %1947 = vmatpush1.msra.mxu0 %v1891
      %1948 = vmatprep.subr.mxu0 0.0
      %1949 = vmatpush1.msra.mxu0 %v1892
      %1950 = vmatprep.subr.mxu0 0.0
      %1951 = vmatpush1.msra.mxu0 %v1893
      %1952 = vmatprep.subr.mxu0 0.0
      %1953 = vmatpush1.msra.mxu0 %v1894
      %1954 = vmatprep.subr.mxu0 0.0
      %1955 = vmatpush1.msra.mxu0 %v1895
      %1956 = vmatprep.subr.mxu0 0.0
      %1957 = vmatpush1.msra.mxu0 %v1896
      %1958 = vmatprep.subr.mxu0 0.0
      %1959 = vmatpush1.msra.mxu0 %v1897
      %1960 = vmatprep.subr.mxu0 0.0
      %1961 = vmatpush1.msra.mxu0 %v1898
      %1962 = vmatprep.subr.mxu0 0.0
      %1963 = vmatpush1.msra.mxu0 %v1899
      %1964 = vmatprep.subr.mxu0 0.0
      %1965 = vmatpush1.msra.mxu0 %v1900
      %1966 = vmatprep.subr.mxu0 0.0
      %1967 = vmatpush1.msra.mxu0 %v1901
      %1968 = vmatprep.subr.mxu0 0.0
      %1969 = vmatpush1.msra.mxu0 %v1902
      %1970 = vmatprep.subr.mxu0 0.0
      %1971 = vmatpush1.msra.mxu0 %v1903
      %1972 = vmatprep.subr.mxu0 0.0
      %1973 = vmatpush1.msra.mxu0 %v1904
      %1974 = vmatprep.subr.mxu0 0.0
      %1975 = vmatpush1.msra.mxu0 %v1905
      %1976 = vmatprep.subr.mxu0 0.0
      %1977 = vmatpush1.msra.mxu0 %v1906
      %1978 = vmatprep.mubr.f32.mxu0 %v1874
      %1979 = vmatmul.mubr.f32.gmra.mrb[0].mxu0 %v1873
      %v1980 = vpop.f32.mrb[0].mxu0
      %v1981 = vadd.f32 %v1912, %v1980
      %v1982 = vpop.f32.mrb[0].mxu0
      %1983 = vdwg.mxu0
      %v1984 = vld [vmem:[%s14] sm:$0x1]
      %v1986 = vlaneseq
      %v1987 = vshrl.u32 %v1986, 7
      %v1988 = vsub.s32 0, %v1987
      %v1989 = vrot.slane %v1984, %v1988
      %v1991 = vmul.f32 %v1989, %v1981
      %v1992 = vadd.f32 %v1714, %v1991
      %1993 = vst [vmem:[%s489] sm:$0xff] %v1992
      %p1994 = scmp.lt.s32.totalorder %s26, 1
      %s1995 = scalar_select %p1994, %s26, 1
      %s1996 = smul.addr %s1995, 8
      %s1997 = scalar_lea.vmem %s15, %s1996
      // Predicated region
      $region81: #{unified_model_forward.9} parent=79 // pred_check
        %p1998 = pneg %p364
      $region82: #{unified_model_forward.9} parent=79 // pred_check_branch
        %2000 = sbr.rel (%p1998) target = $region84
      $region83: #{unified_model_forward.9} parent=79 // pred_region
        _
      $region84: #{unified_model_forward.9} parent=79 // pred_fallthru
        _
    $region80: #{unified_model_forward.9} parent=5 // pred_fallthru
      _
    %p2001 = scmp.le.s32.totalorder 2, %s21
    // Predicated region
    $region85: #{unified_model_forward.9} parent=5 // pred_check
      %p2002 = pneg %p2001
    $region86: #{unified_model_forward.9} parent=5 // pred_check_branch
      %2004 = sbr.rel (%p2002) target = $region88
    $region87: #{unified_model_forward.9} parent=5 // pred_region
      %s2005 = ssub.s32 %s21, 2
      // Predicated region
      $region89: #{unified_model_forward.9} parent=87 // pred_check
        %p2006 = pneg %p370
      $region90: #{unified_model_forward.9} parent=87 // pred_check_branch
        %2008 = sbr.rel (%p2006) target = $region92
      $region91: #{unified_model_forward.9} parent=87 // pred_region
        %p2009 = scmp.lt.s32.totalorder %s27, 1
        %s2010 = scalar_select %p2009, %s27, 1
        %s2011 = smul.addr %s2010, 8
        %s2012 = scalar_lea.vmem %s15, %s2011
      $region92: #{unified_model_forward.9} parent=87 // pred_fallthru
        _
    $region88: #{unified_model_forward.9} parent=5 // pred_fallthru
      _
  $region6: #{unified_model_forward.9} parent=0 // loop_footer
    %s25 = sadd.s32 1, %s21
  $region7: #{unified_model_forward.9} parent=0 // loop_footer_branch
    %20 = sbr.rel target = $region3
  $region8: #{unified_model_forward.9} parent=0 // loop_exit
    _

// kernel: unified_model_forward.14
$region0: #{unified_model_forward.14}
  #allocation0 [shape = 'u32[]', space=smem, size = 0x4, offset = 0x4, fixed_abs, tag = 'smem constant byte address 0x4 - core index']
  #allocation1 [shape = 'u32[144,128]{1,0:T(1,128)}', space=vmem, size = 0x12000, scoped, tag = 'internal scratch']
  %s0 = inlined_call_operand.vmem [shape: f32[34,128], index: 0, kind: input, shape index: {}]
  %s1 = inlined_call_operand.vmem [shape: f32[1,128], index: 1, kind: input, shape index: {}]
  %s2 = inlined_call_operand.vmem [shape: f32[1,128], index: 2, kind: input, shape index: {}]
  %s3 = inlined_call_operand.vmem [shape: f32[128,48], index: 3, kind: input, shape index: {}]
  %s4 = inlined_call_operand.vmem [shape: f32[1,48], index: 4, kind: input, shape index: {}]
  %s5 = inlined_call_operand.vmem [shape: f32[34,48], index: 5, kind: output, shape index: {}]
  %s6 = sld [smem:[#allocation0]]
  $region30: #{unified_model_forward.14} parent=0
    _
  %s8 = ssub.s32 1, %s6
  %s9 = scalar_select 0, %s8, %s6
  // Predicated region
  $region2: #{unified_model_forward.14} parent=0 // pred_check
    _
  $region3: #{unified_model_forward.14} parent=0 // pred_check_branch
    %11 = sbr.rel (0) target = $region5
  $region4: #{unified_model_forward.14} parent=0 // pred_region
    _
  $region5: #{unified_model_forward.14} parent=0 // pred_fallthru
    _
  // Predicated region
  $region6: #{unified_model_forward.14} parent=0 // pred_check
    _
  $region7: #{unified_model_forward.14} parent=0 // pred_check_branch
    %13 = sbr.rel (0) target = $region9
  $region8: #{unified_model_forward.14} parent=0 // pred_region
    _
  $region9: #{unified_model_forward.14} parent=0 // pred_fallthru
    _
  // Predicated region
  $region10: #{unified_model_forward.14} parent=0 // pred_check
    _
  $region11: #{unified_model_forward.14} parent=0 // pred_check_branch
    %15 = sbr.rel (0) target = $region13
  $region12: #{unified_model_forward.14} parent=0 // pred_region
    _
  $region13: #{unified_model_forward.14} parent=0 // pred_fallthru
    _
  // Predicated region
  $region14: #{unified_model_forward.14} parent=0 // pred_check
    _
  $region15: #{unified_model_forward.14} parent=0 // pred_check_branch
    %17 = sbr.rel (0) target = $region17
  $region16: #{unified_model_forward.14} parent=0 // pred_region
    _
  $region17: #{unified_model_forward.14} parent=0 // pred_fallthru
    _
  // Predicated region
  $region18: #{unified_model_forward.14} parent=0 // pred_check
    _
  $region19: #{unified_model_forward.14} parent=0 // pred_check_branch
    %19 = sbr.rel (0) target = $region21
  $region20: #{unified_model_forward.14} parent=0 // pred_region
    _
  $region21: #{unified_model_forward.14} parent=0 // pred_fallthru
    _
  %v20 = vld [vmem:[%s0] sm:$0xff]
  %v21 = vld [vmem:[%s0 + $0x8] sm:$0xff]
  %v22 = vld [vmem:[%s0 + $0x10] sm:$0xff]
  %v23 = vld [vmem:[%s0 + $0x18] sm:$0xff]
  %v24 = vld [vmem:[%s0 + $0x20] sm:$0x3]
  %25 = vadd.xlane.f32.xlu0 %v20
  %v26 = vpop.xlane.xlu0 %25
  %27 = vadd.xlane.f32.xlu0 %v21
  %v28 = vpop.xlane.xlu0 %27
  %29 = vadd.xlane.f32.xlu0 %v22
  %v30 = vpop.xlane.xlu0 %29
  %31 = vadd.xlane.f32.xlu0 %v23
  %v32 = vpop.xlane.xlu0 %31
  %vm33 = vcmask 1041408
  %v34 = vsel %vm33, %v24, 0.0
  %35 = vadd.xlane.f32.xlu0 %v34
  %v36 = vpop.xlane.xlu0 %35
  %v37 = vrcp.pop 128.0
  %v38 = vmul.f32 %v26, %v37
  %v39 = vmul.f32 %v28, %v37
  %v40 = vmul.f32 %v30, %v37
  %v41 = vmul.f32 %v32, %v37
  %v42 = vmul.f32 %v36, %v37
  %v43 = vsub.f32 %v20, %v38
  %v44 = vsub.f32 %v21, %v39
  %v45 = vsub.f32 %v22, %v40
  %v46 = vsub.f32 %v23, %v41
  %v47 = vsub.f32 %v24, %v42
  %v48 = vmul.f32 %v43, %v43
  %v49 = vmul.f32 %v44, %v44
  %v50 = vmul.f32 %v45, %v45
  %v51 = vmul.f32 %v46, %v46
  %v52 = vmul.f32 %v47, %v47
  %53 = vadd.xlane.f32.xlu0 %v48
  %v54 = vpop.xlane.xlu0 %53
  %55 = vadd.xlane.f32.xlu0 %v49
  %v56 = vpop.xlane.xlu0 %55
  %57 = vadd.xlane.f32.xlu0 %v50
  %v58 = vpop.xlane.xlu0 %57
  %59 = vadd.xlane.f32.xlu0 %v51
  %v60 = vpop.xlane.xlu0 %59
  %v61 = vsel %vm33, %v52, 0.0
  %62 = vadd.xlane.f32.xlu0 %v61
  %v63 = vpop.xlane.xlu0 %62
  %v64 = vmul.f32 %v54, %v37
  %v65 = vmul.f32 %v56, %v37
  %v66 = vmul.f32 %v58, %v37
  %v67 = vmul.f32 %v60, %v37
  %v68 = vmul.f32 %v63, %v37
  %v69 = vadd.f32 %v64, 1e-06
  %v70 = vadd.f32 %v65, 1e-06
  %v71 = vadd.f32 %v66, 1e-06
  %v72 = vadd.f32 %v67, 1e-06
  %v73 = vadd.f32 %v68, 1e-06
  %v74 = vrsqrt.pop %v69
  %v75 = vrsqrt.pop %v70
  %v76 = vrsqrt.pop %v71
  %v77 = vrsqrt.pop %v72
  %v78 = vrsqrt.pop %v73
  %v79 = vmul.f32 %v43, %v74
  %v80 = vmul.f32 %v44, %v75
  %v81 = vmul.f32 %v45, %v76
  %v82 = vmul.f32 %v46, %v77
  %v83 = vmul.f32 %v47, %v78
  %v84 = vld [vmem:[%s1] sm:$0x1]
  %v86 = vlaneseq
  %v87 = vshrl.u32 %v86, 7
  %v88 = vsub.s32 0, %v87
  %v89 = vrot.slane %v84, %v88
  %v91 = vmul.f32 %v79, %v89
  %v92 = vmul.f32 %v80, %v89
  %v93 = vmul.f32 %v81, %v89
  %v94 = vmul.f32 %v82, %v89
  %v95 = vmul.f32 %v83, %v89
  %v96 = vld [vmem:[%s2] sm:$0x1]
  %v98 = vlaneseq
  %v99 = vshrl.u32 %v98, 7
  %v100 = vsub.s32 0, %v99
  %v101 = vrot.slane %v96, %v100
  %v103 = vadd.f32 %v91, %v101
  %v104 = vadd.f32 %v92, %v101
  %v105 = vadd.f32 %v93, %v101
  %v106 = vadd.f32 %v94, %v101
  %v107 = vadd.f32 %v95, %v101
  %v108 = vld [vmem:[%s3] sm:$0xff]
  %v109 = vld [vmem:[%s3 + $0x8] sm:$0xff]
  %v110 = vld [vmem:[%s3 + $0x10] sm:$0xff]
  %v111 = vld [vmem:[%s3 + $0x18] sm:$0xff]
  %v112 = vld [vmem:[%s3 + $0x20] sm:$0xff]
  %v113 = vld [vmem:[%s3 + $0x28] sm:$0xff]
  %v114 = vld [vmem:[%s3 + $0x30] sm:$0xff]
  %v115 = vld [vmem:[%s3 + $0x38] sm:$0xff]
  %v116 = vld [vmem:[%s3 + $0x40] sm:$0xff]
  %v117 = vld [vmem:[%s3 + $0x48] sm:$0xff]
  %v118 = vld [vmem:[%s3 + $0x50] sm:$0xff]
  %v119 = vld [vmem:[%s3 + $0x58] sm:$0xff]
  %v120 = vld [vmem:[%s3 + $0x60] sm:$0xff]
  %v121 = vld [vmem:[%s3 + $0x68] sm:$0xff]
  %v122 = vld [vmem:[%s3 + $0x70] sm:$0xff]
  %v123 = vld [vmem:[%s3 + $0x78] sm:$0xff]
  %v124 = vld [vmem:[%s4] sm:$0x1]
  %v126 = vlaneseq
  %v127 = vshrl.u32 %v126, 7
  %v128 = vsub.s32 0, %v127
  %v129 = vrot.slane %v124, %v128
  %131 = vmatprep.subr.mxu0 0.0
  %132 = vmatpush1.msra.mxu0 %v108
  %133 = vmatprep.subr.mxu0 0.0
  %134 = vmatpush1.msra.mxu0 %v109
  %135 = vmatprep.subr.mxu0 0.0
  %136 = vmatpush1.msra.mxu0 %v110
  %137 = vmatprep.subr.mxu0 0.0
  %138 = vmatpush1.msra.mxu0 %v111
  %139 = vmatprep.subr.mxu0 0.0
  %140 = vmatpush1.msra.mxu0 %v112
  %141 = vmatprep.subr.mxu0 0.0
  %142 = vmatpush1.msra.mxu0 %v113
  %143 = vmatprep.subr.mxu0 0.0
  %144 = vmatpush1.msra.mxu0 %v114
  %145 = vmatprep.subr.mxu0 0.0
  %146 = vmatpush1.msra.mxu0 %v115
  %147 = vmatprep.subr.mxu0 0.0
  %148 = vmatpush1.msra.mxu0 %v116
  %149 = vmatprep.subr.mxu0 0.0
  %150 = vmatpush1.msra.mxu0 %v117
  %151 = vmatprep.subr.mxu0 0.0
  %152 = vmatpush1.msra.mxu0 %v118
  %153 = vmatprep.subr.mxu0 0.0
  %154 = vmatpush1.msra.mxu0 %v119
  %155 = vmatprep.subr.mxu0 0.0
  %156 = vmatpush1.msra.mxu0 %v120
  %157 = vmatprep.subr.mxu0 0.0
  %158 = vmatpush1.msra.mxu0 %v121
  %159 = vmatprep.subr.mxu0 0.0
  %160 = vmatpush1.msra.mxu0 %v122
  %161 = vmatprep.subr.mxu0 0.0
  %162 = vmatpush1.msra.mxu0 %v123
  %163 = vmatprep.subr.mxu0 0.0
  %164 = vmatpush1.msra.mxu0 0.0
  %165 = vmatprep.subr.mxu0 0.0
  %166 = vmatpush1.msra.mxu0 0.0
  %167 = vmatprep.subr.mxu0 0.0
  %168 = vmatpush1.msra.mxu0 0.0
  %169 = vmatprep.subr.mxu0 0.0
  %170 = vmatpush1.msra.mxu0 0.0
  %171 = vmatprep.subr.mxu0 0.0
  %172 = vmatpush1.msra.mxu0 0.0
  %173 = vmatprep.subr.mxu0 0.0
  %174 = vmatpush1.msra.mxu0 0.0
  %175 = vmatprep.subr.mxu0 0.0
  %176 = vmatpush1.msra.mxu0 0.0
  %177 = vmatprep.subr.mxu0 0.0
  %178 = vmatpush1.msra.mxu0 0.0
  %179 = vmatprep.subr.mxu0 0.0
  %180 = vmatpush1.msra.mxu0 0.0
  %181 = vmatprep.subr.mxu0 0.0
  %182 = vmatpush1.msra.mxu0 0.0
  %183 = vmatprep.subr.mxu0 0.0
  %184 = vmatpush1.msra.mxu0 0.0
  %185 = vmatprep.subr.mxu0 0.0
  %186 = vmatpush1.msra.mxu0 0.0
  %187 = vmatprep.subr.mxu0 0.0
  %188 = vmatpush1.msra.mxu0 0.0
  %189 = vmatprep.subr.mxu0 0.0
  %190 = vmatpush1.msra.mxu0 0.0
  %191 = vmatprep.subr.mxu0 0.0
  %192 = vmatpush1.msra.mxu0 0.0
  %193 = vmatprep.subr.mxu0 0.0
  %194 = vmatpush1.msra.mxu0 0.0
  %195 = vmatprep.mubr.f32.mxu0 0.0
  %196 = vmatmul.mubr.f32.gmra.mrb[0].mxu0 %v103
  %v197 = vpop.f32.mrb[0].mxu0
  %v198 = vadd.f32 %v129, %v197
  %v199 = vpop.f32.mrb[0].mxu0
  %200 = vmatprep.mubr.f32.mxu0 0.0
  %201 = vmatmul.mubr.f32.gmra.mrb[0].mxu0 %v104
  %v202 = vpop.f32.mrb[0].mxu0
  %v203 = vadd.f32 %v129, %v202
  %v204 = vpop.f32.mrb[0].mxu0
  %205 = vmatprep.mubr.f32.mxu0 0.0
  %206 = vmatmul.mubr.f32.gmra.mrb[0].mxu0 %v105
  %v207 = vpop.f32.mrb[0].mxu0
  %v208 = vadd.f32 %v129, %v207
  %v209 = vpop.f32.mrb[0].mxu0
  %210 = vmatprep.mubr.f32.mxu0 0.0
  %211 = vmatmul.mubr.f32.gmra.mrb[0].mxu0 %v106
  %v212 = vpop.f32.mrb[0].mxu0
  %v213 = vadd.f32 %v129, %v212
  %v214 = vpop.f32.mrb[0].mxu0
  %215 = vmatprep.mubr.f32.mxu0 0.0
  %216 = vmatmul.mubr.f32.gmra.mrb[0].mxu0 %v107
  %v217 = vpop.f32.mrb[0].mxu0
  %v218 = vadd.f32 %v129, %v217
  %v219 = vpop.f32.mrb[0].mxu0
  %220 = vdwg.mxu0
  %vm221 = vcmask 392192
  %222 = vst.msk [vmem:[%s5] sm:$0xff] %vm221, %v198
  %223 = vst.msk [vmem:[%s5 + $0x8] sm:$0xff] %vm221, %v203
  %224 = vst.msk [vmem:[%s5 + $0x10] sm:$0xff] %vm221, %v208
  %225 = vst.msk [vmem:[%s5 + $0x18] sm:$0xff] %vm221, %v213
  %vm226 = vcmask 386048
  %227 = vst.msk [vmem:[%s5 + $0x20] sm:$0x3] %vm226, %v218
  // Predicated region
  $region22: #{unified_model_forward.14} parent=0 // pred_check
    _
  $region23: #{unified_model_forward.14} parent=0 // pred_check_branch
    %229 = sbr.rel (0) target = $region25
  $region24: #{unified_model_forward.14} parent=0 // pred_region
    _
  $region25: #{unified_model_forward.14} parent=0 // pred_fallthru
    _
  // Predicated region
  $region26: #{unified_model_forward.14} parent=0 // pred_check
    _
  $region27: #{unified_model_forward.14} parent=0 // pred_check_branch
    %231 = sbr.rel (0) target = $region29
  $region28: #{unified_model_forward.14} parent=0 // pred_region
    _
  $region29: #{unified_model_forward.14} parent=0 // pred_fallthru
    _

// kernel: unified_model_forward.12
$region0: #{unified_model_forward.12}
  #allocation0 [shape = 'u32[]', space=smem, size = 0x4, offset = 0x4, fixed_abs, tag = 'smem constant byte address 0x4 - core index']
  #allocation1 [shape = 'u32[144,128]{1,0:T(1,128)}', space=vmem, size = 0x12000, scoped, tag = 'internal scratch']
  %s0 = inlined_call_operand.vmem [shape: f32[2,24,128], index: 0, kind: input, shape index: {}]
  %s1 = inlined_call_operand.vmem [shape: f32[1,128], index: 1, kind: input, shape index: {}]
  %s2 = inlined_call_operand.vmem [shape: f32[1,128], index: 2, kind: input, shape index: {}]
  %s3 = inlined_call_operand.vmem [shape: f32[128,384], index: 3, kind: input, shape index: {}]
  %s4 = inlined_call_operand.vmem [shape: f32[1,384], index: 4, kind: input, shape index: {}]
  %s5 = inlined_call_operand.vmem [shape: f32[128,128], index: 5, kind: input, shape index: {}]
  %s6 = inlined_call_operand.vmem [shape: f32[1,128], index: 6, kind: input, shape index: {}]
  %s7 = inlined_call_operand.vmem [shape: f32[1,128], index: 7, kind: input, shape index: {}]
  %s8 = inlined_call_operand.vmem [shape: f32[1,128], index: 8, kind: input, shape index: {}]
  %s9 = inlined_call_operand.vmem [shape: f32[1,128], index: 9, kind: input, shape index: {}]
  %s10 = inlined_call_operand.vmem [shape: f32[128,512], index: 10, kind: input, shape index: {}]
  %s11 = inlined_call_operand.vmem [shape: f32[1,512], index: 11, kind: input, shape index: {}]
  %s12 = inlined_call_operand.vmem [shape: f32[512,128], index: 12, kind: input, shape index: {}]
  %s13 = inlined_call_operand.vmem [shape: f32[1,128], index: 13, kind: input, shape index: {}]
  %s14 = inlined_call_operand.vmem [shape: f32[1,128], index: 14, kind: input, shape index: {}]
  %s15 = inlined_call_operand.vmem [shape: f32[2,24,128], index: 15, kind: output, shape index: {}]
  %s16 = sld [smem:[#allocation0]]
  $region93: #{unified_model_forward.12} parent=0
    _
  %s18 = ssub.s32 1, %s16
  %s19 = scalar_select 0, %s18, %s16
  loop: start=0, step=1, limit=4
  $region2: #{unified_model_forward.12} parent=0 // loop_pre_header
    _
  $region3: #{unified_model_forward.12} parent=0 // loop_header
    %s21 = sphi 0, %s25
    %p22 = scmp.ge.s32.totalorder %s21, 4
    %s31 = sphi 0, %s33
    %s34 = sphi 0, %s31
    %s35 = sphi 0, %s34
    %s51 = sphi 0, %s35
    %s55 = sphi 0, %s55
    %s57 = sphi 0, %s55
    %s58 = sphi 0, %s57
    %s72 = sphi 0, %s58
    %s76 = sphi 0, %s76
    %s78 = sphi 0, %s76
    %s79 = sphi 0, %s78
    %s93 = sphi 0, %s79
    %s97 = sphi 0, %s97
    %s99 = sphi 0, %s97
    %s100 = sphi 0, %s99
    %s114 = sphi 0, %s100
    %s118 = sphi 0, %s118
    %s120 = sphi 0, %s118
    %s121 = sphi 0, %s120
    %s135 = sphi 0, %s121
    %s139 = sphi 0, %s139
    %s141 = sphi 0, %s139
    %s142 = sphi 0, %s141
    %s156 = sphi 0, %s142
    %s160 = sphi 0, %s160
    %s162 = sphi 0, %s160
    %s163 = sphi 0, %s162
    %s177 = sphi 0, %s163
    %s181 = sphi 0, %s181
    %s183 = sphi 0, %s181
    %s184 = sphi 0, %s183
    %s198 = sphi 0, %s184
    %s202 = sphi 0, %s202
    %s204 = sphi 0, %s202
    %s205 = sphi 0, %s204
    %s219 = sphi 0, %s205
    %s223 = sphi 0, %s223
    %s225 = sphi 0, %s223
    %s226 = sphi 0, %s225
    %s240 = sphi 0, %s226
    %s244 = sphi 0, %s244
    %s246 = sphi 0, %s244
    %s247 = sphi 0, %s246
    %s261 = sphi 0, %s247
    %s265 = sphi 0, %s265
    %s267 = sphi 0, %s265
    %s268 = sphi 0, %s267
    %s282 = sphi 0, %s268
    %s286 = sphi 0, %s286
    %s288 = sphi 0, %s286
    %s289 = sphi 0, %s288
    %s303 = sphi 0, %s289
    %s307 = sphi 0, %s307
    %s309 = sphi 0, %s307
    %s310 = sphi 0, %s309
    %s324 = sphi 0, %s310
    %s328 = sphi 0, %s328
    %s330 = sphi 0, %s328
    %s331 = sphi 0, %s330
    %s345 = sphi 0, %s331
    %s351 = sphi 0, %s353
    %s354 = sphi 0, %s351
    %s355 = sphi 0, %s354
    %s371 = sphi 0, %s355
  $region4: #{unified_model_forward.12} parent=0 // loop_header_branch
    %24 = sbr.rel (%p22) target = $region8
  $region5: #{unified_model_forward.12} parent=0 // loop_body
    %s26 = ssub.s32 %s21, 1
    %s27 = ssub.s32 %s21, 2
    %s28 = sadd.s32 %s21, 1
    %s29 = ssub.s32 %s21, %s28
    %p30 = scmp.eq.s32.totalorder %s29, 0
    %s32 = sadd.s32 %s31, 1
    %s33 = scalar_select %p30, %s31, %s32
    %p36 = pneg %p30
    %p37 = scmp.eq.s32.totalorder %s21, 1
    %p38 = por %p36, %p37
    %p39 = scmp.ne.s32.totalorder %s31, %s34
    %p40 = scmp.eq.s32.totalorder %s21, 0
    %p41 = por %p39, %p40
    %p42 = scmp.ne.s32.totalorder %s31, %s34
    %p43 = scmp.eq.s32.totalorder %s26, 1
    %p44 = por %p42, %p43
    %p45 = scmp.ne.s32.totalorder %s34, %s35
    %p46 = scmp.eq.s32.totalorder %s26, 0
    %p47 = por %p45, %p46
    %p48 = scmp.ne.s32.totalorder %s34, %s35
    %p49 = scmp.eq.s32.totalorder %s27, 1
    %p50 = por %p48, %p49
    %p52 = scmp.ne.s32.totalorder %s35, %s51
    %p53 = scmp.eq.s32.totalorder %s27, 0
    %p54 = por %p52, %p53
    %s56 = sadd.s32 %s55, 1
    %p59 = scmp.eq.s32.totalorder %s21, 1
    %p60 = scmp.ne.s32.totalorder %s55, %s57
    %p61 = scmp.eq.s32.totalorder %s21, 0
    %p62 = por %p60, %p61
    %p63 = scmp.ne.s32.totalorder %s55, %s57
    %p64 = scmp.eq.s32.totalorder %s26, 1
    %p65 = por %p63, %p64
    %p66 = scmp.ne.s32.totalorder %s57, %s58
    %p67 = scmp.eq.s32.totalorder %s26, 0
    %p68 = por %p66, %p67
    %p69 = scmp.ne.s32.totalorder %s57, %s58
    %p70 = scmp.eq.s32.totalorder %s27, 1
    %p71 = por %p69, %p70
    %p73 = scmp.ne.s32.totalorder %s58, %s72
    %p74 = scmp.eq.s32.totalorder %s27, 0
    %p75 = por %p73, %p74
    %s77 = sadd.s32 %s76, 1
    %p80 = scmp.eq.s32.totalorder %s21, 1
    %p81 = scmp.ne.s32.totalorder %s76, %s78
    %p82 = scmp.eq.s32.totalorder %s21, 0
    %p83 = por %p81, %p82
    %p84 = scmp.ne.s32.totalorder %s76, %s78
    %p85 = scmp.eq.s32.totalorder %s26, 1
    %p86 = por %p84, %p85
    %p87 = scmp.ne.s32.totalorder %s78, %s79
    %p88 = scmp.eq.s32.totalorder %s26, 0
    %p89 = por %p87, %p88
    %p90 = scmp.ne.s32.totalorder %s78, %s79
    %p91 = scmp.eq.s32.totalorder %s27, 1
    %p92 = por %p90, %p91
    %p94 = scmp.ne.s32.totalorder %s79, %s93
    %p95 = scmp.eq.s32.totalorder %s27, 0
    %p96 = por %p94, %p95
    %s98 = sadd.s32 %s97, 1
    %p101 = scmp.eq.s32.totalorder %s21, 1
    %p102 = scmp.ne.s32.totalorder %s97, %s99
    %p103 = scmp.eq.s32.totalorder %s21, 0
    %p104 = por %p102, %p103
    %p105 = scmp.ne.s32.totalorder %s97, %s99
    %p106 = scmp.eq.s32.totalorder %s26, 1
    %p107 = por %p105, %p106
    %p108 = scmp.ne.s32.totalorder %s99, %s100
    %p109 = scmp.eq.s32.totalorder %s26, 0
    %p110 = por %p108, %p109
    %p111 = scmp.ne.s32.totalorder %s99, %s100
    %p112 = scmp.eq.s32.totalorder %s27, 1
    %p113 = por %p111, %p112
    %p115 = scmp.ne.s32.totalorder %s100, %s114
    %p116 = scmp.eq.s32.totalorder %s27, 0
    %p117 = por %p115, %p116
    %s119 = sadd.s32 %s118, 1
    %p122 = scmp.eq.s32.totalorder %s21, 1
    %p123 = scmp.ne.s32.totalorder %s118, %s120
    %p124 = scmp.eq.s32.totalorder %s21, 0
    %p125 = por %p123, %p124
    %p126 = scmp.ne.s32.totalorder %s118, %s120
    %p127 = scmp.eq.s32.totalorder %s26, 1
    %p128 = por %p126, %p127
    %p129 = scmp.ne.s32.totalorder %s120, %s121
    %p130 = scmp.eq.s32.totalorder %s26, 0
    %p131 = por %p129, %p130
    %p132 = scmp.ne.s32.totalorder %s120, %s121
    %p133 = scmp.eq.s32.totalorder %s27, 1
    %p134 = por %p132, %p133
    %p136 = scmp.ne.s32.totalorder %s121, %s135
    %p137 = scmp.eq.s32.totalorder %s27, 0
    %p138 = por %p136, %p137
    %s140 = sadd.s32 %s139, 1
    %p143 = scmp.eq.s32.totalorder %s21, 1
    %p144 = scmp.ne.s32.totalorder %s139, %s141
    %p145 = scmp.eq.s32.totalorder %s21, 0
    %p146 = por %p144, %p145
    %p147 = scmp.ne.s32.totalorder %s139, %s141
    %p148 = scmp.eq.s32.totalorder %s26, 1
    %p149 = por %p147, %p148
    %p150 = scmp.ne.s32.totalorder %s141, %s142
    %p151 = scmp.eq.s32.totalorder %s26, 0
    %p152 = por %p150, %p151
    %p153 = scmp.ne.s32.totalorder %s141, %s142
    %p154 = scmp.eq.s32.totalorder %s27, 1
    %p155 = por %p153, %p154
    %p157 = scmp.ne.s32.totalorder %s142, %s156
    %p158 = scmp.eq.s32.totalorder %s27, 0
    %p159 = por %p157, %p158
    %s161 = sadd.s32 %s160, 1
    %p164 = scmp.eq.s32.totalorder %s21, 1
    %p165 = scmp.ne.s32.totalorder %s160, %s162
    %p166 = scmp.eq.s32.totalorder %s21, 0
    %p167 = por %p165, %p166
    %p168 = scmp.ne.s32.totalorder %s160, %s162
    %p169 = scmp.eq.s32.totalorder %s26, 1
    %p170 = por %p168, %p169
    %p171 = scmp.ne.s32.totalorder %s162, %s163
    %p172 = scmp.eq.s32.totalorder %s26, 0
    %p173 = por %p171, %p172
    %p174 = scmp.ne.s32.totalorder %s162, %s163
    %p175 = scmp.eq.s32.totalorder %s27, 1
    %p176 = por %p174, %p175
    %p178 = scmp.ne.s32.totalorder %s163, %s177
    %p179 = scmp.eq.s32.totalorder %s27, 0
    %p180 = por %p178, %p179
    %s182 = sadd.s32 %s181, 1
    %p185 = scmp.eq.s32.totalorder %s21, 1
    %p186 = scmp.ne.s32.totalorder %s181, %s183
    %p187 = scmp.eq.s32.totalorder %s21, 0
    %p188 = por %p186, %p187
    %p189 = scmp.ne.s32.totalorder %s181, %s183
    %p190 = scmp.eq.s32.totalorder %s26, 1
    %p191 = por %p189, %p190
    %p192 = scmp.ne.s32.totalorder %s183, %s184
    %p193 = scmp.eq.s32.totalorder %s26, 0
    %p194 = por %p192, %p193
    %p195 = scmp.ne.s32.totalorder %s183, %s184
    %p196 = scmp.eq.s32.totalorder %s27, 1
    %p197 = por %p195, %p196
    %p199 = scmp.ne.s32.totalorder %s184, %s198
    %p200 = scmp.eq.s32.totalorder %s27, 0
    %p201 = por %p199, %p200
    %s203 = sadd.s32 %s202, 1
    %p206 = scmp.eq.s32.totalorder %s21, 1
    %p207 = scmp.ne.s32.totalorder %s202, %s204
    %p208 = scmp.eq.s32.totalorder %s21, 0
    %p209 = por %p207, %p208
    %p210 = scmp.ne.s32.totalorder %s202, %s204
    %p211 = scmp.eq.s32.totalorder %s26, 1
    %p212 = por %p210, %p211
    %p213 = scmp.ne.s32.totalorder %s204, %s205
    %p214 = scmp.eq.s32.totalorder %s26, 0
    %p215 = por %p213, %p214
    %p216 = scmp.ne.s32.totalorder %s204, %s205
    %p217 = scmp.eq.s32.totalorder %s27, 1
    %p218 = por %p216, %p217
    %p220 = scmp.ne.s32.totalorder %s205, %s219
    %p221 = scmp.eq.s32.totalorder %s27, 0
    %p222 = por %p220, %p221
    %s224 = sadd.s32 %s223, 1
    %p227 = scmp.eq.s32.totalorder %s21, 1
    %p228 = scmp.ne.s32.totalorder %s223, %s225
    %p229 = scmp.eq.s32.totalorder %s21, 0
    %p230 = por %p228, %p229
    %p231 = scmp.ne.s32.totalorder %s223, %s225
    %p232 = scmp.eq.s32.totalorder %s26, 1
    %p233 = por %p231, %p232
    %p234 = scmp.ne.s32.totalorder %s225, %s226
    %p235 = scmp.eq.s32.totalorder %s26, 0
    %p236 = por %p234, %p235
    %p237 = scmp.ne.s32.totalorder %s225, %s226
    %p238 = scmp.eq.s32.totalorder %s27, 1
    %p239 = por %p237, %p238
    %p241 = scmp.ne.s32.totalorder %s226, %s240
    %p242 = scmp.eq.s32.totalorder %s27, 0
    %p243 = por %p241, %p242
    %s245 = sadd.s32 %s244, 1
    %p248 = scmp.eq.s32.totalorder %s21, 1
    %p249 = scmp.ne.s32.totalorder %s244, %s246
    %p250 = scmp.eq.s32.totalorder %s21, 0
    %p251 = por %p249, %p250
    %p252 = scmp.ne.s32.totalorder %s244, %s246
    %p253 = scmp.eq.s32.totalorder %s26, 1
    %p254 = por %p252, %p253
    %p255 = scmp.ne.s32.totalorder %s246, %s247
    %p256 = scmp.eq.s32.totalorder %s26, 0
    %p257 = por %p255, %p256
    %p258 = scmp.ne.s32.totalorder %s246, %s247
    %p259 = scmp.eq.s32.totalorder %s27, 1
    %p260 = por %p258, %p259
    %p262 = scmp.ne.s32.totalorder %s247, %s261
    %p263 = scmp.eq.s32.totalorder %s27, 0
    %p264 = por %p262, %p263
    %s266 = sadd.s32 %s265, 1
    %p269 = scmp.eq.s32.totalorder %s21, 1
    %p270 = scmp.ne.s32.totalorder %s265, %s267
    %p271 = scmp.eq.s32.totalorder %s21, 0
    %p272 = por %p270, %p271
    %p273 = scmp.ne.s32.totalorder %s265, %s267
    %p274 = scmp.eq.s32.totalorder %s26, 1
    %p275 = por %p273, %p274
    %p276 = scmp.ne.s32.totalorder %s267, %s268
    %p277 = scmp.eq.s32.totalorder %s26, 0
    %p278 = por %p276, %p277
    %p279 = scmp.ne.s32.totalorder %s267, %s268
    %p280 = scmp.eq.s32.totalorder %s27, 1
    %p281 = por %p279, %p280
    %p283 = scmp.ne.s32.totalorder %s268, %s282
    %p284 = scmp.eq.s32.totalorder %s27, 0
    %p285 = por %p283, %p284
    %s287 = sadd.s32 %s286, 1
    %p290 = scmp.eq.s32.totalorder %s21, 1
    %p291 = scmp.ne.s32.totalorder %s286, %s288
    %p292 = scmp.eq.s32.totalorder %s21, 0
    %p293 = por %p291, %p292
    %p294 = scmp.ne.s32.totalorder %s286, %s288
    %p295 = scmp.eq.s32.totalorder %s26, 1
    %p296 = por %p294, %p295
    %p297 = scmp.ne.s32.totalorder %s288, %s289
    %p298 = scmp.eq.s32.totalorder %s26, 0
    %p299 = por %p297, %p298
    %p300 = scmp.ne.s32.totalorder %s288, %s289
    %p301 = scmp.eq.s32.totalorder %s27, 1
    %p302 = por %p300, %p301
    %p304 = scmp.ne.s32.totalorder %s289, %s303
    %p305 = scmp.eq.s32.totalorder %s27, 0
    %p306 = por %p304, %p305
    %s308 = sadd.s32 %s307, 1
    %p311 = scmp.eq.s32.totalorder %s21, 1
    %p312 = scmp.ne.s32.totalorder %s307, %s309
    %p313 = scmp.eq.s32.totalorder %s21, 0
    %p314 = por %p312, %p313
    %p315 = scmp.ne.s32.totalorder %s307, %s309
    %p316 = scmp.eq.s32.totalorder %s26, 1
    %p317 = por %p315, %p316
    %p318 = scmp.ne.s32.totalorder %s309, %s310
    %p319 = scmp.eq.s32.totalorder %s26, 0
    %p320 = por %p318, %p319
    %p321 = scmp.ne.s32.totalorder %s309, %s310
    %p322 = scmp.eq.s32.totalorder %s27, 1
    %p323 = por %p321, %p322
    %p325 = scmp.ne.s32.totalorder %s310, %s324
    %p326 = scmp.eq.s32.totalorder %s27, 0
    %p327 = por %p325, %p326
    %s329 = sadd.s32 %s328, 1
    %p332 = scmp.eq.s32.totalorder %s21, 1
    %p333 = scmp.ne.s32.totalorder %s328, %s330
    %p334 = scmp.eq.s32.totalorder %s21, 0
    %p335 = por %p333, %p334
    %p336 = scmp.ne.s32.totalorder %s328, %s330
    %p337 = scmp.eq.s32.totalorder %s26, 1
    %p338 = por %p336, %p337
    %p339 = scmp.ne.s32.totalorder %s330, %s331
    %p340 = scmp.eq.s32.totalorder %s26, 0
    %p341 = por %p339, %p340
    %p342 = scmp.ne.s32.totalorder %s330, %s331
    %p343 = scmp.eq.s32.totalorder %s27, 1
    %p344 = por %p342, %p343
    %p346 = scmp.ne.s32.totalorder %s331, %s345
    %p347 = scmp.eq.s32.totalorder %s27, 0
    %p348 = por %p346, %p347
    %s349 = ssub.s32 %s21, %s28
    %p350 = scmp.eq.s32.totalorder %s349, 0
    %s352 = sadd.s32 %s351, 1
    %s353 = scalar_select %p350, %s351, %s352
    %p356 = pneg %p350
    %p357 = scmp.eq.s32.totalorder %s21, 1
    %p358 = por %p356, %p357
    %p359 = scmp.ne.s32.totalorder %s351, %s354
    %p360 = scmp.eq.s32.totalorder %s21, 0
    %p361 = por %p359, %p360
    %p362 = scmp.ne.s32.totalorder %s351, %s354
    %p363 = scmp.eq.s32.totalorder %s26, 1
    %p364 = por %p362, %p363
    %p365 = scmp.ne.s32.totalorder %s354, %s355
    %p366 = scmp.eq.s32.totalorder %s26, 0
    %p367 = por %p365, %p366
    %p368 = scmp.ne.s32.totalorder %s354, %s355
    %p369 = scmp.eq.s32.totalorder %s27, 1
    %p370 = por %p368, %p369
    %p372 = scmp.ne.s32.totalorder %s355, %s371
    %p373 = scmp.eq.s32.totalorder %s27, 0
    %p374 = por %p372, %p373
    %p375 = scmp.le.s32.totalorder 1, %s21
    %p376 = scmp.lt.s32.totalorder %s21, 3
    %p377 = pnand %p375, %p376
    %p378 = pneg %p377
    // Predicated region
    $region9: #{unified_model_forward.12} parent=5 // pred_check
      _
    $region10: #{unified_model_forward.12} parent=5 // pred_check_branch
      %380 = sbr.rel (%p377) target = $region12
    $region11: #{unified_model_forward.12} parent=5 // pred_region
      %s381 = ssub.s32 %s21, 1
      // Predicated region
      $region13: #{unified_model_forward.12} parent=11 // pred_check
        %p382 = pneg %p68
      $region14: #{unified_model_forward.12} parent=11 // pred_check_branch
        %384 = sbr.rel (%p382) target = $region16
      $region15: #{unified_model_forward.12} parent=11 // pred_region
        _
      $region16: #{unified_model_forward.12} parent=11 // pred_fallthru
        _
      // Predicated region
      $region17: #{unified_model_forward.12} parent=11 // pred_check
        %p385 = pneg %p89
      $region18: #{unified_model_forward.12} parent=11 // pred_check_branch
        %387 = sbr.rel (%p385) target = $region20
      $region19: #{unified_model_forward.12} parent=11 // pred_region
        _
      $region20: #{unified_model_forward.12} parent=11 // pred_fallthru
        _
      // Predicated region
      $region21: #{unified_model_forward.12} parent=11 // pred_check
        %p388 = pneg %p110
      $region22: #{unified_model_forward.12} parent=11 // pred_check_branch
        %390 = sbr.rel (%p388) target = $region24
      $region23: #{unified_model_forward.12} parent=11 // pred_region
        _
      $region24: #{unified_model_forward.12} parent=11 // pred_fallthru
        _
      // Predicated region
      $region25: #{unified_model_forward.12} parent=11 // pred_check
        %p391 = pneg %p131
      $region26: #{unified_model_forward.12} parent=11 // pred_check_branch
        %393 = sbr.rel (%p391) target = $region28
      $region27: #{unified_model_forward.12} parent=11 // pred_region
        _
      $region28: #{unified_model_forward.12} parent=11 // pred_fallthru
        _
      // Predicated region
      $region29: #{unified_model_forward.12} parent=11 // pred_check
        %p394 = pneg %p152
      $region30: #{unified_model_forward.12} parent=11 // pred_check_branch
        %396 = sbr.rel (%p394) target = $region32
      $region31: #{unified_model_forward.12} parent=11 // pred_region
        _
      $region32: #{unified_model_forward.12} parent=11 // pred_fallthru
        _
      // Predicated region
      $region33: #{unified_model_forward.12} parent=11 // pred_check
        %p397 = pneg %p173
      $region34: #{unified_model_forward.12} parent=11 // pred_check_branch
        %399 = sbr.rel (%p397) target = $region36
      $region35: #{unified_model_forward.12} parent=11 // pred_region
        _
      $region36: #{unified_model_forward.12} parent=11 // pred_fallthru
        _
      // Predicated region
      $region37: #{unified_model_forward.12} parent=11 // pred_check
        %p400 = pneg %p194
      $region38: #{unified_model_forward.12} parent=11 // pred_check_branch
        %402 = sbr.rel (%p400) target = $region40
      $region39: #{unified_model_forward.12} parent=11 // pred_region
        _
      $region40: #{unified_model_forward.12} parent=11 // pred_fallthru
        _
      // Predicated region
      $region41: #{unified_model_forward.12} parent=11 // pred_check
        %p403 = pneg %p215
      $region42: #{unified_model_forward.12} parent=11 // pred_check_branch
        %405 = sbr.rel (%p403) target = $region44
      $region43: #{unified_model_forward.12} parent=11 // pred_region
        _
      $region44: #{unified_model_forward.12} parent=11 // pred_fallthru
        _
      // Predicated region
      $region45: #{unified_model_forward.12} parent=11 // pred_check
        %p406 = pneg %p236
      $region46: #{unified_model_forward.12} parent=11 // pred_check_branch
        %408 = sbr.rel (%p406) target = $region48
      $region47: #{unified_model_forward.12} parent=11 // pred_region
        _
      $region48: #{unified_model_forward.12} parent=11 // pred_fallthru
        _
      // Predicated region
      $region49: #{unified_model_forward.12} parent=11 // pred_check
        %p409 = pneg %p257
      $region50: #{unified_model_forward.12} parent=11 // pred_check_branch
        %411 = sbr.rel (%p409) target = $region52
      $region51: #{unified_model_forward.12} parent=11 // pred_region
        _
      $region52: #{unified_model_forward.12} parent=11 // pred_fallthru
        _
      // Predicated region
      $region53: #{unified_model_forward.12} parent=11 // pred_check
        %p412 = pneg %p278
      $region54: #{unified_model_forward.12} parent=11 // pred_check_branch
        %414 = sbr.rel (%p412) target = $region56
      $region55: #{unified_model_forward.12} parent=11 // pred_region
        _
      $region56: #{unified_model_forward.12} parent=11 // pred_fallthru
        _
      // Predicated region
      $region57: #{unified_model_forward.12} parent=11 // pred_check
        %p415 = pneg %p299
      $region58: #{unified_model_forward.12} parent=11 // pred_check_branch
        %417 = sbr.rel (%p415) target = $region60
      $region59: #{unified_model_forward.12} parent=11 // pred_region
        _
      $region60: #{unified_model_forward.12} parent=11 // pred_fallthru
        _
      // Predicated region
      $region61: #{unified_model_forward.12} parent=11 // pred_check
        %p418 = pneg %p320
      $region62: #{unified_model_forward.12} parent=11 // pred_check_branch
        %420 = sbr.rel (%p418) target = $region64
      $region63: #{unified_model_forward.12} parent=11 // pred_region
        _
      $region64: #{unified_model_forward.12} parent=11 // pred_fallthru
        _
      // Predicated region
      $region65: #{unified_model_forward.12} parent=11 // pred_check
        %p421 = pneg %p341
      $region66: #{unified_model_forward.12} parent=11 // pred_check_branch
        %423 = sbr.rel (%p421) target = $region68
      $region67: #{unified_model_forward.12} parent=11 // pred_region
        _
      $region68: #{unified_model_forward.12} parent=11 // pred_fallthru
        _
    $region12: #{unified_model_forward.12} parent=5 // pred_fallthru
      _
    %p424 = scmp.lt.s32.totalorder %s21, 2
    // Predicated region
    $region69: #{unified_model_forward.12} parent=5 // pred_check
      %p425 = pneg %p424
    $region70: #{unified_model_forward.12} parent=5 // pred_check_branch
      %427 = sbr.rel (%p425) target = $region72
    $region71: #{unified_model_forward.12} parent=5 // pred_region
      // Predicated region
      $region73: #{unified_model_forward.12} parent=71 // pred_check
        %p428 = pneg %p41
      $region74: #{unified_model_forward.12} parent=71 // pred_check_branch
        %430 = sbr.rel (%p428) target = $region76
      $region75: #{unified_model_forward.12} parent=71 // pred_region
        %p431 = scmp.lt.s32.totalorder %s21, 1
        %s432 = scalar_select %p431, %s21, 1
        %s433 = smul.addr %s432, 3
        %s434 = smul.addr %s433, 8
        %s435 = scalar_lea.vmem %s0, %s434
      $region76: #{unified_model_forward.12} parent=71 // pred_fallthru
        _
    $region72: #{unified_model_forward.12} parent=5 // pred_fallthru
      _
    %p436 = scmp.le.s32.totalorder 1, %s21
    %p437 = scmp.lt.s32.totalorder %s21, 3
    %p438 = pnand %p436, %p437
    %p439 = pneg %p438
    // Predicated region
    $region77: #{unified_model_forward.12} parent=5 // pred_check
      _
    $region78: #{unified_model_forward.12} parent=5 // pred_check_branch
      %441 = sbr.rel (%p438) target = $region80
    $region79: #{unified_model_forward.12} parent=5 // pred_region
      %s442 = ssub.s32 %s21, 1
      %p443 = scmp.lt.s32.totalorder %s26, 1
      %s444 = scalar_select %p443, %s26, 1
      %s445 = smul.addr %s444, 3
      %s446 = smul.addr %s445, 8
      %s447 = scalar_lea.vmem %s0, %s446
      %p448 = pneg %p47
      %p449 = pneg %p44
      %p450 = pneg %p68
      %p451 = pneg %p65
      %p452 = pneg %p89
      %p453 = pneg %p86
      %p454 = pneg %p110
      %p455 = pneg %p107
      %p456 = pneg %p131
      %p457 = pneg %p128
      %p458 = pneg %p152
      %p459 = pneg %p149
      %p460 = pneg %p173
      %p461 = pneg %p170
      %p462 = pneg %p194
      %p463 = pneg %p191
      %p464 = pneg %p215
      %p465 = pneg %p212
      %p466 = pneg %p236
      %p467 = pneg %p233
      %p468 = pneg %p257
      %p469 = pneg %p254
      %p470 = pneg %p278
      %p471 = pneg %p275
      %p472 = pneg %p299
      %p473 = pneg %p296
      %p474 = pneg %p320
      %p475 = pneg %p317
      %p476 = pneg %p341
      %p477 = pneg %p338
      %p478 = pneg %p367
      %p479 = pneg %p364
      %p480 = scmp.lt.s32.totalorder %s26, 1
      %s481 = scalar_select %p480, %s26, 1
      %s482 = smul.addr %s481, 3
      %s483 = smul.addr %s482, 8
      %s484 = scalar_lea.vmem %s15, %s483
      %p485 = scmp.lt.s32.totalorder %s26, 1
      %s486 = scalar_select %p485, %s26, 1
      %s487 = smul.addr %s486, 3
      %s488 = smul.addr %s487, 8
      %s489 = scalar_lea.vmem %s0, %s488
      %p490 = scmp.lt.s32.totalorder %s26, 1
      %s491 = scalar_select %p490, %s26, 1
      %s492 = smul.addr %s491, 3
      %s493 = smul.addr %s492, 8
      %s494 = scalar_lea.vmem %s15, %s493
      %v495 = vld [vmem:[%s489] sm:$0xff]
      %v496 = vld [vmem:[%s489 + $0x8] sm:$0xff]
      %v497 = vld [vmem:[%s489 + $0x10] sm:$0xff]
      %498 = vadd.xlane.f32.xlu0 %v495
      %v499 = vpop.xlane.xlu0 %498
      %500 = vadd.xlane.f32.xlu0 %v496
      %v501 = vpop.xlane.xlu0 %500
      %502 = vadd.xlane.f32.xlu0 %v497
      %v503 = vpop.xlane.xlu0 %502
      %v504 = vrcp.pop 128.0
      %v505 = vmul.f32 %v499, %v504
      %v506 = vmul.f32 %v501, %v504
      %v507 = vmul.f32 %v503, %v504
      %v508 = vsub.f32 %v495, %v505
      %v509 = vsub.f32 %v496, %v506
      %v510 = vsub.f32 %v497, %v507
      %v511 = vmul.f32 %v508, %v508
      %v512 = vmul.f32 %v509, %v509
      %v513 = vmul.f32 %v510, %v510
      %514 = vadd.xlane.f32.xlu0 %v511
      %v515 = vpop.xlane.xlu0 %514
      %516 = vadd.xlane.f32.xlu0 %v512
      %v517 = vpop.xlane.xlu0 %516
      %518 = vadd.xlane.f32.xlu0 %v513
      %v519 = vpop.xlane.xlu0 %518
      %v520 = vmul.f32 %v515, %v504
      %v521 = vmul.f32 %v517, %v504
      %v522 = vmul.f32 %v519, %v504
      %v523 = vadd.f32 %v520, 1e-06
      %v524 = vadd.f32 %v521, 1e-06
      %v525 = vadd.f32 %v522, 1e-06
      %v526 = vrsqrt.pop %v523
      %v527 = vrsqrt.pop %v524
      %v528 = vrsqrt.pop %v525
      %v529 = vmul.f32 %v508, %v526
      %v530 = vmul.f32 %v509, %v527
      %v531 = vmul.f32 %v510, %v528
      %v532 = vld [vmem:[%s1] sm:$0x1]
      %v534 = vlaneseq
      %v535 = vshrl.u32 %v534, 7
      %v536 = vsub.s32 0, %v535
      %v537 = vrot.slane %v532, %v536
      %v539 = vmul.f32 %v529, %v537
      %v540 = vmul.f32 %v530, %v537
      %v541 = vmul.f32 %v531, %v537
      %v542 = vld [vmem:[%s2] sm:$0x1]
      %v544 = vlaneseq
      %v545 = vshrl.u32 %v544, 7
      %v546 = vsub.s32 0, %v545
      %v547 = vrot.slane %v542, %v546
      %v549 = vadd.f32 %v539, %v547
      %v550 = vadd.f32 %v540, %v547
      %v551 = vadd.f32 %v541, %v547
      %v552 = vld [vmem:[%s3] sm:$0xff]
      %v553 = vld [vmem:[%s3 + $0x8] sm:$0xff]
      %v554 = vld [vmem:[%s3 + $0x10] sm:$0xff]
      %v555 = vld [vmem:[%s3 + $0x18] sm:$0xff]
      %v556 = vld [vmem:[%s3 + $0x20] sm:$0xff]
      %v557 = vld [vmem:[%s3 + $0x28] sm:$0xff]
      %v558 = vld [vmem:[%s3 + $0x30] sm:$0xff]
      %v559 = vld [vmem:[%s3 + $0x38] sm:$0xff]
      %v560 = vld [vmem:[%s3 + $0x40] sm:$0xff]
      %v561 = vld [vmem:[%s3 + $0x48] sm:$0xff]
      %v562 = vld [vmem:[%s3 + $0x50] sm:$0xff]
      %v563 = vld [vmem:[%s3 + $0x58] sm:$0xff]
      %v564 = vld [vmem:[%s3 + $0x60] sm:$0xff]
      %v565 = vld [vmem:[%s3 + $0x68] sm:$0xff]
      %v566 = vld [vmem:[%s3 + $0x70] sm:$0xff]
      %v567 = vld [vmem:[%s3 + $0x78] sm:$0xff]
      %v568 = vld [vmem:[%s3 + $0x80] sm:$0xff]
      %v569 = vld [vmem:[%s3 + $0x88] sm:$0xff]
      %v570 = vld [vmem:[%s3 + $0x90] sm:$0xff]
      %v571 = vld [vmem:[%s3 + $0x98] sm:$0xff]
      %v572 = vld [vmem:[%s3 + $0xa0] sm:$0xff]
      %v573 = vld [vmem:[%s3 + $0xa8] sm:$0xff]
      %v574 = vld [vmem:[%s3 + $0xb0] sm:$0xff]
      %v575 = vld [vmem:[%s3 + $0xb8] sm:$0xff]
      %v576 = vld [vmem:[%s3 + $0xc0] sm:$0xff]
      %v577 = vld [vmem:[%s3 + $0xc8] sm:$0xff]
      %v578 = vld [vmem:[%s3 + $0xd0] sm:$0xff]
      %v579 = vld [vmem:[%s3 + $0xd8] sm:$0xff]
      %v580 = vld [vmem:[%s3 + $0xe0] sm:$0xff]
      %v581 = vld [vmem:[%s3 + $0xe8] sm:$0xff]
      %v582 = vld [vmem:[%s3 + $0xf0] sm:$0xff]
      %v583 = vld [vmem:[%s3 + $0xf8] sm:$0xff]
      %v584 = vld [vmem:[%s3 + $0x100] sm:$0xff]
      %v585 = vld [vmem:[%s3 + $0x108] sm:$0xff]
      %v586 = vld [vmem:[%s3 + $0x110] sm:$0xff]
      %v587 = vld [vmem:[%s3 + $0x118] sm:$0xff]
      %v588 = vld [vmem:[%s3 + $0x120] sm:$0xff]
      %v589 = vld [vmem:[%s3 + $0x128] sm:$0xff]
      %v590 = vld [vmem:[%s3 + $0x130] sm:$0xff]
      %v591 = vld [vmem:[%s3 + $0x138] sm:$0xff]
      %v592 = vld [vmem:[%s3 + $0x140] sm:$0xff]
      %v593 = vld [vmem:[%s3 + $0x148] sm:$0xff]
      %v594 = vld [vmem:[%s3 + $0x150] sm:$0xff]
      %v595 = vld [vmem:[%s3 + $0x158] sm:$0xff]
      %v596 = vld [vmem:[%s3 + $0x160] sm:$0xff]
      %v597 = vld [vmem:[%s3 + $0x168] sm:$0xff]
      %v598 = vld [vmem:[%s3 + $0x170] sm:$0xff]
      %v599 = vld [vmem:[%s3 + $0x178] sm:$0xff]
      %v600 = vld [vmem:[%s4] sm:$0x7]
      %v602 = vlaneseq
      %v603 = vshrl.u32 %v602, 7
      %v604 = vsub.s32 0, %v603
      %v605 = vrot.slane %v600, %v604
      %v606 = vlaneseq
      %v607 = vshrl.u32 %v606, 7
      %v608 = vsub.s32 1, %v607
      %v609 = vrot.slane %v600, %v608
      %v610 = vlaneseq
      %v611 = vshrl.u32 %v610, 7
      %v612 = vsub.s32 2, %v611
      %v613 = vrot.slane %v600, %v612
      %617 = vmatprep.subr.mxu0 %v553
      %618 = vmatpush1.msra.mxu0 %v552
      %619 = vmatprep.subr.mxu0 %v556
      %620 = vmatpush1.msra.mxu0 %v555
      %621 = vmatprep.subr.mxu0 %v559
      %622 = vmatpush1.msra.mxu0 %v558
      %623 = vmatprep.subr.mxu0 %v562
      %624 = vmatpush1.msra.mxu0 %v561
      %625 = vmatprep.subr.mxu0 %v565
      %626 = vmatpush1.msra.mxu0 %v564
      %627 = vmatprep.subr.mxu0 %v568
      %628 = vmatpush1.msra.mxu0 %v567
      %629 = vmatprep.subr.mxu0 %v571
      %630 = vmatpush1.msra.mxu0 %v570
      %631 = vmatprep.subr.mxu0 %v574
      %632 = vmatpush1.msra.mxu0 %v573
      %633 = vmatprep.subr.mxu0 %v577
      %634 = vmatpush1.msra.mxu0 %v576
      %635 = vmatprep.subr.mxu0 %v580
      %636 = vmatpush1.msra.mxu0 %v579
      %637 = vmatprep.subr.mxu0 %v583
      %638 = vmatpush1.msra.mxu0 %v582
      %639 = vmatprep.subr.mxu0 %v586
      %640 = vmatpush1.msra.mxu0 %v585
      %641 = vmatprep.subr.mxu0 %v589
      %642 = vmatpush1.msra.mxu0 %v588
      %643 = vmatprep.subr.mxu0 %v592
      %644 = vmatpush1.msra.mxu0 %v591
      %645 = vmatprep.subr.mxu0 %v595
      %646 = vmatpush1.msra.mxu0 %v594
      %647 = vmatprep.subr.mxu0 %v598
      %648 = vmatpush1.msra.mxu0 %v597
      %649 = vmatprep.subr.mxu0 0.0
      %650 = vmatpush1.msra.mxu0 0.0
      %651 = vmatprep.subr.mxu0 0.0
      %652 = vmatpush1.msra.mxu0 0.0
      %653 = vmatprep.subr.mxu0 0.0
      %654 = vmatpush1.msra.mxu0 0.0
      %655 = vmatprep.subr.mxu0 0.0
      %656 = vmatpush1.msra.mxu0 0.0
      %657 = vmatprep.subr.mxu0 0.0
      %658 = vmatpush1.msra.mxu0 0.0
      %659 = vmatprep.subr.mxu0 0.0
      %660 = vmatpush1.msra.mxu0 0.0
      %661 = vmatprep.subr.mxu0 0.0
      %662 = vmatpush1.msra.mxu0 0.0
      %663 = vmatprep.subr.mxu0 0.0
      %664 = vmatpush1.msra.mxu0 0.0
      %665 = vmatprep.subr.mxu0 0.0
      %666 = vmatpush1.msra.mxu0 0.0
      %667 = vmatprep.subr.mxu0 0.0
      %668 = vmatpush1.msra.mxu0 0.0
      %669 = vmatprep.subr.mxu0 0.0
      %670 = vmatpush1.msra.mxu0 0.0
      %671 = vmatprep.subr.mxu0 0.0
      %672 = vmatpush1.msra.mxu0 0.0
      %673 = vmatprep.subr.mxu0 0.0
      %674 = vmatpush1.msra.mxu0 0.0
      %675 = vmatprep.subr.mxu0 0.0
      %676 = vmatpush1.msra.mxu0 0.0
      %677 = vmatprep.subr.mxu0 0.0
      %678 = vmatpush1.msra.mxu0 0.0
      %679 = vmatprep.subr.mxu0 0.0
      %680 = vmatpush1.msra.mxu0 0.0
      %681 = vmatprep.mubr.f32.mxu0 0.0
      %682 = vmatmul.mubr.f32.gmra.mrb[0].mxu0 %v549
      %v683 = vpop.f32.mrb[0].mxu0
      %v684 = vadd.f32 %v605, %v683
      %v685 = vpop.f32.mrb[0].mxu0
      %v686 = vadd.f32 %v609, %v685
      %687 = vmatprep.mubr.f32.mxu0 0.0
      %688 = vmatmul.mubr.f32.gmra.mrb[0].mxu0 %v550
      %v689 = vpop.f32.mrb[0].mxu0
      %v690 = vadd.f32 %v605, %v689
      %v691 = vpop.f32.mrb[0].mxu0
      %v692 = vadd.f32 %v609, %v691
      %693 = vmatprep.mubr.f32.mxu0 0.0
      %694 = vmatmul.mubr.f32.gmra.mrb[0].mxu0 %v551
      %v695 = vpop.f32.mrb[0].mxu0
      %v696 = vadd.f32 %v605, %v695
      %v697 = vpop.f32.mrb[0].mxu0
      %v698 = vadd.f32 %v609, %v697
      %699 = vdwg.mxu0
      %700 = vmatprep.subr.mxu0 0.0
      %701 = vmatpush1.msra.mxu0 %v554
      %702 = vmatprep.subr.mxu0 0.0
      %703 = vmatpush1.msra.mxu0 %v557
      %704 = vmatprep.subr.mxu0 0.0
      %705 = vmatpush1.msra.mxu0 %v560
      %706 = vmatprep.subr.mxu0 0.0
      %707 = vmatpush1.msra.mxu0 %v563
      %708 = vmatprep.subr.mxu0 0.0
      %709 = vmatpush1.msra.mxu0 %v566
      %710 = vmatprep.subr.mxu0 0.0
      %711 = vmatpush1.msra.mxu0 %v569
      %712 = vmatprep.subr.mxu0 0.0
      %713 = vmatpush1.msra.mxu0 %v572
      %714 = vmatprep.subr.mxu0 0.0
      %715 = vmatpush1.msra.mxu0 %v575
      %716 = vmatprep.subr.mxu0 0.0
      %717 = vmatpush1.msra.mxu0 %v578
      %718 = vmatprep.subr.mxu0 0.0
      %719 = vmatpush1.msra.mxu0 %v581
      %720 = vmatprep.subr.mxu0 0.0
      %721 = vmatpush1.msra.mxu0 %v584
      %722 = vmatprep.subr.mxu0 0.0
      %723 = vmatpush1.msra.mxu0 %v587
      %724 = vmatprep.subr.mxu0 0.0
      %725 = vmatpush1.msra.mxu0 %v590
      %726 = vmatprep.subr.mxu0 0.0
      %727 = vmatpush1.msra.mxu0 %v593
      %728 = vmatprep.subr.mxu0 0.0
      %729 = vmatpush1.msra.mxu0 %v596
      %730 = vmatprep.subr.mxu0 0.0
      %731 = vmatpush1.msra.mxu0 %v599
      %732 = vmatprep.subr.mxu0 0.0
      %733 = vmatpush1.msra.mxu0 0.0
      %734 = vmatprep.subr.mxu0 0.0
      %735 = vmatpush1.msra.mxu0 0.0
      %736 = vmatprep.subr.mxu0 0.0
      %737 = vmatpush1.msra.mxu0 0.0
      %738 = vmatprep.subr.mxu0 0.0
      %739 = vmatpush1.msra.mxu0 0.0
      %740 = vmatprep.subr.mxu0 0.0
      %741 = vmatpush1.msra.mxu0 0.0
      %742 = vmatprep.subr.mxu0 0.0
      %743 = vmatpush1.msra.mxu0 0.0
      %744 = vmatprep.subr.mxu0 0.0
      %745 = vmatpush1.msra.mxu0 0.0
      %746 = vmatprep.subr.mxu0 0.0
      %747 = vmatpush1.msra.mxu0 0.0
      %748 = vmatprep.subr.mxu0 0.0
      %749 = vmatpush1.msra.mxu0 0.0
      %750 = vmatprep.subr.mxu0 0.0
      %751 = vmatpush1.msra.mxu0 0.0
      %752 = vmatprep.subr.mxu0 0.0
      %753 = vmatpush1.msra.mxu0 0.0
      %754 = vmatprep.subr.mxu0 0.0
      %755 = vmatpush1.msra.mxu0 0.0
      %756 = vmatprep.subr.mxu0 0.0
      %757 = vmatpush1.msra.mxu0 0.0
      %758 = vmatprep.subr.mxu0 0.0
      %759 = vmatpush1.msra.mxu0 0.0
      %760 = vmatprep.subr.mxu0 0.0
      %761 = vmatpush1.msra.mxu0 0.0
      %762 = vmatprep.subr.mxu0 0.0
      %763 = vmatpush1.msra.mxu0 0.0
      %764 = vmatprep.mubr.f32.mxu0 0.0
      %765 = vmatmul.mubr.f32.gmra.mrb[0].mxu0 %v549
      %v766 = vpop.f32.mrb[0].mxu0
      %v767 = vadd.f32 %v613, %v766
      %v768 = vpop.f32.mrb[0].mxu0
      %769 = vmatprep.mubr.f32.mxu0 0.0
      %770 = vmatmul.mubr.f32.gmra.mrb[0].mxu0 %v550
      %v771 = vpop.f32.mrb[0].mxu0
      %v772 = vadd.f32 %v613, %v771
      %v773 = vpop.f32.mrb[0].mxu0
      %774 = vmatprep.mubr.f32.mxu0 0.0
      %775 = vmatmul.mubr.f32.gmra.mrb[0].mxu0 %v551
      %v776 = vpop.f32.mrb[0].mxu0
      %v777 = vadd.f32 %v613, %v776
      %v778 = vpop.f32.mrb[0].mxu0
      %779 = vdwg.mxu0
      %v780 = vld [vmem:[%s5] sm:$0xff]
      %v781 = vld [vmem:[%s5 + $0x8] sm:$0xff]
      %v782 = vld [vmem:[%s5 + $0x10] sm:$0xff]
      %v783 = vld [vmem:[%s5 + $0x18] sm:$0xff]
      %v784 = vld [vmem:[%s5 + $0x20] sm:$0xff]
      %v785 = vld [vmem:[%s5 + $0x28] sm:$0xff]
      %v786 = vld [vmem:[%s5 + $0x30] sm:$0xff]
      %v787 = vld [vmem:[%s5 + $0x38] sm:$0xff]
      %v788 = vld [vmem:[%s5 + $0x40] sm:$0xff]
      %v789 = vld [vmem:[%s5 + $0x48] sm:$0xff]
      %v790 = vld [vmem:[%s5 + $0x50] sm:$0xff]
      %v791 = vld [vmem:[%s5 + $0x58] sm:$0xff]
      %v792 = vld [vmem:[%s5 + $0x60] sm:$0xff]
      %v793 = vld [vmem:[%s5 + $0x68] sm:$0xff]
      %v794 = vld [vmem:[%s5 + $0x70] sm:$0xff]
      %v795 = vld [vmem:[%s5 + $0x78] sm:$0xff]
      %v796 = vlaneseq
      %v797 = vand.u32 %v796, 127
      %vm798 = vcmp.lt.s32.totalorder %v797, 17
      %v799 = vsel %vm798, 0.0, -1e+30
      %v800 = vmul.f32 %v684, 0.17677669
      %v801 = vmul.f32 %v690, 0.17677669
      %v802 = vmul.f32 %v696, 0.17677669
      %vm803 = vcmask 261120
      %v805 = vsel %vm803, %v800, 0
      %v808 = vsel %vm803, %v801, 0
      %v811 = vsel %vm803, %v802, 0
      %v814 = vsel %vm803, %v686, 0
      %v817 = vsel %vm803, %v692, 0
      %v820 = vsel %vm803, %v698, 0
      %822 = vmatprep.subr.mxu0 0.0
      %823 = vmatpush1.xpose.msra.mxu0 %v814
      %824 = vmatprep.subr.mxu0 0.0
      %825 = vmatpush1.xpose.msra.mxu0 %v817
      %826 = vmatprep.subr.mxu0 0.0
      %827 = vmatpush1.xpose.msra.mxu0 %v820
      %828 = vmatprep.subr.mxu0 0.0
      %829 = vmatpush1.xpose.msra.mxu0 0.0
      %830 = vmatprep.subr.mxu0 0.0
      %831 = vmatpush1.xpose.msra.mxu0 0.0
      %832 = vmatprep.subr.mxu0 0.0
      %833 = vmatpush1.xpose.msra.mxu0 0.0
      %834 = vmatprep.subr.mxu0 0.0
      %835 = vmatpush1.xpose.msra.mxu0 0.0
      %836 = vmatprep.subr.mxu0 0.0
      %837 = vmatpush1.xpose.msra.mxu0 0.0
      %838 = vmatprep.subr.mxu0 0.0
      %839 = vmatpush1.xpose.msra.mxu0 0.0
      %840 = vmatprep.subr.mxu0 0.0
      %841 = vmatpush1.xpose.msra.mxu0 0.0
      %842 = vmatprep.subr.mxu0 0.0
      %843 = vmatpush1.xpose.msra.mxu0 0.0
      %844 = vmatprep.subr.mxu0 0.0
      %845 = vmatpush1.xpose.msra.mxu0 0.0
      %846 = vmatprep.subr.mxu0 0.0
      %847 = vmatpush1.xpose.msra.mxu0 0.0
      %848 = vmatprep.subr.mxu0 0.0
      %849 = vmatpush1.xpose.msra.mxu0 0.0
      %850 = vmatprep.subr.mxu0 0.0
      %851 = vmatpush1.xpose.msra.mxu0 0.0
      %852 = vmatprep.subr.mxu0 0.0
      %853 = vmatpush1.xpose.msra.mxu0 0.0
      %854 = vmatprep.subr.mxu0 0.0
      %855 = vmatpush1.xpose.msra.mxu0 0.0
      %856 = vmatprep.subr.mxu0 0.0
      %857 = vmatpush1.xpose.msra.mxu0 0.0
      %858 = vmatprep.subr.mxu0 0.0
      %859 = vmatpush1.xpose.msra.mxu0 0.0
      %860 = vmatprep.subr.mxu0 0.0
      %861 = vmatpush1.xpose.msra.mxu0 0.0
      %862 = vmatprep.subr.mxu0 0.0
      %863 = vmatpush1.xpose.msra.mxu0 0.0
      %864 = vmatprep.subr.mxu0 0.0
      %865 = vmatpush1.xpose.msra.mxu0 0.0
      %866 = vmatprep.subr.mxu0 0.0
      %867 = vmatpush1.xpose.msra.mxu0 0.0
      %868 = vmatprep.subr.mxu0 0.0
      %869 = vmatpush1.xpose.msra.mxu0 0.0
      %870 = vmatprep.subr.mxu0 0.0
      %871 = vmatpush1.xpose.msra.mxu0 0.0
      %872 = vmatprep.subr.mxu0 0.0
      %873 = vmatpush1.xpose.msra.mxu0 0.0
      %874 = vmatprep.subr.mxu0 0.0
      %875 = vmatpush1.xpose.msra.mxu0 0.0
      %876 = vmatprep.subr.mxu0 0.0
      %877 = vmatpush1.xpose.msra.mxu0 0.0
      %878 = vmatprep.subr.mxu0 0.0
      %879 = vmatpush1.xpose.msra.mxu0 0.0
      %880 = vmatprep.subr.mxu0 0.0
      %881 = vmatpush1.xpose.msra.mxu0 0.0
      %882 = vmatprep.subr.mxu0 0.0
      %883 = vmatpush1.xpose.msra.mxu0 0.0
      %884 = vmatprep.subr.mxu0 0.0
      %885 = vmatpush1.xpose.msra.mxu0 0.0
      %886 = vmatprep.mubr.f32.mxu0 0.0
      %887 = vmatmul.mubr.f32.gmra.mrb[0].mxu0 %v805
      %v888 = vpop.f32.mrb[0].mxu0
      %v889 = vadd.f32 %v799, %v888
      %v890 = vpop.f32.mrb[0].mxu0
      %891 = vmatprep.mubr.f32.mxu0 0.0
      %892 = vmatmul.mubr.f32.gmra.mrb[0].mxu0 %v808
      %v893 = vpop.f32.mrb[0].mxu0
      %v894 = vadd.f32 %v799, %v893
      %v895 = vpop.f32.mrb[0].mxu0
      %896 = vmatprep.mubr.f32.mxu0 0.0
      %897 = vmatmul.mubr.f32.gmra.mrb[0].mxu0 %v811
      %v898 = vpop.f32.mrb[0].mxu0
      %v899 = vadd.f32 %v799, %v898
      %v900 = vpop.f32.mrb[0].mxu0
      %901 = vdwg.mxu0
      %vm902 = vcmask 195584
      %v903 = vsel %vm902, %v889, -inf
      %904 = vmax.xlane.f32.xlu0 %v903
      %v905 = vpop.xlane.xlu0 %904
      %v906 = vsel %vm902, %v894, -inf
      %907 = vmax.xlane.f32.xlu0 %v906
      %v908 = vpop.xlane.xlu0 %907
      %v909 = vsel %vm902, %v899, -inf
      %910 = vmax.xlane.f32.xlu0 %v909
      %v911 = vpop.xlane.xlu0 %910
      %v912 = vsub.f32 %v889, %v905
      %v913 = vsub.f32 %v894, %v908
      %v914 = vsub.f32 %v899, %v911
      %v915 = vmul.f32 %v912, 1.442695
      %v916 = vpow.pop %v915
      %v917 = vmul.f32 %v913, 1.442695
      %v918 = vpow.pop %v917
      %v919 = vmul.f32 %v914, 1.442695
      %v920 = vpow.pop %v919
      %v921 = vsel %vm902, %v916, 0.0
      %922 = vadd.xlane.f32.xlu0 %v921
      %v923 = vpop.xlane.xlu0 %922
      %v924 = vsel %vm902, %v918, 0.0
      %925 = vadd.xlane.f32.xlu0 %v924
      %v926 = vpop.xlane.xlu0 %925
      %v927 = vsel %vm902, %v920, 0.0
      %928 = vadd.xlane.f32.xlu0 %v927
      %v929 = vpop.xlane.xlu0 %928
      %v930 = vrcp.pop %v923
      %v931 = vrcp.pop %v926
      %v932 = vrcp.pop %v929
      %v933 = vmul.f32 %v916, %v930
      %v934 = vmul.f32 %v918, %v931
      %v935 = vmul.f32 %v920, %v932
      %v937 = vsel %vm902, %v933, 0
      %v940 = vsel %vm902, %v934, 0
      %v943 = vsel %vm902, %v935, 0
      %945 = vmatprep.subr.mxu0 0.0
      %946 = vmatpush1.msra.mxu0 %v767
      %947 = vmatprep.subr.mxu0 0.0
      %948 = vmatpush1.msra.mxu0 %v772
      %949 = vmatprep.subr.mxu0 0.0
      %950 = vmatpush1.msra.mxu0 %v777
      %951 = vmatprep.subr.mxu0 0.0
      %952 = vmatpush1.msra.mxu0 0.0
      %953 = vmatprep.subr.mxu0 0.0
      %954 = vmatpush1.msra.mxu0 0.0
      %955 = vmatprep.subr.mxu0 0.0
      %956 = vmatpush1.msra.mxu0 0.0
      %957 = vmatprep.subr.mxu0 0.0
      %958 = vmatpush1.msra.mxu0 0.0
      %959 = vmatprep.subr.mxu0 0.0
      %960 = vmatpush1.msra.mxu0 0.0
      %961 = vmatprep.subr.mxu0 0.0
      %962 = vmatpush1.msra.mxu0 0.0
      %963 = vmatprep.subr.mxu0 0.0
      %964 = vmatpush1.msra.mxu0 0.0
      %965 = vmatprep.subr.mxu0 0.0
      %966 = vmatpush1.msra.mxu0 0.0
      %967 = vmatprep.subr.mxu0 0.0
      %968 = vmatpush1.msra.mxu0 0.0
      %969 = vmatprep.subr.mxu0 0.0
      %970 = vmatpush1.msra.mxu0 0.0
      %971 = vmatprep.subr.mxu0 0.0
      %972 = vmatpush1.msra.mxu0 0.0
      %973 = vmatprep.subr.mxu0 0.0
      %974 = vmatpush1.msra.mxu0 0.0
      %975 = vmatprep.subr.mxu0 0.0
      %976 = vmatpush1.msra.mxu0 0.0
      %977 = vmatprep.subr.mxu0 0.0
      %978 = vmatpush1.msra.mxu0 0.0
      %979 = vmatprep.subr.mxu0 0.0
      %980 = vmatpush1.msra.mxu0 0.0
      %981 = vmatprep.subr.mxu0 0.0
      %982 = vmatpush1.msra.mxu0 0.0
      %983 = vmatprep.subr.mxu0 0.0
      %984 = vmatpush1.msra.mxu0 0.0
      %985 = vmatprep.subr.mxu0 0.0
      %986 = vmatpush1.msra.mxu0 0.0
      %987 = vmatprep.subr.mxu0 0.0
      %988 = vmatpush1.msra.mxu0 0.0
      %989 = vmatprep.subr.mxu0 0.0
      %990 = vmatpush1.msra.mxu0 0.0
      %991 = vmatprep.subr.mxu0 0.0
      %992 = vmatpush1.msra.mxu0 0.0
      %993 = vmatprep.subr.mxu0 0.0
      %994 = vmatpush1.msra.mxu0 0.0
      %995 = vmatprep.subr.mxu0 0.0
      %996 = vmatpush1.msra.mxu0 0.0
      %997 = vmatprep.subr.mxu0 0.0
      %998 = vmatpush1.msra.mxu0 0.0
      %999 = vmatprep.subr.mxu0 0.0
      %1000 = vmatpush1.msra.mxu0 0.0
      %1001 = vmatprep.subr.mxu0 0.0
      %1002 = vmatpush1.msra.mxu0 0.0
      %1003 = vmatprep.subr.mxu0 0.0
      %1004 = vmatpush1.msra.mxu0 0.0
      %1005 = vmatprep.subr.mxu0 0.0
      %1006 = vmatpush1.msra.mxu0 0.0
      %1007 = vmatprep.subr.mxu0 0.0
      %1008 = vmatpush1.msra.mxu0 0.0
      %1009 = vmatprep.mubr.f32.mxu0 0.0
      %1010 = vmatmul.mubr.f32.gmra.mrb[0].mxu0 %v937
      %v1011 = vpop.f32.mrb[0].mxu0
      %v1012 = vadd.f32 0.0, %v1011
      %v1013 = vpop.f32.mrb[0].mxu0
      %1014 = vmatprep.mubr.f32.mxu0 0.0
      %1015 = vmatmul.mubr.f32.gmra.mrb[0].mxu0 %v940
      %v1016 = vpop.f32.mrb[0].mxu0
      %v1017 = vadd.f32 0.0, %v1016
      %v1018 = vpop.f32.mrb[0].mxu0
      %1019 = vmatprep.mubr.f32.mxu0 0.0
      %1020 = vmatmul.mubr.f32.gmra.mrb[0].mxu0 %v943
      %v1021 = vpop.f32.mrb[0].mxu0
      %v1022 = vadd.f32 0.0, %v1021
      %v1023 = vpop.f32.mrb[0].mxu0
      %1024 = vdwg.mxu0
      %1025 = vrot.lane.b32.xlu0 %v800, 96
      %v1026 = vpop.permute.xlu0 %1025
      %1027 = vrot.lane.b32.xlu0 %v801, 96
      %v1028 = vpop.permute.xlu0 %1027
      %1029 = vrot.lane.b32.xlu0 %v802, 96
      %v1030 = vpop.permute.xlu0 %1029
      %1031 = vrot.lane.b32.xlu0 %v686, 96
      %v1032 = vpop.permute.xlu0 %1031
      %1033 = vrot.lane.b32.xlu0 %v692, 96
      %v1034 = vpop.permute.xlu0 %1033
      %1035 = vrot.lane.b32.xlu0 %v698, 96
      %v1036 = vpop.permute.xlu0 %1035
      %v1037 = vsel %vm803, %v1026, 0
      %v1039 = vsel %vm803, %v1028, 0
      %v1041 = vsel %vm803, %v1030, 0
      %v1043 = vsel %vm803, %v1032, 0
      %v1045 = vsel %vm803, %v1034, 0
      %v1047 = vsel %vm803, %v1036, 0
      %1049 = vmatprep.subr.mxu0 0.0
      %1050 = vmatpush1.xpose.msra.mxu0 %v1043
      %1051 = vmatprep.subr.mxu0 0.0
      %1052 = vmatpush1.xpose.msra.mxu0 %v1045
      %1053 = vmatprep.subr.mxu0 0.0
      %1054 = vmatpush1.xpose.msra.mxu0 %v1047
      %1055 = vmatprep.subr.mxu0 0.0
      %1056 = vmatpush1.xpose.msra.mxu0 0.0
      %1057 = vmatprep.subr.mxu0 0.0
      %1058 = vmatpush1.xpose.msra.mxu0 0.0
      %1059 = vmatprep.subr.mxu0 0.0
      %1060 = vmatpush1.xpose.msra.mxu0 0.0
      %1061 = vmatprep.subr.mxu0 0.0
      %1062 = vmatpush1.xpose.msra.mxu0 0.0
      %1063 = vmatprep.subr.mxu0 0.0
      %1064 = vmatpush1.xpose.msra.mxu0 0.0
      %1065 = vmatprep.subr.mxu0 0.0
      %1066 = vmatpush1.xpose.msra.mxu0 0.0
      %1067 = vmatprep.subr.mxu0 0.0
      %1068 = vmatpush1.xpose.msra.mxu0 0.0
      %1069 = vmatprep.subr.mxu0 0.0
      %1070 = vmatpush1.xpose.msra.mxu0 0.0
      %1071 = vmatprep.subr.mxu0 0.0
      %1072 = vmatpush1.xpose.msra.mxu0 0.0
      %1073 = vmatprep.subr.mxu0 0.0
      %1074 = vmatpush1.xpose.msra.mxu0 0.0
      %1075 = vmatprep.subr.mxu0 0.0
      %1076 = vmatpush1.xpose.msra.mxu0 0.0
      %1077 = vmatprep.subr.mxu0 0.0
      %1078 = vmatpush1.xpose.msra.mxu0 0.0
      %1079 = vmatprep.subr.mxu0 0.0
      %1080 = vmatpush1.xpose.msra.mxu0 0.0
      %1081 = vmatprep.subr.mxu0 0.0
      %1082 = vmatpush1.xpose.msra.mxu0 0.0
      %1083 = vmatprep.subr.mxu0 0.0
      %1084 = vmatpush1.xpose.msra.mxu0 0.0
      %1085 = vmatprep.subr.mxu0 0.0
      %1086 = vmatpush1.xpose.msra.mxu0 0.0
      %1087 = vmatprep.subr.mxu0 0.0
      %1088 = vmatpush1.xpose.msra.mxu0 0.0
      %1089 = vmatprep.subr.mxu0 0.0
      %1090 = vmatpush1.xpose.msra.mxu0 0.0
      %1091 = vmatprep.subr.mxu0 0.0
      %1092 = vmatpush1.xpose.msra.mxu0 0.0
      %1093 = vmatprep.subr.mxu0 0.0
      %1094 = vmatpush1.xpose.msra.mxu0 0.0
      %1095 = vmatprep.subr.mxu0 0.0
      %1096 = vmatpush1.xpose.msra.mxu0 0.0
      %1097 = vmatprep.subr.mxu0 0.0
      %1098 = vmatpush1.xpose.msra.mxu0 0.0
      %1099 = vmatprep.subr.mxu0 0.0
      %1100 = vmatpush1.xpose.msra.mxu0 0.0
      %1101 = vmatprep.subr.mxu0 0.0
      %1102 = vmatpush1.xpose.msra.mxu0 0.0
      %1103 = vmatprep.subr.mxu0 0.0
      %1104 = vmatpush1.xpose.msra.mxu0 0.0
      %1105 = vmatprep.subr.mxu0 0.0
      %1106 = vmatpush1.xpose.msra.mxu0 0.0
      %1107 = vmatprep.subr.mxu0 0.0
      %1108 = vmatpush1.xpose.msra.mxu0 0.0
      %1109 = vmatprep.subr.mxu0 0.0
      %1110 = vmatpush1.xpose.msra.mxu0 0.0
      %1111 = vmatprep.subr.mxu0 0.0
      %1112 = vmatpush1.xpose.msra.mxu0 0.0
      %1113 = vmatprep.mubr.f32.mxu0 0.0
      %1114 = vmatmul.mubr.f32.gmra.mrb[0].mxu0 %v1037
      %v1115 = vpop.f32.mrb[0].mxu0
      %v1116 = vadd.f32 %v799, %v1115
      %v1117 = vpop.f32.mrb[0].mxu0
      %1118 = vmatprep.mubr.f32.mxu0 0.0
      %1119 = vmatmul.mubr.f32.gmra.mrb[0].mxu0 %v1039
      %v1120 = vpop.f32.mrb[0].mxu0
      %v1121 = vadd.f32 %v799, %v1120
      %v1122 = vpop.f32.mrb[0].mxu0
      %1123 = vmatprep.mubr.f32.mxu0 0.0
      %1124 = vmatmul.mubr.f32.gmra.mrb[0].mxu0 %v1041
      %v1125 = vpop.f32.mrb[0].mxu0
      %v1126 = vadd.f32 %v799, %v1125
      %v1127 = vpop.f32.mrb[0].mxu0
      %1128 = vdwg.mxu0
      %v1129 = vsel %vm902, %v1116, -inf
      %1130 = vmax.xlane.f32.xlu0 %v1129
      %v1131 = vpop.xlane.xlu0 %1130
      %v1132 = vsel %vm902, %v1121, -inf
      %1133 = vmax.xlane.f32.xlu0 %v1132
      %v1134 = vpop.xlane.xlu0 %1133
      %v1135 = vsel %vm902, %v1126, -inf
      %1136 = vmax.xlane.f32.xlu0 %v1135
      %v1137 = vpop.xlane.xlu0 %1136
      %v1138 = vsub.f32 %v1116, %v1131
      %v1139 = vsub.f32 %v1121, %v1134
      %v1140 = vsub.f32 %v1126, %v1137
      %v1141 = vmul.f32 %v1138, 1.442695
      %v1142 = vpow.pop %v1141
      %v1143 = vmul.f32 %v1139, 1.442695
      %v1144 = vpow.pop %v1143
      %v1145 = vmul.f32 %v1140, 1.442695
      %v1146 = vpow.pop %v1145
      %v1147 = vsel %vm902, %v1142, 0.0
      %1148 = vadd.xlane.f32.xlu0 %v1147
      %v1149 = vpop.xlane.xlu0 %1148
      %v1150 = vsel %vm902, %v1144, 0.0
      %1151 = vadd.xlane.f32.xlu0 %v1150
      %v1152 = vpop.xlane.xlu0 %1151
      %v1153 = vsel %vm902, %v1146, 0.0
      %1154 = vadd.xlane.f32.xlu0 %v1153
      %v1155 = vpop.xlane.xlu0 %1154
      %v1156 = vrcp.pop %v1149
      %v1157 = vrcp.pop %v1152
      %v1158 = vrcp.pop %v1155
      %v1159 = vmul.f32 %v1142, %v1156
      %v1160 = vmul.f32 %v1144, %v1157
      %v1161 = vmul.f32 %v1146, %v1158
      %1165 = vrot.lane.b32.xlu0 %v767, 96
      %v1166 = vpop.permute.xlu0 %1165
      %1167 = vrot.lane.b32.xlu0 %v772, 96
      %v1168 = vpop.permute.xlu0 %1167
      %1169 = vrot.lane.b32.xlu0 %v777, 96
      %v1170 = vpop.permute.xlu0 %1169
      %v1175 = vsel %vm902, %v1159, 0
      %v1178 = vsel %vm902, %v1160, 0
      %v1181 = vsel %vm902, %v1161, 0
      %1183 = vmatprep.subr.mxu0 0.0
      %1184 = vmatpush1.msra.mxu0 %v1166
      %1185 = vmatprep.subr.mxu0 0.0
      %1186 = vmatpush1.msra.mxu0 %v1168
      %1187 = vmatprep.subr.mxu0 0.0
      %1188 = vmatpush1.msra.mxu0 %v1170
      %1189 = vmatprep.subr.mxu0 0.0
      %1190 = vmatpush1.msra.mxu0 0.0
      %1191 = vmatprep.subr.mxu0 0.0
      %1192 = vmatpush1.msra.mxu0 0.0
      %1193 = vmatprep.subr.mxu0 0.0
      %1194 = vmatpush1.msra.mxu0 0.0
      %1195 = vmatprep.subr.mxu0 0.0
      %1196 = vmatpush1.msra.mxu0 0.0
      %1197 = vmatprep.subr.mxu0 0.0
      %1198 = vmatpush1.msra.mxu0 0.0
      %1199 = vmatprep.subr.mxu0 0.0
      %1200 = vmatpush1.msra.mxu0 0.0
      %1201 = vmatprep.subr.mxu0 0.0
      %1202 = vmatpush1.msra.mxu0 0.0
      %1203 = vmatprep.subr.mxu0 0.0
      %1204 = vmatpush1.msra.mxu0 0.0
      %1205 = vmatprep.subr.mxu0 0.0
      %1206 = vmatpush1.msra.mxu0 0.0
      %1207 = vmatprep.subr.mxu0 0.0
      %1208 = vmatpush1.msra.mxu0 0.0
      %1209 = vmatprep.subr.mxu0 0.0
      %1210 = vmatpush1.msra.mxu0 0.0
      %1211 = vmatprep.subr.mxu0 0.0
      %1212 = vmatpush1.msra.mxu0 0.0
      %1213 = vmatprep.subr.mxu0 0.0
      %1214 = vmatpush1.msra.mxu0 0.0
      %1215 = vmatprep.subr.mxu0 0.0
      %1216 = vmatpush1.msra.mxu0 0.0
      %1217 = vmatprep.subr.mxu0 0.0
      %1218 = vmatpush1.msra.mxu0 0.0
      %1219 = vmatprep.subr.mxu0 0.0
      %1220 = vmatpush1.msra.mxu0 0.0
      %1221 = vmatprep.subr.mxu0 0.0
      %1222 = vmatpush1.msra.mxu0 0.0
      %1223 = vmatprep.subr.mxu0 0.0
      %1224 = vmatpush1.msra.mxu0 0.0
      %1225 = vmatprep.subr.mxu0 0.0
      %1226 = vmatpush1.msra.mxu0 0.0
      %1227 = vmatprep.subr.mxu0 0.0
      %1228 = vmatpush1.msra.mxu0 0.0
      %1229 = vmatprep.subr.mxu0 0.0
      %1230 = vmatpush1.msra.mxu0 0.0
      %1231 = vmatprep.subr.mxu0 0.0
      %1232 = vmatpush1.msra.mxu0 0.0
      %1233 = vmatprep.subr.mxu0 0.0
      %1234 = vmatpush1.msra.mxu0 0.0
      %1235 = vmatprep.subr.mxu0 0.0
      %1236 = vmatpush1.msra.mxu0 0.0
      %1237 = vmatprep.subr.mxu0 0.0
      %1238 = vmatpush1.msra.mxu0 0.0
      %1239 = vmatprep.subr.mxu0 0.0
      %1240 = vmatpush1.msra.mxu0 0.0
      %1241 = vmatprep.subr.mxu0 0.0
      %1242 = vmatpush1.msra.mxu0 0.0
      %1243 = vmatprep.subr.mxu0 0.0
      %1244 = vmatpush1.msra.mxu0 0.0
      %1245 = vmatprep.subr.mxu0 0.0
      %1246 = vmatpush1.msra.mxu0 0.0
      %1247 = vmatprep.mubr.f32.mxu0 0.0
      %1248 = vmatmul.mubr.f32.gmra.mrb[0].mxu0 %v1175
      %v1249 = vpop.f32.mrb[0].mxu0
      %v1250 = vadd.f32 0.0, %v1249
      %v1251 = vpop.f32.mrb[0].mxu0
      %1252 = vmatprep.mubr.f32.mxu0 0.0
      %1253 = vmatmul.mubr.f32.gmra.mrb[0].mxu0 %v1178
      %v1254 = vpop.f32.mrb[0].mxu0
      %v1255 = vadd.f32 0.0, %v1254
      %v1256 = vpop.f32.mrb[0].mxu0
      %1257 = vmatprep.mubr.f32.mxu0 0.0
      %1258 = vmatmul.mubr.f32.gmra.mrb[0].mxu0 %v1181
      %v1259 = vpop.f32.mrb[0].mxu0
      %v1260 = vadd.f32 0.0, %v1259
      %v1261 = vpop.f32.mrb[0].mxu0
      %1262 = vdwg.mxu0
      %v1264 = vsel %vm803, %v1250, 0
      %v1267 = vsel %vm803, %v1255, 0
      %v1270 = vsel %vm803, %v1260, 0
      %1272 = vmatprep.subr.mxu0 0.0
      %1273 = vmatpush1.msra.mxu0 %v784
      %1274 = vmatprep.subr.mxu0 0.0
      %1275 = vmatpush1.msra.mxu0 %v785
      %1276 = vmatprep.subr.mxu0 0.0
      %1277 = vmatpush1.msra.mxu0 %v786
      %1278 = vmatprep.subr.mxu0 0.0
      %1279 = vmatpush1.msra.mxu0 %v787
      %1280 = vmatprep.subr.mxu0 0.0
      %1281 = vmatpush1.msra.mxu0 0.0
      %1282 = vmatprep.subr.mxu0 0.0
      %1283 = vmatpush1.msra.mxu0 0.0
      %1284 = vmatprep.subr.mxu0 0.0
      %1285 = vmatpush1.msra.mxu0 0.0
      %1286 = vmatprep.subr.mxu0 0.0
      %1287 = vmatpush1.msra.mxu0 0.0
      %1288 = vmatprep.subr.mxu0 0.0
      %1289 = vmatpush1.msra.mxu0 0.0
      %1290 = vmatprep.subr.mxu0 0.0
      %1291 = vmatpush1.msra.mxu0 0.0
      %1292 = vmatprep.subr.mxu0 0.0
      %1293 = vmatpush1.msra.mxu0 0.0
      %1294 = vmatprep.subr.mxu0 0.0
      %1295 = vmatpush1.msra.mxu0 0.0
      %1296 = vmatprep.subr.mxu0 0.0
      %1297 = vmatpush1.msra.mxu0 0.0
      %1298 = vmatprep.subr.mxu0 0.0
      %1299 = vmatpush1.msra.mxu0 0.0
      %1300 = vmatprep.subr.mxu0 0.0
      %1301 = vmatpush1.msra.mxu0 0.0
      %1302 = vmatprep.subr.mxu0 0.0
      %1303 = vmatpush1.msra.mxu0 0.0
      %1304 = vmatprep.subr.mxu0 0.0
      %1305 = vmatpush1.msra.mxu0 0.0
      %1306 = vmatprep.subr.mxu0 0.0
      %1307 = vmatpush1.msra.mxu0 0.0
      %1308 = vmatprep.subr.mxu0 0.0
      %1309 = vmatpush1.msra.mxu0 0.0
      %1310 = vmatprep.subr.mxu0 0.0
      %1311 = vmatpush1.msra.mxu0 0.0
      %1312 = vmatprep.subr.mxu0 0.0
      %1313 = vmatpush1.msra.mxu0 0.0
      %1314 = vmatprep.subr.mxu0 0.0
      %1315 = vmatpush1.msra.mxu0 0.0
      %1316 = vmatprep.subr.mxu0 0.0
      %1317 = vmatpush1.msra.mxu0 0.0
      %1318 = vmatprep.subr.mxu0 0.0
      %1319 = vmatpush1.msra.mxu0 0.0
      %1320 = vmatprep.subr.mxu0 0.0
      %1321 = vmatpush1.msra.mxu0 0.0
      %1322 = vmatprep.subr.mxu0 0.0
      %1323 = vmatpush1.msra.mxu0 0.0
      %1324 = vmatprep.subr.mxu0 0.0
      %1325 = vmatpush1.msra.mxu0 0.0
      %1326 = vmatprep.subr.mxu0 0.0
      %1327 = vmatpush1.msra.mxu0 0.0
      %1328 = vmatprep.subr.mxu0 0.0
      %1329 = vmatpush1.msra.mxu0 0.0
      %1330 = vmatprep.subr.mxu0 0.0
      %1331 = vmatpush1.msra.mxu0 0.0
      %1332 = vmatprep.subr.mxu0 0.0
      %1333 = vmatpush1.msra.mxu0 0.0
      %1334 = vmatprep.subr.mxu0 0.0
      %1335 = vmatpush1.msra.mxu0 0.0
      %1336 = vmatprep.mubr.f32.mxu0 0.0
      %1337 = vmatmul.mubr.f32.gmra.mrb[0].mxu0 %v1264
      %v1338 = vpop.f32.mrb[0].mxu0
      %v1339 = vadd.f32 0.0, %v1338
      %v1340 = vpop.f32.mrb[0].mxu0
      %1341 = vmatprep.mubr.f32.mxu0 0.0
      %1342 = vmatmul.mubr.f32.gmra.mrb[0].mxu0 %v1267
      %v1343 = vpop.f32.mrb[0].mxu0
      %v1344 = vadd.f32 0.0, %v1343
      %v1345 = vpop.f32.mrb[0].mxu0
      %1346 = vmatprep.mubr.f32.mxu0 0.0
      %1347 = vmatmul.mubr.f32.gmra.mrb[0].mxu0 %v1270
      %v1348 = vpop.f32.mrb[0].mxu0
      %v1349 = vadd.f32 0.0, %v1348
      %v1350 = vpop.f32.mrb[0].mxu0
      %1351 = vdwg.mxu0
      %v1353 = vsel %vm803, %v1012, 0
      %v1356 = vsel %vm803, %v1017, 0
      %v1359 = vsel %vm803, %v1022, 0
      %1361 = vmatprep.subr.mxu0 0.0
      %1362 = vmatpush1.msra.mxu0 %v780
      %1363 = vmatprep.subr.mxu0 0.0
      %1364 = vmatpush1.msra.mxu0 %v781
      %1365 = vmatprep.subr.mxu0 0.0
      %1366 = vmatpush1.msra.mxu0 %v782
      %1367 = vmatprep.subr.mxu0 0.0
      %1368 = vmatpush1.msra.mxu0 %v783
      %1369 = vmatprep.subr.mxu0 0.0
      %1370 = vmatpush1.msra.mxu0 0.0
      %1371 = vmatprep.subr.mxu0 0.0
      %1372 = vmatpush1.msra.mxu0 0.0
      %1373 = vmatprep.subr.mxu0 0.0
      %1374 = vmatpush1.msra.mxu0 0.0
      %1375 = vmatprep.subr.mxu0 0.0
      %1376 = vmatpush1.msra.mxu0 0.0
      %1377 = vmatprep.subr.mxu0 0.0
      %1378 = vmatpush1.msra.mxu0 0.0
      %1379 = vmatprep.subr.mxu0 0.0
      %1380 = vmatpush1.msra.mxu0 0.0
      %1381 = vmatprep.subr.mxu0 0.0
      %1382 = vmatpush1.msra.mxu0 0.0
      %1383 = vmatprep.subr.mxu0 0.0
      %1384 = vmatpush1.msra.mxu0 0.0
      %1385 = vmatprep.subr.mxu0 0.0
      %1386 = vmatpush1.msra.mxu0 0.0
      %1387 = vmatprep.subr.mxu0 0.0
      %1388 = vmatpush1.msra.mxu0 0.0
      %1389 = vmatprep.subr.mxu0 0.0
      %1390 = vmatpush1.msra.mxu0 0.0
      %1391 = vmatprep.subr.mxu0 0.0
      %1392 = vmatpush1.msra.mxu0 0.0
      %1393 = vmatprep.subr.mxu0 0.0
      %1394 = vmatpush1.msra.mxu0 0.0
      %1395 = vmatprep.subr.mxu0 0.0
      %1396 = vmatpush1.msra.mxu0 0.0
      %1397 = vmatprep.subr.mxu0 0.0
      %1398 = vmatpush1.msra.mxu0 0.0
      %1399 = vmatprep.subr.mxu0 0.0
      %1400 = vmatpush1.msra.mxu0 0.0
      %1401 = vmatprep.subr.mxu0 0.0
      %1402 = vmatpush1.msra.mxu0 0.0
      %1403 = vmatprep.subr.mxu0 0.0
      %1404 = vmatpush1.msra.mxu0 0.0
      %1405 = vmatprep.subr.mxu0 0.0
      %1406 = vmatpush1.msra.mxu0 0.0
      %1407 = vmatprep.subr.mxu0 0.0
      %1408 = vmatpush1.msra.mxu0 0.0
      %1409 = vmatprep.subr.mxu0 0.0
      %1410 = vmatpush1.msra.mxu0 0.0
      %1411 = vmatprep.subr.mxu0 0.0
      %1412 = vmatpush1.msra.mxu0 0.0
      %1413 = vmatprep.subr.mxu0 0.0
      %1414 = vmatpush1.msra.mxu0 0.0
      %1415 = vmatprep.subr.mxu0 0.0
      %1416 = vmatpush1.msra.mxu0 0.0
      %1417 = vmatprep.subr.mxu0 0.0
      %1418 = vmatpush1.msra.mxu0 0.0
      %1419 = vmatprep.subr.mxu0 0.0
      %1420 = vmatpush1.msra.mxu0 0.0
      %1421 = vmatprep.subr.mxu0 0.0
      %1422 = vmatpush1.msra.mxu0 0.0
      %1423 = vmatprep.subr.mxu0 0.0
      %1424 = vmatpush1.msra.mxu0 0.0
      %1425 = vmatprep.mubr.f32.mxu0 0.0
      %1426 = vmatmul.mubr.f32.gmra.mrb[0].mxu0 %v1353
      %v1427 = vpop.f32.mrb[0].mxu0
      %v1428 = vadd.f32 %v1339, %v1427
      %v1429 = vpop.f32.mrb[0].mxu0
      %1430 = vmatprep.mubr.f32.mxu0 0.0
      %1431 = vmatmul.mubr.f32.gmra.mrb[0].mxu0 %v1356
      %v1432 = vpop.f32.mrb[0].mxu0
      %v1433 = vadd.f32 %v1344, %v1432
      %v1434 = vpop.f32.mrb[0].mxu0
      %1435 = vmatprep.mubr.f32.mxu0 0.0
      %1436 = vmatmul.mubr.f32.gmra.mrb[0].mxu0 %v1359
      %v1437 = vpop.f32.mrb[0].mxu0
      %v1438 = vadd.f32 %v1349, %v1437
      %v1439 = vpop.f32.mrb[0].mxu0
      %1440 = vdwg.mxu0
      %1441 = vrot.lane.b32.xlu0 %v800, 64
      %v1442 = vpop.permute.xlu0 %1441
      %1443 = vrot.lane.b32.xlu0 %v801, 64
      %v1444 = vpop.permute.xlu0 %1443
      %1445 = vrot.lane.b32.xlu0 %v802, 64
      %v1446 = vpop.permute.xlu0 %1445
      %1447 = vrot.lane.b32.xlu0 %v686, 64
      %v1448 = vpop.permute.xlu0 %1447
      %1449 = vrot.lane.b32.xlu0 %v692, 64
      %v1450 = vpop.permute.xlu0 %1449
      %1451 = vrot.lane.b32.xlu0 %v698, 64
      %v1452 = vpop.permute.xlu0 %1451
      %v1453 = vsel %vm803, %v1442, 0
      %v1455 = vsel %vm803, %v1444, 0
      %v1457 = vsel %vm803, %v1446, 0
      %v1459 = vsel %vm803, %v1448, 0
      %v1461 = vsel %vm803, %v1450, 0
      %v1463 = vsel %vm803, %v1452, 0
      %1465 = vmatprep.subr.mxu0 0.0
      %1466 = vmatpush1.xpose.msra.mxu0 %v1459
      %1467 = vmatprep.subr.mxu0 0.0
      %1468 = vmatpush1.xpose.msra.mxu0 %v1461
      %1469 = vmatprep.subr.mxu0 0.0
      %1470 = vmatpush1.xpose.msra.mxu0 %v1463
      %1471 = vmatprep.subr.mxu0 0.0
      %1472 = vmatpush1.xpose.msra.mxu0 0.0
      %1473 = vmatprep.subr.mxu0 0.0
      %1474 = vmatpush1.xpose.msra.mxu0 0.0
      %1475 = vmatprep.subr.mxu0 0.0
      %1476 = vmatpush1.xpose.msra.mxu0 0.0
      %1477 = vmatprep.subr.mxu0 0.0
      %1478 = vmatpush1.xpose.msra.mxu0 0.0
      %1479 = vmatprep.subr.mxu0 0.0
      %1480 = vmatpush1.xpose.msra.mxu0 0.0
      %1481 = vmatprep.subr.mxu0 0.0
      %1482 = vmatpush1.xpose.msra.mxu0 0.0
      %1483 = vmatprep.subr.mxu0 0.0
      %1484 = vmatpush1.xpose.msra.mxu0 0.0
      %1485 = vmatprep.subr.mxu0 0.0
      %1486 = vmatpush1.xpose.msra.mxu0 0.0
      %1487 = vmatprep.subr.mxu0 0.0
      %1488 = vmatpush1.xpose.msra.mxu0 0.0
      %1489 = vmatprep.subr.mxu0 0.0
      %1490 = vmatpush1.xpose.msra.mxu0 0.0
      %1491 = vmatprep.subr.mxu0 0.0
      %1492 = vmatpush1.xpose.msra.mxu0 0.0
      %1493 = vmatprep.subr.mxu0 0.0
      %1494 = vmatpush1.xpose.msra.mxu0 0.0
      %1495 = vmatprep.subr.mxu0 0.0
      %1496 = vmatpush1.xpose.msra.mxu0 0.0
      %1497 = vmatprep.subr.mxu0 0.0
      %1498 = vmatpush1.xpose.msra.mxu0 0.0
      %1499 = vmatprep.subr.mxu0 0.0
      %1500 = vmatpush1.xpose.msra.mxu0 0.0
      %1501 = vmatprep.subr.mxu0 0.0
      %1502 = vmatpush1.xpose.msra.mxu0 0.0
      %1503 = vmatprep.subr.mxu0 0.0
      %1504 = vmatpush1.xpose.msra.mxu0 0.0
      %1505 = vmatprep.subr.mxu0 0.0
      %1506 = vmatpush1.xpose.msra.mxu0 0.0
      %1507 = vmatprep.subr.mxu0 0.0
      %1508 = vmatpush1.xpose.msra.mxu0 0.0
      %1509 = vmatprep.subr.mxu0 0.0
      %1510 = vmatpush1.xpose.msra.mxu0 0.0
      %1511 = vmatprep.subr.mxu0 0.0
      %1512 = vmatpush1.xpose.msra.mxu0 0.0
      %1513 = vmatprep.subr.mxu0 0.0
      %1514 = vmatpush1.xpose.msra.mxu0 0.0
      %1515 = vmatprep.subr.mxu0 0.0
      %1516 = vmatpush1.xpose.msra.mxu0 0.0
      %1517 = vmatprep.subr.mxu0 0.0
      %1518 = vmatpush1.xpose.msra.mxu0 0.0
      %1519 = vmatprep.subr.mxu0 0.0
      %1520 = vmatpush1.xpose.msra.mxu0 0.0
      %1521 = vmatprep.subr.mxu0 0.0
      %1522 = vmatpush1.xpose.msra.mxu0 0.0
      %1523 = vmatprep.subr.mxu0 0.0
      %1524 = vmatpush1.xpose.msra.mxu0 0.0
      %1525 = vmatprep.subr.mxu0 0.0
      %1526 = vmatpush1.xpose.msra.mxu0 0.0
      %1527 = vmatprep.subr.mxu0 0.0
      %1528 = vmatpush1.xpose.msra.mxu0 0.0
      %1529 = vmatprep.mubr.f32.mxu0 0.0
      %1530 = vmatmul.mubr.f32.gmra.mrb[0].mxu0 %v1453
      %v1531 = vpop.f32.mrb[0].mxu0
      %v1532 = vadd.f32 %v799, %v1531
      %v1533 = vpop.f32.mrb[0].mxu0
      %1534 = vmatprep.mubr.f32.mxu0 0.0
      %1535 = vmatmul.mubr.f32.gmra.mrb[0].mxu0 %v1455
      %v1536 = vpop.f32.mrb[0].mxu0
      %v1537 = vadd.f32 %v799, %v1536
      %v1538 = vpop.f32.mrb[0].mxu0
      %1539 = vmatprep.mubr.f32.mxu0 0.0
      %1540 = vmatmul.mubr.f32.gmra.mrb[0].mxu0 %v1457
      %v1541 = vpop.f32.mrb[0].mxu0
      %v1542 = vadd.f32 %v799, %v1541
      %v1543 = vpop.f32.mrb[0].mxu0
      %1544 = vdwg.mxu0
      %v1545 = vsel %vm902, %v1532, -inf
      %1546 = vmax.xlane.f32.xlu0 %v1545
      %v1547 = vpop.xlane.xlu0 %1546
      %v1548 = vsel %vm902, %v1537, -inf
      %1549 = vmax.xlane.f32.xlu0 %v1548
      %v1550 = vpop.xlane.xlu0 %1549
      %v1551 = vsel %vm902, %v1542, -inf
      %1552 = vmax.xlane.f32.xlu0 %v1551
      %v1553 = vpop.xlane.xlu0 %1552
      %v1554 = vsub.f32 %v1532, %v1547
      %v1555 = vsub.f32 %v1537, %v1550
      %v1556 = vsub.f32 %v1542, %v1553
      %v1557 = vmul.f32 %v1554, 1.442695
      %v1558 = vpow.pop %v1557
      %v1559 = vmul.f32 %v1555, 1.442695
      %v1560 = vpow.pop %v1559
      %v1561 = vmul.f32 %v1556, 1.442695
      %v1562 = vpow.pop %v1561
      %v1563 = vsel %vm902, %v1558, 0.0
      %1564 = vadd.xlane.f32.xlu0 %v1563
      %v1565 = vpop.xlane.xlu0 %1564
      %v1566 = vsel %vm902, %v1560, 0.0
      %1567 = vadd.xlane.f32.xlu0 %v1566
      %v1568 = vpop.xlane.xlu0 %1567
      %v1569 = vsel %vm902, %v1562, 0.0
      %1570 = vadd.xlane.f32.xlu0 %v1569
      %v1571 = vpop.xlane.xlu0 %1570
      %v1572 = vrcp.pop %v1565
      %v1573 = vrcp.pop %v1568
      %v1574 = vrcp.pop %v1571
      %v1575 = vmul.f32 %v1558, %v1572
      %v1576 = vmul.f32 %v1560, %v1573
      %v1577 = vmul.f32 %v1562, %v1574
      %1578 = vrot.lane.b32.xlu0 %v767, 64
      %v1579 = vpop.permute.xlu0 %1578
      %1580 = vrot.lane.b32.xlu0 %v772, 64
      %v1581 = vpop.permute.xlu0 %1580
      %1582 = vrot.lane.b32.xlu0 %v777, 64
      %v1583 = vpop.permute.xlu0 %1582
      %v1588 = vsel %vm902, %v1575, 0
      %v1591 = vsel %vm902, %v1576, 0
      %v1594 = vsel %vm902, %v1577, 0
      %1596 = vmatprep.subr.mxu0 0.0
      %1597 = vmatpush1.msra.mxu0 %v1579
      %1598 = vmatprep.subr.mxu0 0.0
      %1599 = vmatpush1.msra.mxu0 %v1581
      %1600 = vmatprep.subr.mxu0 0.0
      %1601 = vmatpush1.msra.mxu0 %v1583
      %1602 = vmatprep.subr.mxu0 0.0
      %1603 = vmatpush1.msra.mxu0 0.0
      %1604 = vmatprep.subr.mxu0 0.0
      %1605 = vmatpush1.msra.mxu0 0.0
      %1606 = vmatprep.subr.mxu0 0.0
      %1607 = vmatpush1.msra.mxu0 0.0
      %1608 = vmatprep.subr.mxu0 0.0
      %1609 = vmatpush1.msra.mxu0 0.0
      %1610 = vmatprep.subr.mxu0 0.0
      %1611 = vmatpush1.msra.mxu0 0.0
      %1612 = vmatprep.subr.mxu0 0.0
      %1613 = vmatpush1.msra.mxu0 0.0
      %1614 = vmatprep.subr.mxu0 0.0
      %1615 = vmatpush1.msra.mxu0 0.0
      %1616 = vmatprep.subr.mxu0 0.0
      %1617 = vmatpush1.msra.mxu0 0.0
      %1618 = vmatprep.subr.mxu0 0.0
      %1619 = vmatpush1.msra.mxu0 0.0
      %1620 = vmatprep.subr.mxu0 0.0
      %1621 = vmatpush1.msra.mxu0 0.0
      %1622 = vmatprep.subr.mxu0 0.0
      %1623 = vmatpush1.msra.mxu0 0.0
      %1624 = vmatprep.subr.mxu0 0.0
      %1625 = vmatpush1.msra.mxu0 0.0
      %1626 = vmatprep.subr.mxu0 0.0
      %1627 = vmatpush1.msra.mxu0 0.0
      %1628 = vmatprep.subr.mxu0 0.0
      %1629 = vmatpush1.msra.mxu0 0.0
      %1630 = vmatprep.subr.mxu0 0.0
      %1631 = vmatpush1.msra.mxu0 0.0
      %1632 = vmatprep.subr.mxu0 0.0
      %1633 = vmatpush1.msra.mxu0 0.0
      %1634 = vmatprep.subr.mxu0 0.0
      %1635 = vmatpush1.msra.mxu0 0.0
      %1636 = vmatprep.subr.mxu0 0.0
      %1637 = vmatpush1.msra.mxu0 0.0
      %1638 = vmatprep.subr.mxu0 0.0
      %1639 = vmatpush1.msra.mxu0 0.0
      %1640 = vmatprep.subr.mxu0 0.0
      %1641 = vmatpush1.msra.mxu0 0.0
      %1642 = vmatprep.subr.mxu0 0.0
      %1643 = vmatpush1.msra.mxu0 0.0
      %1644 = vmatprep.subr.mxu0 0.0
      %1645 = vmatpush1.msra.mxu0 0.0
      %1646 = vmatprep.subr.mxu0 0.0
      %1647 = vmatpush1.msra.mxu0 0.0
      %1648 = vmatprep.subr.mxu0 0.0
      %1649 = vmatpush1.msra.mxu0 0.0
      %1650 = vmatprep.subr.mxu0 0.0
      %1651 = vmatpush1.msra.mxu0 0.0
      %1652 = vmatprep.subr.mxu0 0.0
      %1653 = vmatpush1.msra.mxu0 0.0
      %1654 = vmatprep.subr.mxu0 0.0
      %1655 = vmatpush1.msra.mxu0 0.0
      %1656 = vmatprep.subr.mxu0 0.0
      %1657 = vmatpush1.msra.mxu0 0.0
      %1658 = vmatprep.subr.mxu0 0.0
      %1659 = vmatpush1.msra.mxu0 0.0
      %1660 = vmatprep.mubr.f32.mxu0 0.0
      %1661 = vmatmul.mubr.f32.gmra.mrb[0].mxu0 %v1588
      %v1662 = vpop.f32.mrb[0].mxu0
      %v1663 = vadd.f32 0.0, %v1662
      %v1664 = vpop.f32.mrb[0].mxu0
      %1665 = vmatprep.mubr.f32.mxu0 0.0
      %1666 = vmatmul.mubr.f32.gmra.mrb[0].mxu0 %v1591
      %v1667 = vpop.f32.mrb[0].mxu0
      %v1668 = vadd.f32 0.0, %v1667
      %v1669 = vpop.f32.mrb[0].mxu0
      %1670 = vmatprep.mubr.f32.mxu0 0.0
      %1671 = vmatmul.mubr.f32.gmra.mrb[0].mxu0 %v1594
      %v1672 = vpop.f32.mrb[0].mxu0
      %v1673 = vadd.f32 0.0, %v1672
      %v1674 = vpop.f32.mrb[0].mxu0
      %1675 = vdwg.mxu0
      %v1677 = vsel %vm803, %v1663, 0
      %v1680 = vsel %vm803, %v1668, 0
      %v1683 = vsel %vm803, %v1673, 0
      %1685 = vmatprep.subr.mxu0 0.0
      %1686 = vmatpush1.msra.mxu0 %v788
      %1687 = vmatprep.subr.mxu0 0.0
      %1688 = vmatpush1.msra.mxu0 %v789
      %1689 = vmatprep.subr.mxu0 0.0
      %1690 = vmatpush1.msra.mxu0 %v790
      %1691 = vmatprep.subr.mxu0 0.0
      %1692 = vmatpush1.msra.mxu0 %v791
      %1693 = vmatprep.subr.mxu0 0.0
      %1694 = vmatpush1.msra.mxu0 0.0
      %1695 = vmatprep.subr.mxu0 0.0
      %1696 = vmatpush1.msra.mxu0 0.0
      %1697 = vmatprep.subr.mxu0 0.0
      %1698 = vmatpush1.msra.mxu0 0.0
      %1699 = vmatprep.subr.mxu0 0.0
      %1700 = vmatpush1.msra.mxu0 0.0
      %1701 = vmatprep.subr.mxu0 0.0
      %1702 = vmatpush1.msra.mxu0 0.0
      %1703 = vmatprep.subr.mxu0 0.0
      %1704 = vmatpush1.msra.mxu0 0.0
      %1705 = vmatprep.subr.mxu0 0.0
      %1706 = vmatpush1.msra.mxu0 0.0
      %1707 = vmatprep.subr.mxu0 0.0
      %1708 = vmatpush1.msra.mxu0 0.0
      %1709 = vmatprep.subr.mxu0 0.0
      %1710 = vmatpush1.msra.mxu0 0.0
      %1711 = vmatprep.subr.mxu0 0.0
      %1712 = vmatpush1.msra.mxu0 0.0
      %1713 = vmatprep.subr.mxu0 0.0
      %1714 = vmatpush1.msra.mxu0 0.0
      %1715 = vmatprep.subr.mxu0 0.0
      %1716 = vmatpush1.msra.mxu0 0.0
      %1717 = vmatprep.subr.mxu0 0.0
      %1718 = vmatpush1.msra.mxu0 0.0
      %1719 = vmatprep.subr.mxu0 0.0
      %1720 = vmatpush1.msra.mxu0 0.0
      %1721 = vmatprep.subr.mxu0 0.0
      %1722 = vmatpush1.msra.mxu0 0.0
      %1723 = vmatprep.subr.mxu0 0.0
      %1724 = vmatpush1.msra.mxu0 0.0
      %1725 = vmatprep.subr.mxu0 0.0
      %1726 = vmatpush1.msra.mxu0 0.0
      %1727 = vmatprep.subr.mxu0 0.0
      %1728 = vmatpush1.msra.mxu0 0.0
      %1729 = vmatprep.subr.mxu0 0.0
      %1730 = vmatpush1.msra.mxu0 0.0
      %1731 = vmatprep.subr.mxu0 0.0
      %1732 = vmatpush1.msra.mxu0 0.0
      %1733 = vmatprep.subr.mxu0 0.0
      %1734 = vmatpush1.msra.mxu0 0.0
      %1735 = vmatprep.subr.mxu0 0.0
      %1736 = vmatpush1.msra.mxu0 0.0
      %1737 = vmatprep.subr.mxu0 0.0
      %1738 = vmatpush1.msra.mxu0 0.0
      %1739 = vmatprep.subr.mxu0 0.0
      %1740 = vmatpush1.msra.mxu0 0.0
      %1741 = vmatprep.subr.mxu0 0.0
      %1742 = vmatpush1.msra.mxu0 0.0
      %1743 = vmatprep.subr.mxu0 0.0
      %1744 = vmatpush1.msra.mxu0 0.0
      %1745 = vmatprep.subr.mxu0 0.0
      %1746 = vmatpush1.msra.mxu0 0.0
      %1747 = vmatprep.subr.mxu0 0.0
      %1748 = vmatpush1.msra.mxu0 0.0
      %1749 = vmatprep.mubr.f32.mxu0 0.0
      %1750 = vmatmul.mubr.f32.gmra.mrb[0].mxu0 %v1677
      %v1751 = vpop.f32.mrb[0].mxu0
      %v1752 = vadd.f32 0.0, %v1751
      %v1753 = vpop.f32.mrb[0].mxu0
      %1754 = vmatprep.mubr.f32.mxu0 0.0
      %1755 = vmatmul.mubr.f32.gmra.mrb[0].mxu0 %v1680
      %v1756 = vpop.f32.mrb[0].mxu0
      %v1757 = vadd.f32 0.0, %v1756
      %v1758 = vpop.f32.mrb[0].mxu0
      %1759 = vmatprep.mubr.f32.mxu0 0.0
      %1760 = vmatmul.mubr.f32.gmra.mrb[0].mxu0 %v1683
      %v1761 = vpop.f32.mrb[0].mxu0
      %v1762 = vadd.f32 0.0, %v1761
      %v1763 = vpop.f32.mrb[0].mxu0
      %1764 = vdwg.mxu0
      %v1765 = vadd.f32 %v1428, %v1752
      %v1766 = vadd.f32 %v1433, %v1757
      %v1767 = vadd.f32 %v1438, %v1762
      %1768 = vrot.lane.b32.xlu0 %v800, 32
      %v1769 = vpop.permute.xlu0 %1768
      %1770 = vrot.lane.b32.xlu0 %v801, 32
      %v1771 = vpop.permute.xlu0 %1770
      %1772 = vrot.lane.b32.xlu0 %v802, 32
      %v1773 = vpop.permute.xlu0 %1772
      %1774 = vrot.lane.b32.xlu0 %v686, 32
      %v1775 = vpop.permute.xlu0 %1774
      %1776 = vrot.lane.b32.xlu0 %v692, 32
      %v1777 = vpop.permute.xlu0 %1776
      %1778 = vrot.lane.b32.xlu0 %v698, 32
      %v1779 = vpop.permute.xlu0 %1778
      %v1780 = vsel %vm803, %v1769, 0
      %v1782 = vsel %vm803, %v1771, 0
      %v1784 = vsel %vm803, %v1773, 0
      %v1786 = vsel %vm803, %v1775, 0
      %v1788 = vsel %vm803, %v1777, 0
      %v1790 = vsel %vm803, %v1779, 0
      %1792 = vmatprep.subr.mxu0 0.0
      %1793 = vmatpush1.xpose.msra.mxu0 %v1786
      %1794 = vmatprep.subr.mxu0 0.0
      %1795 = vmatpush1.xpose.msra.mxu0 %v1788
      %1796 = vmatprep.subr.mxu0 0.0
      %1797 = vmatpush1.xpose.msra.mxu0 %v1790
      %1798 = vmatprep.subr.mxu0 0.0
      %1799 = vmatpush1.xpose.msra.mxu0 0.0
      %1800 = vmatprep.subr.mxu0 0.0
      %1801 = vmatpush1.xpose.msra.mxu0 0.0
      %1802 = vmatprep.subr.mxu0 0.0
      %1803 = vmatpush1.xpose.msra.mxu0 0.0
      %1804 = vmatprep.subr.mxu0 0.0
      %1805 = vmatpush1.xpose.msra.mxu0 0.0
      %1806 = vmatprep.subr.mxu0 0.0
      %1807 = vmatpush1.xpose.msra.mxu0 0.0
      %1808 = vmatprep.subr.mxu0 0.0
      %1809 = vmatpush1.xpose.msra.mxu0 0.0
      %1810 = vmatprep.subr.mxu0 0.0
      %1811 = vmatpush1.xpose.msra.mxu0 0.0
      %1812 = vmatprep.subr.mxu0 0.0
      %1813 = vmatpush1.xpose.msra.mxu0 0.0
      %1814 = vmatprep.subr.mxu0 0.0
      %1815 = vmatpush1.xpose.msra.mxu0 0.0
      %1816 = vmatprep.subr.mxu0 0.0
      %1817 = vmatpush1.xpose.msra.mxu0 0.0
      %1818 = vmatprep.subr.mxu0 0.0
      %1819 = vmatpush1.xpose.msra.mxu0 0.0
      %1820 = vmatprep.subr.mxu0 0.0
      %1821 = vmatpush1.xpose.msra.mxu0 0.0
      %1822 = vmatprep.subr.mxu0 0.0
      %1823 = vmatpush1.xpose.msra.mxu0 0.0
      %1824 = vmatprep.subr.mxu0 0.0
      %1825 = vmatpush1.xpose.msra.mxu0 0.0
      %1826 = vmatprep.subr.mxu0 0.0
      %1827 = vmatpush1.xpose.msra.mxu0 0.0
      %1828 = vmatprep.subr.mxu0 0.0
      %1829 = vmatpush1.xpose.msra.mxu0 0.0
      %1830 = vmatprep.subr.mxu0 0.0
      %1831 = vmatpush1.xpose.msra.mxu0 0.0
      %1832 = vmatprep.subr.mxu0 0.0
      %1833 = vmatpush1.xpose.msra.mxu0 0.0
      %1834 = vmatprep.subr.mxu0 0.0
      %1835 = vmatpush1.xpose.msra.mxu0 0.0
      %1836 = vmatprep.subr.mxu0 0.0
      %1837 = vmatpush1.xpose.msra.mxu0 0.0
      %1838 = vmatprep.subr.mxu0 0.0
      %1839 = vmatpush1.xpose.msra.mxu0 0.0
      %1840 = vmatprep.subr.mxu0 0.0
      %1841 = vmatpush1.xpose.msra.mxu0 0.0
      %1842 = vmatprep.subr.mxu0 0.0
      %1843 = vmatpush1.xpose.msra.mxu0 0.0
      %1844 = vmatprep.subr.mxu0 0.0
      %1845 = vmatpush1.xpose.msra.mxu0 0.0
      %1846 = vmatprep.subr.mxu0 0.0
      %1847 = vmatpush1.xpose.msra.mxu0 0.0
      %1848 = vmatprep.subr.mxu0 0.0
      %1849 = vmatpush1.xpose.msra.mxu0 0.0
      %1850 = vmatprep.subr.mxu0 0.0
      %1851 = vmatpush1.xpose.msra.mxu0 0.0
      %1852 = vmatprep.subr.mxu0 0.0
      %1853 = vmatpush1.xpose.msra.mxu0 0.0
      %1854 = vmatprep.subr.mxu0 0.0
      %1855 = vmatpush1.xpose.msra.mxu0 0.0
      %1856 = vmatprep.mubr.f32.mxu0 0.0
      %1857 = vmatmul.mubr.f32.gmra.mrb[0].mxu0 %v1780
      %v1858 = vpop.f32.mrb[0].mxu0
      %v1859 = vadd.f32 %v799, %v1858
      %v1860 = vpop.f32.mrb[0].mxu0
      %1861 = vmatprep.mubr.f32.mxu0 0.0
      %1862 = vmatmul.mubr.f32.gmra.mrb[0].mxu0 %v1782
      %v1863 = vpop.f32.mrb[0].mxu0
      %v1864 = vadd.f32 %v799, %v1863
      %v1865 = vpop.f32.mrb[0].mxu0
      %1866 = vmatprep.mubr.f32.mxu0 0.0
      %1867 = vmatmul.mubr.f32.gmra.mrb[0].mxu0 %v1784
      %v1868 = vpop.f32.mrb[0].mxu0
      %v1869 = vadd.f32 %v799, %v1868
      %v1870 = vpop.f32.mrb[0].mxu0
      %1871 = vdwg.mxu0
      %v1872 = vsel %vm902, %v1859, -inf
      %1873 = vmax.xlane.f32.xlu0 %v1872
      %v1874 = vpop.xlane.xlu0 %1873
      %v1875 = vsel %vm902, %v1864, -inf
      %1876 = vmax.xlane.f32.xlu0 %v1875
      %v1877 = vpop.xlane.xlu0 %1876
      %v1878 = vsel %vm902, %v1869, -inf
      %1879 = vmax.xlane.f32.xlu0 %v1878
      %v1880 = vpop.xlane.xlu0 %1879
      %v1881 = vsub.f32 %v1859, %v1874
      %v1882 = vsub.f32 %v1864, %v1877
      %v1883 = vsub.f32 %v1869, %v1880
      %v1884 = vmul.f32 %v1881, 1.442695
      %v1885 = vpow.pop %v1884
      %v1886 = vmul.f32 %v1882, 1.442695
      %v1887 = vpow.pop %v1886
      %v1888 = vmul.f32 %v1883, 1.442695
      %v1889 = vpow.pop %v1888
      %v1890 = vsel %vm902, %v1885, 0.0
      %1891 = vadd.xlane.f32.xlu0 %v1890
      %v1892 = vpop.xlane.xlu0 %1891
      %v1893 = vsel %vm902, %v1887, 0.0
      %1894 = vadd.xlane.f32.xlu0 %v1893
      %v1895 = vpop.xlane.xlu0 %1894
      %v1896 = vsel %vm902, %v1889, 0.0
      %1897 = vadd.xlane.f32.xlu0 %v1896
      %v1898 = vpop.xlane.xlu0 %1897
      %v1899 = vrcp.pop %v1892
      %v1900 = vrcp.pop %v1895
      %v1901 = vrcp.pop %v1898
      %v1902 = vmul.f32 %v1885, %v1899
      %v1903 = vmul.f32 %v1887, %v1900
      %v1904 = vmul.f32 %v1889, %v1901
      %1905 = vrot.lane.b32.xlu0 %v767, 32
      %v1906 = vpop.permute.xlu0 %1905
      %1907 = vrot.lane.b32.xlu0 %v772, 32
      %v1908 = vpop.permute.xlu0 %1907
      %1909 = vrot.lane.b32.xlu0 %v777, 32
      %v1910 = vpop.permute.xlu0 %1909
      %v1915 = vsel %vm902, %v1902, 0
      %v1918 = vsel %vm902, %v1903, 0
      %v1921 = vsel %vm902, %v1904, 0
      %1923 = vmatprep.subr.mxu0 0.0
      %1924 = vmatpush1.msra.mxu0 %v1906
      %1925 = vmatprep.subr.mxu0 0.0
      %1926 = vmatpush1.msra.mxu0 %v1908
      %1927 = vmatprep.subr.mxu0 0.0
      %1928 = vmatpush1.msra.mxu0 %v1910
      %1929 = vmatprep.subr.mxu0 0.0
      %1930 = vmatpush1.msra.mxu0 0.0
      %1931 = vmatprep.subr.mxu0 0.0
      %1932 = vmatpush1.msra.mxu0 0.0
      %1933 = vmatprep.subr.mxu0 0.0
      %1934 = vmatpush1.msra.mxu0 0.0
      %1935 = vmatprep.subr.mxu0 0.0
      %1936 = vmatpush1.msra.mxu0 0.0
      %1937 = vmatprep.subr.mxu0 0.0
      %1938 = vmatpush1.msra.mxu0 0.0
      %1939 = vmatprep.subr.mxu0 0.0
      %1940 = vmatpush1.msra.mxu0 0.0
      %1941 = vmatprep.subr.mxu0 0.0
      %1942 = vmatpush1.msra.mxu0 0.0
      %1943 = vmatprep.subr.mxu0 0.0
      %1944 = vmatpush1.msra.mxu0 0.0
      %1945 = vmatprep.subr.mxu0 0.0
      %1946 = vmatpush1.msra.mxu0 0.0
      %1947 = vmatprep.subr.mxu0 0.0
      %1948 = vmatpush1.msra.mxu0 0.0
      %1949 = vmatprep.subr.mxu0 0.0
      %1950 = vmatpush1.msra.mxu0 0.0
      %1951 = vmatprep.subr.mxu0 0.0
      %1952 = vmatpush1.msra.mxu0 0.0
      %1953 = vmatprep.subr.mxu0 0.0
      %1954 = vmatpush1.msra.mxu0 0.0
      %1955 = vmatprep.subr.mxu0 0.0
      %1956 = vmatpush1.msra.mxu0 0.0
      %1957 = vmatprep.subr.mxu0 0.0
      %1958 = vmatpush1.msra.mxu0 0.0
      %1959 = vmatprep.subr.mxu0 0.0
      %1960 = vmatpush1.msra.mxu0 0.0
      %1961 = vmatprep.subr.mxu0 0.0
      %1962 = vmatpush1.msra.mxu0 0.0
      %1963 = vmatprep.subr.mxu0 0.0
      %1964 = vmatpush1.msra.mxu0 0.0
      %1965 = vmatprep.subr.mxu0 0.0
      %1966 = vmatpush1.msra.mxu0 0.0
      %1967 = vmatprep.subr.mxu0 0.0
      %1968 = vmatpush1.msra.mxu0 0.0
      %1969 = vmatprep.subr.mxu0 0.0
      %1970 = vmatpush1.msra.mxu0 0.0
      %1971 = vmatprep.subr.mxu0 0.0
      %1972 = vmatpush1.msra.mxu0 0.0
      %1973 = vmatprep.subr.mxu0 0.0
      %1974 = vmatpush1.msra.mxu0 0.0
      %1975 = vmatprep.subr.mxu0 0.0
      %1976 = vmatpush1.msra.mxu0 0.0
      %1977 = vmatprep.subr.mxu0 0.0
      %1978 = vmatpush1.msra.mxu0 0.0
      %1979 = vmatprep.subr.mxu0 0.0
      %1980 = vmatpush1.msra.mxu0 0.0
      %1981 = vmatprep.subr.mxu0 0.0
      %1982 = vmatpush1.msra.mxu0 0.0
      %1983 = vmatprep.subr.mxu0 0.0
      %1984 = vmatpush1.msra.mxu0 0.0
      %1985 = vmatprep.subr.mxu0 0.0
      %1986 = vmatpush1.msra.mxu0 0.0
      %1987 = vmatprep.mubr.f32.mxu0 0.0
      %1988 = vmatmul.mubr.f32.gmra.mrb[0].mxu0 %v1915
      %v1989 = vpop.f32.mrb[0].mxu0
      %v1990 = vadd.f32 0.0, %v1989
      %v1991 = vpop.f32.mrb[0].mxu0
      %1992 = vmatprep.mubr.f32.mxu0 0.0
      %1993 = vmatmul.mubr.f32.gmra.mrb[0].mxu0 %v1918
      %v1994 = vpop.f32.mrb[0].mxu0
      %v1995 = vadd.f32 0.0, %v1994
      %v1996 = vpop.f32.mrb[0].mxu0
      %1997 = vmatprep.mubr.f32.mxu0 0.0
      %1998 = vmatmul.mubr.f32.gmra.mrb[0].mxu0 %v1921
      %v1999 = vpop.f32.mrb[0].mxu0
      %v2000 = vadd.f32 0.0, %v1999
      %v2001 = vpop.f32.mrb[0].mxu0
      %2002 = vdwg.mxu0
      %v2004 = vsel %vm803, %v1990, 0
      %v2007 = vsel %vm803, %v1995, 0
      %v2010 = vsel %vm803, %v2000, 0
      %2012 = vmatprep.subr.mxu0 0.0
      %2013 = vmatpush1.msra.mxu0 %v792
      %2014 = vmatprep.subr.mxu0 0.0
      %2015 = vmatpush1.msra.mxu0 %v793
      %2016 = vmatprep.subr.mxu0 0.0
      %2017 = vmatpush1.msra.mxu0 %v794
      %2018 = vmatprep.subr.mxu0 0.0
      %2019 = vmatpush1.msra.mxu0 %v795
      %2020 = vmatprep.subr.mxu0 0.0
      %2021 = vmatpush1.msra.mxu0 0.0
      %2022 = vmatprep.subr.mxu0 0.0
      %2023 = vmatpush1.msra.mxu0 0.0
      %2024 = vmatprep.subr.mxu0 0.0
      %2025 = vmatpush1.msra.mxu0 0.0
      %2026 = vmatprep.subr.mxu0 0.0
      %2027 = vmatpush1.msra.mxu0 0.0
      %2028 = vmatprep.subr.mxu0 0.0
      %2029 = vmatpush1.msra.mxu0 0.0
      %2030 = vmatprep.subr.mxu0 0.0
      %2031 = vmatpush1.msra.mxu0 0.0
      %2032 = vmatprep.subr.mxu0 0.0
      %2033 = vmatpush1.msra.mxu0 0.0
      %2034 = vmatprep.subr.mxu0 0.0
      %2035 = vmatpush1.msra.mxu0 0.0
      %2036 = vmatprep.subr.mxu0 0.0
      %2037 = vmatpush1.msra.mxu0 0.0
      %2038 = vmatprep.subr.mxu0 0.0
      %2039 = vmatpush1.msra.mxu0 0.0
      %2040 = vmatprep.subr.mxu0 0.0
      %2041 = vmatpush1.msra.mxu0 0.0
      %2042 = vmatprep.subr.mxu0 0.0
      %2043 = vmatpush1.msra.mxu0 0.0
      %2044 = vmatprep.subr.mxu0 0.0
      %2045 = vmatpush1.msra.mxu0 0.0
      %2046 = vmatprep.subr.mxu0 0.0
      %2047 = vmatpush1.msra.mxu0 0.0
      %2048 = vmatprep.subr.mxu0 0.0
      %2049 = vmatpush1.msra.mxu0 0.0
      %2050 = vmatprep.subr.mxu0 0.0
      %2051 = vmatpush1.msra.mxu0 0.0
      %2052 = vmatprep.subr.mxu0 0.0
      %2053 = vmatpush1.msra.mxu0 0.0
      %2054 = vmatprep.subr.mxu0 0.0
      %2055 = vmatpush1.msra.mxu0 0.0
      %2056 = vmatprep.subr.mxu0 0.0
      %2057 = vmatpush1.msra.mxu0 0.0
      %2058 = vmatprep.subr.mxu0 0.0
      %2059 = vmatpush1.msra.mxu0 0.0
      %2060 = vmatprep.subr.mxu0 0.0
      %2061 = vmatpush1.msra.mxu0 0.0
      %2062 = vmatprep.subr.mxu0 0.0
      %2063 = vmatpush1.msra.mxu0 0.0
      %2064 = vmatprep.subr.mxu0 0.0
      %2065 = vmatpush1.msra.mxu0 0.0
      %2066 = vmatprep.subr.mxu0 0.0
      %2067 = vmatpush1.msra.mxu0 0.0
      %2068 = vmatprep.subr.mxu0 0.0
      %2069 = vmatpush1.msra.mxu0 0.0
      %2070 = vmatprep.subr.mxu0 0.0
      %2071 = vmatpush1.msra.mxu0 0.0
      %2072 = vmatprep.subr.mxu0 0.0
      %2073 = vmatpush1.msra.mxu0 0.0
      %2074 = vmatprep.subr.mxu0 0.0
      %2075 = vmatpush1.msra.mxu0 0.0
      %2076 = vmatprep.mubr.f32.mxu0 0.0
      %2077 = vmatmul.mubr.f32.gmra.mrb[0].mxu0 %v2004
      %v2078 = vpop.f32.mrb[0].mxu0
      %v2079 = vadd.f32 0.0, %v2078
      %v2080 = vpop.f32.mrb[0].mxu0
      %2081 = vmatprep.mubr.f32.mxu0 0.0
      %2082 = vmatmul.mubr.f32.gmra.mrb[0].mxu0 %v2007
      %v2083 = vpop.f32.mrb[0].mxu0
      %v2084 = vadd.f32 0.0, %v2083
      %v2085 = vpop.f32.mrb[0].mxu0
      %2086 = vmatprep.mubr.f32.mxu0 0.0
      %2087 = vmatmul.mubr.f32.gmra.mrb[0].mxu0 %v2010
      %v2088 = vpop.f32.mrb[0].mxu0
      %v2089 = vadd.f32 0.0, %v2088
      %v2090 = vpop.f32.mrb[0].mxu0
      %2091 = vdwg.mxu0
      %v2092 = vadd.f32 %v1765, %v2079
      %v2093 = vadd.f32 %v1766, %v2084
      %v2094 = vadd.f32 %v1767, %v2089
      %v2095 = vld [vmem:[%s6] sm:$0x1]
      %v2097 = vlaneseq
      %v2098 = vshrl.u32 %v2097, 7
      %v2099 = vsub.s32 0, %v2098
      %v2100 = vrot.slane %v2095, %v2099
      %v2102 = vadd.f32 %v2092, %v2100
      %v2103 = vadd.f32 %v2093, %v2100
      %v2104 = vadd.f32 %v2094, %v2100
      %v2105 = vld [vmem:[%s7] sm:$0x1]
      %v2107 = vlaneseq
      %v2108 = vshrl.u32 %v2107, 7
      %v2109 = vsub.s32 0, %v2108
      %v2110 = vrot.slane %v2105, %v2109
      %v2112 = vmul.f32 %v2110, %v2102
      %v2113 = vmul.f32 %v2110, %v2103
      %v2114 = vmul.f32 %v2110, %v2104
      %v2115 = vadd.f32 %v495, %v2112
      %v2116 = vadd.f32 %v496, %v2113
      %v2117 = vadd.f32 %v497, %v2114
      %2118 = vadd.xlane.f32.xlu0 %v2115
      %v2119 = vpop.xlane.xlu0 %2118
      %2120 = vadd.xlane.f32.xlu0 %v2116
      %v2121 = vpop.xlane.xlu0 %2120
      %2122 = vadd.xlane.f32.xlu0 %v2117
      %v2123 = vpop.xlane.xlu0 %2122
      %v2124 = vmul.f32 %v2119, %v504
      %v2125 = vmul.f32 %v2121, %v504
      %v2126 = vmul.f32 %v2123, %v504
      %v2127 = vsub.f32 %v2115, %v2124
      %v2128 = vsub.f32 %v2116, %v2125
      %v2129 = vsub.f32 %v2117, %v2126
      %v2130 = vmul.f32 %v2127, %v2127
      %v2131 = vmul.f32 %v2128, %v2128
      %v2132 = vmul.f32 %v2129, %v2129
      %2133 = vadd.xlane.f32.xlu0 %v2130
      %v2134 = vpop.xlane.xlu0 %2133
      %2135 = vadd.xlane.f32.xlu0 %v2131
      %v2136 = vpop.xlane.xlu0 %2135
      %2137 = vadd.xlane.f32.xlu0 %v2132
      %v2138 = vpop.xlane.xlu0 %2137
      %v2139 = vmul.f32 %v2134, %v504
      %v2140 = vmul.f32 %v2136, %v504
      %v2141 = vmul.f32 %v2138, %v504
      %v2142 = vadd.f32 %v2139, 1e-06
      %v2143 = vadd.f32 %v2140, 1e-06
      %v2144 = vadd.f32 %v2141, 1e-06
      %v2145 = vrsqrt.pop %v2142
      %v2146 = vrsqrt.pop %v2143
      %v2147 = vrsqrt.pop %v2144
      %v2148 = vmul.f32 %v2127, %v2145
      %v2149 = vmul.f32 %v2128, %v2146
      %v2150 = vmul.f32 %v2129, %v2147
      %v2151 = vld [vmem:[%s8] sm:$0x1]
      %v2153 = vlaneseq
      %v2154 = vshrl.u32 %v2153, 7
      %v2155 = vsub.s32 0, %v2154
      %v2156 = vrot.slane %v2151, %v2155
      %v2158 = vmul.f32 %v2148, %v2156
      %v2159 = vmul.f32 %v2149, %v2156
      %v2160 = vmul.f32 %v2150, %v2156
      %v2161 = vld [vmem:[%s9] sm:$0x1]
      %v2163 = vlaneseq
      %v2164 = vshrl.u32 %v2163, 7
      %v2165 = vsub.s32 0, %v2164
      %v2166 = vrot.slane %v2161, %v2165
      %v2168 = vadd.f32 %v2158, %v2166
      %v2169 = vadd.f32 %v2159, %v2166
      %v2170 = vadd.f32 %v2160, %v2166
      %v2171 = vld [vmem:[%s10] sm:$0xff]
      %v2172 = vld [vmem:[%s10 + $0x8] sm:$0xff]
      %v2173 = vld [vmem:[%s10 + $0x10] sm:$0xff]
      %v2174 = vld [vmem:[%s10 + $0x18] sm:$0xff]
      %v2175 = vld [vmem:[%s10 + $0x20] sm:$0xff]
      %v2176 = vld [vmem:[%s10 + $0x28] sm:$0xff]
      %v2177 = vld [vmem:[%s10 + $0x30] sm:$0xff]
      %v2178 = vld [vmem:[%s10 + $0x38] sm:$0xff]
      %v2179 = vld [vmem:[%s10 + $0x40] sm:$0xff]
      %v2180 = vld [vmem:[%s10 + $0x48] sm:$0xff]
      %v2181 = vld [vmem:[%s10 + $0x50] sm:$0xff]
      %v2182 = vld [vmem:[%s10 + $0x58] sm:$0xff]
      %v2183 = vld [vmem:[%s10 + $0x60] sm:$0xff]
      %v2184 = vld [vmem:[%s10 + $0x68] sm:$0xff]
      %v2185 = vld [vmem:[%s10 + $0x70] sm:$0xff]
      %v2186 = vld [vmem:[%s10 + $0x78] sm:$0xff]
      %v2187 = vld [vmem:[%s10 + $0x80] sm:$0xff]
      %v2188 = vld [vmem:[%s10 + $0x88] sm:$0xff]
      %v2189 = vld [vmem:[%s10 + $0x90] sm:$0xff]
      %v2190 = vld [vmem:[%s10 + $0x98] sm:$0xff]
      %v2191 = vld [vmem:[%s10 + $0xa0] sm:$0xff]
      %v2192 = vld [vmem:[%s10 + $0xa8] sm:$0xff]
      %v2193 = vld [vmem:[%s10 + $0xb0] sm:$0xff]
      %v2194 = vld [vmem:[%s10 + $0xb8] sm:$0xff]
      %v2195 = vld [vmem:[%s10 + $0xc0] sm:$0xff]
      %v2196 = vld [vmem:[%s10 + $0xc8] sm:$0xff]
      %v2197 = vld [vmem:[%s10 + $0xd0] sm:$0xff]
      %v2198 = vld [vmem:[%s10 + $0xd8] sm:$0xff]
      %v2199 = vld [vmem:[%s10 + $0xe0] sm:$0xff]
      %v2200 = vld [vmem:[%s10 + $0xe8] sm:$0xff]
      %v2201 = vld [vmem:[%s10 + $0xf0] sm:$0xff]
      %v2202 = vld [vmem:[%s10 + $0xf8] sm:$0xff]
      %v2203 = vld [vmem:[%s10 + $0x100] sm:$0xff]
      %v2204 = vld [vmem:[%s10 + $0x108] sm:$0xff]
      %v2205 = vld [vmem:[%s10 + $0x110] sm:$0xff]
      %v2206 = vld [vmem:[%s10 + $0x118] sm:$0xff]
      %v2207 = vld [vmem:[%s10 + $0x120] sm:$0xff]
      %v2208 = vld [vmem:[%s10 + $0x128] sm:$0xff]
      %v2209 = vld [vmem:[%s10 + $0x130] sm:$0xff]
      %v2210 = vld [vmem:[%s10 + $0x138] sm:$0xff]
      %v2211 = vld [vmem:[%s10 + $0x140] sm:$0xff]
      %v2212 = vld [vmem:[%s10 + $0x148] sm:$0xff]
      %v2213 = vld [vmem:[%s10 + $0x150] sm:$0xff]
      %v2214 = vld [vmem:[%s10 + $0x158] sm:$0xff]
      %v2215 = vld [vmem:[%s10 + $0x160] sm:$0xff]
      %v2216 = vld [vmem:[%s10 + $0x168] sm:$0xff]
      %v2217 = vld [vmem:[%s10 + $0x170] sm:$0xff]
      %v2218 = vld [vmem:[%s10 + $0x178] sm:$0xff]
      %v2219 = vld [vmem:[%s10 + $0x180] sm:$0xff]
      %v2220 = vld [vmem:[%s10 + $0x188] sm:$0xff]
      %v2221 = vld [vmem:[%s10 + $0x190] sm:$0xff]
      %v2222 = vld [vmem:[%s10 + $0x198] sm:$0xff]
      %v2223 = vld [vmem:[%s10 + $0x1a0] sm:$0xff]
      %v2224 = vld [vmem:[%s10 + $0x1a8] sm:$0xff]
      %v2225 = vld [vmem:[%s10 + $0x1b0] sm:$0xff]
      %v2226 = vld [vmem:[%s10 + $0x1b8] sm:$0xff]
      %v2227 = vld [vmem:[%s10 + $0x1c0] sm:$0xff]
      %v2228 = vld [vmem:[%s10 + $0x1c8] sm:$0xff]
      %v2229 = vld [vmem:[%s10 + $0x1d0] sm:$0xff]
      %v2230 = vld [vmem:[%s10 + $0x1d8] sm:$0xff]
      %v2231 = vld [vmem:[%s10 + $0x1e0] sm:$0xff]
      %v2232 = vld [vmem:[%s10 + $0x1e8] sm:$0xff]
      %v2233 = vld [vmem:[%s10 + $0x1f0] sm:$0xff]
      %v2234 = vld [vmem:[%s10 + $0x1f8] sm:$0xff]
      %v2235 = vld [vmem:[%s11] sm:$0xf]
      %v2237 = vlaneseq
      %v2238 = vshrl.u32 %v2237, 7
      %v2239 = vsub.s32 0, %v2238
      %v2240 = vrot.slane %v2235, %v2239
      %v2241 = vlaneseq
      %v2242 = vshrl.u32 %v2241, 7
      %v2243 = vsub.s32 1, %v2242
      %v2244 = vrot.slane %v2235, %v2243
      %v2245 = vlaneseq
      %v2246 = vshrl.u32 %v2245, 7
      %v2247 = vsub.s32 2, %v2246
      %v2248 = vrot.slane %v2235, %v2247
      %v2249 = vlaneseq
      %v2250 = vshrl.u32 %v2249, 7
      %v2251 = vsub.s32 3, %v2250
      %v2252 = vrot.slane %v2235, %v2251
      %2257 = vmatprep.subr.mxu0 %v2172
      %2258 = vmatpush1.msra.mxu0 %v2171
      %2259 = vmatprep.subr.mxu0 %v2176
      %2260 = vmatpush1.msra.mxu0 %v2175
      %2261 = vmatprep.subr.mxu0 %v2180
      %2262 = vmatpush1.msra.mxu0 %v2179
      %2263 = vmatprep.subr.mxu0 %v2184
      %2264 = vmatpush1.msra.mxu0 %v2183
      %2265 = vmatprep.subr.mxu0 %v2188
      %2266 = vmatpush1.msra.mxu0 %v2187
      %2267 = vmatprep.subr.mxu0 %v2192
      %2268 = vmatpush1.msra.mxu0 %v2191
      %2269 = vmatprep.subr.mxu0 %v2196
      %2270 = vmatpush1.msra.mxu0 %v2195
      %2271 = vmatprep.subr.mxu0 %v2200
      %2272 = vmatpush1.msra.mxu0 %v2199
      %2273 = vmatprep.subr.mxu0 %v2204
      %2274 = vmatpush1.msra.mxu0 %v2203
      %2275 = vmatprep.subr.mxu0 %v2208
      %2276 = vmatpush1.msra.mxu0 %v2207
      %2277 = vmatprep.subr.mxu0 %v2212
      %2278 = vmatpush1.msra.mxu0 %v2211
      %2279 = vmatprep.subr.mxu0 %v2216
      %2280 = vmatpush1.msra.mxu0 %v2215
      %2281 = vmatprep.subr.mxu0 %v2220
      %2282 = vmatpush1.msra.mxu0 %v2219
      %2283 = vmatprep.subr.mxu0 %v2224
      %2284 = vmatpush1.msra.mxu0 %v2223
      %2285 = vmatprep.subr.mxu0 %v2228
      %2286 = vmatpush1.msra.mxu0 %v2227
      %2287 = vmatprep.subr.mxu0 %v2232
      %2288 = vmatpush1.msra.mxu0 %v2231
      %2289 = vmatprep.subr.mxu0 0.0
      %2290 = vmatpush1.msra.mxu0 0.0
      %2291 = vmatprep.subr.mxu0 0.0
      %2292 = vmatpush1.msra.mxu0 0.0
      %2293 = vmatprep.subr.mxu0 0.0
      %2294 = vmatpush1.msra.mxu0 0.0
      %2295 = vmatprep.subr.mxu0 0.0
      %2296 = vmatpush1.msra.mxu0 0.0
      %2297 = vmatprep.subr.mxu0 0.0
      %2298 = vmatpush1.msra.mxu0 0.0
      %2299 = vmatprep.subr.mxu0 0.0
      %2300 = vmatpush1.msra.mxu0 0.0
      %2301 = vmatprep.subr.mxu0 0.0
      %2302 = vmatpush1.msra.mxu0 0.0
      %2303 = vmatprep.subr.mxu0 0.0
      %2304 = vmatpush1.msra.mxu0 0.0
      %2305 = vmatprep.subr.mxu0 0.0
      %2306 = vmatpush1.msra.mxu0 0.0
      %2307 = vmatprep.subr.mxu0 0.0
      %2308 = vmatpush1.msra.mxu0 0.0
      %2309 = vmatprep.subr.mxu0 0.0
      %2310 = vmatpush1.msra.mxu0 0.0
      %2311 = vmatprep.subr.mxu0 0.0
      %2312 = vmatpush1.msra.mxu0 0.0
      %2313 = vmatprep.subr.mxu0 0.0
      %2314 = vmatpush1.msra.mxu0 0.0
      %2315 = vmatprep.subr.mxu0 0.0
      %2316 = vmatpush1.msra.mxu0 0.0
      %2317 = vmatprep.subr.mxu0 0.0
      %2318 = vmatpush1.msra.mxu0 0.0
      %2319 = vmatprep.subr.mxu0 0.0
      %2320 = vmatpush1.msra.mxu0 0.0
      %2321 = vmatprep.mubr.f32.mxu0 0.0
      %2322 = vmatmul.mubr.f32.gmra.mrb[0].mxu0 %v2168
      %v2323 = vpop.f32.mrb[0].mxu0
      %v2324 = vadd.f32 %v2240, %v2323
      %v2325 = vpop.f32.mrb[0].mxu0
      %v2326 = vadd.f32 %v2244, %v2325
      %2327 = vmatprep.mubr.f32.mxu0 0.0
      %2328 = vmatmul.mubr.f32.gmra.mrb[0].mxu0 %v2169
      %v2329 = vpop.f32.mrb[0].mxu0
      %v2330 = vadd.f32 %v2240, %v2329
      %v2331 = vpop.f32.mrb[0].mxu0
      %v2332 = vadd.f32 %v2244, %v2331
      %2333 = vmatprep.mubr.f32.mxu0 0.0
      %2334 = vmatmul.mubr.f32.gmra.mrb[0].mxu0 %v2170
      %v2335 = vpop.f32.mrb[0].mxu0
      %v2336 = vadd.f32 %v2240, %v2335
      %v2337 = vpop.f32.mrb[0].mxu0
      %v2338 = vadd.f32 %v2244, %v2337
      %2339 = vdwg.mxu0
      %2340 = vmatprep.subr.mxu0 %v2174
      %2341 = vmatpush1.msra.mxu0 %v2173
      %2342 = vmatprep.subr.mxu0 %v2178
      %2343 = vmatpush1.msra.mxu0 %v2177
      %2344 = vmatprep.subr.mxu0 %v2182
      %2345 = vmatpush1.msra.mxu0 %v2181
      %2346 = vmatprep.subr.mxu0 %v2186
      %2347 = vmatpush1.msra.mxu0 %v2185
      %2348 = vmatprep.subr.mxu0 %v2190
      %2349 = vmatpush1.msra.mxu0 %v2189
      %2350 = vmatprep.subr.mxu0 %v2194
      %2351 = vmatpush1.msra.mxu0 %v2193
      %2352 = vmatprep.subr.mxu0 %v2198
      %2353 = vmatpush1.msra.mxu0 %v2197
      %2354 = vmatprep.subr.mxu0 %v2202
      %2355 = vmatpush1.msra.mxu0 %v2201
      %2356 = vmatprep.subr.mxu0 %v2206
      %2357 = vmatpush1.msra.mxu0 %v2205
      %2358 = vmatprep.subr.mxu0 %v2210
      %2359 = vmatpush1.msra.mxu0 %v2209
      %2360 = vmatprep.subr.mxu0 %v2214
      %2361 = vmatpush1.msra.mxu0 %v2213
      %2362 = vmatprep.subr.mxu0 %v2218
      %2363 = vmatpush1.msra.mxu0 %v2217
      %2364 = vmatprep.subr.mxu0 %v2222
      %2365 = vmatpush1.msra.mxu0 %v2221
      %2366 = vmatprep.subr.mxu0 %v2226
      %2367 = vmatpush1.msra.mxu0 %v2225
      %2368 = vmatprep.subr.mxu0 %v2230
      %2369 = vmatpush1.msra.mxu0 %v2229
      %2370 = vmatprep.subr.mxu0 %v2234
      %2371 = vmatpush1.msra.mxu0 %v2233
      %2372 = vmatprep.subr.mxu0 0.0
      %2373 = vmatpush1.msra.mxu0 0.0
      %2374 = vmatprep.subr.mxu0 0.0
      %2375 = vmatpush1.msra.mxu0 0.0
      %2376 = vmatprep.subr.mxu0 0.0
      %2377 = vmatpush1.msra.mxu0 0.0
      %2378 = vmatprep.subr.mxu0 0.0
      %2379 = vmatpush1.msra.mxu0 0.0
      %2380 = vmatprep.subr.mxu0 0.0
      %2381 = vmatpush1.msra.mxu0 0.0
      %2382 = vmatprep.subr.mxu0 0.0
      %2383 = vmatpush1.msra.mxu0 0.0
      %2384 = vmatprep.subr.mxu0 0.0
      %2385 = vmatpush1.msra.mxu0 0.0
      %2386 = vmatprep.subr.mxu0 0.0
      %2387 = vmatpush1.msra.mxu0 0.0
      %2388 = vmatprep.subr.mxu0 0.0
      %2389 = vmatpush1.msra.mxu0 0.0
      %2390 = vmatprep.subr.mxu0 0.0
      %2391 = vmatpush1.msra.mxu0 0.0
      %2392 = vmatprep.subr.mxu0 0.0
      %2393 = vmatpush1.msra.mxu0 0.0
      %2394 = vmatprep.subr.mxu0 0.0
      %2395 = vmatpush1.msra.mxu0 0.0
      %2396 = vmatprep.subr.mxu0 0.0
      %2397 = vmatpush1.msra.mxu0 0.0
      %2398 = vmatprep.subr.mxu0 0.0
      %2399 = vmatpush1.msra.mxu0 0.0
      %2400 = vmatprep.subr.mxu0 0.0
      %2401 = vmatpush1.msra.mxu0 0.0
      %2402 = vmatprep.subr.mxu0 0.0
      %2403 = vmatpush1.msra.mxu0 0.0
      %2404 = vmatprep.mubr.f32.mxu0 0.0
      %2405 = vmatmul.mubr.f32.gmra.mrb[0].mxu0 %v2168
      %v2406 = vpop.f32.mrb[0].mxu0
      %v2407 = vadd.f32 %v2248, %v2406
      %v2408 = vpop.f32.mrb[0].mxu0
      %v2409 = vadd.f32 %v2252, %v2408
      %2410 = vmatprep.mubr.f32.mxu0 0.0
      %2411 = vmatmul.mubr.f32.gmra.mrb[0].mxu0 %v2169
      %v2412 = vpop.f32.mrb[0].mxu0
      %v2413 = vadd.f32 %v2248, %v2412
      %v2414 = vpop.f32.mrb[0].mxu0
      %v2415 = vadd.f32 %v2252, %v2414
      %2416 = vmatprep.mubr.f32.mxu0 0.0
      %2417 = vmatmul.mubr.f32.gmra.mrb[0].mxu0 %v2170
      %v2418 = vpop.f32.mrb[0].mxu0
      %v2419 = vadd.f32 %v2248, %v2418
      %v2420 = vpop.f32.mrb[0].mxu0
      %v2421 = vadd.f32 %v2252, %v2420
      %2422 = vdwg.mxu0
      %v2423 = vmul.f32 %v2324, %v2324
      %v2424 = vmul.f32 %v2326, %v2326
      %v2425 = vmul.f32 %v2407, %v2407
      %v2426 = vmul.f32 %v2409, %v2409
      %v2427 = vmul.f32 %v2330, %v2330
      %v2428 = vmul.f32 %v2332, %v2332
      %v2429 = vmul.f32 %v2413, %v2413
      %v2430 = vmul.f32 %v2415, %v2415
      %v2431 = vmul.f32 %v2336, %v2336
      %v2432 = vmul.f32 %v2338, %v2338
      %v2433 = vmul.f32 %v2419, %v2419
      %v2434 = vmul.f32 %v2421, %v2421
      %v2435 = vmul.f32 %v2324, %v2423
      %v2436 = vmul.f32 %v2326, %v2424
      %v2437 = vmul.f32 %v2407, %v2425
      %v2438 = vmul.f32 %v2409, %v2426
      %v2439 = vmul.f32 %v2330, %v2427
      %v2440 = vmul.f32 %v2332, %v2428
      %v2441 = vmul.f32 %v2413, %v2429
      %v2442 = vmul.f32 %v2415, %v2430
      %v2443 = vmul.f32 %v2336, %v2431
      %v2444 = vmul.f32 %v2338, %v2432
      %v2445 = vmul.f32 %v2419, %v2433
      %v2446 = vmul.f32 %v2421, %v2434
      %v2447 = vmul.f32 %v2435, 0.044715
      %v2448 = vmul.f32 %v2436, 0.044715
      %v2449 = vmul.f32 %v2437, 0.044715
      %v2450 = vmul.f32 %v2438, 0.044715
      %v2451 = vmul.f32 %v2439, 0.044715
      %v2452 = vmul.f32 %v2440, 0.044715
      %v2453 = vmul.f32 %v2441, 0.044715
      %v2454 = vmul.f32 %v2442, 0.044715
      %v2455 = vmul.f32 %v2443, 0.044715
      %v2456 = vmul.f32 %v2444, 0.044715
      %v2457 = vmul.f32 %v2445, 0.044715
      %v2458 = vmul.f32 %v2446, 0.044715
      %v2459 = vadd.f32 %v2324, %v2447
      %v2460 = vadd.f32 %v2326, %v2448
      %v2461 = vadd.f32 %v2407, %v2449
      %v2462 = vadd.f32 %v2409, %v2450
      %v2463 = vadd.f32 %v2330, %v2451
      %v2464 = vadd.f32 %v2332, %v2452
      %v2465 = vadd.f32 %v2413, %v2453
      %v2466 = vadd.f32 %v2415, %v2454
      %v2467 = vadd.f32 %v2336, %v2455
      %v2468 = vadd.f32 %v2338, %v2456
      %v2469 = vadd.f32 %v2419, %v2457
      %v2470 = vadd.f32 %v2421, %v2458
      %v2471 = vmul.f32 %v2459, 0.7978846
      %v2472 = vmul.f32 %v2460, 0.7978846
      %v2473 = vmul.f32 %v2461, 0.7978846
      %v2474 = vmul.f32 %v2462, 0.7978846
      %v2475 = vmul.f32 %v2463, 0.7978846
      %v2476 = vmul.f32 %v2464, 0.7978846
      %v2477 = vmul.f32 %v2465, 0.7978846
      %v2478 = vmul.f32 %v2466, 0.7978846
      %v2479 = vmul.f32 %v2467, 0.7978846
      %v2480 = vmul.f32 %v2468, 0.7978846
      %v2481 = vmul.f32 %v2469, 0.7978846
      %v2482 = vmul.f32 %v2470, 0.7978846
      %v2483 = vtanh.pop %v2471
      %v2484 = vtanh.pop %v2472
      %v2485 = vtanh.pop %v2473
      %v2486 = vtanh.pop %v2474
      %v2487 = vtanh.pop %v2475
      %v2488 = vtanh.pop %v2476
      %v2489 = vtanh.pop %v2477
      %v2490 = vtanh.pop %v2478
      %v2491 = vtanh.pop %v2479
      %v2492 = vtanh.pop %v2480
      %v2493 = vtanh.pop %v2481
      %v2494 = vtanh.pop %v2482
      %v2495 = vadd.f32 %v2483, 1.0
      %v2496 = vadd.f32 %v2484, 1.0
      %v2497 = vadd.f32 %v2485, 1.0
      %v2498 = vadd.f32 %v2486, 1.0
      %v2499 = vadd.f32 %v2487, 1.0
      %v2500 = vadd.f32 %v2488, 1.0
      %v2501 = vadd.f32 %v2489, 1.0
      %v2502 = vadd.f32 %v2490, 1.0
      %v2503 = vadd.f32 %v2491, 1.0
      %v2504 = vadd.f32 %v2492, 1.0
      %v2505 = vadd.f32 %v2493, 1.0
      %v2506 = vadd.f32 %v2494, 1.0
      %v2507 = vmul.f32 %v2495, 0.5
      %v2508 = vmul.f32 %v2496, 0.5
      %v2509 = vmul.f32 %v2497, 0.5
      %v2510 = vmul.f32 %v2498, 0.5
      %v2511 = vmul.f32 %v2499, 0.5
      %v2512 = vmul.f32 %v2500, 0.5
      %v2513 = vmul.f32 %v2501, 0.5
      %v2514 = vmul.f32 %v2502, 0.5
      %v2515 = vmul.f32 %v2503, 0.5
      %v2516 = vmul.f32 %v2504, 0.5
      %v2517 = vmul.f32 %v2505, 0.5
      %v2518 = vmul.f32 %v2506, 0.5
      %v2519 = vmul.f32 %v2324, %v2507
      %v2520 = vmul.f32 %v2326, %v2508
      %v2521 = vmul.f32 %v2407, %v2509
      %v2522 = vmul.f32 %v2409, %v2510
      %v2523 = vmul.f32 %v2330, %v2511
      %v2524 = vmul.f32 %v2332, %v2512
      %v2525 = vmul.f32 %v2413, %v2513
      %v2526 = vmul.f32 %v2415, %v2514
      %v2527 = vmul.f32 %v2336, %v2515
      %v2528 = vmul.f32 %v2338, %v2516
      %v2529 = vmul.f32 %v2419, %v2517
      %v2530 = vmul.f32 %v2421, %v2518
      %v2531 = vld [vmem:[%s12] sm:$0xff]
      %v2532 = vld [vmem:[%s12 + $0x8] sm:$0xff]
      %v2533 = vld [vmem:[%s12 + $0x10] sm:$0xff]
      %v2534 = vld [vmem:[%s12 + $0x18] sm:$0xff]
      %v2535 = vld [vmem:[%s12 + $0x20] sm:$0xff]
      %v2536 = vld [vmem:[%s12 + $0x28] sm:$0xff]
      %v2537 = vld [vmem:[%s12 + $0x30] sm:$0xff]
      %v2538 = vld [vmem:[%s12 + $0x38] sm:$0xff]
      %v2539 = vld [vmem:[%s12 + $0x40] sm:$0xff]
      %v2540 = vld [vmem:[%s12 + $0x48] sm:$0xff]
      %v2541 = vld [vmem:[%s12 + $0x50] sm:$0xff]
      %v2542 = vld [vmem:[%s12 + $0x58] sm:$0xff]
      %v2543 = vld [vmem:[%s12 + $0x60] sm:$0xff]
      %v2544 = vld [vmem:[%s12 + $0x68] sm:$0xff]
      %v2545 = vld [vmem:[%s12 + $0x70] sm:$0xff]
      %v2546 = vld [vmem:[%s12 + $0x78] sm:$0xff]
      %v2547 = vld [vmem:[%s12 + $0x80] sm:$0xff]
      %v2548 = vld [vmem:[%s12 + $0x88] sm:$0xff]
      %v2549 = vld [vmem:[%s12 + $0x90] sm:$0xff]
      %v2550 = vld [vmem:[%s12 + $0x98] sm:$0xff]
      %v2551 = vld [vmem:[%s12 + $0xa0] sm:$0xff]
      %v2552 = vld [vmem:[%s12 + $0xa8] sm:$0xff]
      %v2553 = vld [vmem:[%s12 + $0xb0] sm:$0xff]
      %v2554 = vld [vmem:[%s12 + $0xb8] sm:$0xff]
      %v2555 = vld [vmem:[%s12 + $0xc0] sm:$0xff]
      %v2556 = vld [vmem:[%s12 + $0xc8] sm:$0xff]
      %v2557 = vld [vmem:[%s12 + $0xd0] sm:$0xff]
      %v2558 = vld [vmem:[%s12 + $0xd8] sm:$0xff]
      %v2559 = vld [vmem:[%s12 + $0xe0] sm:$0xff]
      %v2560 = vld [vmem:[%s12 + $0xe8] sm:$0xff]
      %v2561 = vld [vmem:[%s12 + $0xf0] sm:$0xff]
      %v2562 = vld [vmem:[%s12 + $0xf8] sm:$0xff]
      %v2563 = vld [vmem:[%s12 + $0x100] sm:$0xff]
      %v2564 = vld [vmem:[%s12 + $0x108] sm:$0xff]
      %v2565 = vld [vmem:[%s12 + $0x110] sm:$0xff]
      %v2566 = vld [vmem:[%s12 + $0x118] sm:$0xff]
      %v2567 = vld [vmem:[%s12 + $0x120] sm:$0xff]
      %v2568 = vld [vmem:[%s12 + $0x128] sm:$0xff]
      %v2569 = vld [vmem:[%s12 + $0x130] sm:$0xff]
      %v2570 = vld [vmem:[%s12 + $0x138] sm:$0xff]
      %v2571 = vld [vmem:[%s12 + $0x140] sm:$0xff]
      %v2572 = vld [vmem:[%s12 + $0x148] sm:$0xff]
      %v2573 = vld [vmem:[%s12 + $0x150] sm:$0xff]
      %v2574 = vld [vmem:[%s12 + $0x158] sm:$0xff]
      %v2575 = vld [vmem:[%s12 + $0x160] sm:$0xff]
      %v2576 = vld [vmem:[%s12 + $0x168] sm:$0xff]
      %v2577 = vld [vmem:[%s12 + $0x170] sm:$0xff]
      %v2578 = vld [vmem:[%s12 + $0x178] sm:$0xff]
      %v2579 = vld [vmem:[%s12 + $0x180] sm:$0xff]
      %v2580 = vld [vmem:[%s12 + $0x188] sm:$0xff]
      %v2581 = vld [vmem:[%s12 + $0x190] sm:$0xff]
      %v2582 = vld [vmem:[%s12 + $0x198] sm:$0xff]
      %v2583 = vld [vmem:[%s12 + $0x1a0] sm:$0xff]
      %v2584 = vld [vmem:[%s12 + $0x1a8] sm:$0xff]
      %v2585 = vld [vmem:[%s12 + $0x1b0] sm:$0xff]
      %v2586 = vld [vmem:[%s12 + $0x1b8] sm:$0xff]
      %v2587 = vld [vmem:[%s12 + $0x1c0] sm:$0xff]
      %v2588 = vld [vmem:[%s12 + $0x1c8] sm:$0xff]
      %v2589 = vld [vmem:[%s12 + $0x1d0] sm:$0xff]
      %v2590 = vld [vmem:[%s12 + $0x1d8] sm:$0xff]
      %v2591 = vld [vmem:[%s12 + $0x1e0] sm:$0xff]
      %v2592 = vld [vmem:[%s12 + $0x1e8] sm:$0xff]
      %v2593 = vld [vmem:[%s12 + $0x1f0] sm:$0xff]
      %v2594 = vld [vmem:[%s12 + $0x1f8] sm:$0xff]
      %v2595 = vld [vmem:[%s13] sm:$0x1]
      %v2597 = vlaneseq
      %v2598 = vshrl.u32 %v2597, 7
      %v2599 = vsub.s32 0, %v2598
      %v2600 = vrot.slane %v2595, %v2599
      %2602 = vmatprep.subr.mxu0 0.0
      %2603 = vmatpush1.msra.mxu0 %v2531
      %2604 = vmatprep.subr.mxu0 0.0
      %2605 = vmatpush1.msra.mxu0 %v2532
      %2606 = vmatprep.subr.mxu0 0.0
      %2607 = vmatpush1.msra.mxu0 %v2533
      %2608 = vmatprep.subr.mxu0 0.0
      %2609 = vmatpush1.msra.mxu0 %v2534
      %2610 = vmatprep.subr.mxu0 0.0
      %2611 = vmatpush1.msra.mxu0 %v2535
      %2612 = vmatprep.subr.mxu0 0.0
      %2613 = vmatpush1.msra.mxu0 %v2536
      %2614 = vmatprep.subr.mxu0 0.0
      %2615 = vmatpush1.msra.mxu0 %v2537
      %2616 = vmatprep.subr.mxu0 0.0
      %2617 = vmatpush1.msra.mxu0 %v2538
      %2618 = vmatprep.subr.mxu0 0.0
      %2619 = vmatpush1.msra.mxu0 %v2539
      %2620 = vmatprep.subr.mxu0 0.0
      %2621 = vmatpush1.msra.mxu0 %v2540
      %2622 = vmatprep.subr.mxu0 0.0
      %2623 = vmatpush1.msra.mxu0 %v2541
      %2624 = vmatprep.subr.mxu0 0.0
      %2625 = vmatpush1.msra.mxu0 %v2542
      %2626 = vmatprep.subr.mxu0 0.0
      %2627 = vmatpush1.msra.mxu0 %v2543
      %2628 = vmatprep.subr.mxu0 0.0
      %2629 = vmatpush1.msra.mxu0 %v2544
      %2630 = vmatprep.subr.mxu0 0.0
      %2631 = vmatpush1.msra.mxu0 %v2545
      %2632 = vmatprep.subr.mxu0 0.0
      %2633 = vmatpush1.msra.mxu0 %v2546
      %2634 = vmatprep.subr.mxu0 0.0
      %2635 = vmatpush1.msra.mxu0 %v2547
      %2636 = vmatprep.subr.mxu0 0.0
      %2637 = vmatpush1.msra.mxu0 %v2548
      %2638 = vmatprep.subr.mxu0 0.0
      %2639 = vmatpush1.msra.mxu0 %v2549
      %2640 = vmatprep.subr.mxu0 0.0
      %2641 = vmatpush1.msra.mxu0 %v2550
      %2642 = vmatprep.subr.mxu0 0.0
      %2643 = vmatpush1.msra.mxu0 %v2551
      %2644 = vmatprep.subr.mxu0 0.0
      %2645 = vmatpush1.msra.mxu0 %v2552
      %2646 = vmatprep.subr.mxu0 0.0
      %2647 = vmatpush1.msra.mxu0 %v2553
      %2648 = vmatprep.subr.mxu0 0.0
      %2649 = vmatpush1.msra.mxu0 %v2554
      %2650 = vmatprep.subr.mxu0 0.0
      %2651 = vmatpush1.msra.mxu0 %v2555
      %2652 = vmatprep.subr.mxu0 0.0
      %2653 = vmatpush1.msra.mxu0 %v2556
      %2654 = vmatprep.subr.mxu0 0.0
      %2655 = vmatpush1.msra.mxu0 %v2557
      %2656 = vmatprep.subr.mxu0 0.0
      %2657 = vmatpush1.msra.mxu0 %v2558
      %2658 = vmatprep.subr.mxu0 0.0
      %2659 = vmatpush1.msra.mxu0 %v2559
      %2660 = vmatprep.subr.mxu0 0.0
      %2661 = vmatpush1.msra.mxu0 %v2560
      %2662 = vmatprep.subr.mxu0 0.0
      %2663 = vmatpush1.msra.mxu0 %v2561
      %2664 = vmatprep.subr.mxu0 0.0
      %2665 = vmatpush1.msra.mxu0 %v2562
      %2666 = vmatprep.mubr.f32.mxu0 %v2520
      %2667 = vmatmul.mubr.f32.gmra.mrb[0].mxu0 %v2519
      %v2668 = vpop.f32.mrb[0].mxu0
      %v2669 = vadd.f32 %v2600, %v2668
      %v2670 = vpop.f32.mrb[0].mxu0
      %2671 = vmatprep.mubr.f32.mxu0 %v2524
      %2672 = vmatmul.mubr.f32.gmra.mrb[0].mxu0 %v2523
      %v2673 = vpop.f32.mrb[0].mxu0
      %v2674 = vadd.f32 %v2600, %v2673
      %v2675 = vpop.f32.mrb[0].mxu0
      %2676 = vmatprep.mubr.f32.mxu0 %v2528
      %2677 = vmatmul.mubr.f32.gmra.mrb[0].mxu0 %v2527
      %v2678 = vpop.f32.mrb[0].mxu0
      %v2679 = vadd.f32 %v2600, %v2678
      %v2680 = vpop.f32.mrb[0].mxu0
      %2681 = vdwg.mxu0
      %2682 = vmatprep.subr.mxu0 0.0
      %2683 = vmatpush1.msra.mxu0 %v2563
      %2684 = vmatprep.subr.mxu0 0.0
      %2685 = vmatpush1.msra.mxu0 %v2564
      %2686 = vmatprep.subr.mxu0 0.0
      %2687 = vmatpush1.msra.mxu0 %v2565
      %2688 = vmatprep.subr.mxu0 0.0
      %2689 = vmatpush1.msra.mxu0 %v2566
      %2690 = vmatprep.subr.mxu0 0.0
      %2691 = vmatpush1.msra.mxu0 %v2567
      %2692 = vmatprep.subr.mxu0 0.0
      %2693 = vmatpush1.msra.mxu0 %v2568
      %2694 = vmatprep.subr.mxu0 0.0
      %2695 = vmatpush1.msra.mxu0 %v2569
      %2696 = vmatprep.subr.mxu0 0.0
      %2697 = vmatpush1.msra.mxu0 %v2570
      %2698 = vmatprep.subr.mxu0 0.0
      %2699 = vmatpush1.msra.mxu0 %v2571
      %2700 = vmatprep.subr.mxu0 0.0
      %2701 = vmatpush1.msra.mxu0 %v2572
      %2702 = vmatprep.subr.mxu0 0.0
      %2703 = vmatpush1.msra.mxu0 %v2573
      %2704 = vmatprep.subr.mxu0 0.0
      %2705 = vmatpush1.msra.mxu0 %v2574
      %2706 = vmatprep.subr.mxu0 0.0
      %2707 = vmatpush1.msra.mxu0 %v2575
      %2708 = vmatprep.subr.mxu0 0.0
      %2709 = vmatpush1.msra.mxu0 %v2576
      %2710 = vmatprep.subr.mxu0 0.0
      %2711 = vmatpush1.msra.mxu0 %v2577
      %2712 = vmatprep.subr.mxu0 0.0
      %2713 = vmatpush1.msra.mxu0 %v2578
      %2714 = vmatprep.subr.mxu0 0.0
      %2715 = vmatpush1.msra.mxu0 %v2579
      %2716 = vmatprep.subr.mxu0 0.0
      %2717 = vmatpush1.msra.mxu0 %v2580
      %2718 = vmatprep.subr.mxu0 0.0
      %2719 = vmatpush1.msra.mxu0 %v2581
      %2720 = vmatprep.subr.mxu0 0.0
      %2721 = vmatpush1.msra.mxu0 %v2582
      %2722 = vmatprep.subr.mxu0 0.0
      %2723 = vmatpush1.msra.mxu0 %v2583
      %2724 = vmatprep.subr.mxu0 0.0
      %2725 = vmatpush1.msra.mxu0 %v2584
      %2726 = vmatprep.subr.mxu0 0.0
      %2727 = vmatpush1.msra.mxu0 %v2585
      %2728 = vmatprep.subr.mxu0 0.0
      %2729 = vmatpush1.msra.mxu0 %v2586
      %2730 = vmatprep.subr.mxu0 0.0
      %2731 = vmatpush1.msra.mxu0 %v2587
      %2732 = vmatprep.subr.mxu0 0.0
      %2733 = vmatpush1.msra.mxu0 %v2588
      %2734 = vmatprep.subr.mxu0 0.0
      %2735 = vmatpush1.msra.mxu0 %v2589
      %2736 = vmatprep.subr.mxu0 0.0
      %2737 = vmatpush1.msra.mxu0 %v2590
      %2738 = vmatprep.subr.mxu0 0.0
      %2739 = vmatpush1.msra.mxu0 %v2591
      %2740 = vmatprep.subr.mxu0 0.0
      %2741 = vmatpush1.msra.mxu0 %v2592
      %2742 = vmatprep.subr.mxu0 0.0
      %2743 = vmatpush1.msra.mxu0 %v2593
      %2744 = vmatprep.subr.mxu0 0.0
      %2745 = vmatpush1.msra.mxu0 %v2594
      %2746 = vmatprep.mubr.f32.mxu0 %v2522
      %2747 = vmatmul.mubr.f32.gmra.mrb[0].mxu0 %v2521
      %v2748 = vpop.f32.mrb[0].mxu0
      %v2749 = vadd.f32 %v2669, %v2748
      %v2750 = vpop.f32.mrb[0].mxu0
      %2751 = vmatprep.mubr.f32.mxu0 %v2526
      %2752 = vmatmul.mubr.f32.gmra.mrb[0].mxu0 %v2525
      %v2753 = vpop.f32.mrb[0].mxu0
      %v2754 = vadd.f32 %v2674, %v2753
      %v2755 = vpop.f32.mrb[0].mxu0
      %2756 = vmatprep.mubr.f32.mxu0 %v2530
      %2757 = vmatmul.mubr.f32.gmra.mrb[0].mxu0 %v2529
      %v2758 = vpop.f32.mrb[0].mxu0
      %v2759 = vadd.f32 %v2679, %v2758
      %v2760 = vpop.f32.mrb[0].mxu0
      %2761 = vdwg.mxu0
      %v2762 = vld [vmem:[%s14] sm:$0x1]
      %v2764 = vlaneseq
      %v2765 = vshrl.u32 %v2764, 7
      %v2766 = vsub.s32 0, %v2765
      %v2767 = vrot.slane %v2762, %v2766
      %v2769 = vmul.f32 %v2767, %v2749
      %v2770 = vmul.f32 %v2767, %v2754
      %v2771 = vmul.f32 %v2767, %v2759
      %v2772 = vadd.f32 %v2115, %v2769
      %v2773 = vadd.f32 %v2116, %v2770
      %v2774 = vadd.f32 %v2117, %v2771
      %2775 = vst [vmem:[%s494] sm:$0xff] %v2772
      %2776 = vst [vmem:[%s494 + $0x8] sm:$0xff] %v2773
      %2777 = vst [vmem:[%s494 + $0x10] sm:$0xff] %v2774
      %p2778 = scmp.lt.s32.totalorder %s26, 1
      %s2779 = scalar_select %p2778, %s26, 1
      %s2780 = smul.addr %s2779, 3
      %s2781 = smul.addr %s2780, 8
      %s2782 = scalar_lea.vmem %s15, %s2781
      // Predicated region
      $region81: #{unified_model_forward.12} parent=79 // pred_check
        %p2783 = pneg %p364
      $region82: #{unified_model_forward.12} parent=79 // pred_check_branch
        %2785 = sbr.rel (%p2783) target = $region84
      $region83: #{unified_model_forward.12} parent=79 // pred_region
        _
      $region84: #{unified_model_forward.12} parent=79 // pred_fallthru
        _
    $region80: #{unified_model_forward.12} parent=5 // pred_fallthru
      _
    %p2786 = scmp.le.s32.totalorder 2, %s21
    // Predicated region
    $region85: #{unified_model_forward.12} parent=5 // pred_check
      %p2787 = pneg %p2786
    $region86: #{unified_model_forward.12} parent=5 // pred_check_branch
      %2789 = sbr.rel (%p2787) target = $region88
    $region87: #{unified_model_forward.12} parent=5 // pred_region
      %s2790 = ssub.s32 %s21, 2
      // Predicated region
      $region89: #{unified_model_forward.12} parent=87 // pred_check
        %p2791 = pneg %p370
      $region90: #{unified_model_forward.12} parent=87 // pred_check_branch
        %2793 = sbr.rel (%p2791) target = $region92
      $region91: #{unified_model_forward.12} parent=87 // pred_region
        %p2794 = scmp.lt.s32.totalorder %s27, 1
        %s2795 = scalar_select %p2794, %s27, 1
        %s2796 = smul.addr %s2795, 3
        %s2797 = smul.addr %s2796, 8
        %s2798 = scalar_lea.vmem %s15, %s2797
      $region92: #{unified_model_forward.12} parent=87 // pred_fallthru
        _
    $region88: #{unified_model_forward.12} parent=5 // pred_fallthru
      _
  $region6: #{unified_model_forward.12} parent=0 // loop_footer
    %s25 = sadd.s32 1, %s21
  $region7: #{unified_model_forward.12} parent=0 // loop_footer_branch
    %20 = sbr.rel target = $region3
  $region8: #{unified_model_forward.12} parent=0 // loop_exit
    _

// kernel: unified_model_forward.15
$region0: #{unified_model_forward.15}
  #allocation0 [shape = 'u32[]', space=smem, size = 0x4, offset = 0x4, fixed_abs, tag = 'smem constant byte address 0x4 - core index']
  #allocation1 [shape = 'u32[144,128]{1,0:T(1,128)}', space=vmem, size = 0x12000, scoped, tag = 'internal scratch']
  %s0 = inlined_call_operand.vmem [shape: f32[32,48], index: 0, kind: input, shape index: {}]
  %s1 = inlined_call_operand.vmem [shape: f32[32,48], index: 1, kind: input, shape index: {}]
  %s2 = inlined_call_operand.vmem [shape: f32[32,1], index: 2, kind: input, shape index: {}]
  %s3 = inlined_call_operand.hbm [shape: f32[1,1], index: 3, kind: output, shape index: {0}]
  %s4 = inlined_call_operand.vmem [shape: f32[32,1], index: 4, kind: output, shape index: {1}]
  %s5 = inlined_call_operand.vmem [shape: f32[32,1], index: 5, kind: output, shape index: {2}]
  %6 = xla_tuple %s3, %s4, %s5
  %s7 = sld [smem:[#allocation0]]
  $region38: #{unified_model_forward.15} parent=0
    _
  %s9 = ssub.s32 1, %s7
  %s10 = scalar_select 0, %s9, %s7
  $region1: #{unified_model_forward.15} parent=0
    #allocation2 [shape = 'u8[512]{0}', space=vmem, size = 0x400, scoped, tag = 'output window, operand 0, single buffered']
    #allocation3 [shape = 's32[1]{0}', space=sflag, size = 0x4, scoped, tag = 'scoped memory for unified_model_forward.15']
    %11 = vsyncpa [#allocation3], 0
    // Predicated region
    $region2: #{unified_model_forward.15} parent=1 // pred_check
      _
    $region3: #{unified_model_forward.15} parent=1 // pred_check_branch
      %13 = sbr.rel (0) target = $region5
    $region4: #{unified_model_forward.15} parent=1 // pred_region
      _
    $region5: #{unified_model_forward.15} parent=1 // pred_fallthru
      _
    // Predicated region
    $region6: #{unified_model_forward.15} parent=1 // pred_check
      _
    $region7: #{unified_model_forward.15} parent=1 // pred_check_branch
      %15 = sbr.rel (0) target = $region9
    $region8: #{unified_model_forward.15} parent=1 // pred_region
      _
    $region9: #{unified_model_forward.15} parent=1 // pred_fallthru
      _
    // Predicated region
    $region10: #{unified_model_forward.15} parent=1 // pred_check
      _
    $region11: #{unified_model_forward.15} parent=1 // pred_check_branch
      %17 = sbr.rel (0) target = $region13
    $region12: #{unified_model_forward.15} parent=1 // pred_region
      _
    $region13: #{unified_model_forward.15} parent=1 // pred_fallthru
      _
    %v18 = vld [vmem:[%s1] sm:$0xff]
    %v19 = vld [vmem:[%s1 + $0x8] sm:$0xff]
    %v20 = vld [vmem:[%s1 + $0x10] sm:$0xff]
    %v21 = vld [vmem:[%s1 + $0x18] sm:$0xff]
    %v22 = vld [vmem:[%s0] sm:$0xff]
    %v23 = vld [vmem:[%s0 + $0x8] sm:$0xff]
    %v24 = vld [vmem:[%s0 + $0x10] sm:$0xff]
    %v25 = vld [vmem:[%s0 + $0x18] sm:$0xff]
    %v26 = vld [vmem:[%s2] sm:$0xff]
    %v27 = vld [vmem:[%s2 + $0x8] sm:$0xff]
    %v28 = vld [vmem:[%s2 + $0x10] sm:$0xff]
    %v29 = vld [vmem:[%s2 + $0x18] sm:$0xff]
    %vm30 = vcmask 392192
    %v31 = vsel %vm30, %v18, 0.0
    %32 = vadd.xlane.f32.xlu0 %v31
    %v33 = vpop.xlane.xlu0 %32
    %v34 = vsel %vm30, %v19, 0.0
    %35 = vadd.xlane.f32.xlu0 %v34
    %v36 = vpop.xlane.xlu0 %35
    %v37 = vsel %vm30, %v20, 0.0
    %38 = vadd.xlane.f32.xlu0 %v37
    %v39 = vpop.xlane.xlu0 %38
    %v40 = vsel %vm30, %v21, 0.0
    %41 = vadd.xlane.f32.xlu0 %v40
    %v42 = vpop.xlane.xlu0 %41
    %v43 = vrcp.pop 48.0
    %v44 = vmul.f32 %v33, %v43
    %v45 = vmul.f32 %v36, %v43
    %v46 = vmul.f32 %v39, %v43
    %v47 = vmul.f32 %v42, %v43
    %v48 = vsub.f32 %v18, %v44
    %v49 = vsub.f32 %v19, %v45
    %v50 = vsub.f32 %v20, %v46
    %v51 = vsub.f32 %v21, %v47
    %v52 = vmul.f32 %v48, %v48
    %v53 = vmul.f32 %v49, %v49
    %v54 = vmul.f32 %v50, %v50
    %v55 = vmul.f32 %v51, %v51
    %v56 = vsel %vm30, %v52, 0.0
    %57 = vadd.xlane.f32.xlu0 %v56
    %v58 = vpop.xlane.xlu0 %57
    %v59 = vsel %vm30, %v53, 0.0
    %60 = vadd.xlane.f32.xlu0 %v59
    %v61 = vpop.xlane.xlu0 %60
    %v62 = vsel %vm30, %v54, 0.0
    %63 = vadd.xlane.f32.xlu0 %v62
    %v64 = vpop.xlane.xlu0 %63
    %v65 = vsel %vm30, %v55, 0.0
    %66 = vadd.xlane.f32.xlu0 %v65
    %v67 = vpop.xlane.xlu0 %66
    %v68 = vrcp.pop 47.0
    %v69 = vmul.f32 %v58, %v68
    %v70 = vmul.f32 %v61, %v68
    %v71 = vmul.f32 %v64, %v68
    %v72 = vmul.f32 %v67, %v68
    %vm73 = vcmask 7168
    %74 = vst.msk [vmem:[%s4] sm:$0xff] %vm73, %v44
    %75 = vst.msk [vmem:[%s4 + $0x8] sm:$0xff] %vm73, %v45
    %76 = vst.msk [vmem:[%s4 + $0x10] sm:$0xff] %vm73, %v46
    %77 = vst.msk [vmem:[%s4 + $0x18] sm:$0xff] %vm73, %v47
    %78 = vst.msk [vmem:[%s5] sm:$0xff] %vm73, %v69
    %79 = vst.msk [vmem:[%s5 + $0x8] sm:$0xff] %vm73, %v70
    %80 = vst.msk [vmem:[%s5 + $0x10] sm:$0xff] %vm73, %v71
    %81 = vst.msk [vmem:[%s5 + $0x18] sm:$0xff] %vm73, %v72
    %v82 = vadd.f32 %v69, 1e-06
    %v83 = vadd.f32 %v70, 1e-06
    %v84 = vadd.f32 %v71, 1e-06
    %v85 = vadd.f32 %v72, 1e-06
    %v86 = vrsqrt.pop %v82
    %v87 = vrsqrt.pop %v83
    %v88 = vrsqrt.pop %v84
    %v89 = vrsqrt.pop %v85
    %v90 = vmul.f32 %v48, %v86
    %v91 = vmul.f32 %v49, %v87
    %v92 = vmul.f32 %v50, %v88
    %v93 = vmul.f32 %v51, %v89
    %v94 = vsub.f32 %v22, %v90
    %v95 = vsub.f32 %v23, %v91
    %v96 = vsub.f32 %v24, %v92
    %v97 = vsub.f32 %v25, %v93
    %v98 = vmul.f32 %v94, %v94
    %v99 = vmul.f32 %v95, %v95
    %v100 = vmul.f32 %v96, %v96
    %v101 = vmul.f32 %v97, %v97
    %v102 = vsel %vm30, %v98, 0.0
    %103 = vadd.xlane.f32.xlu0 %v102
    %v104 = vpop.xlane.xlu0 %103
    %v105 = vsel %vm30, %v99, 0.0
    %106 = vadd.xlane.f32.xlu0 %v105
    %v107 = vpop.xlane.xlu0 %106
    %v108 = vsel %vm30, %v100, 0.0
    %109 = vadd.xlane.f32.xlu0 %v108
    %v110 = vpop.xlane.xlu0 %109
    %v111 = vsel %vm30, %v101, 0.0
    %112 = vadd.xlane.f32.xlu0 %v111
    %v113 = vpop.xlane.xlu0 %112
    %v114 = vmul.f32 %v104, %v43
    %v115 = vmul.f32 %v107, %v43
    %v116 = vmul.f32 %v110, %v43
    %v117 = vmul.f32 %v113, %v43
    %v118 = vmul.f32 %v114, %v26
    %v119 = vmul.f32 %v115, %v27
    %v120 = vmul.f32 %v116, %v28
    %v121 = vmul.f32 %v117, %v29
    %v122 = vsel %vm73, %v118, 0.0
    %v123 = vsel %vm73, %v119, 0.0
    %v124 = vadd.f32 %v122, %v123
    %v125 = vsel %vm73, %v120, 0.0
    %v126 = vadd.f32 %v124, %v125
    %v127 = vsel %vm73, %v121, 0.0
    %v128 = vadd.f32 %v126, %v127
    %129 = vadd.xlane.f32.xlu0 %v128
    %v130 = vpop.xlane.xlu0 %129
    %v131 = vrot.slane %v130, 4
    %v132 = vadd.f32 %v130, %v131
    %v133 = vrot.slane %v132, 2
    %v134 = vadd.f32 %v132, %v133
    %v135 = vrot.slane %v134, 1
    %v136 = vadd.f32 %v134, %v135
    %s137 = vtos %v136
    %v138 = vstv %s137
    %v139 = vsel %vm73, %v26, 0.0
    %v140 = vsel %vm73, %v27, 0.0
    %v141 = vadd.f32 %v139, %v140
    %v142 = vsel %vm73, %v28, 0.0
    %v143 = vadd.f32 %v141, %v142
    %v144 = vsel %vm73, %v29, 0.0
    %v145 = vadd.f32 %v143, %v144
    %146 = vadd.xlane.f32.xlu0 %v145
    %v147 = vpop.xlane.xlu0 %146
    %v148 = vrot.slane %v147, 4
    %v149 = vadd.f32 %v147, %v148
    %v150 = vrot.slane %v149, 2
    %v151 = vadd.f32 %v149, %v150
    %v152 = vrot.slane %v151, 1
    %v153 = vadd.f32 %v151, %v152
    %s154 = vtos %v153
    %v155 = vstv %s154
    %v156 = vrcp.pop %v155
    %v157 = vmul.f32 %v138, %v156
    %vm158 = vcmask 0
    %159 = vst.msk [vmem:[#allocation2] sm:$0x1] %vm158, %v157
    // Predicated region
    $region14: #{unified_model_forward.15} parent=1 // pred_check
      _
    $region15: #{unified_model_forward.15} parent=1 // pred_check_branch
      %161 = sbr.rel (0) target = $region17
    $region16: #{unified_model_forward.15} parent=1 // pred_region
      %s163 = ssub.s32 16, 16
      %164 = vsyncadd [#allocation3], %s163
      %s166 = sshll.u32 [#allocation2], 4
      %s167 = int_to_ptr.vmem [resolvable:$true] %s166
      %169 = dma.vmem_to_hbm [thread:$0]  %s167, 16, %s3, [#allocation3]
    $region17: #{unified_model_forward.15} parent=1 // pred_fallthru
      _
    // Predicated region
    $region18: #{unified_model_forward.15} parent=1 // pred_check
      _
    $region19: #{unified_model_forward.15} parent=1 // pred_check_branch
      %171 = sbr.rel (0) target = $region21
    $region20: #{unified_model_forward.15} parent=1 // pred_region
      _
    $region21: #{unified_model_forward.15} parent=1 // pred_fallthru
      _
    // Predicated region
    $region22: #{unified_model_forward.15} parent=1 // pred_check
      _
    $region23: #{unified_model_forward.15} parent=1 // pred_check_branch
      %173 = sbr.rel (0) target = $region25
    $region24: #{unified_model_forward.15} parent=1 // pred_region
      _
    $region25: #{unified_model_forward.15} parent=1 // pred_fallthru
      _
    // Predicated region
    $region26: #{unified_model_forward.15} parent=1 // pred_check
      _
    $region27: #{unified_model_forward.15} parent=1 // pred_check_branch
      %175 = sbr.rel (0) target = $region29
    $region28: #{unified_model_forward.15} parent=1 // pred_region
      %176 = dma.done [#allocation3], 16
    $region29: #{unified_model_forward.15} parent=1 // pred_fallthru
      _
    // Predicated region
    $region30: #{unified_model_forward.15} parent=1 // pred_check
      _
    $region31: #{unified_model_forward.15} parent=1 // pred_check_branch
      %178 = sbr.rel (0) target = $region33
    $region32: #{unified_model_forward.15} parent=1 // pred_region
      _
    $region33: #{unified_model_forward.15} parent=1 // pred_fallthru
      _
    // Predicated region
    $region34: #{unified_model_forward.15} parent=1 // pred_check
      _
    $region35: #{unified_model_forward.15} parent=1 // pred_check_branch
      %180 = sbr.rel (0) target = $region37
    $region36: #{unified_model_forward.15} parent=1 // pred_region
      _
    $region37: #{unified_model_forward.15} parent=1 // pred_fallthru
      _
    %181 = vsyncpa [#allocation3], 1

</llo_original>
